<compile_context>
chip_gen: v7x
topology: tpu7x:2x2x1
jax: 0.10.0
libtpu: 0.0.40
codegen_flags: <defaults>
</compile_context>

<pallas_src>
import functools
import math

import jax
import jax.numpy as jnp
from jax.experimental import pallas as pl
from jax.experimental.pallas import tpu as pltpu


INPUT_DIMS = 784   # x.view(-1, input_dims); here 1x28x28 flattened
HIDDEN = 400
LATENT = 20


def _pad_to(n, m):
    return ((n + m - 1) // m) * m


def _choose_tile(m):
    """Row tile (tm) and padded row count (pm).

    - multiples of 8 (sublane requirement),
    - up to 1024 rows per step (amortizes ~0.35us/step grid overhead),
    - >= 2 grid steps for moderate batches so v7x's 2 TensorCores can both
      work on the 'parallel' axis.
    """
    pm8 = _pad_to(max(m, 1), 8)
    if pm8 <= 16:                      # tiny batch: one step
        return pm8, pm8
    tm = min(1024, _pad_to((pm8 + 1) // 2, 8))
    pm = _pad_to(pm8, tm)
    return tm, pm


# -----------------------------------------------------------------------------
# Fused whole-network kernel.
#   x_ref:  [tm, 784] f32 (cast to bf16 in-kernel)
#   w*_ref: [K, N] bf16 (internal dims padded to 512, external dims natural)
#   b*_ref: [1, N] f32
#   recon:  [tm, 784]     z: [tm, 20]
# -----------------------------------------------------------------------------
def _wae_kernel(x_ref, w1_ref, b1_ref, w2_ref, b2_ref, w3_ref, b3_ref,
                w4_ref, b4_ref, recon_ref, z_ref):
    x = x_ref[...].astype(jnp.bfloat16)

    # fc1 + relu          (K = 784 natural, N = 512 padded; pad cols stay 0)
    h1 = jnp.dot(x, w1_ref[...], preferred_element_type=jnp.float32)
    h1 = jnp.maximum(h1 + b1_ref[...], 0.0)

    # fc2 -> z            (K = 512 padded, N = 20 natural)
    z = jnp.dot(h1.astype(jnp.bfloat16), w2_ref[...],
                preferred_element_type=jnp.float32) + b2_ref[...]
    z_ref[...] = z.astype(z_ref.dtype)

    # fc3 + relu          (K = 20 natural, N = 512 padded; pad cols stay 0)
    h3 = jnp.dot(z.astype(jnp.bfloat16), w3_ref[...],
                 preferred_element_type=jnp.float32)
    h3 = jnp.maximum(h3 + b3_ref[...], 0.0)

    # fc4 + sigmoid -> recon   (K = 512 padded, N = 784 natural)
    r = jnp.dot(h3.astype(jnp.bfloat16), w4_ref[...],
                preferred_element_type=jnp.float32) + b4_ref[...]
    recon_ref[...] = jax.nn.sigmoid(r).astype(recon_ref.dtype)


# -----------------------------------------------------------------------------
# Parameter prep (once, outside the forward):
#   PyTorch nn.Linear layout (out, in) -> [K, N] bf16.
#   Only the *internal* hidden dim is padded (400 -> 512); the external dims
#   (784 in, 784 out, 20 latent) stay natural so the forward needs no per-call
#   pad of x and no post-kernel column slices.  Padded weight/bias entries are
#   zero, so they are numerically inert.
# -----------------------------------------------------------------------------
def init_raw_params(key, input_dims=INPUT_DIMS, hidden=HIDDEN, latent=LATENT):
    """Deterministic PyTorch-Linear-style init: U(-1/sqrt(fan_in), +1/sqrt(fan_in))."""
    p = {}

    def nxt():
        nonlocal key
        key, sub = jax.random.split(key)
        return sub

    def linear(fan_in, fan_out):
        bound = 1.0 / math.sqrt(fan_in)
        w = jax.random.uniform(nxt(), (fan_out, fan_in), jnp.float32, -bound, bound)
        b = jax.random.uniform(nxt(), (fan_out,), jnp.float32, -bound, bound)
        return w, b

    p["fc1_w"], p["fc1_b"] = linear(input_dims, hidden)
    p["fc2_w"], p["fc2_b"] = linear(hidden, latent)
    p["fc3_w"], p["fc3_b"] = linear(latent, hidden)
    p["fc4_w"], p["fc4_b"] = linear(hidden, input_dims)
    return p


def prepare_params(raw, weight_dtype=jnp.bfloat16):
    # TODO(synk): optional int8 (v5e/v6e) / fp8-e4m3 (v7x) weight quantization
    # for fc1/fc4 left out to keep the numerics close to the f32 reference.
    H, D = raw["fc1_w"].shape            # (400, 784)
    Z = raw["fc2_w"].shape[0]            # 20
    Hp = _pad_to(H, 128)                 # 512

    def pack_w(w_out_in, kp, np_):
        w = jnp.transpose(w_out_in).astype(jnp.float32)      # (out,in) -> (K,N)
        k, n = w.shape
        return jnp.pad(w, ((0, kp - k), (0, np_ - n))).astype(weight_dtype)

    def pack_b(b, np_):
        b = b.astype(jnp.float32)
        return jnp.pad(b, (0, np_ - b.shape[0])).reshape(1, np_)

    return dict(
        w1=pack_w(raw["fc1_w"], D,  Hp), b1=pack_b(raw["fc1_b"], Hp),
        w2=pack_w(raw["fc2_w"], Hp, Z),  b2=pack_b(raw["fc2_b"], Z),
        w3=pack_w(raw["fc3_w"], Z,  Hp), b3=pack_b(raw["fc3_b"], Hp),
        w4=pack_w(raw["fc4_w"], Hp, D),  b4=pack_b(raw["fc4_b"], D),
    )


# -----------------------------------------------------------------------------
# Forward: (recon, z) = WAE(x);  x is any shape flattening to (-1, input_dims).
# -----------------------------------------------------------------------------
def wae_forward(x, params, *, recon_dtype=jnp.float32, single_buffer_weights=True):
    w1, w2 = params["w1"], params["w2"]
    D = w1.shape[0]                      # 784 (natural input/output width)
    Z = w2.shape[1]                      # 20  (natural latent width)

    x2 = x.reshape(-1, D)                # x.view(-1, input_dims); stays f32
    M = x2.shape[0]
    tm, pm = _choose_tile(M)
    if pm != M:                          # row-pad only when needed (no col pad/cast)
        x2 = jnp.pad(x2, ((0, pm - M), (0, 0)))

    row = lambda i: (i, 0)
    const = lambda i: (0, 0)

    def wspec(shape):
        # Grid-invariant weights/biases are fetched once; single-buffer them
        # to avoid a redundant second VMEM copy.
        if single_buffer_weights:
            return pl.BlockSpec(shape, const, pipeline_mode=pl.Buffered(1))
        return pl.BlockSpec(shape, const)

    recon, z = pl.pallas_call(
        _wae_kernel,
        out_shape=(jax.ShapeDtypeStruct((pm, D), recon_dtype),
                   jax.ShapeDtypeStruct((pm, Z), jnp.float32)),
        grid_spec=pltpu.PrefetchScalarGridSpec(
            num_scalar_prefetch=0,
            grid=(pm // tm,),
            in_specs=[
                pl.BlockSpec((tm, D), row),              # x (f32, natural width)
                wspec(params["w1"].shape), wspec(params["b1"].shape),
                wspec(params["w2"].shape), wspec(params["b2"].shape),
                wspec(params["w3"].shape), wspec(params["b3"].shape),
                wspec(params["w4"].shape), wspec(params["b4"].shape),
            ],
            out_specs=[
                pl.BlockSpec((tm, D), row),              # recon (natural width)
                pl.BlockSpec((tm, Z), row),              # z     (natural width)
            ],
        ),
        compiler_params=pltpu.CompilerParams(
            dimension_semantics=("parallel",),
            vmem_limit_bytes=48 * 1024 * 1024),
    )(x2, params["w1"], params["b1"], params["w2"], params["b2"],
      params["w3"], params["b3"], params["w4"], params["b4"])

    if pm != M:                          # row un-pad only when needed
        recon, z = recon[:M], z[:M]
    return recon, z


# -----------------------------------------------------------------------------
# Pure-JAX f32 reference (matches the PyTorch module exactly).
# -----------------------------------------------------------------------------
def wae_reference(x, raw):
    D = raw["fc1_w"].shape[1]
    x2 = x.reshape(-1, D).astype(jnp.float32)
    h1 = jax.nn.relu(x2 @ raw["fc1_w"].T + raw["fc1_b"])
    z = h1 @ raw["fc2_w"].T + raw["fc2_b"]
    h3 = jax.nn.relu(z @ raw["fc3_w"].T + raw["fc3_b"])
    recon = jax.nn.sigmoid(h3 @ raw["fc4_w"].T + raw["fc4_b"])
    return recon, z


if __name__ == "__main__":
    key = jax.random.PRNGKey(0)
    pkey, xkey = jax.random.split(key)

    raw = init_raw_params(pkey)
    params = prepare_params(raw)          # pre-transpose / pad-internal / bf16, once

    # Small deterministic input: batch=2 images of 1x28x28 -> 784 features.
    x = jax.random.normal(xkey, (2, 1, 28, 28), jnp.float32)

    def run(single_buffer):
        fwd = jax.jit(functools.partial(
            wae_forward, single_buffer_weights=single_buffer))
        out = fwd(x, params)
        return jax.block_until_ready(out)

    try:
        recon, z = run(True)              # preferred: single-buffered weights
    except Exception:
        recon, z = run(False)             # fallback: default double buffering

    assert recon.shape == (2, INPUT_DIMS), recon.shape
    assert z.shape == (2, LATENT), z.shape
    assert bool(jnp.all(jnp.isfinite(recon))) and bool(jnp.all(jnp.isfinite(z)))
    assert bool(jnp.all(recon >= 0.0)) and bool(jnp.all(recon <= 1.0))  # sigmoid

    # Numerics vs. f32 reference (bf16 weights/activations -> relaxed tolerance).
    ref_recon, ref_z = wae_reference(x, raw)
    assert float(jnp.max(jnp.abs(recon.astype(jnp.float32) - ref_recon))) < 5e-2
    assert float(jnp.max(jnp.abs(z - ref_z))) < 5e-2

    print("KERNEL_OK")
</pallas_src>

<mosaic_0001>
module attributes {stable_mosaic.version = 11 : i64} {
  func.func @_wae_kernel(%arg0: i32, %arg1: memref<8x784xf32, #tpu.memory_space<vmem>>, %arg2: memref<784x512xbf16, #tpu.memory_space<vmem>>, %arg3: memref<1x512xf32, #tpu.memory_space<vmem>>, %arg4: memref<512x20xbf16, #tpu.memory_space<vmem>>, %arg5: memref<1x20xf32, #tpu.memory_space<vmem>>, %arg6: memref<20x512xbf16, #tpu.memory_space<vmem>>, %arg7: memref<1x512xf32, #tpu.memory_space<vmem>>, %arg8: memref<512x784xbf16, #tpu.memory_space<vmem>>, %arg9: memref<1x784xf32, #tpu.memory_space<vmem>>, %arg10: memref<8x784xf32, #tpu.memory_space<vmem>>, %arg11: memref<8x20xf32, #tpu.memory_space<vmem>>) attributes {dimension_semantics = [#tpu.dimension_semantics<parallel>], iteration_bounds = array<i64: 1>, scalar_prefetch = 0 : i64, scratch_operands = 0 : i64, tpu.core_type = #tpu.core_type<tc>, window_params = [{transform_indices = @transform_0, window_bounds = array<i64: 8, 784>}, {pipeline_mode = #tpu.pipeline_mode<synchronous>, transform_indices = @transform_1, window_bounds = array<i64: 784, 512>}, {pipeline_mode = #tpu.pipeline_mode<synchronous>, transform_indices = @transform_2, window_bounds = array<i64: 1, 512>}, {pipeline_mode = #tpu.pipeline_mode<synchronous>, transform_indices = @transform_3, window_bounds = array<i64: 512, 20>}, {pipeline_mode = #tpu.pipeline_mode<synchronous>, transform_indices = @transform_4, window_bounds = array<i64: 1, 20>}, {pipeline_mode = #tpu.pipeline_mode<synchronous>, transform_indices = @transform_5, window_bounds = array<i64: 20, 512>}, {pipeline_mode = #tpu.pipeline_mode<synchronous>, transform_indices = @transform_6, window_bounds = array<i64: 1, 512>}, {pipeline_mode = #tpu.pipeline_mode<synchronous>, transform_indices = @transform_7, window_bounds = array<i64: 512, 784>}, {pipeline_mode = #tpu.pipeline_mode<synchronous>, transform_indices = @transform_8, window_bounds = array<i64: 1, 784>}, {transform_indices = @transform_9, window_bounds = array<i64: 8, 784>}, {transform_indices = @transform_10, window_bounds = array<i64: 8, 20>}]} {
    %c0 = arith.constant 0 : index
    %c0_0 = arith.constant 0 : index
    %0 = vector.load %arg1[%c0, %c0_0] : memref<8x784xf32, #tpu.memory_space<vmem>>, vector<8x784xf32>
    %1 = arith.truncf %0 : vector<8x784xf32> to vector<8x784xbf16>
    %c0_1 = arith.constant 0 : index
    %c0_2 = arith.constant 0 : index
    %2 = vector.load %arg2[%c0_1, %c0_2] : memref<784x512xbf16, #tpu.memory_space<vmem>>, vector<784x512xbf16>
    %cst = arith.constant dense<0.000000e+00> : vector<8x512xf32>
    %3 = tpu.matmul %1, %2, %cst {dimension_numbers = #tpu.dot_dimension_numbers<[1], [0], [0], [1], [0, 0, 1, 1], [], []>} : vector<8x784xbf16>, vector<784x512xbf16>, vector<8x512xf32> -> vector<8x512xf32>
    %c0_3 = arith.constant 0 : index
    %c0_4 = arith.constant 0 : index
    %4 = vector.load %arg3[%c0_3, %c0_4] : memref<1x512xf32, #tpu.memory_space<vmem>>, vector<1x512xf32>
    %5 = vector.broadcast %4 : vector<1x512xf32> to vector<8x512xf32>
    %6 = arith.addf %3, %5 : vector<8x512xf32>
    %cst_5 = arith.constant 0.000000e+00 : f32
    %7 = vector.broadcast %cst_5 : f32 to vector<8x512xf32>
    %8 = arith.maximumf %6, %7 : vector<8x512xf32>
    %9 = arith.truncf %8 : vector<8x512xf32> to vector<8x512xbf16>
    %c0_6 = arith.constant 0 : index
    %c0_7 = arith.constant 0 : index
    %10 = vector.load %arg4[%c0_6, %c0_7] : memref<512x20xbf16, #tpu.memory_space<vmem>>, vector<512x20xbf16>
    %cst_8 = arith.constant dense<0.000000e+00> : vector<8x20xf32>
    %11 = tpu.matmul %9, %10, %cst_8 {dimension_numbers = #tpu.dot_dimension_numbers<[1], [0], [0], [1], [0, 0, 1, 1], [], []>} : vector<8x512xbf16>, vector<512x20xbf16>, vector<8x20xf32> -> vector<8x20xf32>
    %c0_9 = arith.constant 0 : index
    %c0_10 = arith.constant 0 : index
    %12 = vector.load %arg5[%c0_9, %c0_10] : memref<1x20xf32, #tpu.memory_space<vmem>>, vector<1x20xf32>
    %13 = vector.broadcast %12 : vector<1x20xf32> to vector<8x20xf32>
    %14 = arith.addf %11, %13 : vector<8x20xf32>
    %c0_11 = arith.constant 0 : index
    %c0_12 = arith.constant 0 : index
    %15 = vector.load %arg11[%c0_11, %c0_12] : memref<8x20xf32, #tpu.memory_space<vmem>>, vector<8x20xf32>
    tpu.vector_store %arg11[%c0_11, %c0_12], %14 {strides = array<i32>} : memref<8x20xf32, #tpu.memory_space<vmem>>, vector<8x20xf32>,
    %16 = arith.truncf %14 : vector<8x20xf32> to vector<8x20xbf16>
    %c0_13 = arith.constant 0 : index
    %c0_14 = arith.constant 0 : index
    %17 = vector.load %arg6[%c0_13, %c0_14] : memref<20x512xbf16, #tpu.memory_space<vmem>>, vector<20x512xbf16>
    %cst_15 = arith.constant dense<0.000000e+00> : vector<8x512xf32>
    %18 = tpu.matmul %16, %17, %cst_15 {dimension_numbers = #tpu.dot_dimension_numbers<[1], [0], [0], [1], [0, 0, 1, 1], [], []>} : vector<8x20xbf16>, vector<20x512xbf16>, vector<8x512xf32> -> vector<8x512xf32>
    %c0_16 = arith.constant 0 : index
    %c0_17 = arith.constant 0 : index
    %19 = vector.load %arg7[%c0_16, %c0_17] : memref<1x512xf32, #tpu.memory_space<vmem>>, vector<1x512xf32>
    %20 = vector.broadcast %19 : vector<1x512xf32> to vector<8x512xf32>
    %21 = arith.addf %18, %20 : vector<8x512xf32>
    %cst_18 = arith.constant 0.000000e+00 : f32
    %22 = vector.broadcast %cst_18 : f32 to vector<8x512xf32>
    %23 = arith.maximumf %21, %22 : vector<8x512xf32>
    %24 = arith.truncf %23 : vector<8x512xf32> to vector<8x512xbf16>
    %c0_19 = arith.constant 0 : index
    %c0_20 = arith.constant 0 : index
    %25 = vector.load %arg8[%c0_19, %c0_20] : memref<512x784xbf16, #tpu.memory_space<vmem>>, vector<512x784xbf16>
    %cst_21 = arith.constant dense<0.000000e+00> : vector<8x784xf32>
    %26 = tpu.matmul %24, %25, %cst_21 {dimension_numbers = #tpu.dot_dimension_numbers<[1], [0], [0], [1], [0, 0, 1, 1], [], []>} : vector<8x512xbf16>, vector<512x784xbf16>, vector<8x784xf32> -> vector<8x784xf32>
    %c0_22 = arith.constant 0 : index
    %c0_23 = arith.constant 0 : index
    %27 = vector.load %arg9[%c0_22, %c0_23] : memref<1x784xf32, #tpu.memory_space<vmem>>, vector<1x784xf32>
    %28 = vector.broadcast %27 : vector<1x784xf32> to vector<8x784xf32>
    %29 = arith.addf %26, %28 : vector<8x784xf32>
    %30 = arith.negf %29 : vector<8x784xf32>
    %31 = math.exp %30 : vector<8x784xf32>
    %cst_24 = arith.constant 1.000000e+00 : f32
    %32 = vector.broadcast %cst_24 : f32 to vector<8x784xf32>
    %33 = arith.addf %32, %31 : vector<8x784xf32>
    %34 = arith.divf %32, %33 : vector<8x784xf32>
    %c0_25 = arith.constant 0 : index
    %c0_26 = arith.constant 0 : index
    %35 = vector.load %arg10[%c0_25, %c0_26] : memref<8x784xf32, #tpu.memory_space<vmem>>, vector<8x784xf32>
    tpu.vector_store %arg10[%c0_25, %c0_26], %34 {strides = array<i32>} : memref<8x784xf32, #tpu.memory_space<vmem>>, vector<8x784xf32>,
    return
  }
  func.func @transform_0(%arg0: i32) -> (i32, i32) {
    %c0_i32 = arith.constant 0 : i32
    %c0_i32_0 = arith.constant 0 : i32
    return %arg0, %c0_i32 : i32, i32
  }
  func.func @transform_1(%arg0: i32) -> (i32, i32) {
    %c0_i32 = arith.constant 0 : i32
    %c0_i32_0 = arith.constant 0 : i32
    %c0_i32_1 = arith.constant 0 : i32
    return %c0_i32, %c0_i32_0 : i32, i32
  }
  func.func @transform_2(%arg0: i32) -> (i32, i32) {
    %c0_i32 = arith.constant 0 : i32
    %c0_i32_0 = arith.constant 0 : i32
    %c0_i32_1 = arith.constant 0 : i32
    return %c0_i32, %c0_i32_0 : i32, i32
  }
  func.func @transform_3(%arg0: i32) -> (i32, i32) {
    %c0_i32 = arith.constant 0 : i32
    %c0_i32_0 = arith.constant 0 : i32
    %c0_i32_1 = arith.constant 0 : i32
    return %c0_i32, %c0_i32_0 : i32, i32
  }
  func.func @transform_4(%arg0: i32) -> (i32, i32) {
    %c0_i32 = arith.constant 0 : i32
    %c0_i32_0 = arith.constant 0 : i32
    %c0_i32_1 = arith.constant 0 : i32
    return %c0_i32, %c0_i32_0 : i32, i32
  }
  func.func @transform_5(%arg0: i32) -> (i32, i32) {
    %c0_i32 = arith.constant 0 : i32
    %c0_i32_0 = arith.constant 0 : i32
    %c0_i32_1 = arith.constant 0 : i32
    return %c0_i32, %c0_i32_0 : i32, i32
  }
  func.func @transform_6(%arg0: i32) -> (i32, i32) {
    %c0_i32 = arith.constant 0 : i32
    %c0_i32_0 = arith.constant 0 : i32
    %c0_i32_1 = arith.constant 0 : i32
    return %c0_i32, %c0_i32_0 : i32, i32
  }
  func.func @transform_7(%arg0: i32) -> (i32, i32) {
    %c0_i32 = arith.constant 0 : i32
    %c0_i32_0 = arith.constant 0 : i32
    %c0_i32_1 = arith.constant 0 : i32
    return %c0_i32, %c0_i32_0 : i32, i32
  }
  func.func @transform_8(%arg0: i32) -> (i32, i32) {
    %c0_i32 = arith.constant 0 : i32
    %c0_i32_0 = arith.constant 0 : i32
    %c0_i32_1 = arith.constant 0 : i32
    return %c0_i32, %c0_i32_0 : i32, i32
  }
  func.func @transform_9(%arg0: i32) -> (i32, i32) {
    %c0_i32 = arith.constant 0 : i32
    %c0_i32_0 = arith.constant 0 : i32
    return %arg0, %c0_i32 : i32, i32
  }
  func.func @transform_10(%arg0: i32) -> (i32, i32) {
    %c0_i32 = arith.constant 0 : i32
    %c0_i32_0 = arith.constant 0 : i32
    return %arg0, %c0_i32 : i32, i32
  }
}

module attributes {stable_mosaic.version = 11 : i64} {
  func.func @_wae_kernel(%arg0: i32, %arg1: memref<8x784xf32, #tpu.memory_space<vmem>>, %arg2: memref<784x512xbf16, #tpu.memory_space<vmem>>, %arg3: memref<1x512xf32, #tpu.memory_space<vmem>>, %arg4: memref<512x20xbf16, #tpu.memory_space<vmem>>, %arg5: memref<1x20xf32, #tpu.memory_space<vmem>>, %arg6: memref<20x512xbf16, #tpu.memory_space<vmem>>, %arg7: memref<1x512xf32, #tpu.memory_space<vmem>>, %arg8: memref<512x784xbf16, #tpu.memory_space<vmem>>, %arg9: memref<1x784xf32, #tpu.memory_space<vmem>>, %arg10: memref<8x784xf32, #tpu.memory_space<vmem>>, %arg11: memref<8x20xf32, #tpu.memory_space<vmem>>) attributes {dimension_semantics = [#tpu.dimension_semantics<parallel>], iteration_bounds = array<i64: 1>, scalar_prefetch = 0 : i64, scratch_operands = 0 : i64, tpu.core_type = #tpu.core_type<tc>, window_params = [{transform_indices = @transform_0, window_bounds = array<i64: 8, 784>}, {pipeline_mode = #tpu.pipeline_mode<synchronous>, transform_indices = @transform_1, window_bounds = array<i64: 784, 512>}, {pipeline_mode = #tpu.pipeline_mode<synchronous>, transform_indices = @transform_2, window_bounds = array<i64: 1, 512>}, {pipeline_mode = #tpu.pipeline_mode<synchronous>, transform_indices = @transform_3, window_bounds = array<i64: 512, 20>}, {pipeline_mode = #tpu.pipeline_mode<synchronous>, transform_indices = @transform_4, window_bounds = array<i64: 1, 20>}, {pipeline_mode = #tpu.pipeline_mode<synchronous>, transform_indices = @transform_5, window_bounds = array<i64: 20, 512>}, {pipeline_mode = #tpu.pipeline_mode<synchronous>, transform_indices = @transform_6, window_bounds = array<i64: 1, 512>}, {pipeline_mode = #tpu.pipeline_mode<synchronous>, transform_indices = @transform_7, window_bounds = array<i64: 512, 784>}, {pipeline_mode = #tpu.pipeline_mode<synchronous>, transform_indices = @transform_8, window_bounds = array<i64: 1, 784>}, {transform_indices = @transform_9, window_bounds = array<i64: 8, 784>}, {transform_indices = @transform_10, window_bounds = array<i64: 8, 20>}]} {
    %c0 = arith.constant 0 : index
    %c0_0 = arith.constant 0 : index
    %0 = vector.load %arg1[%c0, %c0_0] : memref<8x784xf32, #tpu.memory_space<vmem>>, vector<8x784xf32>
    %1 = arith.truncf %0 : vector<8x784xf32> to vector<8x784xbf16>
    %c0_1 = arith.constant 0 : index
    %c0_2 = arith.constant 0 : index
    %2 = vector.load %arg2[%c0_1, %c0_2] : memref<784x512xbf16, #tpu.memory_space<vmem>>, vector<784x512xbf16>
    %cst = arith.constant dense<0.000000e+00> : vector<8x512xf32>
    %3 = tpu.matmul %1, %2, %cst {dimension_numbers = #tpu.dot_dimension_numbers<[1], [0], [0], [1], [0, 0, 1, 1], [], []>} : vector<8x784xbf16>, vector<784x512xbf16>, vector<8x512xf32> -> vector<8x512xf32>
    %c0_3 = arith.constant 0 : index
    %c0_4 = arith.constant 0 : index
    %4 = vector.load %arg3[%c0_3, %c0_4] : memref<1x512xf32, #tpu.memory_space<vmem>>, vector<1x512xf32>
    %5 = vector.broadcast %4 : vector<1x512xf32> to vector<8x512xf32>
    %6 = arith.addf %3, %5 : vector<8x512xf32>
    %cst_5 = arith.constant 0.000000e+00 : f32
    %7 = vector.broadcast %cst_5 : f32 to vector<8x512xf32>
    %8 = arith.maximumf %6, %7 : vector<8x512xf32>
    %9 = arith.truncf %8 : vector<8x512xf32> to vector<8x512xbf16>
    %c0_6 = arith.constant 0 : index
    %c0_7 = arith.constant 0 : index
    %10 = vector.load %arg4[%c0_6, %c0_7] : memref<512x20xbf16, #tpu.memory_space<vmem>>, vector<512x20xbf16>
    %cst_8 = arith.constant dense<0.000000e+00> : vector<8x20xf32>
    %11 = tpu.matmul %9, %10, %cst_8 {dimension_numbers = #tpu.dot_dimension_numbers<[1], [0], [0], [1], [0, 0, 1, 1], [], []>} : vector<8x512xbf16>, vector<512x20xbf16>, vector<8x20xf32> -> vector<8x20xf32>
    %c0_9 = arith.constant 0 : index
    %c0_10 = arith.constant 0 : index
    %12 = vector.load %arg5[%c0_9, %c0_10] : memref<1x20xf32, #tpu.memory_space<vmem>>, vector<1x20xf32>
    %13 = vector.broadcast %12 : vector<1x20xf32> to vector<8x20xf32>
    %14 = arith.addf %11, %13 : vector<8x20xf32>
    %c0_11 = arith.constant 0 : index
    %c0_12 = arith.constant 0 : index
    %15 = vector.load %arg11[%c0_11, %c0_12] : memref<8x20xf32, #tpu.memory_space<vmem>>, vector<8x20xf32>
    tpu.vector_store %arg11[%c0_11, %c0_12], %14 {strides = array<i32>} : memref<8x20xf32, #tpu.memory_space<vmem>>, vector<8x20xf32>,
    %16 = arith.truncf %14 : vector<8x20xf32> to vector<8x20xbf16>
    %c0_13 = arith.constant 0 : index
    %c0_14 = arith.constant 0 : index
    %17 = vector.load %arg6[%c0_13, %c0_14] : memref<20x512xbf16, #tpu.memory_space<vmem>>, vector<20x512xbf16>
    %cst_15 = arith.constant dense<0.000000e+00> : vector<8x512xf32>
    %18 = tpu.matmul %16, %17, %cst_15 {dimension_numbers = #tpu.dot_dimension_numbers<[1], [0], [0], [1], [0, 0, 1, 1], [], []>} : vector<8x20xbf16>, vector<20x512xbf16>, vector<8x512xf32> -> vector<8x512xf32>
    %c0_16 = arith.constant 0 : index
    %c0_17 = arith.constant 0 : index
    %19 = vector.load %arg7[%c0_16, %c0_17] : memref<1x512xf32, #tpu.memory_space<vmem>>, vector<1x512xf32>
    %20 = vector.broadcast %19 : vector<1x512xf32> to vector<8x512xf32>
    %21 = arith.addf %18, %20 : vector<8x512xf32>
    %cst_18 = arith.constant 0.000000e+00 : f32
    %22 = vector.broadcast %cst_18 : f32 to vector<8x512xf32>
    %23 = arith.maximumf %21, %22 : vector<8x512xf32>
    %24 = arith.truncf %23 : vector<8x512xf32> to vector<8x512xbf16>
    %c0_19 = arith.constant 0 : index
    %c0_20 = arith.constant 0 : index
    %25 = vector.load %arg8[%c0_19, %c0_20] : memref<512x784xbf16, #tpu.memory_space<vmem>>, vector<512x784xbf16>
    %cst_21 = arith.constant dense<0.000000e+00> : vector<8x784xf32>
    %26 = tpu.matmul %24, %25, %cst_21 {dimension_numbers = #tpu.dot_dimension_numbers<[1], [0], [0], [1], [0, 0, 1, 1], [], []>} : vector<8x512xbf16>, vector<512x784xbf16>, vector<8x784xf32> -> vector<8x784xf32>
    %c0_22 = arith.constant 0 : index
    %c0_23 = arith.constant 0 : index
    %27 = vector.load %arg9[%c0_22, %c0_23] : memref<1x784xf32, #tpu.memory_space<vmem>>, vector<1x784xf32>
    %28 = vector.broadcast %27 : vector<1x784xf32> to vector<8x784xf32>
    %29 = arith.addf %26, %28 : vector<8x784xf32>
    %30 = arith.negf %29 : vector<8x784xf32>
    %31 = math.exp %30 : vector<8x784xf32>
    %cst_24 = arith.constant 1.000000e+00 : f32
    %32 = vector.broadcast %cst_24 : f32 to vector<8x784xf32>
    %33 = arith.addf %32, %31 : vector<8x784xf32>
    %34 = arith.divf %32, %33 : vector<8x784xf32>
    %c0_25 = arith.constant 0 : index
    %c0_26 = arith.constant 0 : index
    %35 = vector.load %arg10[%c0_25, %c0_26] : memref<8x784xf32, #tpu.memory_space<vmem>>, vector<8x784xf32>
    tpu.vector_store %arg10[%c0_25, %c0_26], %34 {strides = array<i32>} : memref<8x784xf32, #tpu.memory_space<vmem>>, vector<8x784xf32>,
    return
  }
  func.func @transform_0(%arg0: i32) -> (i32, i32) {
    %c0_i32 = arith.constant 0 : i32
    %c0_i32_0 = arith.constant 0 : i32
    return %arg0, %c0_i32 : i32, i32
  }
  func.func @transform_1(%arg0: i32) -> (i32, i32) {
    %c0_i32 = arith.constant 0 : i32
    %c0_i32_0 = arith.constant 0 : i32
    %c0_i32_1 = arith.constant 0 : i32
    return %c0_i32, %c0_i32_0 : i32, i32
  }
  func.func @transform_2(%arg0: i32) -> (i32, i32) {
    %c0_i32 = arith.constant 0 : i32
    %c0_i32_0 = arith.constant 0 : i32
    %c0_i32_1 = arith.constant 0 : i32
    return %c0_i32, %c0_i32_0 : i32, i32
  }
  func.func @transform_3(%arg0: i32) -> (i32, i32) {
    %c0_i32 = arith.constant 0 : i32
    %c0_i32_0 = arith.constant 0 : i32
    %c0_i32_1 = arith.constant 0 : i32
    return %c0_i32, %c0_i32_0 : i32, i32
  }
  func.func @transform_4(%arg0: i32) -> (i32, i32) {
    %c0_i32 = arith.constant 0 : i32
    %c0_i32_0 = arith.constant 0 : i32
    %c0_i32_1 = arith.constant 0 : i32
    return %c0_i32, %c0_i32_0 : i32, i32
  }
  func.func @transform_5(%arg0: i32) -> (i32, i32) {
    %c0_i32 = arith.constant 0 : i32
    %c0_i32_0 = arith.constant 0 : i32
    %c0_i32_1 = arith.constant 0 : i32
    return %c0_i32, %c0_i32_0 : i32, i32
  }
  func.func @transform_6(%arg0: i32) -> (i32, i32) {
    %c0_i32 = arith.constant 0 : i32
    %c0_i32_0 = arith.constant 0 : i32
    %c0_i32_1 = arith.constant 0 : i32
    return %c0_i32, %c0_i32_0 : i32, i32
  }
  func.func @transform_7(%arg0: i32) -> (i32, i32) {
    %c0_i32 = arith.constant 0 : i32
    %c0_i32_0 = arith.constant 0 : i32
    %c0_i32_1 = arith.constant 0 : i32
    return %c0_i32, %c0_i32_0 : i32, i32
  }
  func.func @transform_8(%arg0: i32) -> (i32, i32) {
    %c0_i32 = arith.constant 0 : i32
    %c0_i32_0 = arith.constant 0 : i32
    %c0_i32_1 = arith.constant 0 : i32
    return %c0_i32, %c0_i32_0 : i32, i32
  }
  func.func @transform_9(%arg0: i32) -> (i32, i32) {
    %c0_i32 = arith.constant 0 : i32
    %c0_i32_0 = arith.constant 0 : i32
    return %arg0, %c0_i32 : i32, i32
  }
  func.func @transform_10(%arg0: i32) -> (i32, i32) {
    %c0_i32 = arith.constant 0 : i32
    %c0_i32_0 = arith.constant 0 : i32
    return %arg0, %c0_i32 : i32, i32
  }
}

</mosaic_0001>

<llo_original>
// kernel: wae_forward.1
$region0: #{wae_forward.1}
  #allocation0 [shape = 'u32[]', space=smem, size = 0x4, offset = 0x4, fixed_abs, tag = 'smem constant byte address 0x4 - core index']
  #allocation1 [shape = 'u32[144,128]{1,0:T(1,128)}', space=vmem, size = 0x12000, scoped, tag = 'internal scratch']
  %s0 = inlined_call_operand.vmem [shape: f32[8,784], index: 0, kind: input, shape index: {}]
  %s1 = inlined_call_operand.vmem [shape: bf16[784,512], index: 1, kind: input, shape index: {}]
  %s2 = inlined_call_operand.vmem [shape: f32[1,512], index: 2, kind: input, shape index: {}]
  %s3 = inlined_call_operand.vmem [shape: bf16[512,20], index: 3, kind: input, shape index: {}]
  %s4 = inlined_call_operand.vmem [shape: f32[1,20], index: 4, kind: input, shape index: {}]
  %s5 = inlined_call_operand.vmem [shape: bf16[20,512], index: 5, kind: input, shape index: {}]
  %s6 = inlined_call_operand.vmem [shape: f32[1,512], index: 6, kind: input, shape index: {}]
  %s7 = inlined_call_operand.vmem [shape: bf16[512,784], index: 7, kind: input, shape index: {}]
  %s8 = inlined_call_operand.vmem [shape: f32[1,784], index: 8, kind: input, shape index: {}]
  %s9 = inlined_call_operand.vmem [shape: f32[8,784], index: 9, kind: output, shape index: {0}]
  %s10 = inlined_call_operand.vmem [shape: f32[8,20], index: 10, kind: output, shape index: {1}]
  %11 = xla_tuple %s9, %s10
  %s12 = sld [smem:[#allocation0]]
  $region54: #{wae_forward.1} parent=0
    _
  %s14 = ssub.s32 1, %s12
  %s15 = scalar_select 0, %s14, %s12
  // Predicated region
  $region2: #{wae_forward.1} parent=0 // pred_check
    _
  $region3: #{wae_forward.1} parent=0 // pred_check_branch
    %17 = sbr.rel (0) target = $region5
  $region4: #{wae_forward.1} parent=0 // pred_region
    _
  $region5: #{wae_forward.1} parent=0 // pred_fallthru
    _
  // Predicated region
  $region6: #{wae_forward.1} parent=0 // pred_check
    _
  $region7: #{wae_forward.1} parent=0 // pred_check_branch
    %19 = sbr.rel (0) target = $region9
  $region8: #{wae_forward.1} parent=0 // pred_region
    _
  $region9: #{wae_forward.1} parent=0 // pred_fallthru
    _
  // Predicated region
  $region10: #{wae_forward.1} parent=0 // pred_check
    _
  $region11: #{wae_forward.1} parent=0 // pred_check_branch
    %21 = sbr.rel (0) target = $region13
  $region12: #{wae_forward.1} parent=0 // pred_region
    _
  $region13: #{wae_forward.1} parent=0 // pred_fallthru
    _
  // Predicated region
  $region14: #{wae_forward.1} parent=0 // pred_check
    _
  $region15: #{wae_forward.1} parent=0 // pred_check_branch
    %23 = sbr.rel (0) target = $region17
  $region16: #{wae_forward.1} parent=0 // pred_region
    _
  $region17: #{wae_forward.1} parent=0 // pred_fallthru
    _
  // Predicated region
  $region18: #{wae_forward.1} parent=0 // pred_check
    _
  $region19: #{wae_forward.1} parent=0 // pred_check_branch
    %25 = sbr.rel (0) target = $region21
  $region20: #{wae_forward.1} parent=0 // pred_region
    _
  $region21: #{wae_forward.1} parent=0 // pred_fallthru
    _
  // Predicated region
  $region22: #{wae_forward.1} parent=0 // pred_check
    _
  $region23: #{wae_forward.1} parent=0 // pred_check_branch
    %27 = sbr.rel (0) target = $region25
  $region24: #{wae_forward.1} parent=0 // pred_region
    _
  $region25: #{wae_forward.1} parent=0 // pred_fallthru
    _
  // Predicated region
  $region26: #{wae_forward.1} parent=0 // pred_check
    _
  $region27: #{wae_forward.1} parent=0 // pred_check_branch
    %29 = sbr.rel (0) target = $region29
  $region28: #{wae_forward.1} parent=0 // pred_region
    _
  $region29: #{wae_forward.1} parent=0 // pred_fallthru
    _
  // Predicated region
  $region30: #{wae_forward.1} parent=0 // pred_check
    _
  $region31: #{wae_forward.1} parent=0 // pred_check_branch
    %31 = sbr.rel (0) target = $region33
  $region32: #{wae_forward.1} parent=0 // pred_region
    _
  $region33: #{wae_forward.1} parent=0 // pred_fallthru
    _
  // Predicated region
  $region34: #{wae_forward.1} parent=0 // pred_check
    _
  $region35: #{wae_forward.1} parent=0 // pred_check_branch
    %33 = sbr.rel (0) target = $region37
  $region36: #{wae_forward.1} parent=0 // pred_region
    _
  $region37: #{wae_forward.1} parent=0 // pred_fallthru
    _
  %v35 = vld [vmem:[%s0] sm:$0xff]
  %v36 = vld [vmem:[%s0 + $0x8] sm:$0xff]
  %v37 = vld [vmem:[%s0 + $0x10] sm:$0xff]
  %v38 = vld [vmem:[%s0 + $0x18] sm:$0xff]
  %v39 = vld [vmem:[%s0 + $0x20] sm:$0xff]
  %v40 = vld [vmem:[%s0 + $0x28] sm:$0xff]
  %v41 = vld [vmem:[%s0 + $0x30] sm:$0xff]
  %v42 = vpack.c.bf16 %v35, %v35
  %v43 = vpack.c.bf16 %v36, %v36
  %v44 = vpack.c.bf16 %v37, %v37
  %v45 = vpack.c.bf16 %v38, %v38
  %v46 = vpack.c.bf16 %v39, %v39
  %v47 = vpack.c.bf16 %v40, %v40
  %v48 = vpack.c.bf16 %v41, %v41
  %v49 = vld [vmem:[%s1] sm:$0xff]
  %v50 = vld [vmem:[%s1 + $0x8] sm:$0xff]
  %v51 = vld [vmem:[%s1 + $0x10] sm:$0xff]
  %v52 = vld [vmem:[%s1 + $0x18] sm:$0xff]
  %v53 = vld [vmem:[%s1 + $0x20] sm:$0xff]
  %v54 = vld [vmem:[%s1 + $0x28] sm:$0xff]
  %v55 = vld [vmem:[%s1 + $0x30] sm:$0xff]
  %v56 = vld [vmem:[%s1 + $0x38] sm:$0xff]
  %v57 = vld [vmem:[%s1 + $0x40] sm:$0xff]
  %v58 = vld [vmem:[%s1 + $0x48] sm:$0xff]
  %v59 = vld [vmem:[%s1 + $0x50] sm:$0xff]
  %v60 = vld [vmem:[%s1 + $0x58] sm:$0xff]
  %v61 = vld [vmem:[%s1 + $0x60] sm:$0xff]
  %v62 = vld [vmem:[%s1 + $0x68] sm:$0xff]
  %v63 = vld [vmem:[%s1 + $0x70] sm:$0xff]
  %v64 = vld [vmem:[%s1 + $0x78] sm:$0xff]
  %v65 = vld [vmem:[%s1 + $0x80] sm:$0xff]
  %v66 = vld [vmem:[%s1 + $0x88] sm:$0xff]
  %v67 = vld [vmem:[%s1 + $0x90] sm:$0xff]
  %v68 = vld [vmem:[%s1 + $0x98] sm:$0xff]
  %v69 = vld [vmem:[%s1 + $0xa0] sm:$0xff]
  %v70 = vld [vmem:[%s1 + $0xa8] sm:$0xff]
  %v71 = vld [vmem:[%s1 + $0xb0] sm:$0xff]
  %v72 = vld [vmem:[%s1 + $0xb8] sm:$0xff]
  %v73 = vld [vmem:[%s1 + $0xc0] sm:$0xff]
  %v74 = vld [vmem:[%s1 + $0xc8] sm:$0xff]
  %v75 = vld [vmem:[%s1 + $0xd0] sm:$0xff]
  %v76 = vld [vmem:[%s1 + $0xd8] sm:$0xff]
  %v77 = vld [vmem:[%s1 + $0xe0] sm:$0xff]
  %v78 = vld [vmem:[%s1 + $0xe8] sm:$0xff]
  %v79 = vld [vmem:[%s1 + $0xf0] sm:$0xff]
  %v80 = vld [vmem:[%s1 + $0xf8] sm:$0xff]
  %v81 = vld [vmem:[%s1 + $0x100] sm:$0xff]
  %v82 = vld [vmem:[%s1 + $0x108] sm:$0xff]
  %v83 = vld [vmem:[%s1 + $0x110] sm:$0xff]
  %v84 = vld [vmem:[%s1 + $0x118] sm:$0xff]
  %v85 = vld [vmem:[%s1 + $0x120] sm:$0xff]
  %v86 = vld [vmem:[%s1 + $0x128] sm:$0xff]
  %v87 = vld [vmem:[%s1 + $0x130] sm:$0xff]
  %v88 = vld [vmem:[%s1 + $0x138] sm:$0xff]
  %v89 = vld [vmem:[%s1 + $0x140] sm:$0xff]
  %v90 = vld [vmem:[%s1 + $0x148] sm:$0xff]
  %v91 = vld [vmem:[%s1 + $0x150] sm:$0xff]
  %v92 = vld [vmem:[%s1 + $0x158] sm:$0xff]
  %v93 = vld [vmem:[%s1 + $0x160] sm:$0xff]
  %v94 = vld [vmem:[%s1 + $0x168] sm:$0xff]
  %v95 = vld [vmem:[%s1 + $0x170] sm:$0xff]
  %v96 = vld [vmem:[%s1 + $0x178] sm:$0xff]
  %v97 = vld [vmem:[%s1 + $0x180] sm:$0xff]
  %v98 = vld [vmem:[%s1 + $0x188] sm:$0xff]
  %v99 = vld [vmem:[%s1 + $0x190] sm:$0xff]
  %v100 = vld [vmem:[%s1 + $0x198] sm:$0xff]
  %v101 = vld [vmem:[%s1 + $0x1a0] sm:$0xff]
  %v102 = vld [vmem:[%s1 + $0x1a8] sm:$0xff]
  %v103 = vld [vmem:[%s1 + $0x1b0] sm:$0xff]
  %v104 = vld [vmem:[%s1 + $0x1b8] sm:$0xff]
  %v105 = vld [vmem:[%s1 + $0x1c0] sm:$0xff]
  %v106 = vld [vmem:[%s1 + $0x1c8] sm:$0xff]
  %v107 = vld [vmem:[%s1 + $0x1d0] sm:$0xff]
  %v108 = vld [vmem:[%s1 + $0x1d8] sm:$0xff]
  %v109 = vld [vmem:[%s1 + $0x1e0] sm:$0xff]
  %v110 = vld [vmem:[%s1 + $0x1e8] sm:$0xff]
  %v111 = vld [vmem:[%s1 + $0x1f0] sm:$0xff]
  %v112 = vld [vmem:[%s1 + $0x1f8] sm:$0xff]
  %v113 = vld [vmem:[%s1 + $0x200] sm:$0xff]
  %v114 = vld [vmem:[%s1 + $0x208] sm:$0xff]
  %v115 = vld [vmem:[%s1 + $0x210] sm:$0xff]
  %v116 = vld [vmem:[%s1 + $0x218] sm:$0xff]
  %v117 = vld [vmem:[%s1 + $0x220] sm:$0xff]
  %v118 = vld [vmem:[%s1 + $0x228] sm:$0xff]
  %v119 = vld [vmem:[%s1 + $0x230] sm:$0xff]
  %v120 = vld [vmem:[%s1 + $0x238] sm:$0xff]
  %v121 = vld [vmem:[%s1 + $0x240] sm:$0xff]
  %v122 = vld [vmem:[%s1 + $0x248] sm:$0xff]
  %v123 = vld [vmem:[%s1 + $0x250] sm:$0xff]
  %v124 = vld [vmem:[%s1 + $0x258] sm:$0xff]
  %v125 = vld [vmem:[%s1 + $0x260] sm:$0xff]
  %v126 = vld [vmem:[%s1 + $0x268] sm:$0xff]
  %v127 = vld [vmem:[%s1 + $0x270] sm:$0xff]
  %v128 = vld [vmem:[%s1 + $0x278] sm:$0xff]
  %v129 = vld [vmem:[%s1 + $0x280] sm:$0xff]
  %v130 = vld [vmem:[%s1 + $0x288] sm:$0xff]
  %v131 = vld [vmem:[%s1 + $0x290] sm:$0xff]
  %v132 = vld [vmem:[%s1 + $0x298] sm:$0xff]
  %v133 = vld [vmem:[%s1 + $0x2a0] sm:$0xff]
  %v134 = vld [vmem:[%s1 + $0x2a8] sm:$0xff]
  %v135 = vld [vmem:[%s1 + $0x2b0] sm:$0xff]
  %v136 = vld [vmem:[%s1 + $0x2b8] sm:$0xff]
  %v137 = vld [vmem:[%s1 + $0x2c0] sm:$0xff]
  %v138 = vld [vmem:[%s1 + $0x2c8] sm:$0xff]
  %v139 = vld [vmem:[%s1 + $0x2d0] sm:$0xff]
  %v140 = vld [vmem:[%s1 + $0x2d8] sm:$0xff]
  %v141 = vld [vmem:[%s1 + $0x2e0] sm:$0xff]
  %v142 = vld [vmem:[%s1 + $0x2e8] sm:$0xff]
  %v143 = vld [vmem:[%s1 + $0x2f0] sm:$0xff]
  %v144 = vld [vmem:[%s1 + $0x2f8] sm:$0xff]
  %v145 = vld [vmem:[%s1 + $0x300] sm:$0xff]
  %v146 = vld [vmem:[%s1 + $0x308] sm:$0xff]
  %v147 = vld [vmem:[%s1 + $0x310] sm:$0xff]
  %v148 = vld [vmem:[%s1 + $0x318] sm:$0xff]
  %v149 = vld [vmem:[%s1 + $0x320] sm:$0xff]
  %v150 = vld [vmem:[%s1 + $0x328] sm:$0xff]
  %v151 = vld [vmem:[%s1 + $0x330] sm:$0xff]
  %v152 = vld [vmem:[%s1 + $0x338] sm:$0xff]
  %v153 = vld [vmem:[%s1 + $0x340] sm:$0xff]
  %v154 = vld [vmem:[%s1 + $0x348] sm:$0xff]
  %v155 = vld [vmem:[%s1 + $0x350] sm:$0xff]
  %v156 = vld [vmem:[%s1 + $0x358] sm:$0xff]
  %v157 = vld [vmem:[%s1 + $0x360] sm:$0xff]
  %v158 = vld [vmem:[%s1 + $0x368] sm:$0xff]
  %v159 = vld [vmem:[%s1 + $0x370] sm:$0xff]
  %v160 = vld [vmem:[%s1 + $0x378] sm:$0xff]
  %v161 = vld [vmem:[%s1 + $0x380] sm:$0xff]
  %v162 = vld [vmem:[%s1 + $0x388] sm:$0xff]
  %v163 = vld [vmem:[%s1 + $0x390] sm:$0xff]
  %v164 = vld [vmem:[%s1 + $0x398] sm:$0xff]
  %v165 = vld [vmem:[%s1 + $0x3a0] sm:$0xff]
  %v166 = vld [vmem:[%s1 + $0x3a8] sm:$0xff]
  %v167 = vld [vmem:[%s1 + $0x3b0] sm:$0xff]
  %v168 = vld [vmem:[%s1 + $0x3b8] sm:$0xff]
  %v169 = vld [vmem:[%s1 + $0x3c0] sm:$0xff]
  %v170 = vld [vmem:[%s1 + $0x3c8] sm:$0xff]
  %v171 = vld [vmem:[%s1 + $0x3d0] sm:$0xff]
  %v172 = vld [vmem:[%s1 + $0x3d8] sm:$0xff]
  %v173 = vld [vmem:[%s1 + $0x3e0] sm:$0xff]
  %v174 = vld [vmem:[%s1 + $0x3e8] sm:$0xff]
  %v175 = vld [vmem:[%s1 + $0x3f0] sm:$0xff]
  %v176 = vld [vmem:[%s1 + $0x3f8] sm:$0xff]
  %v177 = vld [vmem:[%s1 + $0x400] sm:$0xff]
  %v178 = vld [vmem:[%s1 + $0x408] sm:$0xff]
  %v179 = vld [vmem:[%s1 + $0x410] sm:$0xff]
  %v180 = vld [vmem:[%s1 + $0x418] sm:$0xff]
  %v181 = vld [vmem:[%s1 + $0x420] sm:$0xff]
  %v182 = vld [vmem:[%s1 + $0x428] sm:$0xff]
  %v183 = vld [vmem:[%s1 + $0x430] sm:$0xff]
  %v184 = vld [vmem:[%s1 + $0x438] sm:$0xff]
  %v185 = vld [vmem:[%s1 + $0x440] sm:$0xff]
  %v186 = vld [vmem:[%s1 + $0x448] sm:$0xff]
  %v187 = vld [vmem:[%s1 + $0x450] sm:$0xff]
  %v188 = vld [vmem:[%s1 + $0x458] sm:$0xff]
  %v189 = vld [vmem:[%s1 + $0x460] sm:$0xff]
  %v190 = vld [vmem:[%s1 + $0x468] sm:$0xff]
  %v191 = vld [vmem:[%s1 + $0x470] sm:$0xff]
  %v192 = vld [vmem:[%s1 + $0x478] sm:$0xff]
  %v193 = vld [vmem:[%s1 + $0x480] sm:$0xff]
  %v194 = vld [vmem:[%s1 + $0x488] sm:$0xff]
  %v195 = vld [vmem:[%s1 + $0x490] sm:$0xff]
  %v196 = vld [vmem:[%s1 + $0x498] sm:$0xff]
  %v197 = vld [vmem:[%s1 + $0x4a0] sm:$0xff]
  %v198 = vld [vmem:[%s1 + $0x4a8] sm:$0xff]
  %v199 = vld [vmem:[%s1 + $0x4b0] sm:$0xff]
  %v200 = vld [vmem:[%s1 + $0x4b8] sm:$0xff]
  %v201 = vld [vmem:[%s1 + $0x4c0] sm:$0xff]
  %v202 = vld [vmem:[%s1 + $0x4c8] sm:$0xff]
  %v203 = vld [vmem:[%s1 + $0x4d0] sm:$0xff]
  %v204 = vld [vmem:[%s1 + $0x4d8] sm:$0xff]
  %v205 = vld [vmem:[%s1 + $0x4e0] sm:$0xff]
  %v206 = vld [vmem:[%s1 + $0x4e8] sm:$0xff]
  %v207 = vld [vmem:[%s1 + $0x4f0] sm:$0xff]
  %v208 = vld [vmem:[%s1 + $0x4f8] sm:$0xff]
  %v209 = vld [vmem:[%s1 + $0x500] sm:$0xff]
  %v210 = vld [vmem:[%s1 + $0x508] sm:$0xff]
  %v211 = vld [vmem:[%s1 + $0x510] sm:$0xff]
  %v212 = vld [vmem:[%s1 + $0x518] sm:$0xff]
  %v213 = vld [vmem:[%s1 + $0x520] sm:$0xff]
  %v214 = vld [vmem:[%s1 + $0x528] sm:$0xff]
  %v215 = vld [vmem:[%s1 + $0x530] sm:$0xff]
  %v216 = vld [vmem:[%s1 + $0x538] sm:$0xff]
  %v217 = vld [vmem:[%s1 + $0x540] sm:$0xff]
  %v218 = vld [vmem:[%s1 + $0x548] sm:$0xff]
  %v219 = vld [vmem:[%s1 + $0x550] sm:$0xff]
  %v220 = vld [vmem:[%s1 + $0x558] sm:$0xff]
  %v221 = vld [vmem:[%s1 + $0x560] sm:$0xff]
  %v222 = vld [vmem:[%s1 + $0x568] sm:$0xff]
  %v223 = vld [vmem:[%s1 + $0x570] sm:$0xff]
  %v224 = vld [vmem:[%s1 + $0x578] sm:$0xff]
  %v225 = vld [vmem:[%s1 + $0x580] sm:$0xff]
  %v226 = vld [vmem:[%s1 + $0x588] sm:$0xff]
  %v227 = vld [vmem:[%s1 + $0x590] sm:$0xff]
  %v228 = vld [vmem:[%s1 + $0x598] sm:$0xff]
  %v229 = vld [vmem:[%s1 + $0x5a0] sm:$0xff]
  %v230 = vld [vmem:[%s1 + $0x5a8] sm:$0xff]
  %v231 = vld [vmem:[%s1 + $0x5b0] sm:$0xff]
  %v232 = vld [vmem:[%s1 + $0x5b8] sm:$0xff]
  %v233 = vld [vmem:[%s1 + $0x5c0] sm:$0xff]
  %v234 = vld [vmem:[%s1 + $0x5c8] sm:$0xff]
  %v235 = vld [vmem:[%s1 + $0x5d0] sm:$0xff]
  %v236 = vld [vmem:[%s1 + $0x5d8] sm:$0xff]
  %v237 = vld [vmem:[%s1 + $0x5e0] sm:$0xff]
  %v238 = vld [vmem:[%s1 + $0x5e8] sm:$0xff]
  %v239 = vld [vmem:[%s1 + $0x5f0] sm:$0xff]
  %v240 = vld [vmem:[%s1 + $0x5f8] sm:$0xff]
  %v241 = vld [vmem:[%s1 + $0x600] sm:$0xff]
  %v242 = vld [vmem:[%s1 + $0x608] sm:$0xff]
  %v243 = vld [vmem:[%s1 + $0x610] sm:$0xff]
  %v244 = vld [vmem:[%s1 + $0x618] sm:$0xff]
  %v245 = vld [vmem:[%s2] sm:$0xf]
  %v247 = vlaneseq
  %v248 = vshrl.u32 %v247, 7
  %v249 = vsub.s32 0, %v248
  %v250 = vrot.slane %v245, %v249
  %v251 = vlaneseq
  %v252 = vshrl.u32 %v251, 7
  %v253 = vsub.s32 1, %v252
  %v254 = vrot.slane %v245, %v253
  %v255 = vlaneseq
  %v256 = vshrl.u32 %v255, 7
  %v257 = vsub.s32 2, %v256
  %v258 = vrot.slane %v245, %v257
  %v259 = vlaneseq
  %v260 = vshrl.u32 %v259, 7
  %v261 = vsub.s32 3, %v260
  %v262 = vrot.slane %v245, %v261
  %v463 = vunpack.c.l.b16 %v49
  %v464 = vunpack.c.h.b16 %v49
  %v465 = vunpack.c.l.b16 %v50
  %v466 = vunpack.c.h.b16 %v50
  %v467 = vunpack.c.l.b16 %v51
  %v468 = vunpack.c.h.b16 %v51
  %v469 = vunpack.c.l.b16 %v52
  %v470 = vunpack.c.h.b16 %v52
  %v471 = vunpack.c.l.b16 %v53
  %v472 = vunpack.c.h.b16 %v53
  %v473 = vunpack.c.l.b16 %v54
  %v474 = vunpack.c.h.b16 %v54
  %v475 = vunpack.c.l.b16 %v55
  %v476 = vunpack.c.h.b16 %v55
  %v477 = vunpack.c.l.b16 %v56
  %v478 = vunpack.c.h.b16 %v56
  %v479 = vunpack.c.l.b16 %v57
  %v480 = vunpack.c.h.b16 %v57
  %v481 = vunpack.c.l.b16 %v58
  %v482 = vunpack.c.h.b16 %v58
  %v483 = vunpack.c.l.b16 %v59
  %v484 = vunpack.c.h.b16 %v59
  %v485 = vunpack.c.l.b16 %v60
  %v486 = vunpack.c.h.b16 %v60
  %v487 = vunpack.c.l.b16 %v61
  %v488 = vunpack.c.h.b16 %v61
  %v489 = vunpack.c.l.b16 %v62
  %v490 = vunpack.c.h.b16 %v62
  %v491 = vunpack.c.l.b16 %v63
  %v492 = vunpack.c.h.b16 %v63
  %v493 = vunpack.c.l.b16 %v64
  %v494 = vunpack.c.h.b16 %v64
  %v495 = vunpack.c.l.b16 %v65
  %v496 = vunpack.c.h.b16 %v65
  %v497 = vunpack.c.l.b16 %v66
  %v498 = vunpack.c.h.b16 %v66
  %v499 = vunpack.c.l.b16 %v67
  %v500 = vunpack.c.h.b16 %v67
  %v501 = vunpack.c.l.b16 %v68
  %v502 = vunpack.c.h.b16 %v68
  %v503 = vunpack.c.l.b16 %v69
  %v504 = vunpack.c.h.b16 %v69
  %v505 = vunpack.c.l.b16 %v70
  %v506 = vunpack.c.h.b16 %v70
  %v507 = vunpack.c.l.b16 %v71
  %v508 = vunpack.c.h.b16 %v71
  %v509 = vunpack.c.l.b16 %v72
  %v510 = vunpack.c.h.b16 %v72
  %v511 = vunpack.c.l.b16 %v73
  %v512 = vunpack.c.h.b16 %v73
  %v513 = vunpack.c.l.b16 %v74
  %v514 = vunpack.c.h.b16 %v74
  %v515 = vunpack.c.l.b16 %v75
  %v516 = vunpack.c.h.b16 %v75
  %v517 = vunpack.c.l.b16 %v76
  %v518 = vunpack.c.h.b16 %v76
  %v519 = vunpack.c.l.b16 %v77
  %v520 = vunpack.c.h.b16 %v77
  %v521 = vunpack.c.l.b16 %v78
  %v522 = vunpack.c.h.b16 %v78
  %v523 = vunpack.c.l.b16 %v79
  %v524 = vunpack.c.h.b16 %v79
  %v525 = vunpack.c.l.b16 %v80
  %v526 = vunpack.c.h.b16 %v80
  %v527 = vunpack.c.l.b16 %v81
  %v528 = vunpack.c.h.b16 %v81
  %v529 = vunpack.c.l.b16 %v82
  %v530 = vunpack.c.h.b16 %v82
  %v531 = vunpack.c.l.b16 %v83
  %v532 = vunpack.c.h.b16 %v83
  %v533 = vunpack.c.l.b16 %v84
  %v534 = vunpack.c.h.b16 %v84
  %v535 = vunpack.c.l.b16 %v85
  %v536 = vunpack.c.h.b16 %v85
  %v537 = vunpack.c.l.b16 %v86
  %v538 = vunpack.c.h.b16 %v86
  %v539 = vunpack.c.l.b16 %v87
  %v540 = vunpack.c.h.b16 %v87
  %v541 = vunpack.c.l.b16 %v88
  %v542 = vunpack.c.h.b16 %v88
  %v543 = vunpack.c.l.b16 %v89
  %v544 = vunpack.c.h.b16 %v89
  %v545 = vunpack.c.l.b16 %v90
  %v546 = vunpack.c.h.b16 %v90
  %v547 = vunpack.c.l.b16 %v91
  %v548 = vunpack.c.h.b16 %v91
  %v549 = vunpack.c.l.b16 %v92
  %v550 = vunpack.c.h.b16 %v92
  %v551 = vunpack.c.l.b16 %v93
  %v552 = vunpack.c.h.b16 %v93
  %v553 = vunpack.c.l.b16 %v94
  %v554 = vunpack.c.h.b16 %v94
  %v555 = vunpack.c.l.b16 %v95
  %v556 = vunpack.c.h.b16 %v95
  %v557 = vunpack.c.l.b16 %v96
  %v558 = vunpack.c.h.b16 %v96
  %v559 = vunpack.c.l.b16 %v97
  %v560 = vunpack.c.h.b16 %v97
  %v561 = vunpack.c.l.b16 %v98
  %v562 = vunpack.c.h.b16 %v98
  %v563 = vunpack.c.l.b16 %v99
  %v564 = vunpack.c.h.b16 %v99
  %v565 = vunpack.c.l.b16 %v100
  %v566 = vunpack.c.h.b16 %v100
  %v567 = vunpack.c.l.b16 %v101
  %v568 = vunpack.c.h.b16 %v101
  %v569 = vunpack.c.l.b16 %v102
  %v570 = vunpack.c.h.b16 %v102
  %v571 = vunpack.c.l.b16 %v103
  %v572 = vunpack.c.h.b16 %v103
  %v573 = vunpack.c.l.b16 %v104
  %v574 = vunpack.c.h.b16 %v104
  %v575 = vunpack.c.l.b16 %v105
  %v576 = vunpack.c.h.b16 %v105
  %v577 = vunpack.c.l.b16 %v106
  %v578 = vunpack.c.h.b16 %v106
  %v579 = vunpack.c.l.b16 %v107
  %v580 = vunpack.c.h.b16 %v107
  %v581 = vunpack.c.l.b16 %v108
  %v582 = vunpack.c.h.b16 %v108
  %v583 = vunpack.c.l.b16 %v109
  %v584 = vunpack.c.h.b16 %v109
  %v585 = vunpack.c.l.b16 %v110
  %v586 = vunpack.c.h.b16 %v110
  %v587 = vunpack.c.l.b16 %v111
  %v588 = vunpack.c.h.b16 %v111
  %v589 = vunpack.c.l.b16 %v112
  %v590 = vunpack.c.h.b16 %v112
  %v591 = vunpack.c.l.b16 %v113
  %v592 = vunpack.c.h.b16 %v113
  %v593 = vunpack.c.l.b16 %v114
  %v594 = vunpack.c.h.b16 %v114
  %v595 = vunpack.c.l.b16 %v115
  %v596 = vunpack.c.h.b16 %v115
  %v597 = vunpack.c.l.b16 %v116
  %v598 = vunpack.c.h.b16 %v116
  %v599 = vunpack.c.l.b16 %v117
  %v600 = vunpack.c.h.b16 %v117
  %v601 = vunpack.c.l.b16 %v118
  %v602 = vunpack.c.h.b16 %v118
  %v603 = vunpack.c.l.b16 %v119
  %v604 = vunpack.c.h.b16 %v119
  %v605 = vunpack.c.l.b16 %v120
  %v606 = vunpack.c.h.b16 %v120
  %v607 = vunpack.c.l.b16 %v121
  %v608 = vunpack.c.h.b16 %v121
  %v609 = vunpack.c.l.b16 %v122
  %v610 = vunpack.c.h.b16 %v122
  %v611 = vunpack.c.l.b16 %v123
  %v612 = vunpack.c.h.b16 %v123
  %v613 = vunpack.c.l.b16 %v124
  %v614 = vunpack.c.h.b16 %v124
  %v615 = vunpack.c.l.b16 %v125
  %v616 = vunpack.c.h.b16 %v125
  %v617 = vunpack.c.l.b16 %v126
  %v618 = vunpack.c.h.b16 %v126
  %v619 = vunpack.c.l.b16 %v127
  %v620 = vunpack.c.h.b16 %v127
  %v621 = vunpack.c.l.b16 %v128
  %v622 = vunpack.c.h.b16 %v128
  %v623 = vunpack.c.l.b16 %v129
  %v624 = vunpack.c.h.b16 %v129
  %v625 = vunpack.c.l.b16 %v130
  %v626 = vunpack.c.h.b16 %v130
  %v627 = vunpack.c.l.b16 %v131
  %v628 = vunpack.c.h.b16 %v131
  %v629 = vunpack.c.l.b16 %v132
  %v630 = vunpack.c.h.b16 %v132
  %v631 = vunpack.c.l.b16 %v133
  %v632 = vunpack.c.h.b16 %v133
  %v633 = vunpack.c.l.b16 %v134
  %v634 = vunpack.c.h.b16 %v134
  %v635 = vunpack.c.l.b16 %v135
  %v636 = vunpack.c.h.b16 %v135
  %v637 = vunpack.c.l.b16 %v136
  %v638 = vunpack.c.h.b16 %v136
  %v639 = vunpack.c.l.b16 %v137
  %v640 = vunpack.c.h.b16 %v137
  %v641 = vunpack.c.l.b16 %v138
  %v642 = vunpack.c.h.b16 %v138
  %v643 = vunpack.c.l.b16 %v139
  %v644 = vunpack.c.h.b16 %v139
  %v645 = vunpack.c.l.b16 %v140
  %v646 = vunpack.c.h.b16 %v140
  %v647 = vunpack.c.l.b16 %v141
  %v648 = vunpack.c.h.b16 %v141
  %v649 = vunpack.c.l.b16 %v142
  %v650 = vunpack.c.h.b16 %v142
  %v651 = vunpack.c.l.b16 %v143
  %v652 = vunpack.c.h.b16 %v143
  %v653 = vunpack.c.l.b16 %v144
  %v654 = vunpack.c.h.b16 %v144
  %v655 = vunpack.c.l.b16 %v145
  %v656 = vunpack.c.h.b16 %v145
  %v657 = vunpack.c.l.b16 %v146
  %v658 = vunpack.c.h.b16 %v146
  %v659 = vunpack.c.l.b16 %v147
  %v660 = vunpack.c.h.b16 %v147
  %v661 = vunpack.c.l.b16 %v148
  %v662 = vunpack.c.h.b16 %v148
  %v663 = vunpack.c.l.b16 %v149
  %v664 = vunpack.c.h.b16 %v149
  %v665 = vunpack.c.l.b16 %v150
  %v666 = vunpack.c.h.b16 %v150
  %v667 = vunpack.c.l.b16 %v151
  %v668 = vunpack.c.h.b16 %v151
  %v669 = vunpack.c.l.b16 %v152
  %v670 = vunpack.c.h.b16 %v152
  %v671 = vunpack.c.l.b16 %v153
  %v672 = vunpack.c.h.b16 %v153
  %v673 = vunpack.c.l.b16 %v154
  %v674 = vunpack.c.h.b16 %v154
  %v675 = vunpack.c.l.b16 %v155
  %v676 = vunpack.c.h.b16 %v155
  %v677 = vunpack.c.l.b16 %v156
  %v678 = vunpack.c.h.b16 %v156
  %v679 = vunpack.c.l.b16 %v157
  %v680 = vunpack.c.h.b16 %v157
  %v681 = vunpack.c.l.b16 %v158
  %v682 = vunpack.c.h.b16 %v158
  %v683 = vunpack.c.l.b16 %v159
  %v684 = vunpack.c.h.b16 %v159
  %v685 = vunpack.c.l.b16 %v160
  %v686 = vunpack.c.h.b16 %v160
  %v687 = vunpack.c.l.b16 %v161
  %v688 = vunpack.c.h.b16 %v161
  %v689 = vunpack.c.l.b16 %v162
  %v690 = vunpack.c.h.b16 %v162
  %v691 = vunpack.c.l.b16 %v163
  %v692 = vunpack.c.h.b16 %v163
  %v693 = vunpack.c.l.b16 %v164
  %v694 = vunpack.c.h.b16 %v164
  %v695 = vunpack.c.l.b16 %v165
  %v696 = vunpack.c.h.b16 %v165
  %v697 = vunpack.c.l.b16 %v166
  %v698 = vunpack.c.h.b16 %v166
  %v699 = vunpack.c.l.b16 %v167
  %v700 = vunpack.c.h.b16 %v167
  %v701 = vunpack.c.l.b16 %v168
  %v702 = vunpack.c.h.b16 %v168
  %v703 = vunpack.c.l.b16 %v169
  %v704 = vunpack.c.h.b16 %v169
  %v705 = vunpack.c.l.b16 %v170
  %v706 = vunpack.c.h.b16 %v170
  %v707 = vunpack.c.l.b16 %v171
  %v708 = vunpack.c.h.b16 %v171
  %v709 = vunpack.c.l.b16 %v172
  %v710 = vunpack.c.h.b16 %v172
  %v711 = vunpack.c.l.b16 %v173
  %v712 = vunpack.c.h.b16 %v173
  %v713 = vunpack.c.l.b16 %v174
  %v714 = vunpack.c.h.b16 %v174
  %v715 = vunpack.c.l.b16 %v175
  %v716 = vunpack.c.h.b16 %v175
  %v717 = vunpack.c.l.b16 %v176
  %v718 = vunpack.c.h.b16 %v176
  %v719 = vunpack.c.l.b16 %v177
  %v720 = vunpack.c.h.b16 %v177
  %v721 = vunpack.c.l.b16 %v178
  %v722 = vunpack.c.h.b16 %v178
  %v723 = vunpack.c.l.b16 %v179
  %v724 = vunpack.c.h.b16 %v179
  %v725 = vunpack.c.l.b16 %v180
  %v726 = vunpack.c.h.b16 %v180
  %v727 = vunpack.c.l.b16 %v181
  %v728 = vunpack.c.h.b16 %v181
  %v729 = vunpack.c.l.b16 %v182
  %v730 = vunpack.c.h.b16 %v182
  %v731 = vunpack.c.l.b16 %v183
  %v732 = vunpack.c.h.b16 %v183
  %v733 = vunpack.c.l.b16 %v184
  %v734 = vunpack.c.h.b16 %v184
  %v735 = vunpack.c.l.b16 %v185
  %v736 = vunpack.c.h.b16 %v185
  %v737 = vunpack.c.l.b16 %v186
  %v738 = vunpack.c.h.b16 %v186
  %v739 = vunpack.c.l.b16 %v187
  %v740 = vunpack.c.h.b16 %v187
  %v741 = vunpack.c.l.b16 %v188
  %v742 = vunpack.c.h.b16 %v188
  %v743 = vunpack.c.l.b16 %v189
  %v744 = vunpack.c.h.b16 %v189
  %v745 = vunpack.c.l.b16 %v190
  %v746 = vunpack.c.h.b16 %v190
  %v747 = vunpack.c.l.b16 %v191
  %v748 = vunpack.c.h.b16 %v191
  %v749 = vunpack.c.l.b16 %v192
  %v750 = vunpack.c.h.b16 %v192
  %v751 = vunpack.c.l.b16 %v193
  %v752 = vunpack.c.h.b16 %v193
  %v753 = vunpack.c.l.b16 %v194
  %v754 = vunpack.c.h.b16 %v194
  %v755 = vunpack.c.l.b16 %v195
  %v756 = vunpack.c.h.b16 %v195
  %v757 = vunpack.c.l.b16 %v196
  %v758 = vunpack.c.h.b16 %v196
  %v759 = vunpack.c.l.b16 %v197
  %v760 = vunpack.c.h.b16 %v197
  %v761 = vunpack.c.l.b16 %v198
  %v762 = vunpack.c.h.b16 %v198
  %v763 = vunpack.c.l.b16 %v199
  %v764 = vunpack.c.h.b16 %v199
  %v765 = vunpack.c.l.b16 %v200
  %v766 = vunpack.c.h.b16 %v200
  %v767 = vunpack.c.l.b16 %v201
  %v768 = vunpack.c.h.b16 %v201
  %v769 = vunpack.c.l.b16 %v202
  %v770 = vunpack.c.h.b16 %v202
  %v771 = vunpack.c.l.b16 %v203
  %v772 = vunpack.c.h.b16 %v203
  %v773 = vunpack.c.l.b16 %v204
  %v774 = vunpack.c.h.b16 %v204
  %v775 = vunpack.c.l.b16 %v205
  %v776 = vunpack.c.h.b16 %v205
  %v777 = vunpack.c.l.b16 %v206
  %v778 = vunpack.c.h.b16 %v206
  %v779 = vunpack.c.l.b16 %v207
  %v780 = vunpack.c.h.b16 %v207
  %v781 = vunpack.c.l.b16 %v208
  %v782 = vunpack.c.h.b16 %v208
  %v783 = vunpack.c.l.b16 %v209
  %v784 = vunpack.c.h.b16 %v209
  %v785 = vunpack.c.l.b16 %v210
  %v786 = vunpack.c.h.b16 %v210
  %v787 = vunpack.c.l.b16 %v211
  %v788 = vunpack.c.h.b16 %v211
  %v789 = vunpack.c.l.b16 %v212
  %v790 = vunpack.c.h.b16 %v212
  %v791 = vunpack.c.l.b16 %v213
  %v792 = vunpack.c.h.b16 %v213
  %v793 = vunpack.c.l.b16 %v214
  %v794 = vunpack.c.h.b16 %v214
  %v795 = vunpack.c.l.b16 %v215
  %v796 = vunpack.c.h.b16 %v215
  %v797 = vunpack.c.l.b16 %v216
  %v798 = vunpack.c.h.b16 %v216
  %v799 = vunpack.c.l.b16 %v217
  %v800 = vunpack.c.h.b16 %v217
  %v801 = vunpack.c.l.b16 %v218
  %v802 = vunpack.c.h.b16 %v218
  %v803 = vunpack.c.l.b16 %v219
  %v804 = vunpack.c.h.b16 %v219
  %v805 = vunpack.c.l.b16 %v220
  %v806 = vunpack.c.h.b16 %v220
  %v807 = vunpack.c.l.b16 %v221
  %v808 = vunpack.c.h.b16 %v221
  %v809 = vunpack.c.l.b16 %v222
  %v810 = vunpack.c.h.b16 %v222
  %v811 = vunpack.c.l.b16 %v223
  %v812 = vunpack.c.h.b16 %v223
  %v813 = vunpack.c.l.b16 %v224
  %v814 = vunpack.c.h.b16 %v224
  %v815 = vunpack.c.l.b16 %v225
  %v816 = vunpack.c.h.b16 %v225
  %v817 = vunpack.c.l.b16 %v226
  %v818 = vunpack.c.h.b16 %v226
  %v819 = vunpack.c.l.b16 %v227
  %v820 = vunpack.c.h.b16 %v227
  %v821 = vunpack.c.l.b16 %v228
  %v822 = vunpack.c.h.b16 %v228
  %v823 = vunpack.c.l.b16 %v229
  %v824 = vunpack.c.h.b16 %v229
  %v825 = vunpack.c.l.b16 %v230
  %v826 = vunpack.c.h.b16 %v230
  %v827 = vunpack.c.l.b16 %v231
  %v828 = vunpack.c.h.b16 %v231
  %v829 = vunpack.c.l.b16 %v232
  %v830 = vunpack.c.h.b16 %v232
  %v831 = vunpack.c.l.b16 %v233
  %v832 = vunpack.c.h.b16 %v233
  %v833 = vunpack.c.l.b16 %v234
  %v834 = vunpack.c.h.b16 %v234
  %v835 = vunpack.c.l.b16 %v235
  %v836 = vunpack.c.h.b16 %v235
  %v837 = vunpack.c.l.b16 %v236
  %v838 = vunpack.c.h.b16 %v236
  %v839 = vunpack.c.l.b16 %v237
  %v840 = vunpack.c.h.b16 %v237
  %v841 = vunpack.c.l.b16 %v238
  %v842 = vunpack.c.h.b16 %v238
  %v843 = vunpack.c.l.b16 %v239
  %v844 = vunpack.c.h.b16 %v239
  %v845 = vunpack.c.l.b16 %v240
  %v846 = vunpack.c.h.b16 %v240
  %v847 = vunpack.c.l.b16 %v241
  %v848 = vunpack.c.h.b16 %v241
  %v849 = vunpack.c.l.b16 %v242
  %v850 = vunpack.c.h.b16 %v242
  %v851 = vunpack.c.l.b16 %v243
  %v852 = vunpack.c.h.b16 %v243
  %v853 = vunpack.c.l.b16 %v244
  %v854 = vunpack.c.h.b16 %v244
  %v855 = vpack.c.b16 %v467, %v463
  %v856 = vpack.c.b16 %v468, %v464
  %v857 = vpack.c.b16 %v469, %v465
  %v858 = vpack.c.b16 %v470, %v466
  %v859 = vpack.c.b16 %v475, %v471
  %v860 = vpack.c.b16 %v476, %v472
  %v861 = vpack.c.b16 %v477, %v473
  %v862 = vpack.c.b16 %v478, %v474
  %v863 = vpack.c.b16 %v483, %v479
  %v864 = vpack.c.b16 %v484, %v480
  %v865 = vpack.c.b16 %v485, %v481
  %v866 = vpack.c.b16 %v486, %v482
  %v867 = vpack.c.b16 %v491, %v487
  %v868 = vpack.c.b16 %v492, %v488
  %v869 = vpack.c.b16 %v493, %v489
  %v870 = vpack.c.b16 %v494, %v490
  %v871 = vpack.c.b16 %v499, %v495
  %v872 = vpack.c.b16 %v500, %v496
  %v873 = vpack.c.b16 %v501, %v497
  %v874 = vpack.c.b16 %v502, %v498
  %v875 = vpack.c.b16 %v507, %v503
  %v876 = vpack.c.b16 %v508, %v504
  %v877 = vpack.c.b16 %v509, %v505
  %v878 = vpack.c.b16 %v510, %v506
  %v879 = vpack.c.b16 %v515, %v511
  %v880 = vpack.c.b16 %v516, %v512
  %v881 = vpack.c.b16 %v517, %v513
  %v882 = vpack.c.b16 %v518, %v514
  %v883 = vpack.c.b16 %v523, %v519
  %v884 = vpack.c.b16 %v524, %v520
  %v885 = vpack.c.b16 %v525, %v521
  %v886 = vpack.c.b16 %v526, %v522
  %v887 = vpack.c.b16 %v531, %v527
  %v888 = vpack.c.b16 %v532, %v528
  %v889 = vpack.c.b16 %v533, %v529
  %v890 = vpack.c.b16 %v534, %v530
  %v891 = vpack.c.b16 %v539, %v535
  %v892 = vpack.c.b16 %v540, %v536
  %v893 = vpack.c.b16 %v541, %v537
  %v894 = vpack.c.b16 %v542, %v538
  %v895 = vpack.c.b16 %v547, %v543
  %v896 = vpack.c.b16 %v548, %v544
  %v897 = vpack.c.b16 %v549, %v545
  %v898 = vpack.c.b16 %v550, %v546
  %v899 = vpack.c.b16 %v555, %v551
  %v900 = vpack.c.b16 %v556, %v552
  %v901 = vpack.c.b16 %v557, %v553
  %v902 = vpack.c.b16 %v558, %v554
  %v903 = vpack.c.b16 %v563, %v559
  %v904 = vpack.c.b16 %v564, %v560
  %v905 = vpack.c.b16 %v565, %v561
  %v906 = vpack.c.b16 %v566, %v562
  %v907 = vpack.c.b16 %v571, %v567
  %v908 = vpack.c.b16 %v572, %v568
  %v909 = vpack.c.b16 %v573, %v569
  %v910 = vpack.c.b16 %v574, %v570
  %v911 = vpack.c.b16 %v579, %v575
  %v912 = vpack.c.b16 %v580, %v576
  %v913 = vpack.c.b16 %v581, %v577
  %v914 = vpack.c.b16 %v582, %v578
  %v915 = vpack.c.b16 %v587, %v583
  %v916 = vpack.c.b16 %v588, %v584
  %v917 = vpack.c.b16 %v589, %v585
  %v918 = vpack.c.b16 %v590, %v586
  %v919 = vpack.c.b16 %v595, %v591
  %v920 = vpack.c.b16 %v596, %v592
  %v921 = vpack.c.b16 %v597, %v593
  %v922 = vpack.c.b16 %v598, %v594
  %v923 = vpack.c.b16 %v603, %v599
  %v924 = vpack.c.b16 %v604, %v600
  %v925 = vpack.c.b16 %v605, %v601
  %v926 = vpack.c.b16 %v606, %v602
  %v927 = vpack.c.b16 %v611, %v607
  %v928 = vpack.c.b16 %v612, %v608
  %v929 = vpack.c.b16 %v613, %v609
  %v930 = vpack.c.b16 %v614, %v610
  %v931 = vpack.c.b16 %v619, %v615
  %v932 = vpack.c.b16 %v620, %v616
  %v933 = vpack.c.b16 %v621, %v617
  %v934 = vpack.c.b16 %v622, %v618
  %v935 = vpack.c.b16 %v627, %v623
  %v936 = vpack.c.b16 %v628, %v624
  %v937 = vpack.c.b16 %v629, %v625
  %v938 = vpack.c.b16 %v630, %v626
  %v939 = vpack.c.b16 %v635, %v631
  %v940 = vpack.c.b16 %v636, %v632
  %v941 = vpack.c.b16 %v637, %v633
  %v942 = vpack.c.b16 %v638, %v634
  %v943 = vpack.c.b16 %v643, %v639
  %v944 = vpack.c.b16 %v644, %v640
  %v945 = vpack.c.b16 %v645, %v641
  %v946 = vpack.c.b16 %v646, %v642
  %v947 = vpack.c.b16 %v651, %v647
  %v948 = vpack.c.b16 %v652, %v648
  %v949 = vpack.c.b16 %v653, %v649
  %v950 = vpack.c.b16 %v654, %v650
  %v951 = vpack.c.b16 %v659, %v655
  %v952 = vpack.c.b16 %v660, %v656
  %v953 = vpack.c.b16 %v661, %v657
  %v954 = vpack.c.b16 %v662, %v658
  %v955 = vpack.c.b16 %v667, %v663
  %v956 = vpack.c.b16 %v668, %v664
  %v957 = vpack.c.b16 %v669, %v665
  %v958 = vpack.c.b16 %v670, %v666
  %v959 = vpack.c.b16 %v675, %v671
  %v960 = vpack.c.b16 %v676, %v672
  %v961 = vpack.c.b16 %v677, %v673
  %v962 = vpack.c.b16 %v678, %v674
  %v963 = vpack.c.b16 %v683, %v679
  %v964 = vpack.c.b16 %v684, %v680
  %v965 = vpack.c.b16 %v685, %v681
  %v966 = vpack.c.b16 %v686, %v682
  %v967 = vpack.c.b16 %v691, %v687
  %v968 = vpack.c.b16 %v692, %v688
  %v969 = vpack.c.b16 %v693, %v689
  %v970 = vpack.c.b16 %v694, %v690
  %v971 = vpack.c.b16 %v699, %v695
  %v972 = vpack.c.b16 %v700, %v696
  %v973 = vpack.c.b16 %v701, %v697
  %v974 = vpack.c.b16 %v702, %v698
  %v975 = vpack.c.b16 %v707, %v703
  %v976 = vpack.c.b16 %v708, %v704
  %v977 = vpack.c.b16 %v709, %v705
  %v978 = vpack.c.b16 %v710, %v706
  %v979 = vpack.c.b16 %v715, %v711
  %v980 = vpack.c.b16 %v716, %v712
  %v981 = vpack.c.b16 %v717, %v713
  %v982 = vpack.c.b16 %v718, %v714
  %v983 = vpack.c.b16 %v723, %v719
  %v984 = vpack.c.b16 %v724, %v720
  %v985 = vpack.c.b16 %v725, %v721
  %v986 = vpack.c.b16 %v726, %v722
  %v987 = vpack.c.b16 %v731, %v727
  %v988 = vpack.c.b16 %v732, %v728
  %v989 = vpack.c.b16 %v733, %v729
  %v990 = vpack.c.b16 %v734, %v730
  %v991 = vpack.c.b16 %v739, %v735
  %v992 = vpack.c.b16 %v740, %v736
  %v993 = vpack.c.b16 %v741, %v737
  %v994 = vpack.c.b16 %v742, %v738
  %v995 = vpack.c.b16 %v747, %v743
  %v996 = vpack.c.b16 %v748, %v744
  %v997 = vpack.c.b16 %v749, %v745
  %v998 = vpack.c.b16 %v750, %v746
  %v999 = vpack.c.b16 %v755, %v751
  %v1000 = vpack.c.b16 %v756, %v752
  %v1001 = vpack.c.b16 %v757, %v753
  %v1002 = vpack.c.b16 %v758, %v754
  %v1003 = vpack.c.b16 %v763, %v759
  %v1004 = vpack.c.b16 %v764, %v760
  %v1005 = vpack.c.b16 %v765, %v761
  %v1006 = vpack.c.b16 %v766, %v762
  %v1007 = vpack.c.b16 %v771, %v767
  %v1008 = vpack.c.b16 %v772, %v768
  %v1009 = vpack.c.b16 %v773, %v769
  %v1010 = vpack.c.b16 %v774, %v770
  %v1011 = vpack.c.b16 %v779, %v775
  %v1012 = vpack.c.b16 %v780, %v776
  %v1013 = vpack.c.b16 %v781, %v777
  %v1014 = vpack.c.b16 %v782, %v778
  %v1015 = vpack.c.b16 %v787, %v783
  %v1016 = vpack.c.b16 %v788, %v784
  %v1017 = vpack.c.b16 %v789, %v785
  %v1018 = vpack.c.b16 %v790, %v786
  %v1019 = vpack.c.b16 %v795, %v791
  %v1020 = vpack.c.b16 %v796, %v792
  %v1021 = vpack.c.b16 %v797, %v793
  %v1022 = vpack.c.b16 %v798, %v794
  %v1023 = vpack.c.b16 %v803, %v799
  %v1024 = vpack.c.b16 %v804, %v800
  %v1025 = vpack.c.b16 %v805, %v801
  %v1026 = vpack.c.b16 %v806, %v802
  %v1027 = vpack.c.b16 %v811, %v807
  %v1028 = vpack.c.b16 %v812, %v808
  %v1029 = vpack.c.b16 %v813, %v809
  %v1030 = vpack.c.b16 %v814, %v810
  %v1031 = vpack.c.b16 %v819, %v815
  %v1032 = vpack.c.b16 %v820, %v816
  %v1033 = vpack.c.b16 %v821, %v817
  %v1034 = vpack.c.b16 %v822, %v818
  %v1035 = vpack.c.b16 %v827, %v823
  %v1036 = vpack.c.b16 %v828, %v824
  %v1037 = vpack.c.b16 %v829, %v825
  %v1038 = vpack.c.b16 %v830, %v826
  %v1039 = vpack.c.b16 %v835, %v831
  %v1040 = vpack.c.b16 %v836, %v832
  %v1041 = vpack.c.b16 %v837, %v833
  %v1042 = vpack.c.b16 %v838, %v834
  %v1043 = vpack.c.b16 %v843, %v839
  %v1044 = vpack.c.b16 %v844, %v840
  %v1045 = vpack.c.b16 %v845, %v841
  %v1046 = vpack.c.b16 %v846, %v842
  %v1047 = vpack.c.b16 %v851, %v847
  %v1048 = vpack.c.b16 %v852, %v848
  %v1049 = vpack.c.b16 %v853, %v849
  %v1050 = vpack.c.b16 %v854, %v850
  %vm1247 = vcmask 130048
  %v1249 = vsel %vm1247, %v48, 0
  %1251 = vmatprep.subr.bf16.mxu0 %v856
  %1252 = vmatpush1.bf16.msra.mxu0 %v855
  %1253 = vmatprep.subr.bf16.mxu0 %v860
  %1254 = vmatpush1.bf16.msra.mxu0 %v859
  %1255 = vmatprep.subr.bf16.mxu0 %v864
  %1256 = vmatpush1.bf16.msra.mxu0 %v863
  %1257 = vmatprep.subr.bf16.mxu0 %v868
  %1258 = vmatpush1.bf16.msra.mxu0 %v867
  %1259 = vmatprep.subr.bf16.mxu0 %v872
  %1260 = vmatpush1.bf16.msra.mxu0 %v871
  %1261 = vmatprep.subr.bf16.mxu0 %v876
  %1262 = vmatpush1.bf16.msra.mxu0 %v875
  %1263 = vmatprep.subr.bf16.mxu0 %v880
  %1264 = vmatpush1.bf16.msra.mxu0 %v879
  %1265 = vmatprep.subr.bf16.mxu0 %v884
  %1266 = vmatpush1.bf16.msra.mxu0 %v883
  %1267 = vmatprep.subr.bf16.mxu0 %v888
  %1268 = vmatpush1.bf16.msra.mxu0 %v887
  %1269 = vmatprep.subr.bf16.mxu0 %v892
  %1270 = vmatpush1.bf16.msra.mxu0 %v891
  %1271 = vmatprep.subr.bf16.mxu0 %v896
  %1272 = vmatpush1.bf16.msra.mxu0 %v895
  %1273 = vmatprep.subr.bf16.mxu0 %v900
  %1274 = vmatpush1.bf16.msra.mxu0 %v899
  %1275 = vmatprep.subr.bf16.mxu0 %v904
  %1276 = vmatpush1.bf16.msra.mxu0 %v903
  %1277 = vmatprep.subr.bf16.mxu0 %v908
  %1278 = vmatpush1.bf16.msra.mxu0 %v907
  %1279 = vmatprep.subr.bf16.mxu0 %v912
  %1280 = vmatpush1.bf16.msra.mxu0 %v911
  %1281 = vmatprep.subr.bf16.mxu0 %v916
  %1282 = vmatpush1.bf16.msra.mxu0 %v915
  %1283 = vmatprep.mubr.bf16.mxu0 %v43
  %1284 = vmatmul.mubr.bf16.gmra.mrb[0].mxu0 %v42
  %v1285 = vpop.f32.mrb[0].mxu0
  %v1286 = vadd.f32 %v250, %v1285
  %v1287 = vpop.f32.mrb[0].mxu0
  %v1288 = vadd.f32 %v254, %v1287
  %v1289 = vpop.f32.mrb[0].mxu0
  %v1290 = vpop.f32.mrb[0].mxu0
  %1291 = vdwg.mxu0
  %1292 = vmatprep.subr.bf16.mxu0 %v920
  %1293 = vmatpush1.bf16.msra.mxu0 %v919
  %1294 = vmatprep.subr.bf16.mxu0 %v924
  %1295 = vmatpush1.bf16.msra.mxu0 %v923
  %1296 = vmatprep.subr.bf16.mxu0 %v928
  %1297 = vmatpush1.bf16.msra.mxu0 %v927
  %1298 = vmatprep.subr.bf16.mxu0 %v932
  %1299 = vmatpush1.bf16.msra.mxu0 %v931
  %1300 = vmatprep.subr.bf16.mxu0 %v936
  %1301 = vmatpush1.bf16.msra.mxu0 %v935
  %1302 = vmatprep.subr.bf16.mxu0 %v940
  %1303 = vmatpush1.bf16.msra.mxu0 %v939
  %1304 = vmatprep.subr.bf16.mxu0 %v944
  %1305 = vmatpush1.bf16.msra.mxu0 %v943
  %1306 = vmatprep.subr.bf16.mxu0 %v948
  %1307 = vmatpush1.bf16.msra.mxu0 %v947
  %1308 = vmatprep.subr.bf16.mxu0 %v952
  %1309 = vmatpush1.bf16.msra.mxu0 %v951
  %1310 = vmatprep.subr.bf16.mxu0 %v956
  %1311 = vmatpush1.bf16.msra.mxu0 %v955
  %1312 = vmatprep.subr.bf16.mxu0 %v960
  %1313 = vmatpush1.bf16.msra.mxu0 %v959
  %1314 = vmatprep.subr.bf16.mxu0 %v964
  %1315 = vmatpush1.bf16.msra.mxu0 %v963
  %1316 = vmatprep.subr.bf16.mxu0 %v968
  %1317 = vmatpush1.bf16.msra.mxu0 %v967
  %1318 = vmatprep.subr.bf16.mxu0 %v972
  %1319 = vmatpush1.bf16.msra.mxu0 %v971
  %1320 = vmatprep.subr.bf16.mxu0 %v976
  %1321 = vmatpush1.bf16.msra.mxu0 %v975
  %1322 = vmatprep.subr.bf16.mxu0 %v980
  %1323 = vmatpush1.bf16.msra.mxu0 %v979
  %1324 = vmatprep.mubr.bf16.mxu0 %v45
  %1325 = vmatmul.mubr.bf16.gmra.mrb[0].mxu0 %v44
  %v1326 = vpop.f32.mrb[0].mxu0
  %v1327 = vadd.f32 %v1286, %v1326
  %v1328 = vpop.f32.mrb[0].mxu0
  %v1329 = vadd.f32 %v1288, %v1328
  %v1330 = vpop.f32.mrb[0].mxu0
  %v1331 = vpop.f32.mrb[0].mxu0
  %1332 = vdwg.mxu0
  %1333 = vmatprep.subr.bf16.mxu0 %v984
  %1334 = vmatpush1.bf16.msra.mxu0 %v983
  %1335 = vmatprep.subr.bf16.mxu0 %v988
  %1336 = vmatpush1.bf16.msra.mxu0 %v987
  %1337 = vmatprep.subr.bf16.mxu0 %v992
  %1338 = vmatpush1.bf16.msra.mxu0 %v991
  %1339 = vmatprep.subr.bf16.mxu0 %v996
  %1340 = vmatpush1.bf16.msra.mxu0 %v995
  %1341 = vmatprep.subr.bf16.mxu0 %v1000
  %1342 = vmatpush1.bf16.msra.mxu0 %v999
  %1343 = vmatprep.subr.bf16.mxu0 %v1004
  %1344 = vmatpush1.bf16.msra.mxu0 %v1003
  %1345 = vmatprep.subr.bf16.mxu0 %v1008
  %1346 = vmatpush1.bf16.msra.mxu0 %v1007
  %1347 = vmatprep.subr.bf16.mxu0 %v1012
  %1348 = vmatpush1.bf16.msra.mxu0 %v1011
  %1349 = vmatprep.subr.bf16.mxu0 %v1016
  %1350 = vmatpush1.bf16.msra.mxu0 %v1015
  %1351 = vmatprep.subr.bf16.mxu0 %v1020
  %1352 = vmatpush1.bf16.msra.mxu0 %v1019
  %1353 = vmatprep.subr.bf16.mxu0 %v1024
  %1354 = vmatpush1.bf16.msra.mxu0 %v1023
  %1355 = vmatprep.subr.bf16.mxu0 %v1028
  %1356 = vmatpush1.bf16.msra.mxu0 %v1027
  %1357 = vmatprep.subr.bf16.mxu0 %v1032
  %1358 = vmatpush1.bf16.msra.mxu0 %v1031
  %1359 = vmatprep.subr.bf16.mxu0 %v1036
  %1360 = vmatpush1.bf16.msra.mxu0 %v1035
  %1361 = vmatprep.subr.bf16.mxu0 %v1040
  %1362 = vmatpush1.bf16.msra.mxu0 %v1039
  %1363 = vmatprep.subr.bf16.mxu0 %v1044
  %1364 = vmatpush1.bf16.msra.mxu0 %v1043
  %1365 = vmatprep.mubr.bf16.mxu0 %v47
  %1366 = vmatmul.mubr.bf16.gmra.mrb[0].mxu0 %v46
  %v1367 = vpop.f32.mrb[0].mxu0
  %v1368 = vadd.f32 %v1327, %v1367
  %v1369 = vpop.f32.mrb[0].mxu0
  %v1370 = vadd.f32 %v1329, %v1369
  %v1371 = vpop.f32.mrb[0].mxu0
  %v1372 = vpop.f32.mrb[0].mxu0
  %1373 = vdwg.mxu0
  %1374 = vmatprep.subr.bf16.mxu0 %v1048
  %1375 = vmatpush1.bf16.msra.mxu0 %v1047
  %1376 = vmatprep.subr.bf16.mxu0 0
  %1377 = vmatpush1.bf16.msra.mxu0 0
  %1378 = vmatprep.subr.bf16.mxu0 0
  %1379 = vmatpush1.bf16.msra.mxu0 0
  %1380 = vmatprep.subr.bf16.mxu0 0
  %1381 = vmatpush1.bf16.msra.mxu0 0
  %1382 = vmatprep.subr.bf16.mxu0 0
  %1383 = vmatpush1.bf16.msra.mxu0 0
  %1384 = vmatprep.subr.bf16.mxu0 0
  %1385 = vmatpush1.bf16.msra.mxu0 0
  %1386 = vmatprep.subr.bf16.mxu0 0
  %1387 = vmatpush1.bf16.msra.mxu0 0
  %1388 = vmatprep.subr.bf16.mxu0 0
  %1389 = vmatpush1.bf16.msra.mxu0 0
  %1390 = vmatprep.subr.bf16.mxu0 0
  %1391 = vmatpush1.bf16.msra.mxu0 0
  %1392 = vmatprep.subr.bf16.mxu0 0
  %1393 = vmatpush1.bf16.msra.mxu0 0
  %1394 = vmatprep.subr.bf16.mxu0 0
  %1395 = vmatpush1.bf16.msra.mxu0 0
  %1396 = vmatprep.subr.bf16.mxu0 0
  %1397 = vmatpush1.bf16.msra.mxu0 0
  %1398 = vmatprep.subr.bf16.mxu0 0
  %1399 = vmatpush1.bf16.msra.mxu0 0
  %1400 = vmatprep.subr.bf16.mxu0 0
  %1401 = vmatpush1.bf16.msra.mxu0 0
  %1402 = vmatprep.subr.bf16.mxu0 0
  %1403 = vmatpush1.bf16.msra.mxu0 0
  %1404 = vmatprep.subr.bf16.mxu0 0
  %1405 = vmatpush1.bf16.msra.mxu0 0
  %1406 = vmatprep.mubr.bf16.mxu0 0
  %1407 = vmatmul.mubr.bf16.gmra.mrb[0].mxu0 %v1249
  %v1408 = vpop.f32.mrb[0].mxu0
  %v1409 = vadd.f32 %v1368, %v1408
  %v1410 = vpop.f32.mrb[0].mxu0
  %v1411 = vadd.f32 %v1370, %v1410
  %v1412 = vpop.f32.mrb[0].mxu0
  %v1413 = vpop.f32.mrb[0].mxu0
  %1414 = vdwg.mxu0
  %1415 = vmatprep.subr.bf16.mxu0 %v858
  %1416 = vmatpush1.bf16.msra.mxu0 %v857
  %1417 = vmatprep.subr.bf16.mxu0 %v862
  %1418 = vmatpush1.bf16.msra.mxu0 %v861
  %1419 = vmatprep.subr.bf16.mxu0 %v866
  %1420 = vmatpush1.bf16.msra.mxu0 %v865
  %1421 = vmatprep.subr.bf16.mxu0 %v870
  %1422 = vmatpush1.bf16.msra.mxu0 %v869
  %1423 = vmatprep.subr.bf16.mxu0 %v874
  %1424 = vmatpush1.bf16.msra.mxu0 %v873
  %1425 = vmatprep.subr.bf16.mxu0 %v878
  %1426 = vmatpush1.bf16.msra.mxu0 %v877
  %1427 = vmatprep.subr.bf16.mxu0 %v882
  %1428 = vmatpush1.bf16.msra.mxu0 %v881
  %1429 = vmatprep.subr.bf16.mxu0 %v886
  %1430 = vmatpush1.bf16.msra.mxu0 %v885
  %1431 = vmatprep.subr.bf16.mxu0 %v890
  %1432 = vmatpush1.bf16.msra.mxu0 %v889
  %1433 = vmatprep.subr.bf16.mxu0 %v894
  %1434 = vmatpush1.bf16.msra.mxu0 %v893
  %1435 = vmatprep.subr.bf16.mxu0 %v898
  %1436 = vmatpush1.bf16.msra.mxu0 %v897
  %1437 = vmatprep.subr.bf16.mxu0 %v902
  %1438 = vmatpush1.bf16.msra.mxu0 %v901
  %1439 = vmatprep.subr.bf16.mxu0 %v906
  %1440 = vmatpush1.bf16.msra.mxu0 %v905
  %1441 = vmatprep.subr.bf16.mxu0 %v910
  %1442 = vmatpush1.bf16.msra.mxu0 %v909
  %1443 = vmatprep.subr.bf16.mxu0 %v914
  %1444 = vmatpush1.bf16.msra.mxu0 %v913
  %1445 = vmatprep.subr.bf16.mxu0 %v918
  %1446 = vmatpush1.bf16.msra.mxu0 %v917
  %1447 = vmatprep.mubr.bf16.mxu0 %v43
  %1448 = vmatmul.mubr.bf16.gmra.mrb[0].mxu0 %v42
  %v1449 = vpop.f32.mrb[0].mxu0
  %v1450 = vadd.f32 %v258, %v1449
  %v1451 = vpop.f32.mrb[0].mxu0
  %v1452 = vadd.f32 %v262, %v1451
  %v1453 = vpop.f32.mrb[0].mxu0
  %v1454 = vpop.f32.mrb[0].mxu0
  %1455 = vdwg.mxu0
  %1456 = vmatprep.subr.bf16.mxu0 %v922
  %1457 = vmatpush1.bf16.msra.mxu0 %v921
  %1458 = vmatprep.subr.bf16.mxu0 %v926
  %1459 = vmatpush1.bf16.msra.mxu0 %v925
  %1460 = vmatprep.subr.bf16.mxu0 %v930
  %1461 = vmatpush1.bf16.msra.mxu0 %v929
  %1462 = vmatprep.subr.bf16.mxu0 %v934
  %1463 = vmatpush1.bf16.msra.mxu0 %v933
  %1464 = vmatprep.subr.bf16.mxu0 %v938
  %1465 = vmatpush1.bf16.msra.mxu0 %v937
  %1466 = vmatprep.subr.bf16.mxu0 %v942
  %1467 = vmatpush1.bf16.msra.mxu0 %v941
  %1468 = vmatprep.subr.bf16.mxu0 %v946
  %1469 = vmatpush1.bf16.msra.mxu0 %v945
  %1470 = vmatprep.subr.bf16.mxu0 %v950
  %1471 = vmatpush1.bf16.msra.mxu0 %v949
  %1472 = vmatprep.subr.bf16.mxu0 %v954
  %1473 = vmatpush1.bf16.msra.mxu0 %v953
  %1474 = vmatprep.subr.bf16.mxu0 %v958
  %1475 = vmatpush1.bf16.msra.mxu0 %v957
  %1476 = vmatprep.subr.bf16.mxu0 %v962
  %1477 = vmatpush1.bf16.msra.mxu0 %v961
  %1478 = vmatprep.subr.bf16.mxu0 %v966
  %1479 = vmatpush1.bf16.msra.mxu0 %v965
  %1480 = vmatprep.subr.bf16.mxu0 %v970
  %1481 = vmatpush1.bf16.msra.mxu0 %v969
  %1482 = vmatprep.subr.bf16.mxu0 %v974
  %1483 = vmatpush1.bf16.msra.mxu0 %v973
  %1484 = vmatprep.subr.bf16.mxu0 %v978
  %1485 = vmatpush1.bf16.msra.mxu0 %v977
  %1486 = vmatprep.subr.bf16.mxu0 %v982
  %1487 = vmatpush1.bf16.msra.mxu0 %v981
  %1488 = vmatprep.mubr.bf16.mxu0 %v45
  %1489 = vmatmul.mubr.bf16.gmra.mrb[0].mxu0 %v44
  %v1490 = vpop.f32.mrb[0].mxu0
  %v1491 = vadd.f32 %v1450, %v1490
  %v1492 = vpop.f32.mrb[0].mxu0
  %v1493 = vadd.f32 %v1452, %v1492
  %v1494 = vpop.f32.mrb[0].mxu0
  %v1495 = vpop.f32.mrb[0].mxu0
  %1496 = vdwg.mxu0
  %1497 = vmatprep.subr.bf16.mxu0 %v986
  %1498 = vmatpush1.bf16.msra.mxu0 %v985
  %1499 = vmatprep.subr.bf16.mxu0 %v990
  %1500 = vmatpush1.bf16.msra.mxu0 %v989
  %1501 = vmatprep.subr.bf16.mxu0 %v994
  %1502 = vmatpush1.bf16.msra.mxu0 %v993
  %1503 = vmatprep.subr.bf16.mxu0 %v998
  %1504 = vmatpush1.bf16.msra.mxu0 %v997
  %1505 = vmatprep.subr.bf16.mxu0 %v1002
  %1506 = vmatpush1.bf16.msra.mxu0 %v1001
  %1507 = vmatprep.subr.bf16.mxu0 %v1006
  %1508 = vmatpush1.bf16.msra.mxu0 %v1005
  %1509 = vmatprep.subr.bf16.mxu0 %v1010
  %1510 = vmatpush1.bf16.msra.mxu0 %v1009
  %1511 = vmatprep.subr.bf16.mxu0 %v1014
  %1512 = vmatpush1.bf16.msra.mxu0 %v1013
  %1513 = vmatprep.subr.bf16.mxu0 %v1018
  %1514 = vmatpush1.bf16.msra.mxu0 %v1017
  %1515 = vmatprep.subr.bf16.mxu0 %v1022
  %1516 = vmatpush1.bf16.msra.mxu0 %v1021
  %1517 = vmatprep.subr.bf16.mxu0 %v1026
  %1518 = vmatpush1.bf16.msra.mxu0 %v1025
  %1519 = vmatprep.subr.bf16.mxu0 %v1030
  %1520 = vmatpush1.bf16.msra.mxu0 %v1029
  %1521 = vmatprep.subr.bf16.mxu0 %v1034
  %1522 = vmatpush1.bf16.msra.mxu0 %v1033
  %1523 = vmatprep.subr.bf16.mxu0 %v1038
  %1524 = vmatpush1.bf16.msra.mxu0 %v1037
  %1525 = vmatprep.subr.bf16.mxu0 %v1042
  %1526 = vmatpush1.bf16.msra.mxu0 %v1041
  %1527 = vmatprep.subr.bf16.mxu0 %v1046
  %1528 = vmatpush1.bf16.msra.mxu0 %v1045
  %1529 = vmatprep.mubr.bf16.mxu0 %v47
  %1530 = vmatmul.mubr.bf16.gmra.mrb[0].mxu0 %v46
  %v1531 = vpop.f32.mrb[0].mxu0
  %v1532 = vadd.f32 %v1491, %v1531
  %v1533 = vpop.f32.mrb[0].mxu0
  %v1534 = vadd.f32 %v1493, %v1533
  %v1535 = vpop.f32.mrb[0].mxu0
  %v1536 = vpop.f32.mrb[0].mxu0
  %1537 = vdwg.mxu0
  %1538 = vmatprep.subr.bf16.mxu0 %v1050
  %1539 = vmatpush1.bf16.msra.mxu0 %v1049
  %1540 = vmatprep.subr.bf16.mxu0 0
  %1541 = vmatpush1.bf16.msra.mxu0 0
  %1542 = vmatprep.subr.bf16.mxu0 0
  %1543 = vmatpush1.bf16.msra.mxu0 0
  %1544 = vmatprep.subr.bf16.mxu0 0
  %1545 = vmatpush1.bf16.msra.mxu0 0
  %1546 = vmatprep.subr.bf16.mxu0 0
  %1547 = vmatpush1.bf16.msra.mxu0 0
  %1548 = vmatprep.subr.bf16.mxu0 0
  %1549 = vmatpush1.bf16.msra.mxu0 0
  %1550 = vmatprep.subr.bf16.mxu0 0
  %1551 = vmatpush1.bf16.msra.mxu0 0
  %1552 = vmatprep.subr.bf16.mxu0 0
  %1553 = vmatpush1.bf16.msra.mxu0 0
  %1554 = vmatprep.subr.bf16.mxu0 0
  %1555 = vmatpush1.bf16.msra.mxu0 0
  %1556 = vmatprep.subr.bf16.mxu0 0
  %1557 = vmatpush1.bf16.msra.mxu0 0
  %1558 = vmatprep.subr.bf16.mxu0 0
  %1559 = vmatpush1.bf16.msra.mxu0 0
  %1560 = vmatprep.subr.bf16.mxu0 0
  %1561 = vmatpush1.bf16.msra.mxu0 0
  %1562 = vmatprep.subr.bf16.mxu0 0
  %1563 = vmatpush1.bf16.msra.mxu0 0
  %1564 = vmatprep.subr.bf16.mxu0 0
  %1565 = vmatpush1.bf16.msra.mxu0 0
  %1566 = vmatprep.subr.bf16.mxu0 0
  %1567 = vmatpush1.bf16.msra.mxu0 0
  %1568 = vmatprep.subr.bf16.mxu0 0
  %1569 = vmatpush1.bf16.msra.mxu0 0
  %1570 = vmatprep.mubr.bf16.mxu0 0
  %1571 = vmatmul.mubr.bf16.gmra.mrb[0].mxu0 %v1249
  %v1572 = vpop.f32.mrb[0].mxu0
  %v1573 = vadd.f32 %v1532, %v1572
  %v1574 = vpop.f32.mrb[0].mxu0
  %v1575 = vadd.f32 %v1534, %v1574
  %v1576 = vpop.f32.mrb[0].mxu0
  %v1577 = vpop.f32.mrb[0].mxu0
  %1578 = vdwg.mxu0
  %v1579 = vmax.f32 %v1409, 0.0
  %v1580 = vmax.f32 %v1411, 0.0
  %v1581 = vmax.f32 %v1573, 0.0
  %v1582 = vmax.f32 %v1575, 0.0
  %v1583 = vpack.c.bf16 %v1579, %v1579
  %v1584 = vpack.c.bf16 %v1580, %v1580
  %v1585 = vpack.c.bf16 %v1581, %v1581
  %v1586 = vpack.c.bf16 %v1582, %v1582
  %v1587 = vld [vmem:[%s3] sm:$0xf]
  %v1588 = vld [vmem:[%s3 + $0x4] sm:$0xf]
  %v1589 = vld [vmem:[%s3 + $0x8] sm:$0xf]
  %v1590 = vld [vmem:[%s3 + $0xc] sm:$0xf]
  %v1591 = vld [vmem:[%s3 + $0x10] sm:$0xf]
  %v1592 = vld [vmem:[%s3 + $0x14] sm:$0xf]
  %v1593 = vld [vmem:[%s3 + $0x18] sm:$0xf]
  %v1594 = vld [vmem:[%s3 + $0x1c] sm:$0xf]
  %v1595 = vld [vmem:[%s3 + $0x20] sm:$0xf]
  %v1596 = vld [vmem:[%s3 + $0x24] sm:$0xf]
  %v1597 = vld [vmem:[%s3 + $0x28] sm:$0xf]
  %v1598 = vld [vmem:[%s3 + $0x2c] sm:$0xf]
  %v1599 = vld [vmem:[%s3 + $0x30] sm:$0xf]
  %v1600 = vld [vmem:[%s3 + $0x34] sm:$0xf]
  %v1601 = vld [vmem:[%s3 + $0x38] sm:$0xf]
  %v1602 = vld [vmem:[%s3 + $0x3c] sm:$0xf]
  %v1603 = vld [vmem:[%s3 + $0x40] sm:$0xf]
  %v1604 = vld [vmem:[%s3 + $0x44] sm:$0xf]
  %v1605 = vld [vmem:[%s3 + $0x48] sm:$0xf]
  %v1606 = vld [vmem:[%s3 + $0x4c] sm:$0xf]
  %v1607 = vld [vmem:[%s3 + $0x50] sm:$0xf]
  %v1608 = vld [vmem:[%s3 + $0x54] sm:$0xf]
  %v1609 = vld [vmem:[%s3 + $0x58] sm:$0xf]
  %v1610 = vld [vmem:[%s3 + $0x5c] sm:$0xf]
  %v1611 = vld [vmem:[%s3 + $0x60] sm:$0xf]
  %v1612 = vld [vmem:[%s3 + $0x64] sm:$0xf]
  %v1613 = vld [vmem:[%s3 + $0x68] sm:$0xf]
  %v1614 = vld [vmem:[%s3 + $0x6c] sm:$0xf]
  %v1615 = vld [vmem:[%s3 + $0x70] sm:$0xf]
  %v1616 = vld [vmem:[%s3 + $0x74] sm:$0xf]
  %v1617 = vld [vmem:[%s3 + $0x78] sm:$0xf]
  %v1618 = vld [vmem:[%s3 + $0x7c] sm:$0xf]
  %v1619 = vld [vmem:[%s3 + $0x80] sm:$0xf]
  %v1620 = vld [vmem:[%s3 + $0x84] sm:$0xf]
  %v1621 = vld [vmem:[%s3 + $0x88] sm:$0xf]
  %v1622 = vld [vmem:[%s3 + $0x8c] sm:$0xf]
  %v1623 = vld [vmem:[%s3 + $0x90] sm:$0xf]
  %v1624 = vld [vmem:[%s3 + $0x94] sm:$0xf]
  %v1625 = vld [vmem:[%s3 + $0x98] sm:$0xf]
  %v1626 = vld [vmem:[%s3 + $0x9c] sm:$0xf]
  %v1627 = vld [vmem:[%s3 + $0xa0] sm:$0xf]
  %v1628 = vld [vmem:[%s3 + $0xa4] sm:$0xf]
  %v1629 = vld [vmem:[%s3 + $0xa8] sm:$0xf]
  %v1630 = vld [vmem:[%s3 + $0xac] sm:$0xf]
  %v1631 = vld [vmem:[%s3 + $0xb0] sm:$0xf]
  %v1632 = vld [vmem:[%s3 + $0xb4] sm:$0xf]
  %v1633 = vld [vmem:[%s3 + $0xb8] sm:$0xf]
  %v1634 = vld [vmem:[%s3 + $0xbc] sm:$0xf]
  %v1635 = vld [vmem:[%s3 + $0xc0] sm:$0xf]
  %v1636 = vld [vmem:[%s3 + $0xc4] sm:$0xf]
  %v1637 = vld [vmem:[%s3 + $0xc8] sm:$0xf]
  %v1638 = vld [vmem:[%s3 + $0xcc] sm:$0xf]
  %v1639 = vld [vmem:[%s3 + $0xd0] sm:$0xf]
  %v1640 = vld [vmem:[%s3 + $0xd4] sm:$0xf]
  %v1641 = vld [vmem:[%s3 + $0xd8] sm:$0xf]
  %v1642 = vld [vmem:[%s3 + $0xdc] sm:$0xf]
  %v1643 = vld [vmem:[%s3 + $0xe0] sm:$0xf]
  %v1644 = vld [vmem:[%s3 + $0xe4] sm:$0xf]
  %v1645 = vld [vmem:[%s3 + $0xe8] sm:$0xf]
  %v1646 = vld [vmem:[%s3 + $0xec] sm:$0xf]
  %v1647 = vld [vmem:[%s3 + $0xf0] sm:$0xf]
  %v1648 = vld [vmem:[%s3 + $0xf4] sm:$0xf]
  %v1649 = vld [vmem:[%s3 + $0xf8] sm:$0xf]
  %v1650 = vld [vmem:[%s3 + $0xfc] sm:$0xf]
  %v1651 = vld [vmem:[%s4] sm:$0x1]
  %v1653 = vlaneseq
  %v1654 = vshrl.u32 %v1653, 7
  %v1655 = vsub.s32 0, %v1654
  %v1656 = vrot.slane %v1651, %v1655
  %v1722 = vunpack.c.l.b16 %v1587
  %v1723 = vunpack.c.l.b16 %v1588
  %v1724 = vunpack.c.l.b16 %v1589
  %v1725 = vunpack.c.l.b16 %v1590
  %v1726 = vunpack.c.l.b16 %v1591
  %v1727 = vunpack.c.l.b16 %v1592
  %v1728 = vunpack.c.l.b16 %v1593
  %v1729 = vunpack.c.l.b16 %v1594
  %v1730 = vunpack.c.l.b16 %v1595
  %v1731 = vunpack.c.l.b16 %v1596
  %v1732 = vunpack.c.l.b16 %v1597
  %v1733 = vunpack.c.l.b16 %v1598
  %v1734 = vunpack.c.l.b16 %v1599
  %v1735 = vunpack.c.l.b16 %v1600
  %v1736 = vunpack.c.l.b16 %v1601
  %v1737 = vunpack.c.l.b16 %v1602
  %v1738 = vunpack.c.l.b16 %v1603
  %v1739 = vunpack.c.l.b16 %v1604
  %v1740 = vunpack.c.l.b16 %v1605
  %v1741 = vunpack.c.l.b16 %v1606
  %v1742 = vunpack.c.l.b16 %v1607
  %v1743 = vunpack.c.l.b16 %v1608
  %v1744 = vunpack.c.l.b16 %v1609
  %v1745 = vunpack.c.l.b16 %v1610
  %v1746 = vunpack.c.l.b16 %v1611
  %v1747 = vunpack.c.l.b16 %v1612
  %v1748 = vunpack.c.l.b16 %v1613
  %v1749 = vunpack.c.l.b16 %v1614
  %v1750 = vunpack.c.l.b16 %v1615
  %v1751 = vunpack.c.l.b16 %v1616
  %v1752 = vunpack.c.l.b16 %v1617
  %v1753 = vunpack.c.l.b16 %v1618
  %v1754 = vunpack.c.l.b16 %v1619
  %v1755 = vunpack.c.l.b16 %v1620
  %v1756 = vunpack.c.l.b16 %v1621
  %v1757 = vunpack.c.l.b16 %v1622
  %v1758 = vunpack.c.l.b16 %v1623
  %v1759 = vunpack.c.l.b16 %v1624
  %v1760 = vunpack.c.l.b16 %v1625
  %v1761 = vunpack.c.l.b16 %v1626
  %v1762 = vunpack.c.l.b16 %v1627
  %v1763 = vunpack.c.l.b16 %v1628
  %v1764 = vunpack.c.l.b16 %v1629
  %v1765 = vunpack.c.l.b16 %v1630
  %v1766 = vunpack.c.l.b16 %v1631
  %v1767 = vunpack.c.l.b16 %v1632
  %v1768 = vunpack.c.l.b16 %v1633
  %v1769 = vunpack.c.l.b16 %v1634
  %v1770 = vunpack.c.l.b16 %v1635
  %v1771 = vunpack.c.l.b16 %v1636
  %v1772 = vunpack.c.l.b16 %v1637
  %v1773 = vunpack.c.l.b16 %v1638
  %v1774 = vunpack.c.l.b16 %v1639
  %v1775 = vunpack.c.l.b16 %v1640
  %v1776 = vunpack.c.l.b16 %v1641
  %v1777 = vunpack.c.l.b16 %v1642
  %v1778 = vunpack.c.l.b16 %v1643
  %v1779 = vunpack.c.l.b16 %v1644
  %v1780 = vunpack.c.l.b16 %v1645
  %v1781 = vunpack.c.l.b16 %v1646
  %v1782 = vunpack.c.l.b16 %v1647
  %v1783 = vunpack.c.l.b16 %v1648
  %v1784 = vunpack.c.l.b16 %v1649
  %v1785 = vunpack.c.l.b16 %v1650
  %v1786 = vpack.c.b16 %v1723, %v1722
  %v1787 = vpack.c.b16 %v1725, %v1724
  %v1788 = vpack.c.b16 %v1727, %v1726
  %v1789 = vpack.c.b16 %v1729, %v1728
  %v1790 = vpack.c.b16 %v1731, %v1730
  %v1791 = vpack.c.b16 %v1733, %v1732
  %v1792 = vpack.c.b16 %v1735, %v1734
  %v1793 = vpack.c.b16 %v1737, %v1736
  %v1794 = vpack.c.b16 %v1739, %v1738
  %v1795 = vpack.c.b16 %v1741, %v1740
  %v1796 = vpack.c.b16 %v1743, %v1742
  %v1797 = vpack.c.b16 %v1745, %v1744
  %v1798 = vpack.c.b16 %v1747, %v1746
  %v1799 = vpack.c.b16 %v1749, %v1748
  %v1800 = vpack.c.b16 %v1751, %v1750
  %v1801 = vpack.c.b16 %v1753, %v1752
  %v1802 = vpack.c.b16 %v1755, %v1754
  %v1803 = vpack.c.b16 %v1757, %v1756
  %v1804 = vpack.c.b16 %v1759, %v1758
  %v1805 = vpack.c.b16 %v1761, %v1760
  %v1806 = vpack.c.b16 %v1763, %v1762
  %v1807 = vpack.c.b16 %v1765, %v1764
  %v1808 = vpack.c.b16 %v1767, %v1766
  %v1809 = vpack.c.b16 %v1769, %v1768
  %v1810 = vpack.c.b16 %v1771, %v1770
  %v1811 = vpack.c.b16 %v1773, %v1772
  %v1812 = vpack.c.b16 %v1775, %v1774
  %v1813 = vpack.c.b16 %v1777, %v1776
  %v1814 = vpack.c.b16 %v1779, %v1778
  %v1815 = vpack.c.b16 %v1781, %v1780
  %v1816 = vpack.c.b16 %v1783, %v1782
  %v1817 = vpack.c.b16 %v1785, %v1784
  %1850 = vmatprep.subr.bf16.mxu0 0
  %1851 = vmatpush1.bf16.msra.mxu0 %v1786
  %1852 = vmatprep.subr.bf16.mxu0 0
  %1853 = vmatpush1.bf16.msra.mxu0 %v1787
  %1854 = vmatprep.subr.bf16.mxu0 0
  %1855 = vmatpush1.bf16.msra.mxu0 %v1788
  %1856 = vmatprep.subr.bf16.mxu0 0
  %1857 = vmatpush1.bf16.msra.mxu0 %v1789
  %1858 = vmatprep.subr.bf16.mxu0 0
  %1859 = vmatpush1.bf16.msra.mxu0 %v1790
  %1860 = vmatprep.subr.bf16.mxu0 0
  %1861 = vmatpush1.bf16.msra.mxu0 %v1791
  %1862 = vmatprep.subr.bf16.mxu0 0
  %1863 = vmatpush1.bf16.msra.mxu0 %v1792
  %1864 = vmatprep.subr.bf16.mxu0 0
  %1865 = vmatpush1.bf16.msra.mxu0 %v1793
  %1866 = vmatprep.subr.bf16.mxu0 0
  %1867 = vmatpush1.bf16.msra.mxu0 %v1794
  %1868 = vmatprep.subr.bf16.mxu0 0
  %1869 = vmatpush1.bf16.msra.mxu0 %v1795
  %1870 = vmatprep.subr.bf16.mxu0 0
  %1871 = vmatpush1.bf16.msra.mxu0 %v1796
  %1872 = vmatprep.subr.bf16.mxu0 0
  %1873 = vmatpush1.bf16.msra.mxu0 %v1797
  %1874 = vmatprep.subr.bf16.mxu0 0
  %1875 = vmatpush1.bf16.msra.mxu0 %v1798
  %1876 = vmatprep.subr.bf16.mxu0 0
  %1877 = vmatpush1.bf16.msra.mxu0 %v1799
  %1878 = vmatprep.subr.bf16.mxu0 0
  %1879 = vmatpush1.bf16.msra.mxu0 %v1800
  %1880 = vmatprep.subr.bf16.mxu0 0
  %1881 = vmatpush1.bf16.msra.mxu0 %v1801
  %1882 = vmatprep.mubr.bf16.mxu0 %v1584
  %1883 = vmatmul.mubr.bf16.gmra.mrb[0].mxu0 %v1583
  %v1884 = vpop.f32.mrb[0].mxu0
  %v1885 = vadd.f32 %v1656, %v1884
  %v1886 = vpop.f32.mrb[0].mxu0
  %v1887 = vpop.f32.mrb[0].mxu0
  %v1888 = vpop.f32.mrb[0].mxu0
  %1889 = vdwg.mxu0
  %1890 = vmatprep.subr.bf16.mxu0 0
  %1891 = vmatpush1.bf16.msra.mxu0 %v1802
  %1892 = vmatprep.subr.bf16.mxu0 0
  %1893 = vmatpush1.bf16.msra.mxu0 %v1803
  %1894 = vmatprep.subr.bf16.mxu0 0
  %1895 = vmatpush1.bf16.msra.mxu0 %v1804
  %1896 = vmatprep.subr.bf16.mxu0 0
  %1897 = vmatpush1.bf16.msra.mxu0 %v1805
  %1898 = vmatprep.subr.bf16.mxu0 0
  %1899 = vmatpush1.bf16.msra.mxu0 %v1806
  %1900 = vmatprep.subr.bf16.mxu0 0
  %1901 = vmatpush1.bf16.msra.mxu0 %v1807
  %1902 = vmatprep.subr.bf16.mxu0 0
  %1903 = vmatpush1.bf16.msra.mxu0 %v1808
  %1904 = vmatprep.subr.bf16.mxu0 0
  %1905 = vmatpush1.bf16.msra.mxu0 %v1809
  %1906 = vmatprep.subr.bf16.mxu0 0
  %1907 = vmatpush1.bf16.msra.mxu0 %v1810
  %1908 = vmatprep.subr.bf16.mxu0 0
  %1909 = vmatpush1.bf16.msra.mxu0 %v1811
  %1910 = vmatprep.subr.bf16.mxu0 0
  %1911 = vmatpush1.bf16.msra.mxu0 %v1812
  %1912 = vmatprep.subr.bf16.mxu0 0
  %1913 = vmatpush1.bf16.msra.mxu0 %v1813
  %1914 = vmatprep.subr.bf16.mxu0 0
  %1915 = vmatpush1.bf16.msra.mxu0 %v1814
  %1916 = vmatprep.subr.bf16.mxu0 0
  %1917 = vmatpush1.bf16.msra.mxu0 %v1815
  %1918 = vmatprep.subr.bf16.mxu0 0
  %1919 = vmatpush1.bf16.msra.mxu0 %v1816
  %1920 = vmatprep.subr.bf16.mxu0 0
  %1921 = vmatpush1.bf16.msra.mxu0 %v1817
  %1922 = vmatprep.mubr.bf16.mxu0 %v1586
  %1923 = vmatmul.mubr.bf16.gmra.mrb[0].mxu0 %v1585
  %v1924 = vpop.f32.mrb[0].mxu0
  %v1925 = vadd.f32 %v1885, %v1924
  %v1926 = vpop.f32.mrb[0].mxu0
  %v1927 = vpop.f32.mrb[0].mxu0
  %v1928 = vpop.f32.mrb[0].mxu0
  %1929 = vdwg.mxu0
  %vm1930 = vcmask 162816
  %1931 = vst.msk [vmem:[%s10] sm:$0xff] %vm1930, %v1925
  %v1932 = vpack.c.bf16 %v1925, %v1925
  %v1933 = vld [vmem:[%s5] sm:$0xff]
  %v1934 = vld [vmem:[%s5 + $0x8] sm:$0xff]
  %v1935 = vld [vmem:[%s5 + $0x10] sm:$0xff]
  %v1936 = vld [vmem:[%s5 + $0x18] sm:$0xff]
  %v1937 = vld [vmem:[%s5 + $0x20] sm:$0x33]
  %v1938 = vld [vmem:[%s5 + $0x28] sm:$0x33]
  %v1939 = vld [vmem:[%s6] sm:$0xf]
  %v1941 = vlaneseq
  %v1942 = vshrl.u32 %v1941, 7
  %v1943 = vsub.s32 0, %v1942
  %v1944 = vrot.slane %v1939, %v1943
  %v1945 = vlaneseq
  %v1946 = vshrl.u32 %v1945, 7
  %v1947 = vsub.s32 1, %v1946
  %v1948 = vrot.slane %v1939, %v1947
  %v1949 = vlaneseq
  %v1950 = vshrl.u32 %v1949, 7
  %v1951 = vsub.s32 2, %v1950
  %v1952 = vrot.slane %v1939, %v1951
  %v1953 = vlaneseq
  %v1954 = vshrl.u32 %v1953, 7
  %v1955 = vsub.s32 3, %v1954
  %v1956 = vrot.slane %v1939, %v1955
  %v1967 = vunpack.c.l.b16 %v1933
  %v1968 = vunpack.c.h.b16 %v1933
  %v1969 = vunpack.c.l.b16 %v1934
  %v1970 = vunpack.c.h.b16 %v1934
  %v1971 = vunpack.c.l.b16 %v1935
  %v1972 = vunpack.c.h.b16 %v1935
  %v1973 = vunpack.c.l.b16 %v1936
  %v1974 = vunpack.c.h.b16 %v1936
  %v1975 = vunpack.c.l.b16 %v1937
  %v1976 = vunpack.c.h.b16 %v1937
  %v1977 = vunpack.c.l.b16 %v1938
  %v1978 = vunpack.c.h.b16 %v1938
  %v1979 = vpack.c.b16 %v1971, %v1967
  %v1980 = vpack.c.b16 %v1972, %v1968
  %v1981 = vpack.c.b16 %v1973, %v1969
  %v1982 = vpack.c.b16 %v1974, %v1970
  %v1983 = vpack.c.b16 %v1975, %v1975
  %v1984 = vpack.c.b16 %v1976, %v1976
  %v1985 = vpack.c.b16 %v1977, %v1977
  %v1986 = vpack.c.b16 %v1978, %v1978
  %v1992 = vsel %vm1930, %v1932, 0
  %vm1994 = vcmask 1041408
  %v1996 = vsel %vm1994, %v1983, 0
  %v1999 = vsel %vm1994, %v1984, 0
  %v2002 = vsel %vm1994, %v1985, 0
  %v2005 = vsel %vm1994, %v1986, 0
  %2007 = vmatprep.subr.bf16.mxu0 %v1980
  %2008 = vmatpush1.bf16.msra.mxu0 %v1979
  %2009 = vmatprep.subr.bf16.mxu0 %v1999
  %2010 = vmatpush1.bf16.msra.mxu0 %v1996
  %2011 = vmatprep.subr.bf16.mxu0 0
  %2012 = vmatpush1.bf16.msra.mxu0 0
  %2013 = vmatprep.subr.bf16.mxu0 0
  %2014 = vmatpush1.bf16.msra.mxu0 0
  %2015 = vmatprep.subr.bf16.mxu0 0
  %2016 = vmatpush1.bf16.msra.mxu0 0
  %2017 = vmatprep.subr.bf16.mxu0 0
  %2018 = vmatpush1.bf16.msra.mxu0 0
  %2019 = vmatprep.subr.bf16.mxu0 0
  %2020 = vmatpush1.bf16.msra.mxu0 0
  %2021 = vmatprep.subr.bf16.mxu0 0
  %2022 = vmatpush1.bf16.msra.mxu0 0
  %2023 = vmatprep.subr.bf16.mxu0 0
  %2024 = vmatpush1.bf16.msra.mxu0 0
  %2025 = vmatprep.subr.bf16.mxu0 0
  %2026 = vmatpush1.bf16.msra.mxu0 0
  %2027 = vmatprep.subr.bf16.mxu0 0
  %2028 = vmatpush1.bf16.msra.mxu0 0
  %2029 = vmatprep.subr.bf16.mxu0 0
  %2030 = vmatpush1.bf16.msra.mxu0 0
  %2031 = vmatprep.subr.bf16.mxu0 0
  %2032 = vmatpush1.bf16.msra.mxu0 0
  %2033 = vmatprep.subr.bf16.mxu0 0
  %2034 = vmatpush1.bf16.msra.mxu0 0
  %2035 = vmatprep.subr.bf16.mxu0 0
  %2036 = vmatpush1.bf16.msra.mxu0 0
  %2037 = vmatprep.subr.bf16.mxu0 0
  %2038 = vmatpush1.bf16.msra.mxu0 0
  %2039 = vmatprep.mubr.bf16.mxu0 0
  %2040 = vmatmul.mubr.bf16.gmra.mrb[0].mxu0 %v1992
  %v2041 = vpop.f32.mrb[0].mxu0
  %v2042 = vadd.f32 %v1944, %v2041
  %v2043 = vpop.f32.mrb[0].mxu0
  %v2044 = vadd.f32 %v1948, %v2043
  %v2045 = vpop.f32.mrb[0].mxu0
  %v2046 = vpop.f32.mrb[0].mxu0
  %2047 = vdwg.mxu0
  %2048 = vmatprep.subr.bf16.mxu0 %v1982
  %2049 = vmatpush1.bf16.msra.mxu0 %v1981
  %2050 = vmatprep.subr.bf16.mxu0 %v2005
  %2051 = vmatpush1.bf16.msra.mxu0 %v2002
  %2052 = vmatprep.subr.bf16.mxu0 0
  %2053 = vmatpush1.bf16.msra.mxu0 0
  %2054 = vmatprep.subr.bf16.mxu0 0
  %2055 = vmatpush1.bf16.msra.mxu0 0
  %2056 = vmatprep.subr.bf16.mxu0 0
  %2057 = vmatpush1.bf16.msra.mxu0 0
  %2058 = vmatprep.subr.bf16.mxu0 0
  %2059 = vmatpush1.bf16.msra.mxu0 0
  %2060 = vmatprep.subr.bf16.mxu0 0
  %2061 = vmatpush1.bf16.msra.mxu0 0
  %2062 = vmatprep.subr.bf16.mxu0 0
  %2063 = vmatpush1.bf16.msra.mxu0 0
  %2064 = vmatprep.subr.bf16.mxu0 0
  %2065 = vmatpush1.bf16.msra.mxu0 0
  %2066 = vmatprep.subr.bf16.mxu0 0
  %2067 = vmatpush1.bf16.msra.mxu0 0
  %2068 = vmatprep.subr.bf16.mxu0 0
  %2069 = vmatpush1.bf16.msra.mxu0 0
  %2070 = vmatprep.subr.bf16.mxu0 0
  %2071 = vmatpush1.bf16.msra.mxu0 0
  %2072 = vmatprep.subr.bf16.mxu0 0
  %2073 = vmatpush1.bf16.msra.mxu0 0
  %2074 = vmatprep.subr.bf16.mxu0 0
  %2075 = vmatpush1.bf16.msra.mxu0 0
  %2076 = vmatprep.subr.bf16.mxu0 0
  %2077 = vmatpush1.bf16.msra.mxu0 0
  %2078 = vmatprep.subr.bf16.mxu0 0
  %2079 = vmatpush1.bf16.msra.mxu0 0
  %2080 = vmatprep.mubr.bf16.mxu0 0
  %2081 = vmatmul.mubr.bf16.gmra.mrb[0].mxu0 %v1992
  %v2082 = vpop.f32.mrb[0].mxu0
  %v2083 = vadd.f32 %v1952, %v2082
  %v2084 = vpop.f32.mrb[0].mxu0
  %v2085 = vadd.f32 %v1956, %v2084
  %v2086 = vpop.f32.mrb[0].mxu0
  %v2087 = vpop.f32.mrb[0].mxu0
  %2088 = vdwg.mxu0
  %v2089 = vmax.f32 %v2042, 0.0
  %v2090 = vmax.f32 %v2044, 0.0
  %v2091 = vmax.f32 %v2083, 0.0
  %v2092 = vmax.f32 %v2085, 0.0
  %v2093 = vpack.c.bf16 %v2089, %v2089
  %v2094 = vpack.c.bf16 %v2090, %v2090
  %v2095 = vpack.c.bf16 %v2091, %v2091
  %v2096 = vpack.c.bf16 %v2092, %v2092
  %v2097 = vld [vmem:[%s7] sm:$0xff]
  %v2098 = vld [vmem:[%s7 + $0x8] sm:$0xff]
  %v2099 = vld [vmem:[%s7 + $0x10] sm:$0xff]
  %v2100 = vld [vmem:[%s7 + $0x18] sm:$0xf]
  %v2101 = vld [vmem:[%s7 + $0x1c] sm:$0xff]
  %v2102 = vld [vmem:[%s7 + $0x24] sm:$0xff]
  %v2103 = vld [vmem:[%s7 + $0x2c] sm:$0xff]
  %v2104 = vld [vmem:[%s7 + $0x34] sm:$0xf]
  %v2105 = vld [vmem:[%s7 + $0x38] sm:$0xff]
  %v2106 = vld [vmem:[%s7 + $0x40] sm:$0xff]
  %v2107 = vld [vmem:[%s7 + $0x48] sm:$0xff]
  %v2108 = vld [vmem:[%s7 + $0x50] sm:$0xf]
  %v2109 = vld [vmem:[%s7 + $0x54] sm:$0xff]
  %v2110 = vld [vmem:[%s7 + $0x5c] sm:$0xff]
  %v2111 = vld [vmem:[%s7 + $0x64] sm:$0xff]
  %v2112 = vld [vmem:[%s7 + $0x6c] sm:$0xf]
  %v2113 = vld [vmem:[%s7 + $0x70] sm:$0xff]
  %v2114 = vld [vmem:[%s7 + $0x78] sm:$0xff]
  %v2115 = vld [vmem:[%s7 + $0x80] sm:$0xff]
  %v2116 = vld [vmem:[%s7 + $0x88] sm:$0xf]
  %v2117 = vld [vmem:[%s7 + $0x8c] sm:$0xff]
  %v2118 = vld [vmem:[%s7 + $0x94] sm:$0xff]
  %v2119 = vld [vmem:[%s7 + $0x9c] sm:$0xff]
  %v2120 = vld [vmem:[%s7 + $0xa4] sm:$0xf]
  %v2121 = vld [vmem:[%s7 + $0xa8] sm:$0xff]
  %v2122 = vld [vmem:[%s7 + $0xb0] sm:$0xff]
  %v2123 = vld [vmem:[%s7 + $0xb8] sm:$0xff]
  %v2124 = vld [vmem:[%s7 + $0xc0] sm:$0xf]
  %v2125 = vld [vmem:[%s7 + $0xc4] sm:$0xff]
  %v2126 = vld [vmem:[%s7 + $0xcc] sm:$0xff]
  %v2127 = vld [vmem:[%s7 + $0xd4] sm:$0xff]
  %v2128 = vld [vmem:[%s7 + $0xdc] sm:$0xf]
  %v2129 = vld [vmem:[%s7 + $0xe0] sm:$0xff]
  %v2130 = vld [vmem:[%s7 + $0xe8] sm:$0xff]
  %v2131 = vld [vmem:[%s7 + $0xf0] sm:$0xff]
  %v2132 = vld [vmem:[%s7 + $0xf8] sm:$0xf]
  %v2133 = vld [vmem:[%s7 + $0xfc] sm:$0xff]
  %v2134 = vld [vmem:[%s7 + $0x104] sm:$0xff]
  %v2135 = vld [vmem:[%s7 + $0x10c] sm:$0xff]
  %v2136 = vld [vmem:[%s7 + $0x114] sm:$0xf]
  %v2137 = vld [vmem:[%s7 + $0x118] sm:$0xff]
  %v2138 = vld [vmem:[%s7 + $0x120] sm:$0xff]
  %v2139 = vld [vmem:[%s7 + $0x128] sm:$0xff]
  %v2140 = vld [vmem:[%s7 + $0x130] sm:$0xf]
  %v2141 = vld [vmem:[%s7 + $0x134] sm:$0xff]
  %v2142 = vld [vmem:[%s7 + $0x13c] sm:$0xff]
  %v2143 = vld [vmem:[%s7 + $0x144] sm:$0xff]
  %v2144 = vld [vmem:[%s7 + $0x14c] sm:$0xf]
  %v2145 = vld [vmem:[%s7 + $0x150] sm:$0xff]
  %v2146 = vld [vmem:[%s7 + $0x158] sm:$0xff]
  %v2147 = vld [vmem:[%s7 + $0x160] sm:$0xff]
  %v2148 = vld [vmem:[%s7 + $0x168] sm:$0xf]
  %v2149 = vld [vmem:[%s7 + $0x16c] sm:$0xff]
  %v2150 = vld [vmem:[%s7 + $0x174] sm:$0xff]
  %v2151 = vld [vmem:[%s7 + $0x17c] sm:$0xff]
  %v2152 = vld [vmem:[%s7 + $0x184] sm:$0xf]
  %v2153 = vld [vmem:[%s7 + $0x188] sm:$0xff]
  %v2154 = vld [vmem:[%s7 + $0x190] sm:$0xff]
  %v2155 = vld [vmem:[%s7 + $0x198] sm:$0xff]
  %v2156 = vld [vmem:[%s7 + $0x1a0] sm:$0xf]
  %v2157 = vld [vmem:[%s7 + $0x1a4] sm:$0xff]
  %v2158 = vld [vmem:[%s7 + $0x1ac] sm:$0xff]
  %v2159 = vld [vmem:[%s7 + $0x1b4] sm:$0xff]
  %v2160 = vld [vmem:[%s7 + $0x1bc] sm:$0xf]
  %v2161 = vld [vmem:[%s7 + $0x1c0] sm:$0xff]
  %v2162 = vld [vmem:[%s7 + $0x1c8] sm:$0xff]
  %v2163 = vld [vmem:[%s7 + $0x1d0] sm:$0xff]
  %v2164 = vld [vmem:[%s7 + $0x1d8] sm:$0xf]
  %v2165 = vld [vmem:[%s7 + $0x1dc] sm:$0xff]
  %v2166 = vld [vmem:[%s7 + $0x1e4] sm:$0xff]
  %v2167 = vld [vmem:[%s7 + $0x1ec] sm:$0xff]
  %v2168 = vld [vmem:[%s7 + $0x1f4] sm:$0xf]
  %v2169 = vld [vmem:[%s7 + $0x1f8] sm:$0xff]
  %v2170 = vld [vmem:[%s7 + $0x200] sm:$0xff]
  %v2171 = vld [vmem:[%s7 + $0x208] sm:$0xff]
  %v2172 = vld [vmem:[%s7 + $0x210] sm:$0xf]
  %v2173 = vld [vmem:[%s7 + $0x214] sm:$0xff]
  %v2174 = vld [vmem:[%s7 + $0x21c] sm:$0xff]
  %v2175 = vld [vmem:[%s7 + $0x224] sm:$0xff]
  %v2176 = vld [vmem:[%s7 + $0x22c] sm:$0xf]
  %v2177 = vld [vmem:[%s7 + $0x230] sm:$0xff]
  %v2178 = vld [vmem:[%s7 + $0x238] sm:$0xff]
  %v2179 = vld [vmem:[%s7 + $0x240] sm:$0xff]
  %v2180 = vld [vmem:[%s7 + $0x248] sm:$0xf]
  %v2181 = vld [vmem:[%s7 + $0x24c] sm:$0xff]
  %v2182 = vld [vmem:[%s7 + $0x254] sm:$0xff]
  %v2183 = vld [vmem:[%s7 + $0x25c] sm:$0xff]
  %v2184 = vld [vmem:[%s7 + $0x264] sm:$0xf]
  %v2185 = vld [vmem:[%s7 + $0x268] sm:$0xff]
  %v2186 = vld [vmem:[%s7 + $0x270] sm:$0xff]
  %v2187 = vld [vmem:[%s7 + $0x278] sm:$0xff]
  %v2188 = vld [vmem:[%s7 + $0x280] sm:$0xf]
  %v2189 = vld [vmem:[%s7 + $0x284] sm:$0xff]
  %v2190 = vld [vmem:[%s7 + $0x28c] sm:$0xff]
  %v2191 = vld [vmem:[%s7 + $0x294] sm:$0xff]
  %v2192 = vld [vmem:[%s7 + $0x29c] sm:$0xf]
  %v2193 = vld [vmem:[%s7 + $0x2a0] sm:$0xff]
  %v2194 = vld [vmem:[%s7 + $0x2a8] sm:$0xff]
  %v2195 = vld [vmem:[%s7 + $0x2b0] sm:$0xff]
  %v2196 = vld [vmem:[%s7 + $0x2b8] sm:$0xf]
  %v2197 = vld [vmem:[%s7 + $0x2bc] sm:$0xff]
  %v2198 = vld [vmem:[%s7 + $0x2c4] sm:$0xff]
  %v2199 = vld [vmem:[%s7 + $0x2cc] sm:$0xff]
  %v2200 = vld [vmem:[%s7 + $0x2d4] sm:$0xf]
  %v2201 = vld [vmem:[%s7 + $0x2d8] sm:$0xff]
  %v2202 = vld [vmem:[%s7 + $0x2e0] sm:$0xff]
  %v2203 = vld [vmem:[%s7 + $0x2e8] sm:$0xff]
  %v2204 = vld [vmem:[%s7 + $0x2f0] sm:$0xf]
  %v2205 = vld [vmem:[%s7 + $0x2f4] sm:$0xff]
  %v2206 = vld [vmem:[%s7 + $0x2fc] sm:$0xff]
  %v2207 = vld [vmem:[%s7 + $0x304] sm:$0xff]
  %v2208 = vld [vmem:[%s7 + $0x30c] sm:$0xf]
  %v2209 = vld [vmem:[%s7 + $0x310] sm:$0xff]
  %v2210 = vld [vmem:[%s7 + $0x318] sm:$0xff]
  %v2211 = vld [vmem:[%s7 + $0x320] sm:$0xff]
  %v2212 = vld [vmem:[%s7 + $0x328] sm:$0xf]
  %v2213 = vld [vmem:[%s7 + $0x32c] sm:$0xff]
  %v2214 = vld [vmem:[%s7 + $0x334] sm:$0xff]
  %v2215 = vld [vmem:[%s7 + $0x33c] sm:$0xff]
  %v2216 = vld [vmem:[%s7 + $0x344] sm:$0xf]
  %v2217 = vld [vmem:[%s7 + $0x348] sm:$0xff]
  %v2218 = vld [vmem:[%s7 + $0x350] sm:$0xff]
  %v2219 = vld [vmem:[%s7 + $0x358] sm:$0xff]
  %v2220 = vld [vmem:[%s7 + $0x360] sm:$0xf]
  %v2221 = vld [vmem:[%s7 + $0x364] sm:$0xff]
  %v2222 = vld [vmem:[%s7 + $0x36c] sm:$0xff]
  %v2223 = vld [vmem:[%s7 + $0x374] sm:$0xff]
  %v2224 = vld [vmem:[%s7 + $0x37c] sm:$0xf]
  %v2225 = vld [vmem:[%s7 + $0x380] sm:$0xff]
  %v2226 = vld [vmem:[%s7 + $0x388] sm:$0xff]
  %v2227 = vld [vmem:[%s7 + $0x390] sm:$0xff]
  %v2228 = vld [vmem:[%s7 + $0x398] sm:$0xf]
  %v2229 = vld [vmem:[%s7 + $0x39c] sm:$0xff]
  %v2230 = vld [vmem:[%s7 + $0x3a4] sm:$0xff]
  %v2231 = vld [vmem:[%s7 + $0x3ac] sm:$0xff]
  %v2232 = vld [vmem:[%s7 + $0x3b4] sm:$0xf]
  %v2233 = vld [vmem:[%s7 + $0x3b8] sm:$0xff]
  %v2234 = vld [vmem:[%s7 + $0x3c0] sm:$0xff]
  %v2235 = vld [vmem:[%s7 + $0x3c8] sm:$0xff]
  %v2236 = vld [vmem:[%s7 + $0x3d0] sm:$0xf]
  %v2237 = vld [vmem:[%s7 + $0x3d4] sm:$0xff]
  %v2238 = vld [vmem:[%s7 + $0x3dc] sm:$0xff]
  %v2239 = vld [vmem:[%s7 + $0x3e4] sm:$0xff]
  %v2240 = vld [vmem:[%s7 + $0x3ec] sm:$0xf]
  %v2241 = vld [vmem:[%s7 + $0x3f0] sm:$0xff]
  %v2242 = vld [vmem:[%s7 + $0x3f8] sm:$0xff]
  %v2243 = vld [vmem:[%s7 + $0x400] sm:$0xff]
  %v2244 = vld [vmem:[%s7 + $0x408] sm:$0xf]
  %v2245 = vld [vmem:[%s7 + $0x40c] sm:$0xff]
  %v2246 = vld [vmem:[%s7 + $0x414] sm:$0xff]
  %v2247 = vld [vmem:[%s7 + $0x41c] sm:$0xff]
  %v2248 = vld [vmem:[%s7 + $0x424] sm:$0xf]
  %v2249 = vld [vmem:[%s7 + $0x428] sm:$0xff]
  %v2250 = vld [vmem:[%s7 + $0x430] sm:$0xff]
  %v2251 = vld [vmem:[%s7 + $0x438] sm:$0xff]
  %v2252 = vld [vmem:[%s7 + $0x440] sm:$0xf]
  %v2253 = vld [vmem:[%s7 + $0x444] sm:$0xff]
  %v2254 = vld [vmem:[%s7 + $0x44c] sm:$0xff]
  %v2255 = vld [vmem:[%s7 + $0x454] sm:$0xff]
  %v2256 = vld [vmem:[%s7 + $0x45c] sm:$0xf]
  %v2257 = vld [vmem:[%s7 + $0x460] sm:$0xff]
  %v2258 = vld [vmem:[%s7 + $0x468] sm:$0xff]
  %v2259 = vld [vmem:[%s7 + $0x470] sm:$0xff]
  %v2260 = vld [vmem:[%s7 + $0x478] sm:$0xf]
  %v2261 = vld [vmem:[%s7 + $0x47c] sm:$0xff]
  %v2262 = vld [vmem:[%s7 + $0x484] sm:$0xff]
  %v2263 = vld [vmem:[%s7 + $0x48c] sm:$0xff]
  %v2264 = vld [vmem:[%s7 + $0x494] sm:$0xf]
  %v2265 = vld [vmem:[%s7 + $0x498] sm:$0xff]
  %v2266 = vld [vmem:[%s7 + $0x4a0] sm:$0xff]
  %v2267 = vld [vmem:[%s7 + $0x4a8] sm:$0xff]
  %v2268 = vld [vmem:[%s7 + $0x4b0] sm:$0xf]
  %v2269 = vld [vmem:[%s7 + $0x4b4] sm:$0xff]
  %v2270 = vld [vmem:[%s7 + $0x4bc] sm:$0xff]
  %v2271 = vld [vmem:[%s7 + $0x4c4] sm:$0xff]
  %v2272 = vld [vmem:[%s7 + $0x4cc] sm:$0xf]
  %v2273 = vld [vmem:[%s7 + $0x4d0] sm:$0xff]
  %v2274 = vld [vmem:[%s7 + $0x4d8] sm:$0xff]
  %v2275 = vld [vmem:[%s7 + $0x4e0] sm:$0xff]
  %v2276 = vld [vmem:[%s7 + $0x4e8] sm:$0xf]
  %v2277 = vld [vmem:[%s7 + $0x4ec] sm:$0xff]
  %v2278 = vld [vmem:[%s7 + $0x4f4] sm:$0xff]
  %v2279 = vld [vmem:[%s7 + $0x4fc] sm:$0xff]
  %v2280 = vld [vmem:[%s7 + $0x504] sm:$0xf]
  %v2281 = vld [vmem:[%s7 + $0x508] sm:$0xff]
  %v2282 = vld [vmem:[%s7 + $0x510] sm:$0xff]
  %v2283 = vld [vmem:[%s7 + $0x518] sm:$0xff]
  %v2284 = vld [vmem:[%s7 + $0x520] sm:$0xf]
  %v2285 = vld [vmem:[%s7 + $0x524] sm:$0xff]
  %v2286 = vld [vmem:[%s7 + $0x52c] sm:$0xff]
  %v2287 = vld [vmem:[%s7 + $0x534] sm:$0xff]
  %v2288 = vld [vmem:[%s7 + $0x53c] sm:$0xf]
  %v2289 = vld [vmem:[%s7 + $0x540] sm:$0xff]
  %v2290 = vld [vmem:[%s7 + $0x548] sm:$0xff]
  %v2291 = vld [vmem:[%s7 + $0x550] sm:$0xff]
  %v2292 = vld [vmem:[%s7 + $0x558] sm:$0xf]
  %v2293 = vld [vmem:[%s7 + $0x55c] sm:$0xff]
  %v2294 = vld [vmem:[%s7 + $0x564] sm:$0xff]
  %v2295 = vld [vmem:[%s7 + $0x56c] sm:$0xff]
  %v2296 = vld [vmem:[%s7 + $0x574] sm:$0xf]
  %v2297 = vld [vmem:[%s7 + $0x578] sm:$0xff]
  %v2298 = vld [vmem:[%s7 + $0x580] sm:$0xff]
  %v2299 = vld [vmem:[%s7 + $0x588] sm:$0xff]
  %v2300 = vld [vmem:[%s7 + $0x590] sm:$0xf]
  %v2301 = vld [vmem:[%s7 + $0x594] sm:$0xff]
  %v2302 = vld [vmem:[%s7 + $0x59c] sm:$0xff]
  %v2303 = vld [vmem:[%s7 + $0x5a4] sm:$0xff]
  %v2304 = vld [vmem:[%s7 + $0x5ac] sm:$0xf]
  %v2305 = vld [vmem:[%s7 + $0x5b0] sm:$0xff]
  %v2306 = vld [vmem:[%s7 + $0x5b8] sm:$0xff]
  %v2307 = vld [vmem:[%s7 + $0x5c0] sm:$0xff]
  %v2308 = vld [vmem:[%s7 + $0x5c8] sm:$0xf]
  %v2309 = vld [vmem:[%s7 + $0x5cc] sm:$0xff]
  %v2310 = vld [vmem:[%s7 + $0x5d4] sm:$0xff]
  %v2311 = vld [vmem:[%s7 + $0x5dc] sm:$0xff]
  %v2312 = vld [vmem:[%s7 + $0x5e4] sm:$0xf]
  %v2313 = vld [vmem:[%s7 + $0x5e8] sm:$0xff]
  %v2314 = vld [vmem:[%s7 + $0x5f0] sm:$0xff]
  %v2315 = vld [vmem:[%s7 + $0x5f8] sm:$0xff]
  %v2316 = vld [vmem:[%s7 + $0x600] sm:$0xf]
  %v2317 = vld [vmem:[%s7 + $0x604] sm:$0xff]
  %v2318 = vld [vmem:[%s7 + $0x60c] sm:$0xff]
  %v2319 = vld [vmem:[%s7 + $0x614] sm:$0xff]
  %v2320 = vld [vmem:[%s7 + $0x61c] sm:$0xf]
  %v2321 = vld [vmem:[%s7 + $0x620] sm:$0xff]
  %v2322 = vld [vmem:[%s7 + $0x628] sm:$0xff]
  %v2323 = vld [vmem:[%s7 + $0x630] sm:$0xff]
  %v2324 = vld [vmem:[%s7 + $0x638] sm:$0xf]
  %v2325 = vld [vmem:[%s7 + $0x63c] sm:$0xff]
  %v2326 = vld [vmem:[%s7 + $0x644] sm:$0xff]
  %v2327 = vld [vmem:[%s7 + $0x64c] sm:$0xff]
  %v2328 = vld [vmem:[%s7 + $0x654] sm:$0xf]
  %v2329 = vld [vmem:[%s7 + $0x658] sm:$0xff]
  %v2330 = vld [vmem:[%s7 + $0x660] sm:$0xff]
  %v2331 = vld [vmem:[%s7 + $0x668] sm:$0xff]
  %v2332 = vld [vmem:[%s7 + $0x670] sm:$0xf]
  %v2333 = vld [vmem:[%s7 + $0x674] sm:$0xff]
  %v2334 = vld [vmem:[%s7 + $0x67c] sm:$0xff]
  %v2335 = vld [vmem:[%s7 + $0x684] sm:$0xff]
  %v2336 = vld [vmem:[%s7 + $0x68c] sm:$0xf]
  %v2337 = vld [vmem:[%s7 + $0x690] sm:$0xff]
  %v2338 = vld [vmem:[%s7 + $0x698] sm:$0xff]
  %v2339 = vld [vmem:[%s7 + $0x6a0] sm:$0xff]
  %v2340 = vld [vmem:[%s7 + $0x6a8] sm:$0xf]
  %v2341 = vld [vmem:[%s7 + $0x6ac] sm:$0xff]
  %v2342 = vld [vmem:[%s7 + $0x6b4] sm:$0xff]
  %v2343 = vld [vmem:[%s7 + $0x6bc] sm:$0xff]
  %v2344 = vld [vmem:[%s7 + $0x6c4] sm:$0xf]
  %v2345 = vld [vmem:[%s7 + $0x6c8] sm:$0xff]
  %v2346 = vld [vmem:[%s7 + $0x6d0] sm:$0xff]
  %v2347 = vld [vmem:[%s7 + $0x6d8] sm:$0xff]
  %v2348 = vld [vmem:[%s7 + $0x6e0] sm:$0xf]
  %v2349 = vld [vmem:[%s7 + $0x6e4] sm:$0xff]
  %v2350 = vld [vmem:[%s7 + $0x6ec] sm:$0xff]
  %v2351 = vld [vmem:[%s7 + $0x6f4] sm:$0xff]
  %v2352 = vld [vmem:[%s7 + $0x6fc] sm:$0xf]
  %v2353 = vld [vmem:[%s8] sm:$0x7f]
  %v2355 = vlaneseq
  %v2356 = vshrl.u32 %v2355, 7
  %v2357 = vsub.s32 0, %v2356
  %v2358 = vrot.slane %v2353, %v2357
  %v2359 = vlaneseq
  %v2360 = vshrl.u32 %v2359, 7
  %v2361 = vsub.s32 1, %v2360
  %v2362 = vrot.slane %v2353, %v2361
  %v2363 = vlaneseq
  %v2364 = vshrl.u32 %v2363, 7
  %v2365 = vsub.s32 2, %v2364
  %v2366 = vrot.slane %v2353, %v2365
  %v2367 = vlaneseq
  %v2368 = vshrl.u32 %v2367, 7
  %v2369 = vsub.s32 3, %v2368
  %v2370 = vrot.slane %v2353, %v2369
  %v2371 = vlaneseq
  %v2372 = vshrl.u32 %v2371, 7
  %v2373 = vsub.s32 4, %v2372
  %v2374 = vrot.slane %v2353, %v2373
  %v2375 = vlaneseq
  %v2376 = vshrl.u32 %v2375, 7
  %v2377 = vsub.s32 5, %v2376
  %v2378 = vrot.slane %v2353, %v2377
  %v2379 = vlaneseq
  %v2380 = vshrl.u32 %v2379, 7
  %v2381 = vsub.s32 6, %v2380
  %v2382 = vrot.slane %v2353, %v2381
  %v2646 = vunpack.c.l.b16 %v2097
  %v2647 = vunpack.c.h.b16 %v2097
  %v2648 = vunpack.c.l.b16 %v2098
  %v2649 = vunpack.c.h.b16 %v2098
  %v2650 = vunpack.c.l.b16 %v2099
  %v2651 = vunpack.c.h.b16 %v2099
  %v2652 = vunpack.c.l.b16 %v2100
  %v2653 = vunpack.c.l.b16 %v2101
  %v2654 = vunpack.c.h.b16 %v2101
  %v2655 = vunpack.c.l.b16 %v2102
  %v2656 = vunpack.c.h.b16 %v2102
  %v2657 = vunpack.c.l.b16 %v2103
  %v2658 = vunpack.c.h.b16 %v2103
  %v2659 = vunpack.c.l.b16 %v2104
  %v2660 = vunpack.c.l.b16 %v2105
  %v2661 = vunpack.c.h.b16 %v2105
  %v2662 = vunpack.c.l.b16 %v2106
  %v2663 = vunpack.c.h.b16 %v2106
  %v2664 = vunpack.c.l.b16 %v2107
  %v2665 = vunpack.c.h.b16 %v2107
  %v2666 = vunpack.c.l.b16 %v2108
  %v2667 = vunpack.c.l.b16 %v2109
  %v2668 = vunpack.c.h.b16 %v2109
  %v2669 = vunpack.c.l.b16 %v2110
  %v2670 = vunpack.c.h.b16 %v2110
  %v2671 = vunpack.c.l.b16 %v2111
  %v2672 = vunpack.c.h.b16 %v2111
  %v2673 = vunpack.c.l.b16 %v2112
  %v2674 = vunpack.c.l.b16 %v2113
  %v2675 = vunpack.c.h.b16 %v2113
  %v2676 = vunpack.c.l.b16 %v2114
  %v2677 = vunpack.c.h.b16 %v2114
  %v2678 = vunpack.c.l.b16 %v2115
  %v2679 = vunpack.c.h.b16 %v2115
  %v2680 = vunpack.c.l.b16 %v2116
  %v2681 = vunpack.c.l.b16 %v2117
  %v2682 = vunpack.c.h.b16 %v2117
  %v2683 = vunpack.c.l.b16 %v2118
  %v2684 = vunpack.c.h.b16 %v2118
  %v2685 = vunpack.c.l.b16 %v2119
  %v2686 = vunpack.c.h.b16 %v2119
  %v2687 = vunpack.c.l.b16 %v2120
  %v2688 = vunpack.c.l.b16 %v2121
  %v2689 = vunpack.c.h.b16 %v2121
  %v2690 = vunpack.c.l.b16 %v2122
  %v2691 = vunpack.c.h.b16 %v2122
  %v2692 = vunpack.c.l.b16 %v2123
  %v2693 = vunpack.c.h.b16 %v2123
  %v2694 = vunpack.c.l.b16 %v2124
  %v2695 = vunpack.c.l.b16 %v2125
  %v2696 = vunpack.c.h.b16 %v2125
  %v2697 = vunpack.c.l.b16 %v2126
  %v2698 = vunpack.c.h.b16 %v2126
  %v2699 = vunpack.c.l.b16 %v2127
  %v2700 = vunpack.c.h.b16 %v2127
  %v2701 = vunpack.c.l.b16 %v2128
  %v2702 = vunpack.c.l.b16 %v2129
  %v2703 = vunpack.c.h.b16 %v2129
  %v2704 = vunpack.c.l.b16 %v2130
  %v2705 = vunpack.c.h.b16 %v2130
  %v2706 = vunpack.c.l.b16 %v2131
  %v2707 = vunpack.c.h.b16 %v2131
  %v2708 = vunpack.c.l.b16 %v2132
  %v2709 = vunpack.c.l.b16 %v2133
  %v2710 = vunpack.c.h.b16 %v2133
  %v2711 = vunpack.c.l.b16 %v2134
  %v2712 = vunpack.c.h.b16 %v2134
  %v2713 = vunpack.c.l.b16 %v2135
  %v2714 = vunpack.c.h.b16 %v2135
  %v2715 = vunpack.c.l.b16 %v2136
  %v2716 = vunpack.c.l.b16 %v2137
  %v2717 = vunpack.c.h.b16 %v2137
  %v2718 = vunpack.c.l.b16 %v2138
  %v2719 = vunpack.c.h.b16 %v2138
  %v2720 = vunpack.c.l.b16 %v2139
  %v2721 = vunpack.c.h.b16 %v2139
  %v2722 = vunpack.c.l.b16 %v2140
  %v2723 = vunpack.c.l.b16 %v2141
  %v2724 = vunpack.c.h.b16 %v2141
  %v2725 = vunpack.c.l.b16 %v2142
  %v2726 = vunpack.c.h.b16 %v2142
  %v2727 = vunpack.c.l.b16 %v2143
  %v2728 = vunpack.c.h.b16 %v2143
  %v2729 = vunpack.c.l.b16 %v2144
  %v2730 = vunpack.c.l.b16 %v2145
  %v2731 = vunpack.c.h.b16 %v2145
  %v2732 = vunpack.c.l.b16 %v2146
  %v2733 = vunpack.c.h.b16 %v2146
  %v2734 = vunpack.c.l.b16 %v2147
  %v2735 = vunpack.c.h.b16 %v2147
  %v2736 = vunpack.c.l.b16 %v2148
  %v2737 = vunpack.c.l.b16 %v2149
  %v2738 = vunpack.c.h.b16 %v2149
  %v2739 = vunpack.c.l.b16 %v2150
  %v2740 = vunpack.c.h.b16 %v2150
  %v2741 = vunpack.c.l.b16 %v2151
  %v2742 = vunpack.c.h.b16 %v2151
  %v2743 = vunpack.c.l.b16 %v2152
  %v2744 = vunpack.c.l.b16 %v2153
  %v2745 = vunpack.c.h.b16 %v2153
  %v2746 = vunpack.c.l.b16 %v2154
  %v2747 = vunpack.c.h.b16 %v2154
  %v2748 = vunpack.c.l.b16 %v2155
  %v2749 = vunpack.c.h.b16 %v2155
  %v2750 = vunpack.c.l.b16 %v2156
  %v2751 = vunpack.c.l.b16 %v2157
  %v2752 = vunpack.c.h.b16 %v2157
  %v2753 = vunpack.c.l.b16 %v2158
  %v2754 = vunpack.c.h.b16 %v2158
  %v2755 = vunpack.c.l.b16 %v2159
  %v2756 = vunpack.c.h.b16 %v2159
  %v2757 = vunpack.c.l.b16 %v2160
  %v2758 = vunpack.c.l.b16 %v2161
  %v2759 = vunpack.c.h.b16 %v2161
  %v2760 = vunpack.c.l.b16 %v2162
  %v2761 = vunpack.c.h.b16 %v2162
  %v2762 = vunpack.c.l.b16 %v2163
  %v2763 = vunpack.c.h.b16 %v2163
  %v2764 = vunpack.c.l.b16 %v2164
  %v2765 = vunpack.c.l.b16 %v2165
  %v2766 = vunpack.c.h.b16 %v2165
  %v2767 = vunpack.c.l.b16 %v2166
  %v2768 = vunpack.c.h.b16 %v2166
  %v2769 = vunpack.c.l.b16 %v2167
  %v2770 = vunpack.c.h.b16 %v2167
  %v2771 = vunpack.c.l.b16 %v2168
  %v2772 = vunpack.c.l.b16 %v2169
  %v2773 = vunpack.c.h.b16 %v2169
  %v2774 = vunpack.c.l.b16 %v2170
  %v2775 = vunpack.c.h.b16 %v2170
  %v2776 = vunpack.c.l.b16 %v2171
  %v2777 = vunpack.c.h.b16 %v2171
  %v2778 = vunpack.c.l.b16 %v2172
  %v2779 = vunpack.c.l.b16 %v2173
  %v2780 = vunpack.c.h.b16 %v2173
  %v2781 = vunpack.c.l.b16 %v2174
  %v2782 = vunpack.c.h.b16 %v2174
  %v2783 = vunpack.c.l.b16 %v2175
  %v2784 = vunpack.c.h.b16 %v2175
  %v2785 = vunpack.c.l.b16 %v2176
  %v2786 = vunpack.c.l.b16 %v2177
  %v2787 = vunpack.c.h.b16 %v2177
  %v2788 = vunpack.c.l.b16 %v2178
  %v2789 = vunpack.c.h.b16 %v2178
  %v2790 = vunpack.c.l.b16 %v2179
  %v2791 = vunpack.c.h.b16 %v2179
  %v2792 = vunpack.c.l.b16 %v2180
  %v2793 = vunpack.c.l.b16 %v2181
  %v2794 = vunpack.c.h.b16 %v2181
  %v2795 = vunpack.c.l.b16 %v2182
  %v2796 = vunpack.c.h.b16 %v2182
  %v2797 = vunpack.c.l.b16 %v2183
  %v2798 = vunpack.c.h.b16 %v2183
  %v2799 = vunpack.c.l.b16 %v2184
  %v2800 = vunpack.c.l.b16 %v2185
  %v2801 = vunpack.c.h.b16 %v2185
  %v2802 = vunpack.c.l.b16 %v2186
  %v2803 = vunpack.c.h.b16 %v2186
  %v2804 = vunpack.c.l.b16 %v2187
  %v2805 = vunpack.c.h.b16 %v2187
  %v2806 = vunpack.c.l.b16 %v2188
  %v2807 = vunpack.c.l.b16 %v2189
  %v2808 = vunpack.c.h.b16 %v2189
  %v2809 = vunpack.c.l.b16 %v2190
  %v2810 = vunpack.c.h.b16 %v2190
  %v2811 = vunpack.c.l.b16 %v2191
  %v2812 = vunpack.c.h.b16 %v2191
  %v2813 = vunpack.c.l.b16 %v2192
  %v2814 = vunpack.c.l.b16 %v2193
  %v2815 = vunpack.c.h.b16 %v2193
  %v2816 = vunpack.c.l.b16 %v2194
  %v2817 = vunpack.c.h.b16 %v2194
  %v2818 = vunpack.c.l.b16 %v2195
  %v2819 = vunpack.c.h.b16 %v2195
  %v2820 = vunpack.c.l.b16 %v2196
  %v2821 = vunpack.c.l.b16 %v2197
  %v2822 = vunpack.c.h.b16 %v2197
  %v2823 = vunpack.c.l.b16 %v2198
  %v2824 = vunpack.c.h.b16 %v2198
  %v2825 = vunpack.c.l.b16 %v2199
  %v2826 = vunpack.c.h.b16 %v2199
  %v2827 = vunpack.c.l.b16 %v2200
  %v2828 = vunpack.c.l.b16 %v2201
  %v2829 = vunpack.c.h.b16 %v2201
  %v2830 = vunpack.c.l.b16 %v2202
  %v2831 = vunpack.c.h.b16 %v2202
  %v2832 = vunpack.c.l.b16 %v2203
  %v2833 = vunpack.c.h.b16 %v2203
  %v2834 = vunpack.c.l.b16 %v2204
  %v2835 = vunpack.c.l.b16 %v2205
  %v2836 = vunpack.c.h.b16 %v2205
  %v2837 = vunpack.c.l.b16 %v2206
  %v2838 = vunpack.c.h.b16 %v2206
  %v2839 = vunpack.c.l.b16 %v2207
  %v2840 = vunpack.c.h.b16 %v2207
  %v2841 = vunpack.c.l.b16 %v2208
  %v2842 = vunpack.c.l.b16 %v2209
  %v2843 = vunpack.c.h.b16 %v2209
  %v2844 = vunpack.c.l.b16 %v2210
  %v2845 = vunpack.c.h.b16 %v2210
  %v2846 = vunpack.c.l.b16 %v2211
  %v2847 = vunpack.c.h.b16 %v2211
  %v2848 = vunpack.c.l.b16 %v2212
  %v2849 = vunpack.c.l.b16 %v2213
  %v2850 = vunpack.c.h.b16 %v2213
  %v2851 = vunpack.c.l.b16 %v2214
  %v2852 = vunpack.c.h.b16 %v2214
  %v2853 = vunpack.c.l.b16 %v2215
  %v2854 = vunpack.c.h.b16 %v2215
  %v2855 = vunpack.c.l.b16 %v2216
  %v2856 = vunpack.c.l.b16 %v2217
  %v2857 = vunpack.c.h.b16 %v2217
  %v2858 = vunpack.c.l.b16 %v2218
  %v2859 = vunpack.c.h.b16 %v2218
  %v2860 = vunpack.c.l.b16 %v2219
  %v2861 = vunpack.c.h.b16 %v2219
  %v2862 = vunpack.c.l.b16 %v2220
  %v2863 = vunpack.c.l.b16 %v2221
  %v2864 = vunpack.c.h.b16 %v2221
  %v2865 = vunpack.c.l.b16 %v2222
  %v2866 = vunpack.c.h.b16 %v2222
  %v2867 = vunpack.c.l.b16 %v2223
  %v2868 = vunpack.c.h.b16 %v2223
  %v2869 = vunpack.c.l.b16 %v2224
  %v2870 = vunpack.c.l.b16 %v2225
  %v2871 = vunpack.c.h.b16 %v2225
  %v2872 = vunpack.c.l.b16 %v2226
  %v2873 = vunpack.c.h.b16 %v2226
  %v2874 = vunpack.c.l.b16 %v2227
  %v2875 = vunpack.c.h.b16 %v2227
  %v2876 = vunpack.c.l.b16 %v2228
  %v2877 = vunpack.c.l.b16 %v2229
  %v2878 = vunpack.c.h.b16 %v2229
  %v2879 = vunpack.c.l.b16 %v2230
  %v2880 = vunpack.c.h.b16 %v2230
  %v2881 = vunpack.c.l.b16 %v2231
  %v2882 = vunpack.c.h.b16 %v2231
  %v2883 = vunpack.c.l.b16 %v2232
  %v2884 = vunpack.c.l.b16 %v2233
  %v2885 = vunpack.c.h.b16 %v2233
  %v2886 = vunpack.c.l.b16 %v2234
  %v2887 = vunpack.c.h.b16 %v2234
  %v2888 = vunpack.c.l.b16 %v2235
  %v2889 = vunpack.c.h.b16 %v2235
  %v2890 = vunpack.c.l.b16 %v2236
  %v2891 = vunpack.c.l.b16 %v2237
  %v2892 = vunpack.c.h.b16 %v2237
  %v2893 = vunpack.c.l.b16 %v2238
  %v2894 = vunpack.c.h.b16 %v2238
  %v2895 = vunpack.c.l.b16 %v2239
  %v2896 = vunpack.c.h.b16 %v2239
  %v2897 = vunpack.c.l.b16 %v2240
  %v2898 = vunpack.c.l.b16 %v2241
  %v2899 = vunpack.c.h.b16 %v2241
  %v2900 = vunpack.c.l.b16 %v2242
  %v2901 = vunpack.c.h.b16 %v2242
  %v2902 = vunpack.c.l.b16 %v2243
  %v2903 = vunpack.c.h.b16 %v2243
  %v2904 = vunpack.c.l.b16 %v2244
  %v2905 = vunpack.c.l.b16 %v2245
  %v2906 = vunpack.c.h.b16 %v2245
  %v2907 = vunpack.c.l.b16 %v2246
  %v2908 = vunpack.c.h.b16 %v2246
  %v2909 = vunpack.c.l.b16 %v2247
  %v2910 = vunpack.c.h.b16 %v2247
  %v2911 = vunpack.c.l.b16 %v2248
  %v2912 = vunpack.c.l.b16 %v2249
  %v2913 = vunpack.c.h.b16 %v2249
  %v2914 = vunpack.c.l.b16 %v2250
  %v2915 = vunpack.c.h.b16 %v2250
  %v2916 = vunpack.c.l.b16 %v2251
  %v2917 = vunpack.c.h.b16 %v2251
  %v2918 = vunpack.c.l.b16 %v2252
  %v2919 = vunpack.c.l.b16 %v2253
  %v2920 = vunpack.c.h.b16 %v2253
  %v2921 = vunpack.c.l.b16 %v2254
  %v2922 = vunpack.c.h.b16 %v2254
  %v2923 = vunpack.c.l.b16 %v2255
  %v2924 = vunpack.c.h.b16 %v2255
  %v2925 = vunpack.c.l.b16 %v2256
  %v2926 = vunpack.c.l.b16 %v2257
  %v2927 = vunpack.c.h.b16 %v2257
  %v2928 = vunpack.c.l.b16 %v2258
  %v2929 = vunpack.c.h.b16 %v2258
  %v2930 = vunpack.c.l.b16 %v2259
  %v2931 = vunpack.c.h.b16 %v2259
  %v2932 = vunpack.c.l.b16 %v2260
  %v2933 = vunpack.c.l.b16 %v2261
  %v2934 = vunpack.c.h.b16 %v2261
  %v2935 = vunpack.c.l.b16 %v2262
  %v2936 = vunpack.c.h.b16 %v2262
  %v2937 = vunpack.c.l.b16 %v2263
  %v2938 = vunpack.c.h.b16 %v2263
  %v2939 = vunpack.c.l.b16 %v2264
  %v2940 = vunpack.c.l.b16 %v2265
  %v2941 = vunpack.c.h.b16 %v2265
  %v2942 = vunpack.c.l.b16 %v2266
  %v2943 = vunpack.c.h.b16 %v2266
  %v2944 = vunpack.c.l.b16 %v2267
  %v2945 = vunpack.c.h.b16 %v2267
  %v2946 = vunpack.c.l.b16 %v2268
  %v2947 = vunpack.c.l.b16 %v2269
  %v2948 = vunpack.c.h.b16 %v2269
  %v2949 = vunpack.c.l.b16 %v2270
  %v2950 = vunpack.c.h.b16 %v2270
  %v2951 = vunpack.c.l.b16 %v2271
  %v2952 = vunpack.c.h.b16 %v2271
  %v2953 = vunpack.c.l.b16 %v2272
  %v2954 = vunpack.c.l.b16 %v2273
  %v2955 = vunpack.c.h.b16 %v2273
  %v2956 = vunpack.c.l.b16 %v2274
  %v2957 = vunpack.c.h.b16 %v2274
  %v2958 = vunpack.c.l.b16 %v2275
  %v2959 = vunpack.c.h.b16 %v2275
  %v2960 = vunpack.c.l.b16 %v2276
  %v2961 = vunpack.c.l.b16 %v2277
  %v2962 = vunpack.c.h.b16 %v2277
  %v2963 = vunpack.c.l.b16 %v2278
  %v2964 = vunpack.c.h.b16 %v2278
  %v2965 = vunpack.c.l.b16 %v2279
  %v2966 = vunpack.c.h.b16 %v2279
  %v2967 = vunpack.c.l.b16 %v2280
  %v2968 = vunpack.c.l.b16 %v2281
  %v2969 = vunpack.c.h.b16 %v2281
  %v2970 = vunpack.c.l.b16 %v2282
  %v2971 = vunpack.c.h.b16 %v2282
  %v2972 = vunpack.c.l.b16 %v2283
  %v2973 = vunpack.c.h.b16 %v2283
  %v2974 = vunpack.c.l.b16 %v2284
  %v2975 = vunpack.c.l.b16 %v2285
  %v2976 = vunpack.c.h.b16 %v2285
  %v2977 = vunpack.c.l.b16 %v2286
  %v2978 = vunpack.c.h.b16 %v2286
  %v2979 = vunpack.c.l.b16 %v2287
  %v2980 = vunpack.c.h.b16 %v2287
  %v2981 = vunpack.c.l.b16 %v2288
  %v2982 = vunpack.c.l.b16 %v2289
  %v2983 = vunpack.c.h.b16 %v2289
  %v2984 = vunpack.c.l.b16 %v2290
  %v2985 = vunpack.c.h.b16 %v2290
  %v2986 = vunpack.c.l.b16 %v2291
  %v2987 = vunpack.c.h.b16 %v2291
  %v2988 = vunpack.c.l.b16 %v2292
  %v2989 = vunpack.c.l.b16 %v2293
  %v2990 = vunpack.c.h.b16 %v2293
  %v2991 = vunpack.c.l.b16 %v2294
  %v2992 = vunpack.c.h.b16 %v2294
  %v2993 = vunpack.c.l.b16 %v2295
  %v2994 = vunpack.c.h.b16 %v2295
  %v2995 = vunpack.c.l.b16 %v2296
  %v2996 = vunpack.c.l.b16 %v2297
  %v2997 = vunpack.c.h.b16 %v2297
  %v2998 = vunpack.c.l.b16 %v2298
  %v2999 = vunpack.c.h.b16 %v2298
  %v3000 = vunpack.c.l.b16 %v2299
  %v3001 = vunpack.c.h.b16 %v2299
  %v3002 = vunpack.c.l.b16 %v2300
  %v3003 = vunpack.c.l.b16 %v2301
  %v3004 = vunpack.c.h.b16 %v2301
  %v3005 = vunpack.c.l.b16 %v2302
  %v3006 = vunpack.c.h.b16 %v2302
  %v3007 = vunpack.c.l.b16 %v2303
  %v3008 = vunpack.c.h.b16 %v2303
  %v3009 = vunpack.c.l.b16 %v2304
  %v3010 = vunpack.c.l.b16 %v2305
  %v3011 = vunpack.c.h.b16 %v2305
  %v3012 = vunpack.c.l.b16 %v2306
  %v3013 = vunpack.c.h.b16 %v2306
  %v3014 = vunpack.c.l.b16 %v2307
  %v3015 = vunpack.c.h.b16 %v2307
  %v3016 = vunpack.c.l.b16 %v2308
  %v3017 = vunpack.c.l.b16 %v2309
  %v3018 = vunpack.c.h.b16 %v2309
  %v3019 = vunpack.c.l.b16 %v2310
  %v3020 = vunpack.c.h.b16 %v2310
  %v3021 = vunpack.c.l.b16 %v2311
  %v3022 = vunpack.c.h.b16 %v2311
  %v3023 = vunpack.c.l.b16 %v2312
  %v3024 = vunpack.c.l.b16 %v2313
  %v3025 = vunpack.c.h.b16 %v2313
  %v3026 = vunpack.c.l.b16 %v2314
  %v3027 = vunpack.c.h.b16 %v2314
  %v3028 = vunpack.c.l.b16 %v2315
  %v3029 = vunpack.c.h.b16 %v2315
  %v3030 = vunpack.c.l.b16 %v2316
  %v3031 = vunpack.c.l.b16 %v2317
  %v3032 = vunpack.c.h.b16 %v2317
  %v3033 = vunpack.c.l.b16 %v2318
  %v3034 = vunpack.c.h.b16 %v2318
  %v3035 = vunpack.c.l.b16 %v2319
  %v3036 = vunpack.c.h.b16 %v2319
  %v3037 = vunpack.c.l.b16 %v2320
  %v3038 = vunpack.c.l.b16 %v2321
  %v3039 = vunpack.c.h.b16 %v2321
  %v3040 = vunpack.c.l.b16 %v2322
  %v3041 = vunpack.c.h.b16 %v2322
  %v3042 = vunpack.c.l.b16 %v2323
  %v3043 = vunpack.c.h.b16 %v2323
  %v3044 = vunpack.c.l.b16 %v2324
  %v3045 = vunpack.c.l.b16 %v2325
  %v3046 = vunpack.c.h.b16 %v2325
  %v3047 = vunpack.c.l.b16 %v2326
  %v3048 = vunpack.c.h.b16 %v2326
  %v3049 = vunpack.c.l.b16 %v2327
  %v3050 = vunpack.c.h.b16 %v2327
  %v3051 = vunpack.c.l.b16 %v2328
  %v3052 = vunpack.c.l.b16 %v2329
  %v3053 = vunpack.c.h.b16 %v2329
  %v3054 = vunpack.c.l.b16 %v2330
  %v3055 = vunpack.c.h.b16 %v2330
  %v3056 = vunpack.c.l.b16 %v2331
  %v3057 = vunpack.c.h.b16 %v2331
  %v3058 = vunpack.c.l.b16 %v2332
  %v3059 = vunpack.c.l.b16 %v2333
  %v3060 = vunpack.c.h.b16 %v2333
  %v3061 = vunpack.c.l.b16 %v2334
  %v3062 = vunpack.c.h.b16 %v2334
  %v3063 = vunpack.c.l.b16 %v2335
  %v3064 = vunpack.c.h.b16 %v2335
  %v3065 = vunpack.c.l.b16 %v2336
  %v3066 = vunpack.c.l.b16 %v2337
  %v3067 = vunpack.c.h.b16 %v2337
  %v3068 = vunpack.c.l.b16 %v2338
  %v3069 = vunpack.c.h.b16 %v2338
  %v3070 = vunpack.c.l.b16 %v2339
  %v3071 = vunpack.c.h.b16 %v2339
  %v3072 = vunpack.c.l.b16 %v2340
  %v3073 = vunpack.c.l.b16 %v2341
  %v3074 = vunpack.c.h.b16 %v2341
  %v3075 = vunpack.c.l.b16 %v2342
  %v3076 = vunpack.c.h.b16 %v2342
  %v3077 = vunpack.c.l.b16 %v2343
  %v3078 = vunpack.c.h.b16 %v2343
  %v3079 = vunpack.c.l.b16 %v2344
  %v3080 = vunpack.c.l.b16 %v2345
  %v3081 = vunpack.c.h.b16 %v2345
  %v3082 = vunpack.c.l.b16 %v2346
  %v3083 = vunpack.c.h.b16 %v2346
  %v3084 = vunpack.c.l.b16 %v2347
  %v3085 = vunpack.c.h.b16 %v2347
  %v3086 = vunpack.c.l.b16 %v2348
  %v3087 = vunpack.c.l.b16 %v2349
  %v3088 = vunpack.c.h.b16 %v2349
  %v3089 = vunpack.c.l.b16 %v2350
  %v3090 = vunpack.c.h.b16 %v2350
  %v3091 = vunpack.c.l.b16 %v2351
  %v3092 = vunpack.c.h.b16 %v2351
  %v3093 = vunpack.c.l.b16 %v2352
  %v3094 = vpack.c.b16 %v2653, %v2646
  %v3095 = vpack.c.b16 %v2654, %v2647
  %v3096 = vpack.c.b16 %v2655, %v2648
  %v3097 = vpack.c.b16 %v2656, %v2649
  %v3098 = vpack.c.b16 %v2657, %v2650
  %v3099 = vpack.c.b16 %v2658, %v2651
  %v3100 = vpack.c.b16 %v2659, %v2652
  %v3101 = vpack.c.b16 %v2667, %v2660
  %v3102 = vpack.c.b16 %v2668, %v2661
  %v3103 = vpack.c.b16 %v2669, %v2662
  %v3104 = vpack.c.b16 %v2670, %v2663
  %v3105 = vpack.c.b16 %v2671, %v2664
  %v3106 = vpack.c.b16 %v2672, %v2665
  %v3107 = vpack.c.b16 %v2673, %v2666
  %v3108 = vpack.c.b16 %v2681, %v2674
  %v3109 = vpack.c.b16 %v2682, %v2675
  %v3110 = vpack.c.b16 %v2683, %v2676
  %v3111 = vpack.c.b16 %v2684, %v2677
  %v3112 = vpack.c.b16 %v2685, %v2678
  %v3113 = vpack.c.b16 %v2686, %v2679
  %v3114 = vpack.c.b16 %v2687, %v2680
  %v3115 = vpack.c.b16 %v2695, %v2688
  %v3116 = vpack.c.b16 %v2696, %v2689
  %v3117 = vpack.c.b16 %v2697, %v2690
  %v3118 = vpack.c.b16 %v2698, %v2691
  %v3119 = vpack.c.b16 %v2699, %v2692
  %v3120 = vpack.c.b16 %v2700, %v2693
  %v3121 = vpack.c.b16 %v2701, %v2694
  %v3122 = vpack.c.b16 %v2709, %v2702
  %v3123 = vpack.c.b16 %v2710, %v2703
  %v3124 = vpack.c.b16 %v2711, %v2704
  %v3125 = vpack.c.b16 %v2712, %v2705
  %v3126 = vpack.c.b16 %v2713, %v2706
  %v3127 = vpack.c.b16 %v2714, %v2707
  %v3128 = vpack.c.b16 %v2715, %v2708
  %v3129 = vpack.c.b16 %v2723, %v2716
  %v3130 = vpack.c.b16 %v2724, %v2717
  %v3131 = vpack.c.b16 %v2725, %v2718
  %v3132 = vpack.c.b16 %v2726, %v2719
  %v3133 = vpack.c.b16 %v2727, %v2720
  %v3134 = vpack.c.b16 %v2728, %v2721
  %v3135 = vpack.c.b16 %v2729, %v2722
  %v3136 = vpack.c.b16 %v2737, %v2730
  %v3137 = vpack.c.b16 %v2738, %v2731
  %v3138 = vpack.c.b16 %v2739, %v2732
  %v3139 = vpack.c.b16 %v2740, %v2733
  %v3140 = vpack.c.b16 %v2741, %v2734
  %v3141 = vpack.c.b16 %v2742, %v2735
  %v3142 = vpack.c.b16 %v2743, %v2736
  %v3143 = vpack.c.b16 %v2751, %v2744
  %v3144 = vpack.c.b16 %v2752, %v2745
  %v3145 = vpack.c.b16 %v2753, %v2746
  %v3146 = vpack.c.b16 %v2754, %v2747
  %v3147 = vpack.c.b16 %v2755, %v2748
  %v3148 = vpack.c.b16 %v2756, %v2749
  %v3149 = vpack.c.b16 %v2757, %v2750
  %v3150 = vpack.c.b16 %v2765, %v2758
  %v3151 = vpack.c.b16 %v2766, %v2759
  %v3152 = vpack.c.b16 %v2767, %v2760
  %v3153 = vpack.c.b16 %v2768, %v2761
  %v3154 = vpack.c.b16 %v2769, %v2762
  %v3155 = vpack.c.b16 %v2770, %v2763
  %v3156 = vpack.c.b16 %v2771, %v2764
  %v3157 = vpack.c.b16 %v2779, %v2772
  %v3158 = vpack.c.b16 %v2780, %v2773
  %v3159 = vpack.c.b16 %v2781, %v2774
  %v3160 = vpack.c.b16 %v2782, %v2775
  %v3161 = vpack.c.b16 %v2783, %v2776
  %v3162 = vpack.c.b16 %v2784, %v2777
  %v3163 = vpack.c.b16 %v2785, %v2778
  %v3164 = vpack.c.b16 %v2793, %v2786
  %v3165 = vpack.c.b16 %v2794, %v2787
  %v3166 = vpack.c.b16 %v2795, %v2788
  %v3167 = vpack.c.b16 %v2796, %v2789
  %v3168 = vpack.c.b16 %v2797, %v2790
  %v3169 = vpack.c.b16 %v2798, %v2791
  %v3170 = vpack.c.b16 %v2799, %v2792
  %v3171 = vpack.c.b16 %v2807, %v2800
  %v3172 = vpack.c.b16 %v2808, %v2801
  %v3173 = vpack.c.b16 %v2809, %v2802
  %v3174 = vpack.c.b16 %v2810, %v2803
  %v3175 = vpack.c.b16 %v2811, %v2804
  %v3176 = vpack.c.b16 %v2812, %v2805
  %v3177 = vpack.c.b16 %v2813, %v2806
  %v3178 = vpack.c.b16 %v2821, %v2814
  %v3179 = vpack.c.b16 %v2822, %v2815
  %v3180 = vpack.c.b16 %v2823, %v2816
  %v3181 = vpack.c.b16 %v2824, %v2817
  %v3182 = vpack.c.b16 %v2825, %v2818
  %v3183 = vpack.c.b16 %v2826, %v2819
  %v3184 = vpack.c.b16 %v2827, %v2820
  %v3185 = vpack.c.b16 %v2835, %v2828
  %v3186 = vpack.c.b16 %v2836, %v2829
  %v3187 = vpack.c.b16 %v2837, %v2830
  %v3188 = vpack.c.b16 %v2838, %v2831
  %v3189 = vpack.c.b16 %v2839, %v2832
  %v3190 = vpack.c.b16 %v2840, %v2833
  %v3191 = vpack.c.b16 %v2841, %v2834
  %v3192 = vpack.c.b16 %v2849, %v2842
  %v3193 = vpack.c.b16 %v2850, %v2843
  %v3194 = vpack.c.b16 %v2851, %v2844
  %v3195 = vpack.c.b16 %v2852, %v2845
  %v3196 = vpack.c.b16 %v2853, %v2846
  %v3197 = vpack.c.b16 %v2854, %v2847
  %v3198 = vpack.c.b16 %v2855, %v2848
  %v3199 = vpack.c.b16 %v2863, %v2856
  %v3200 = vpack.c.b16 %v2864, %v2857
  %v3201 = vpack.c.b16 %v2865, %v2858
  %v3202 = vpack.c.b16 %v2866, %v2859
  %v3203 = vpack.c.b16 %v2867, %v2860
  %v3204 = vpack.c.b16 %v2868, %v2861
  %v3205 = vpack.c.b16 %v2869, %v2862
  %v3206 = vpack.c.b16 %v2877, %v2870
  %v3207 = vpack.c.b16 %v2878, %v2871
  %v3208 = vpack.c.b16 %v2879, %v2872
  %v3209 = vpack.c.b16 %v2880, %v2873
  %v3210 = vpack.c.b16 %v2881, %v2874
  %v3211 = vpack.c.b16 %v2882, %v2875
  %v3212 = vpack.c.b16 %v2883, %v2876
  %v3213 = vpack.c.b16 %v2891, %v2884
  %v3214 = vpack.c.b16 %v2892, %v2885
  %v3215 = vpack.c.b16 %v2893, %v2886
  %v3216 = vpack.c.b16 %v2894, %v2887
  %v3217 = vpack.c.b16 %v2895, %v2888
  %v3218 = vpack.c.b16 %v2896, %v2889
  %v3219 = vpack.c.b16 %v2897, %v2890
  %v3220 = vpack.c.b16 %v2905, %v2898
  %v3221 = vpack.c.b16 %v2906, %v2899
  %v3222 = vpack.c.b16 %v2907, %v2900
  %v3223 = vpack.c.b16 %v2908, %v2901
  %v3224 = vpack.c.b16 %v2909, %v2902
  %v3225 = vpack.c.b16 %v2910, %v2903
  %v3226 = vpack.c.b16 %v2911, %v2904
  %v3227 = vpack.c.b16 %v2919, %v2912
  %v3228 = vpack.c.b16 %v2920, %v2913
  %v3229 = vpack.c.b16 %v2921, %v2914
  %v3230 = vpack.c.b16 %v2922, %v2915
  %v3231 = vpack.c.b16 %v2923, %v2916
  %v3232 = vpack.c.b16 %v2924, %v2917
  %v3233 = vpack.c.b16 %v2925, %v2918
  %v3234 = vpack.c.b16 %v2933, %v2926
  %v3235 = vpack.c.b16 %v2934, %v2927
  %v3236 = vpack.c.b16 %v2935, %v2928
  %v3237 = vpack.c.b16 %v2936, %v2929
  %v3238 = vpack.c.b16 %v2937, %v2930
  %v3239 = vpack.c.b16 %v2938, %v2931
  %v3240 = vpack.c.b16 %v2939, %v2932
  %v3241 = vpack.c.b16 %v2947, %v2940
  %v3242 = vpack.c.b16 %v2948, %v2941
  %v3243 = vpack.c.b16 %v2949, %v2942
  %v3244 = vpack.c.b16 %v2950, %v2943
  %v3245 = vpack.c.b16 %v2951, %v2944
  %v3246 = vpack.c.b16 %v2952, %v2945
  %v3247 = vpack.c.b16 %v2953, %v2946
  %v3248 = vpack.c.b16 %v2961, %v2954
  %v3249 = vpack.c.b16 %v2962, %v2955
  %v3250 = vpack.c.b16 %v2963, %v2956
  %v3251 = vpack.c.b16 %v2964, %v2957
  %v3252 = vpack.c.b16 %v2965, %v2958
  %v3253 = vpack.c.b16 %v2966, %v2959
  %v3254 = vpack.c.b16 %v2967, %v2960
  %v3255 = vpack.c.b16 %v2975, %v2968
  %v3256 = vpack.c.b16 %v2976, %v2969
  %v3257 = vpack.c.b16 %v2977, %v2970
  %v3258 = vpack.c.b16 %v2978, %v2971
  %v3259 = vpack.c.b16 %v2979, %v2972
  %v3260 = vpack.c.b16 %v2980, %v2973
  %v3261 = vpack.c.b16 %v2981, %v2974
  %v3262 = vpack.c.b16 %v2989, %v2982
  %v3263 = vpack.c.b16 %v2990, %v2983
  %v3264 = vpack.c.b16 %v2991, %v2984
  %v3265 = vpack.c.b16 %v2992, %v2985
  %v3266 = vpack.c.b16 %v2993, %v2986
  %v3267 = vpack.c.b16 %v2994, %v2987
  %v3268 = vpack.c.b16 %v2995, %v2988
  %v3269 = vpack.c.b16 %v3003, %v2996
  %v3270 = vpack.c.b16 %v3004, %v2997
  %v3271 = vpack.c.b16 %v3005, %v2998
  %v3272 = vpack.c.b16 %v3006, %v2999
  %v3273 = vpack.c.b16 %v3007, %v3000
  %v3274 = vpack.c.b16 %v3008, %v3001
  %v3275 = vpack.c.b16 %v3009, %v3002
  %v3276 = vpack.c.b16 %v3017, %v3010
  %v3277 = vpack.c.b16 %v3018, %v3011
  %v3278 = vpack.c.b16 %v3019, %v3012
  %v3279 = vpack.c.b16 %v3020, %v3013
  %v3280 = vpack.c.b16 %v3021, %v3014
  %v3281 = vpack.c.b16 %v3022, %v3015
  %v3282 = vpack.c.b16 %v3023, %v3016
  %v3283 = vpack.c.b16 %v3031, %v3024
  %v3284 = vpack.c.b16 %v3032, %v3025
  %v3285 = vpack.c.b16 %v3033, %v3026
  %v3286 = vpack.c.b16 %v3034, %v3027
  %v3287 = vpack.c.b16 %v3035, %v3028
  %v3288 = vpack.c.b16 %v3036, %v3029
  %v3289 = vpack.c.b16 %v3037, %v3030
  %v3290 = vpack.c.b16 %v3045, %v3038
  %v3291 = vpack.c.b16 %v3046, %v3039
  %v3292 = vpack.c.b16 %v3047, %v3040
  %v3293 = vpack.c.b16 %v3048, %v3041
  %v3294 = vpack.c.b16 %v3049, %v3042
  %v3295 = vpack.c.b16 %v3050, %v3043
  %v3296 = vpack.c.b16 %v3051, %v3044
  %v3297 = vpack.c.b16 %v3059, %v3052
  %v3298 = vpack.c.b16 %v3060, %v3053
  %v3299 = vpack.c.b16 %v3061, %v3054
  %v3300 = vpack.c.b16 %v3062, %v3055
  %v3301 = vpack.c.b16 %v3063, %v3056
  %v3302 = vpack.c.b16 %v3064, %v3057
  %v3303 = vpack.c.b16 %v3065, %v3058
  %v3304 = vpack.c.b16 %v3073, %v3066
  %v3305 = vpack.c.b16 %v3074, %v3067
  %v3306 = vpack.c.b16 %v3075, %v3068
  %v3307 = vpack.c.b16 %v3076, %v3069
  %v3308 = vpack.c.b16 %v3077, %v3070
  %v3309 = vpack.c.b16 %v3078, %v3071
  %v3310 = vpack.c.b16 %v3079, %v3072
  %v3311 = vpack.c.b16 %v3087, %v3080
  %v3312 = vpack.c.b16 %v3088, %v3081
  %v3313 = vpack.c.b16 %v3089, %v3082
  %v3314 = vpack.c.b16 %v3090, %v3083
  %v3315 = vpack.c.b16 %v3091, %v3084
  %v3316 = vpack.c.b16 %v3092, %v3085
  %v3317 = vpack.c.b16 %v3093, %v3086
  %3542 = vmatprep.subr.bf16.mxu0 %v3095
  %3543 = vmatpush1.bf16.msra.mxu0 %v3094
  %3544 = vmatprep.subr.bf16.mxu0 %v3102
  %3545 = vmatpush1.bf16.msra.mxu0 %v3101
  %3546 = vmatprep.subr.bf16.mxu0 %v3109
  %3547 = vmatpush1.bf16.msra.mxu0 %v3108
  %3548 = vmatprep.subr.bf16.mxu0 %v3116
  %3549 = vmatpush1.bf16.msra.mxu0 %v3115
  %3550 = vmatprep.subr.bf16.mxu0 %v3123
  %3551 = vmatpush1.bf16.msra.mxu0 %v3122
  %3552 = vmatprep.subr.bf16.mxu0 %v3130
  %3553 = vmatpush1.bf16.msra.mxu0 %v3129
  %3554 = vmatprep.subr.bf16.mxu0 %v3137
  %3555 = vmatpush1.bf16.msra.mxu0 %v3136
  %3556 = vmatprep.subr.bf16.mxu0 %v3144
  %3557 = vmatpush1.bf16.msra.mxu0 %v3143
  %3558 = vmatprep.subr.bf16.mxu0 %v3151
  %3559 = vmatpush1.bf16.msra.mxu0 %v3150
  %3560 = vmatprep.subr.bf16.mxu0 %v3158
  %3561 = vmatpush1.bf16.msra.mxu0 %v3157
  %3562 = vmatprep.subr.bf16.mxu0 %v3165
  %3563 = vmatpush1.bf16.msra.mxu0 %v3164
  %3564 = vmatprep.subr.bf16.mxu0 %v3172
  %3565 = vmatpush1.bf16.msra.mxu0 %v3171
  %3566 = vmatprep.subr.bf16.mxu0 %v3179
  %3567 = vmatpush1.bf16.msra.mxu0 %v3178
  %3568 = vmatprep.subr.bf16.mxu0 %v3186
  %3569 = vmatpush1.bf16.msra.mxu0 %v3185
  %3570 = vmatprep.subr.bf16.mxu0 %v3193
  %3571 = vmatpush1.bf16.msra.mxu0 %v3192
  %3572 = vmatprep.subr.bf16.mxu0 %v3200
  %3573 = vmatpush1.bf16.msra.mxu0 %v3199
  %3574 = vmatprep.mubr.bf16.mxu0 %v2094
  %3575 = vmatmul.mubr.bf16.gmra.mrb[0].mxu0 %v2093
  %v3576 = vpop.f32.mrb[0].mxu0
  %v3577 = vadd.f32 %v2358, %v3576
  %v3578 = vpop.f32.mrb[0].mxu0
  %v3579 = vadd.f32 %v2362, %v3578
  %v3580 = vpop.f32.mrb[0].mxu0
  %v3581 = vpop.f32.mrb[0].mxu0
  %3582 = vdwg.mxu0
  %3583 = vmatprep.subr.bf16.mxu0 %v3207
  %3584 = vmatpush1.bf16.msra.mxu0 %v3206
  %3585 = vmatprep.subr.bf16.mxu0 %v3214
  %3586 = vmatpush1.bf16.msra.mxu0 %v3213
  %3587 = vmatprep.subr.bf16.mxu0 %v3221
  %3588 = vmatpush1.bf16.msra.mxu0 %v3220
  %3589 = vmatprep.subr.bf16.mxu0 %v3228
  %3590 = vmatpush1.bf16.msra.mxu0 %v3227
  %3591 = vmatprep.subr.bf16.mxu0 %v3235
  %3592 = vmatpush1.bf16.msra.mxu0 %v3234
  %3593 = vmatprep.subr.bf16.mxu0 %v3242
  %3594 = vmatpush1.bf16.msra.mxu0 %v3241
  %3595 = vmatprep.subr.bf16.mxu0 %v3249
  %3596 = vmatpush1.bf16.msra.mxu0 %v3248
  %3597 = vmatprep.subr.bf16.mxu0 %v3256
  %3598 = vmatpush1.bf16.msra.mxu0 %v3255
  %3599 = vmatprep.subr.bf16.mxu0 %v3263
  %3600 = vmatpush1.bf16.msra.mxu0 %v3262
  %3601 = vmatprep.subr.bf16.mxu0 %v3270
  %3602 = vmatpush1.bf16.msra.mxu0 %v3269
  %3603 = vmatprep.subr.bf16.mxu0 %v3277
  %3604 = vmatpush1.bf16.msra.mxu0 %v3276
  %3605 = vmatprep.subr.bf16.mxu0 %v3284
  %3606 = vmatpush1.bf16.msra.mxu0 %v3283
  %3607 = vmatprep.subr.bf16.mxu0 %v3291
  %3608 = vmatpush1.bf16.msra.mxu0 %v3290
  %3609 = vmatprep.subr.bf16.mxu0 %v3298
  %3610 = vmatpush1.bf16.msra.mxu0 %v3297
  %3611 = vmatprep.subr.bf16.mxu0 %v3305
  %3612 = vmatpush1.bf16.msra.mxu0 %v3304
  %3613 = vmatprep.subr.bf16.mxu0 %v3312
  %3614 = vmatpush1.bf16.msra.mxu0 %v3311
  %3615 = vmatprep.mubr.bf16.mxu0 %v2096
  %3616 = vmatmul.mubr.bf16.gmra.mrb[0].mxu0 %v2095
  %v3617 = vpop.f32.mrb[0].mxu0
  %v3618 = vadd.f32 %v3577, %v3617
  %v3619 = vpop.f32.mrb[0].mxu0
  %v3620 = vadd.f32 %v3579, %v3619
  %v3621 = vpop.f32.mrb[0].mxu0
  %v3622 = vpop.f32.mrb[0].mxu0
  %3623 = vdwg.mxu0
  %3624 = vmatprep.subr.bf16.mxu0 %v3097
  %3625 = vmatpush1.bf16.msra.mxu0 %v3096
  %3626 = vmatprep.subr.bf16.mxu0 %v3104
  %3627 = vmatpush1.bf16.msra.mxu0 %v3103
  %3628 = vmatprep.subr.bf16.mxu0 %v3111
  %3629 = vmatpush1.bf16.msra.mxu0 %v3110
  %3630 = vmatprep.subr.bf16.mxu0 %v3118
  %3631 = vmatpush1.bf16.msra.mxu0 %v3117
  %3632 = vmatprep.subr.bf16.mxu0 %v3125
  %3633 = vmatpush1.bf16.msra.mxu0 %v3124
  %3634 = vmatprep.subr.bf16.mxu0 %v3132
  %3635 = vmatpush1.bf16.msra.mxu0 %v3131
  %3636 = vmatprep.subr.bf16.mxu0 %v3139
  %3637 = vmatpush1.bf16.msra.mxu0 %v3138
  %3638 = vmatprep.subr.bf16.mxu0 %v3146
  %3639 = vmatpush1.bf16.msra.mxu0 %v3145
  %3640 = vmatprep.subr.bf16.mxu0 %v3153
  %3641 = vmatpush1.bf16.msra.mxu0 %v3152
  %3642 = vmatprep.subr.bf16.mxu0 %v3160
  %3643 = vmatpush1.bf16.msra.mxu0 %v3159
  %3644 = vmatprep.subr.bf16.mxu0 %v3167
  %3645 = vmatpush1.bf16.msra.mxu0 %v3166
  %3646 = vmatprep.subr.bf16.mxu0 %v3174
  %3647 = vmatpush1.bf16.msra.mxu0 %v3173
  %3648 = vmatprep.subr.bf16.mxu0 %v3181
  %3649 = vmatpush1.bf16.msra.mxu0 %v3180
  %3650 = vmatprep.subr.bf16.mxu0 %v3188
  %3651 = vmatpush1.bf16.msra.mxu0 %v3187
  %3652 = vmatprep.subr.bf16.mxu0 %v3195
  %3653 = vmatpush1.bf16.msra.mxu0 %v3194
  %3654 = vmatprep.subr.bf16.mxu0 %v3202
  %3655 = vmatpush1.bf16.msra.mxu0 %v3201
  %3656 = vmatprep.mubr.bf16.mxu0 %v2094
  %3657 = vmatmul.mubr.bf16.gmra.mrb[0].mxu0 %v2093
  %v3658 = vpop.f32.mrb[0].mxu0
  %v3659 = vadd.f32 %v2366, %v3658
  %v3660 = vpop.f32.mrb[0].mxu0
  %v3661 = vadd.f32 %v2370, %v3660
  %v3662 = vpop.f32.mrb[0].mxu0
  %v3663 = vpop.f32.mrb[0].mxu0
  %3664 = vdwg.mxu0
  %3665 = vmatprep.subr.bf16.mxu0 %v3209
  %3666 = vmatpush1.bf16.msra.mxu0 %v3208
  %3667 = vmatprep.subr.bf16.mxu0 %v3216
  %3668 = vmatpush1.bf16.msra.mxu0 %v3215
  %3669 = vmatprep.subr.bf16.mxu0 %v3223
  %3670 = vmatpush1.bf16.msra.mxu0 %v3222
  %3671 = vmatprep.subr.bf16.mxu0 %v3230
  %3672 = vmatpush1.bf16.msra.mxu0 %v3229
  %3673 = vmatprep.subr.bf16.mxu0 %v3237
  %3674 = vmatpush1.bf16.msra.mxu0 %v3236
  %3675 = vmatprep.subr.bf16.mxu0 %v3244
  %3676 = vmatpush1.bf16.msra.mxu0 %v3243
  %3677 = vmatprep.subr.bf16.mxu0 %v3251
  %3678 = vmatpush1.bf16.msra.mxu0 %v3250
  %3679 = vmatprep.subr.bf16.mxu0 %v3258
  %3680 = vmatpush1.bf16.msra.mxu0 %v3257
  %3681 = vmatprep.subr.bf16.mxu0 %v3265
  %3682 = vmatpush1.bf16.msra.mxu0 %v3264
  %3683 = vmatprep.subr.bf16.mxu0 %v3272
  %3684 = vmatpush1.bf16.msra.mxu0 %v3271
  %3685 = vmatprep.subr.bf16.mxu0 %v3279
  %3686 = vmatpush1.bf16.msra.mxu0 %v3278
  %3687 = vmatprep.subr.bf16.mxu0 %v3286
  %3688 = vmatpush1.bf16.msra.mxu0 %v3285
  %3689 = vmatprep.subr.bf16.mxu0 %v3293
  %3690 = vmatpush1.bf16.msra.mxu0 %v3292
  %3691 = vmatprep.subr.bf16.mxu0 %v3300
  %3692 = vmatpush1.bf16.msra.mxu0 %v3299
  %3693 = vmatprep.subr.bf16.mxu0 %v3307
  %3694 = vmatpush1.bf16.msra.mxu0 %v3306
  %3695 = vmatprep.subr.bf16.mxu0 %v3314
  %3696 = vmatpush1.bf16.msra.mxu0 %v3313
  %3697 = vmatprep.mubr.bf16.mxu0 %v2096
  %3698 = vmatmul.mubr.bf16.gmra.mrb[0].mxu0 %v2095
  %v3699 = vpop.f32.mrb[0].mxu0
  %v3700 = vadd.f32 %v3659, %v3699
  %v3701 = vpop.f32.mrb[0].mxu0
  %v3702 = vadd.f32 %v3661, %v3701
  %v3703 = vpop.f32.mrb[0].mxu0
  %v3704 = vpop.f32.mrb[0].mxu0
  %3705 = vdwg.mxu0
  %3706 = vmatprep.subr.bf16.mxu0 %v3099
  %3707 = vmatpush1.bf16.msra.mxu0 %v3098
  %3708 = vmatprep.subr.bf16.mxu0 %v3106
  %3709 = vmatpush1.bf16.msra.mxu0 %v3105
  %3710 = vmatprep.subr.bf16.mxu0 %v3113
  %3711 = vmatpush1.bf16.msra.mxu0 %v3112
  %3712 = vmatprep.subr.bf16.mxu0 %v3120
  %3713 = vmatpush1.bf16.msra.mxu0 %v3119
  %3714 = vmatprep.subr.bf16.mxu0 %v3127
  %3715 = vmatpush1.bf16.msra.mxu0 %v3126
  %3716 = vmatprep.subr.bf16.mxu0 %v3134
  %3717 = vmatpush1.bf16.msra.mxu0 %v3133
  %3718 = vmatprep.subr.bf16.mxu0 %v3141
  %3719 = vmatpush1.bf16.msra.mxu0 %v3140
  %3720 = vmatprep.subr.bf16.mxu0 %v3148
  %3721 = vmatpush1.bf16.msra.mxu0 %v3147
  %3722 = vmatprep.subr.bf16.mxu0 %v3155
  %3723 = vmatpush1.bf16.msra.mxu0 %v3154
  %3724 = vmatprep.subr.bf16.mxu0 %v3162
  %3725 = vmatpush1.bf16.msra.mxu0 %v3161
  %3726 = vmatprep.subr.bf16.mxu0 %v3169
  %3727 = vmatpush1.bf16.msra.mxu0 %v3168
  %3728 = vmatprep.subr.bf16.mxu0 %v3176
  %3729 = vmatpush1.bf16.msra.mxu0 %v3175
  %3730 = vmatprep.subr.bf16.mxu0 %v3183
  %3731 = vmatpush1.bf16.msra.mxu0 %v3182
  %3732 = vmatprep.subr.bf16.mxu0 %v3190
  %3733 = vmatpush1.bf16.msra.mxu0 %v3189
  %3734 = vmatprep.subr.bf16.mxu0 %v3197
  %3735 = vmatpush1.bf16.msra.mxu0 %v3196
  %3736 = vmatprep.subr.bf16.mxu0 %v3204
  %3737 = vmatpush1.bf16.msra.mxu0 %v3203
  %3738 = vmatprep.mubr.bf16.mxu0 %v2094
  %3739 = vmatmul.mubr.bf16.gmra.mrb[0].mxu0 %v2093
  %v3740 = vpop.f32.mrb[0].mxu0
  %v3741 = vadd.f32 %v2374, %v3740
  %v3742 = vpop.f32.mrb[0].mxu0
  %v3743 = vadd.f32 %v2378, %v3742
  %v3744 = vpop.f32.mrb[0].mxu0
  %v3745 = vpop.f32.mrb[0].mxu0
  %3746 = vdwg.mxu0
  %3747 = vmatprep.subr.bf16.mxu0 %v3211
  %3748 = vmatpush1.bf16.msra.mxu0 %v3210
  %3749 = vmatprep.subr.bf16.mxu0 %v3218
  %3750 = vmatpush1.bf16.msra.mxu0 %v3217
  %3751 = vmatprep.subr.bf16.mxu0 %v3225
  %3752 = vmatpush1.bf16.msra.mxu0 %v3224
  %3753 = vmatprep.subr.bf16.mxu0 %v3232
  %3754 = vmatpush1.bf16.msra.mxu0 %v3231
  %3755 = vmatprep.subr.bf16.mxu0 %v3239
  %3756 = vmatpush1.bf16.msra.mxu0 %v3238
  %3757 = vmatprep.subr.bf16.mxu0 %v3246
  %3758 = vmatpush1.bf16.msra.mxu0 %v3245
  %3759 = vmatprep.subr.bf16.mxu0 %v3253
  %3760 = vmatpush1.bf16.msra.mxu0 %v3252
  %3761 = vmatprep.subr.bf16.mxu0 %v3260
  %3762 = vmatpush1.bf16.msra.mxu0 %v3259
  %3763 = vmatprep.subr.bf16.mxu0 %v3267
  %3764 = vmatpush1.bf16.msra.mxu0 %v3266
  %3765 = vmatprep.subr.bf16.mxu0 %v3274
  %3766 = vmatpush1.bf16.msra.mxu0 %v3273
  %3767 = vmatprep.subr.bf16.mxu0 %v3281
  %3768 = vmatpush1.bf16.msra.mxu0 %v3280
  %3769 = vmatprep.subr.bf16.mxu0 %v3288
  %3770 = vmatpush1.bf16.msra.mxu0 %v3287
  %3771 = vmatprep.subr.bf16.mxu0 %v3295
  %3772 = vmatpush1.bf16.msra.mxu0 %v3294
  %3773 = vmatprep.subr.bf16.mxu0 %v3302
  %3774 = vmatpush1.bf16.msra.mxu0 %v3301
  %3775 = vmatprep.subr.bf16.mxu0 %v3309
  %3776 = vmatpush1.bf16.msra.mxu0 %v3308
  %3777 = vmatprep.subr.bf16.mxu0 %v3316
  %3778 = vmatpush1.bf16.msra.mxu0 %v3315
  %3779 = vmatprep.mubr.bf16.mxu0 %v2096
  %3780 = vmatmul.mubr.bf16.gmra.mrb[0].mxu0 %v2095
  %v3781 = vpop.f32.mrb[0].mxu0
  %v3782 = vadd.f32 %v3741, %v3781
  %v3783 = vpop.f32.mrb[0].mxu0
  %v3784 = vadd.f32 %v3743, %v3783
  %v3785 = vpop.f32.mrb[0].mxu0
  %v3786 = vpop.f32.mrb[0].mxu0
  %3787 = vdwg.mxu0
  %3788 = vmatprep.subr.bf16.mxu0 0
  %3789 = vmatpush1.bf16.msra.mxu0 %v3100
  %3790 = vmatprep.subr.bf16.mxu0 0
  %3791 = vmatpush1.bf16.msra.mxu0 %v3107
  %3792 = vmatprep.subr.bf16.mxu0 0
  %3793 = vmatpush1.bf16.msra.mxu0 %v3114
  %3794 = vmatprep.subr.bf16.mxu0 0
  %3795 = vmatpush1.bf16.msra.mxu0 %v3121
  %3796 = vmatprep.subr.bf16.mxu0 0
  %3797 = vmatpush1.bf16.msra.mxu0 %v3128
  %3798 = vmatprep.subr.bf16.mxu0 0
  %3799 = vmatpush1.bf16.msra.mxu0 %v3135
  %3800 = vmatprep.subr.bf16.mxu0 0
  %3801 = vmatpush1.bf16.msra.mxu0 %v3142
  %3802 = vmatprep.subr.bf16.mxu0 0
  %3803 = vmatpush1.bf16.msra.mxu0 %v3149
  %3804 = vmatprep.subr.bf16.mxu0 0
  %3805 = vmatpush1.bf16.msra.mxu0 %v3156
  %3806 = vmatprep.subr.bf16.mxu0 0
  %3807 = vmatpush1.bf16.msra.mxu0 %v3163
  %3808 = vmatprep.subr.bf16.mxu0 0
  %3809 = vmatpush1.bf16.msra.mxu0 %v3170
  %3810 = vmatprep.subr.bf16.mxu0 0
  %3811 = vmatpush1.bf16.msra.mxu0 %v3177
  %3812 = vmatprep.subr.bf16.mxu0 0
  %3813 = vmatpush1.bf16.msra.mxu0 %v3184
  %3814 = vmatprep.subr.bf16.mxu0 0
  %3815 = vmatpush1.bf16.msra.mxu0 %v3191
  %3816 = vmatprep.subr.bf16.mxu0 0
  %3817 = vmatpush1.bf16.msra.mxu0 %v3198
  %3818 = vmatprep.subr.bf16.mxu0 0
  %3819 = vmatpush1.bf16.msra.mxu0 %v3205
  %3820 = vmatprep.mubr.bf16.mxu0 %v2094
  %3821 = vmatmul.mubr.bf16.gmra.mrb[0].mxu0 %v2093
  %v3822 = vpop.f32.mrb[0].mxu0
  %v3823 = vadd.f32 %v2382, %v3822
  %v3824 = vpop.f32.mrb[0].mxu0
  %v3825 = vpop.f32.mrb[0].mxu0
  %v3826 = vpop.f32.mrb[0].mxu0
  %3827 = vdwg.mxu0
  %3828 = vmatprep.subr.bf16.mxu0 0
  %3829 = vmatpush1.bf16.msra.mxu0 %v3212
  %3830 = vmatprep.subr.bf16.mxu0 0
  %3831 = vmatpush1.bf16.msra.mxu0 %v3219
  %3832 = vmatprep.subr.bf16.mxu0 0
  %3833 = vmatpush1.bf16.msra.mxu0 %v3226
  %3834 = vmatprep.subr.bf16.mxu0 0
  %3835 = vmatpush1.bf16.msra.mxu0 %v3233
  %3836 = vmatprep.subr.bf16.mxu0 0
  %3837 = vmatpush1.bf16.msra.mxu0 %v3240
  %3838 = vmatprep.subr.bf16.mxu0 0
  %3839 = vmatpush1.bf16.msra.mxu0 %v3247
  %3840 = vmatprep.subr.bf16.mxu0 0
  %3841 = vmatpush1.bf16.msra.mxu0 %v3254
  %3842 = vmatprep.subr.bf16.mxu0 0
  %3843 = vmatpush1.bf16.msra.mxu0 %v3261
  %3844 = vmatprep.subr.bf16.mxu0 0
  %3845 = vmatpush1.bf16.msra.mxu0 %v3268
  %3846 = vmatprep.subr.bf16.mxu0 0
  %3847 = vmatpush1.bf16.msra.mxu0 %v3275
  %3848 = vmatprep.subr.bf16.mxu0 0
  %3849 = vmatpush1.bf16.msra.mxu0 %v3282
  %3850 = vmatprep.subr.bf16.mxu0 0
  %3851 = vmatpush1.bf16.msra.mxu0 %v3289
  %3852 = vmatprep.subr.bf16.mxu0 0
  %3853 = vmatpush1.bf16.msra.mxu0 %v3296
  %3854 = vmatprep.subr.bf16.mxu0 0
  %3855 = vmatpush1.bf16.msra.mxu0 %v3303
  %3856 = vmatprep.subr.bf16.mxu0 0
  %3857 = vmatpush1.bf16.msra.mxu0 %v3310
  %3858 = vmatprep.subr.bf16.mxu0 0
  %3859 = vmatpush1.bf16.msra.mxu0 %v3317
  %3860 = vmatprep.mubr.bf16.mxu0 %v2096
  %3861 = vmatmul.mubr.bf16.gmra.mrb[0].mxu0 %v2095
  %v3862 = vpop.f32.mrb[0].mxu0
  %v3863 = vadd.f32 %v3823, %v3862
  %v3864 = vpop.f32.mrb[0].mxu0
  %v3865 = vpop.f32.mrb[0].mxu0
  %v3866 = vpop.f32.mrb[0].mxu0
  %3867 = vdwg.mxu0
  %v3868 = vxor.u32 %v3618, 2147483648
  %v3869 = vxor.u32 %v3620, 2147483648
  %v3870 = vxor.u32 %v3700, 2147483648
  %v3871 = vxor.u32 %v3702, 2147483648
  %v3872 = vxor.u32 %v3782, 2147483648
  %v3873 = vxor.u32 %v3784, 2147483648
  %v3874 = vxor.u32 %v3863, 2147483648
  %v3875 = vmul.f32 %v3868, 1.442695
  %v3876 = vpow.pop %v3875
  %v3877 = vmul.f32 %v3869, 1.442695
  %v3878 = vpow.pop %v3877
  %v3879 = vmul.f32 %v3870, 1.442695
  %v3880 = vpow.pop %v3879
  %v3881 = vmul.f32 %v3871, 1.442695
  %v3882 = vpow.pop %v3881
  %v3883 = vmul.f32 %v3872, 1.442695
  %v3884 = vpow.pop %v3883
  %v3885 = vmul.f32 %v3873, 1.442695
  %v3886 = vpow.pop %v3885
  %v3887 = vmul.f32 %v3874, 1.442695
  %v3888 = vpow.pop %v3887
  %v3889 = vadd.f32 %v3876, 1.0
  %v3890 = vadd.f32 %v3878, 1.0
  %v3891 = vadd.f32 %v3880, 1.0
  %v3892 = vadd.f32 %v3882, 1.0
  %v3893 = vadd.f32 %v3884, 1.0
  %v3894 = vadd.f32 %v3886, 1.0
  %v3895 = vadd.f32 %v3888, 1.0
  %v3896 = vrcp.pop %v3889
  %v3897 = vmul.f32 1.0, %v3896
  %v3898 = vrcp.pop %v3890
  %v3899 = vmul.f32 1.0, %v3898
  %v3900 = vrcp.pop %v3891
  %v3901 = vmul.f32 1.0, %v3900
  %v3902 = vrcp.pop %v3892
  %v3903 = vmul.f32 1.0, %v3902
  %v3904 = vrcp.pop %v3893
  %v3905 = vmul.f32 1.0, %v3904
  %v3906 = vrcp.pop %v3894
  %v3907 = vmul.f32 1.0, %v3906
  %v3908 = vrcp.pop %v3895
  %v3909 = vmul.f32 1.0, %v3908
  %3910 = vst [vmem:[%s9] sm:$0xff] %v3897
  %3911 = vst [vmem:[%s9 + $0x8] sm:$0xff] %v3899
  %3912 = vst [vmem:[%s9 + $0x10] sm:$0xff] %v3901
  %3913 = vst [vmem:[%s9 + $0x18] sm:$0xff] %v3903
  %3914 = vst [vmem:[%s9 + $0x20] sm:$0xff] %v3905
  %3915 = vst [vmem:[%s9 + $0x28] sm:$0xff] %v3907
  %3916 = vst.msk [vmem:[%s9 + $0x30] sm:$0xff] %vm1247, %v3909
  // Predicated region
  $region38: #{wae_forward.1} parent=0 // pred_check
    _
  $region39: #{wae_forward.1} parent=0 // pred_check_branch
    %3918 = sbr.rel (0) target = $region41
  $region40: #{wae_forward.1} parent=0 // pred_region
    _
  $region41: #{wae_forward.1} parent=0 // pred_fallthru
    _
  // Predicated region
  $region42: #{wae_forward.1} parent=0 // pred_check
    _
  $region43: #{wae_forward.1} parent=0 // pred_check_branch
    %3920 = sbr.rel (0) target = $region45
  $region44: #{wae_forward.1} parent=0 // pred_region
    _
  $region45: #{wae_forward.1} parent=0 // pred_fallthru
    _
  // Predicated region
  $region46: #{wae_forward.1} parent=0 // pred_check
    _
  $region47: #{wae_forward.1} parent=0 // pred_check_branch
    %3922 = sbr.rel (0) target = $region49
  $region48: #{wae_forward.1} parent=0 // pred_region
    _
  $region49: #{wae_forward.1} parent=0 // pred_fallthru
    _
  // Predicated region
  $region50: #{wae_forward.1} parent=0 // pred_check
    _
  $region51: #{wae_forward.1} parent=0 // pred_check_branch
    %3924 = sbr.rel (0) target = $region53
  $region52: #{wae_forward.1} parent=0 // pred_region
    _
  $region53: #{wae_forward.1} parent=0 // pred_fallthru
    _

// kernel: wae_forward.1
$region0: #{wae_forward.1}
  #allocation0 [shape = 'u32[]', space=smem, size = 0x4, offset = 0x4, fixed_abs, tag = 'smem constant byte address 0x4 - core index']
  #allocation1 [shape = 'u32[144,128]{1,0:T(1,128)}', space=vmem, size = 0x12000, scoped, tag = 'internal scratch']
  %s0 = inlined_call_operand.vmem [shape: f32[8,784], index: 0, kind: input, shape index: {}]
  %s1 = inlined_call_operand.vmem [shape: bf16[784,512], index: 1, kind: input, shape index: {}]
  %s2 = inlined_call_operand.vmem [shape: f32[1,512], index: 2, kind: input, shape index: {}]
  %s3 = inlined_call_operand.vmem [shape: bf16[512,20], index: 3, kind: input, shape index: {}]
  %s4 = inlined_call_operand.vmem [shape: f32[1,20], index: 4, kind: input, shape index: {}]
  %s5 = inlined_call_operand.vmem [shape: bf16[20,512], index: 5, kind: input, shape index: {}]
  %s6 = inlined_call_operand.vmem [shape: f32[1,512], index: 6, kind: input, shape index: {}]
  %s7 = inlined_call_operand.vmem [shape: bf16[512,784], index: 7, kind: input, shape index: {}]
  %s8 = inlined_call_operand.vmem [shape: f32[1,784], index: 8, kind: input, shape index: {}]
  %s9 = inlined_call_operand.vmem [shape: f32[8,784], index: 9, kind: output, shape index: {0}]
  %s10 = inlined_call_operand.vmem [shape: f32[8,20], index: 10, kind: output, shape index: {1}]
  %11 = xla_tuple %s9, %s10
  %s12 = sld [smem:[#allocation0]]
  $region54: #{wae_forward.1} parent=0
    _
  %s14 = ssub.s32 1, %s12
  %s15 = scalar_select 0, %s14, %s12
  // Predicated region
  $region2: #{wae_forward.1} parent=0 // pred_check
    _
  $region3: #{wae_forward.1} parent=0 // pred_check_branch
    %17 = sbr.rel (0) target = $region5
  $region4: #{wae_forward.1} parent=0 // pred_region
    _
  $region5: #{wae_forward.1} parent=0 // pred_fallthru
    _
  // Predicated region
  $region6: #{wae_forward.1} parent=0 // pred_check
    _
  $region7: #{wae_forward.1} parent=0 // pred_check_branch
    %19 = sbr.rel (0) target = $region9
  $region8: #{wae_forward.1} parent=0 // pred_region
    _
  $region9: #{wae_forward.1} parent=0 // pred_fallthru
    _
  // Predicated region
  $region10: #{wae_forward.1} parent=0 // pred_check
    _
  $region11: #{wae_forward.1} parent=0 // pred_check_branch
    %21 = sbr.rel (0) target = $region13
  $region12: #{wae_forward.1} parent=0 // pred_region
    _
  $region13: #{wae_forward.1} parent=0 // pred_fallthru
    _
  // Predicated region
  $region14: #{wae_forward.1} parent=0 // pred_check
    _
  $region15: #{wae_forward.1} parent=0 // pred_check_branch
    %23 = sbr.rel (0) target = $region17
  $region16: #{wae_forward.1} parent=0 // pred_region
    _
  $region17: #{wae_forward.1} parent=0 // pred_fallthru
    _
  // Predicated region
  $region18: #{wae_forward.1} parent=0 // pred_check
    _
  $region19: #{wae_forward.1} parent=0 // pred_check_branch
    %25 = sbr.rel (0) target = $region21
  $region20: #{wae_forward.1} parent=0 // pred_region
    _
  $region21: #{wae_forward.1} parent=0 // pred_fallthru
    _
  // Predicated region
  $region22: #{wae_forward.1} parent=0 // pred_check
    _
  $region23: #{wae_forward.1} parent=0 // pred_check_branch
    %27 = sbr.rel (0) target = $region25
  $region24: #{wae_forward.1} parent=0 // pred_region
    _
  $region25: #{wae_forward.1} parent=0 // pred_fallthru
    _
  // Predicated region
  $region26: #{wae_forward.1} parent=0 // pred_check
    _
  $region27: #{wae_forward.1} parent=0 // pred_check_branch
    %29 = sbr.rel (0) target = $region29
  $region28: #{wae_forward.1} parent=0 // pred_region
    _
  $region29: #{wae_forward.1} parent=0 // pred_fallthru
    _
  // Predicated region
  $region30: #{wae_forward.1} parent=0 // pred_check
    _
  $region31: #{wae_forward.1} parent=0 // pred_check_branch
    %31 = sbr.rel (0) target = $region33
  $region32: #{wae_forward.1} parent=0 // pred_region
    _
  $region33: #{wae_forward.1} parent=0 // pred_fallthru
    _
  // Predicated region
  $region34: #{wae_forward.1} parent=0 // pred_check
    _
  $region35: #{wae_forward.1} parent=0 // pred_check_branch
    %33 = sbr.rel (0) target = $region37
  $region36: #{wae_forward.1} parent=0 // pred_region
    _
  $region37: #{wae_forward.1} parent=0 // pred_fallthru
    _
  %v35 = vld [vmem:[%s0] sm:$0xff]
  %v36 = vld [vmem:[%s0 + $0x8] sm:$0xff]
  %v37 = vld [vmem:[%s0 + $0x10] sm:$0xff]
  %v38 = vld [vmem:[%s0 + $0x18] sm:$0xff]
  %v39 = vld [vmem:[%s0 + $0x20] sm:$0xff]
  %v40 = vld [vmem:[%s0 + $0x28] sm:$0xff]
  %v41 = vld [vmem:[%s0 + $0x30] sm:$0xff]
  %v42 = vpack.c.bf16 %v35, %v35
  %v43 = vpack.c.bf16 %v36, %v36
  %v44 = vpack.c.bf16 %v37, %v37
  %v45 = vpack.c.bf16 %v38, %v38
  %v46 = vpack.c.bf16 %v39, %v39
  %v47 = vpack.c.bf16 %v40, %v40
  %v48 = vpack.c.bf16 %v41, %v41
  %v49 = vld [vmem:[%s1] sm:$0xff]
  %v50 = vld [vmem:[%s1 + $0x8] sm:$0xff]
  %v51 = vld [vmem:[%s1 + $0x10] sm:$0xff]
  %v52 = vld [vmem:[%s1 + $0x18] sm:$0xff]
  %v53 = vld [vmem:[%s1 + $0x20] sm:$0xff]
  %v54 = vld [vmem:[%s1 + $0x28] sm:$0xff]
  %v55 = vld [vmem:[%s1 + $0x30] sm:$0xff]
  %v56 = vld [vmem:[%s1 + $0x38] sm:$0xff]
  %v57 = vld [vmem:[%s1 + $0x40] sm:$0xff]
  %v58 = vld [vmem:[%s1 + $0x48] sm:$0xff]
  %v59 = vld [vmem:[%s1 + $0x50] sm:$0xff]
  %v60 = vld [vmem:[%s1 + $0x58] sm:$0xff]
  %v61 = vld [vmem:[%s1 + $0x60] sm:$0xff]
  %v62 = vld [vmem:[%s1 + $0x68] sm:$0xff]
  %v63 = vld [vmem:[%s1 + $0x70] sm:$0xff]
  %v64 = vld [vmem:[%s1 + $0x78] sm:$0xff]
  %v65 = vld [vmem:[%s1 + $0x80] sm:$0xff]
  %v66 = vld [vmem:[%s1 + $0x88] sm:$0xff]
  %v67 = vld [vmem:[%s1 + $0x90] sm:$0xff]
  %v68 = vld [vmem:[%s1 + $0x98] sm:$0xff]
  %v69 = vld [vmem:[%s1 + $0xa0] sm:$0xff]
  %v70 = vld [vmem:[%s1 + $0xa8] sm:$0xff]
  %v71 = vld [vmem:[%s1 + $0xb0] sm:$0xff]
  %v72 = vld [vmem:[%s1 + $0xb8] sm:$0xff]
  %v73 = vld [vmem:[%s1 + $0xc0] sm:$0xff]
  %v74 = vld [vmem:[%s1 + $0xc8] sm:$0xff]
  %v75 = vld [vmem:[%s1 + $0xd0] sm:$0xff]
  %v76 = vld [vmem:[%s1 + $0xd8] sm:$0xff]
  %v77 = vld [vmem:[%s1 + $0xe0] sm:$0xff]
  %v78 = vld [vmem:[%s1 + $0xe8] sm:$0xff]
  %v79 = vld [vmem:[%s1 + $0xf0] sm:$0xff]
  %v80 = vld [vmem:[%s1 + $0xf8] sm:$0xff]
  %v81 = vld [vmem:[%s1 + $0x100] sm:$0xff]
  %v82 = vld [vmem:[%s1 + $0x108] sm:$0xff]
  %v83 = vld [vmem:[%s1 + $0x110] sm:$0xff]
  %v84 = vld [vmem:[%s1 + $0x118] sm:$0xff]
  %v85 = vld [vmem:[%s1 + $0x120] sm:$0xff]
  %v86 = vld [vmem:[%s1 + $0x128] sm:$0xff]
  %v87 = vld [vmem:[%s1 + $0x130] sm:$0xff]
  %v88 = vld [vmem:[%s1 + $0x138] sm:$0xff]
  %v89 = vld [vmem:[%s1 + $0x140] sm:$0xff]
  %v90 = vld [vmem:[%s1 + $0x148] sm:$0xff]
  %v91 = vld [vmem:[%s1 + $0x150] sm:$0xff]
  %v92 = vld [vmem:[%s1 + $0x158] sm:$0xff]
  %v93 = vld [vmem:[%s1 + $0x160] sm:$0xff]
  %v94 = vld [vmem:[%s1 + $0x168] sm:$0xff]
  %v95 = vld [vmem:[%s1 + $0x170] sm:$0xff]
  %v96 = vld [vmem:[%s1 + $0x178] sm:$0xff]
  %v97 = vld [vmem:[%s1 + $0x180] sm:$0xff]
  %v98 = vld [vmem:[%s1 + $0x188] sm:$0xff]
  %v99 = vld [vmem:[%s1 + $0x190] sm:$0xff]
  %v100 = vld [vmem:[%s1 + $0x198] sm:$0xff]
  %v101 = vld [vmem:[%s1 + $0x1a0] sm:$0xff]
  %v102 = vld [vmem:[%s1 + $0x1a8] sm:$0xff]
  %v103 = vld [vmem:[%s1 + $0x1b0] sm:$0xff]
  %v104 = vld [vmem:[%s1 + $0x1b8] sm:$0xff]
  %v105 = vld [vmem:[%s1 + $0x1c0] sm:$0xff]
  %v106 = vld [vmem:[%s1 + $0x1c8] sm:$0xff]
  %v107 = vld [vmem:[%s1 + $0x1d0] sm:$0xff]
  %v108 = vld [vmem:[%s1 + $0x1d8] sm:$0xff]
  %v109 = vld [vmem:[%s1 + $0x1e0] sm:$0xff]
  %v110 = vld [vmem:[%s1 + $0x1e8] sm:$0xff]
  %v111 = vld [vmem:[%s1 + $0x1f0] sm:$0xff]
  %v112 = vld [vmem:[%s1 + $0x1f8] sm:$0xff]
  %v113 = vld [vmem:[%s1 + $0x200] sm:$0xff]
  %v114 = vld [vmem:[%s1 + $0x208] sm:$0xff]
  %v115 = vld [vmem:[%s1 + $0x210] sm:$0xff]
  %v116 = vld [vmem:[%s1 + $0x218] sm:$0xff]
  %v117 = vld [vmem:[%s1 + $0x220] sm:$0xff]
  %v118 = vld [vmem:[%s1 + $0x228] sm:$0xff]
  %v119 = vld [vmem:[%s1 + $0x230] sm:$0xff]
  %v120 = vld [vmem:[%s1 + $0x238] sm:$0xff]
  %v121 = vld [vmem:[%s1 + $0x240] sm:$0xff]
  %v122 = vld [vmem:[%s1 + $0x248] sm:$0xff]
  %v123 = vld [vmem:[%s1 + $0x250] sm:$0xff]
  %v124 = vld [vmem:[%s1 + $0x258] sm:$0xff]
  %v125 = vld [vmem:[%s1 + $0x260] sm:$0xff]
  %v126 = vld [vmem:[%s1 + $0x268] sm:$0xff]
  %v127 = vld [vmem:[%s1 + $0x270] sm:$0xff]
  %v128 = vld [vmem:[%s1 + $0x278] sm:$0xff]
  %v129 = vld [vmem:[%s1 + $0x280] sm:$0xff]
  %v130 = vld [vmem:[%s1 + $0x288] sm:$0xff]
  %v131 = vld [vmem:[%s1 + $0x290] sm:$0xff]
  %v132 = vld [vmem:[%s1 + $0x298] sm:$0xff]
  %v133 = vld [vmem:[%s1 + $0x2a0] sm:$0xff]
  %v134 = vld [vmem:[%s1 + $0x2a8] sm:$0xff]
  %v135 = vld [vmem:[%s1 + $0x2b0] sm:$0xff]
  %v136 = vld [vmem:[%s1 + $0x2b8] sm:$0xff]
  %v137 = vld [vmem:[%s1 + $0x2c0] sm:$0xff]
  %v138 = vld [vmem:[%s1 + $0x2c8] sm:$0xff]
  %v139 = vld [vmem:[%s1 + $0x2d0] sm:$0xff]
  %v140 = vld [vmem:[%s1 + $0x2d8] sm:$0xff]
  %v141 = vld [vmem:[%s1 + $0x2e0] sm:$0xff]
  %v142 = vld [vmem:[%s1 + $0x2e8] sm:$0xff]
  %v143 = vld [vmem:[%s1 + $0x2f0] sm:$0xff]
  %v144 = vld [vmem:[%s1 + $0x2f8] sm:$0xff]
  %v145 = vld [vmem:[%s1 + $0x300] sm:$0xff]
  %v146 = vld [vmem:[%s1 + $0x308] sm:$0xff]
  %v147 = vld [vmem:[%s1 + $0x310] sm:$0xff]
  %v148 = vld [vmem:[%s1 + $0x318] sm:$0xff]
  %v149 = vld [vmem:[%s1 + $0x320] sm:$0xff]
  %v150 = vld [vmem:[%s1 + $0x328] sm:$0xff]
  %v151 = vld [vmem:[%s1 + $0x330] sm:$0xff]
  %v152 = vld [vmem:[%s1 + $0x338] sm:$0xff]
  %v153 = vld [vmem:[%s1 + $0x340] sm:$0xff]
  %v154 = vld [vmem:[%s1 + $0x348] sm:$0xff]
  %v155 = vld [vmem:[%s1 + $0x350] sm:$0xff]
  %v156 = vld [vmem:[%s1 + $0x358] sm:$0xff]
  %v157 = vld [vmem:[%s1 + $0x360] sm:$0xff]
  %v158 = vld [vmem:[%s1 + $0x368] sm:$0xff]
  %v159 = vld [vmem:[%s1 + $0x370] sm:$0xff]
  %v160 = vld [vmem:[%s1 + $0x378] sm:$0xff]
  %v161 = vld [vmem:[%s1 + $0x380] sm:$0xff]
  %v162 = vld [vmem:[%s1 + $0x388] sm:$0xff]
  %v163 = vld [vmem:[%s1 + $0x390] sm:$0xff]
  %v164 = vld [vmem:[%s1 + $0x398] sm:$0xff]
  %v165 = vld [vmem:[%s1 + $0x3a0] sm:$0xff]
  %v166 = vld [vmem:[%s1 + $0x3a8] sm:$0xff]
  %v167 = vld [vmem:[%s1 + $0x3b0] sm:$0xff]
  %v168 = vld [vmem:[%s1 + $0x3b8] sm:$0xff]
  %v169 = vld [vmem:[%s1 + $0x3c0] sm:$0xff]
  %v170 = vld [vmem:[%s1 + $0x3c8] sm:$0xff]
  %v171 = vld [vmem:[%s1 + $0x3d0] sm:$0xff]
  %v172 = vld [vmem:[%s1 + $0x3d8] sm:$0xff]
  %v173 = vld [vmem:[%s1 + $0x3e0] sm:$0xff]
  %v174 = vld [vmem:[%s1 + $0x3e8] sm:$0xff]
  %v175 = vld [vmem:[%s1 + $0x3f0] sm:$0xff]
  %v176 = vld [vmem:[%s1 + $0x3f8] sm:$0xff]
  %v177 = vld [vmem:[%s1 + $0x400] sm:$0xff]
  %v178 = vld [vmem:[%s1 + $0x408] sm:$0xff]
  %v179 = vld [vmem:[%s1 + $0x410] sm:$0xff]
  %v180 = vld [vmem:[%s1 + $0x418] sm:$0xff]
  %v181 = vld [vmem:[%s1 + $0x420] sm:$0xff]
  %v182 = vld [vmem:[%s1 + $0x428] sm:$0xff]
  %v183 = vld [vmem:[%s1 + $0x430] sm:$0xff]
  %v184 = vld [vmem:[%s1 + $0x438] sm:$0xff]
  %v185 = vld [vmem:[%s1 + $0x440] sm:$0xff]
  %v186 = vld [vmem:[%s1 + $0x448] sm:$0xff]
  %v187 = vld [vmem:[%s1 + $0x450] sm:$0xff]
  %v188 = vld [vmem:[%s1 + $0x458] sm:$0xff]
  %v189 = vld [vmem:[%s1 + $0x460] sm:$0xff]
  %v190 = vld [vmem:[%s1 + $0x468] sm:$0xff]
  %v191 = vld [vmem:[%s1 + $0x470] sm:$0xff]
  %v192 = vld [vmem:[%s1 + $0x478] sm:$0xff]
  %v193 = vld [vmem:[%s1 + $0x480] sm:$0xff]
  %v194 = vld [vmem:[%s1 + $0x488] sm:$0xff]
  %v195 = vld [vmem:[%s1 + $0x490] sm:$0xff]
  %v196 = vld [vmem:[%s1 + $0x498] sm:$0xff]
  %v197 = vld [vmem:[%s1 + $0x4a0] sm:$0xff]
  %v198 = vld [vmem:[%s1 + $0x4a8] sm:$0xff]
  %v199 = vld [vmem:[%s1 + $0x4b0] sm:$0xff]
  %v200 = vld [vmem:[%s1 + $0x4b8] sm:$0xff]
  %v201 = vld [vmem:[%s1 + $0x4c0] sm:$0xff]
  %v202 = vld [vmem:[%s1 + $0x4c8] sm:$0xff]
  %v203 = vld [vmem:[%s1 + $0x4d0] sm:$0xff]
  %v204 = vld [vmem:[%s1 + $0x4d8] sm:$0xff]
  %v205 = vld [vmem:[%s1 + $0x4e0] sm:$0xff]
  %v206 = vld [vmem:[%s1 + $0x4e8] sm:$0xff]
  %v207 = vld [vmem:[%s1 + $0x4f0] sm:$0xff]
  %v208 = vld [vmem:[%s1 + $0x4f8] sm:$0xff]
  %v209 = vld [vmem:[%s1 + $0x500] sm:$0xff]
  %v210 = vld [vmem:[%s1 + $0x508] sm:$0xff]
  %v211 = vld [vmem:[%s1 + $0x510] sm:$0xff]
  %v212 = vld [vmem:[%s1 + $0x518] sm:$0xff]
  %v213 = vld [vmem:[%s1 + $0x520] sm:$0xff]
  %v214 = vld [vmem:[%s1 + $0x528] sm:$0xff]
  %v215 = vld [vmem:[%s1 + $0x530] sm:$0xff]
  %v216 = vld [vmem:[%s1 + $0x538] sm:$0xff]
  %v217 = vld [vmem:[%s1 + $0x540] sm:$0xff]
  %v218 = vld [vmem:[%s1 + $0x548] sm:$0xff]
  %v219 = vld [vmem:[%s1 + $0x550] sm:$0xff]
  %v220 = vld [vmem:[%s1 + $0x558] sm:$0xff]
  %v221 = vld [vmem:[%s1 + $0x560] sm:$0xff]
  %v222 = vld [vmem:[%s1 + $0x568] sm:$0xff]
  %v223 = vld [vmem:[%s1 + $0x570] sm:$0xff]
  %v224 = vld [vmem:[%s1 + $0x578] sm:$0xff]
  %v225 = vld [vmem:[%s1 + $0x580] sm:$0xff]
  %v226 = vld [vmem:[%s1 + $0x588] sm:$0xff]
  %v227 = vld [vmem:[%s1 + $0x590] sm:$0xff]
  %v228 = vld [vmem:[%s1 + $0x598] sm:$0xff]
  %v229 = vld [vmem:[%s1 + $0x5a0] sm:$0xff]
  %v230 = vld [vmem:[%s1 + $0x5a8] sm:$0xff]
  %v231 = vld [vmem:[%s1 + $0x5b0] sm:$0xff]
  %v232 = vld [vmem:[%s1 + $0x5b8] sm:$0xff]
  %v233 = vld [vmem:[%s1 + $0x5c0] sm:$0xff]
  %v234 = vld [vmem:[%s1 + $0x5c8] sm:$0xff]
  %v235 = vld [vmem:[%s1 + $0x5d0] sm:$0xff]
  %v236 = vld [vmem:[%s1 + $0x5d8] sm:$0xff]
  %v237 = vld [vmem:[%s1 + $0x5e0] sm:$0xff]
  %v238 = vld [vmem:[%s1 + $0x5e8] sm:$0xff]
  %v239 = vld [vmem:[%s1 + $0x5f0] sm:$0xff]
  %v240 = vld [vmem:[%s1 + $0x5f8] sm:$0xff]
  %v241 = vld [vmem:[%s1 + $0x600] sm:$0xff]
  %v242 = vld [vmem:[%s1 + $0x608] sm:$0xff]
  %v243 = vld [vmem:[%s1 + $0x610] sm:$0xff]
  %v244 = vld [vmem:[%s1 + $0x618] sm:$0xff]
  %v245 = vld [vmem:[%s2] sm:$0xf]
  %v247 = vlaneseq
  %v248 = vshrl.u32 %v247, 7
  %v249 = vsub.s32 0, %v248
  %v250 = vrot.slane %v245, %v249
  %v251 = vlaneseq
  %v252 = vshrl.u32 %v251, 7
  %v253 = vsub.s32 1, %v252
  %v254 = vrot.slane %v245, %v253
  %v255 = vlaneseq
  %v256 = vshrl.u32 %v255, 7
  %v257 = vsub.s32 2, %v256
  %v258 = vrot.slane %v245, %v257
  %v259 = vlaneseq
  %v260 = vshrl.u32 %v259, 7
  %v261 = vsub.s32 3, %v260
  %v262 = vrot.slane %v245, %v261
  %v463 = vunpack.c.l.b16 %v49
  %v464 = vunpack.c.h.b16 %v49
  %v465 = vunpack.c.l.b16 %v50
  %v466 = vunpack.c.h.b16 %v50
  %v467 = vunpack.c.l.b16 %v51
  %v468 = vunpack.c.h.b16 %v51
  %v469 = vunpack.c.l.b16 %v52
  %v470 = vunpack.c.h.b16 %v52
  %v471 = vunpack.c.l.b16 %v53
  %v472 = vunpack.c.h.b16 %v53
  %v473 = vunpack.c.l.b16 %v54
  %v474 = vunpack.c.h.b16 %v54
  %v475 = vunpack.c.l.b16 %v55
  %v476 = vunpack.c.h.b16 %v55
  %v477 = vunpack.c.l.b16 %v56
  %v478 = vunpack.c.h.b16 %v56
  %v479 = vunpack.c.l.b16 %v57
  %v480 = vunpack.c.h.b16 %v57
  %v481 = vunpack.c.l.b16 %v58
  %v482 = vunpack.c.h.b16 %v58
  %v483 = vunpack.c.l.b16 %v59
  %v484 = vunpack.c.h.b16 %v59
  %v485 = vunpack.c.l.b16 %v60
  %v486 = vunpack.c.h.b16 %v60
  %v487 = vunpack.c.l.b16 %v61
  %v488 = vunpack.c.h.b16 %v61
  %v489 = vunpack.c.l.b16 %v62
  %v490 = vunpack.c.h.b16 %v62
  %v491 = vunpack.c.l.b16 %v63
  %v492 = vunpack.c.h.b16 %v63
  %v493 = vunpack.c.l.b16 %v64
  %v494 = vunpack.c.h.b16 %v64
  %v495 = vunpack.c.l.b16 %v65
  %v496 = vunpack.c.h.b16 %v65
  %v497 = vunpack.c.l.b16 %v66
  %v498 = vunpack.c.h.b16 %v66
  %v499 = vunpack.c.l.b16 %v67
  %v500 = vunpack.c.h.b16 %v67
  %v501 = vunpack.c.l.b16 %v68
  %v502 = vunpack.c.h.b16 %v68
  %v503 = vunpack.c.l.b16 %v69
  %v504 = vunpack.c.h.b16 %v69
  %v505 = vunpack.c.l.b16 %v70
  %v506 = vunpack.c.h.b16 %v70
  %v507 = vunpack.c.l.b16 %v71
  %v508 = vunpack.c.h.b16 %v71
  %v509 = vunpack.c.l.b16 %v72
  %v510 = vunpack.c.h.b16 %v72
  %v511 = vunpack.c.l.b16 %v73
  %v512 = vunpack.c.h.b16 %v73
  %v513 = vunpack.c.l.b16 %v74
  %v514 = vunpack.c.h.b16 %v74
  %v515 = vunpack.c.l.b16 %v75
  %v516 = vunpack.c.h.b16 %v75
  %v517 = vunpack.c.l.b16 %v76
  %v518 = vunpack.c.h.b16 %v76
  %v519 = vunpack.c.l.b16 %v77
  %v520 = vunpack.c.h.b16 %v77
  %v521 = vunpack.c.l.b16 %v78
  %v522 = vunpack.c.h.b16 %v78
  %v523 = vunpack.c.l.b16 %v79
  %v524 = vunpack.c.h.b16 %v79
  %v525 = vunpack.c.l.b16 %v80
  %v526 = vunpack.c.h.b16 %v80
  %v527 = vunpack.c.l.b16 %v81
  %v528 = vunpack.c.h.b16 %v81
  %v529 = vunpack.c.l.b16 %v82
  %v530 = vunpack.c.h.b16 %v82
  %v531 = vunpack.c.l.b16 %v83
  %v532 = vunpack.c.h.b16 %v83
  %v533 = vunpack.c.l.b16 %v84
  %v534 = vunpack.c.h.b16 %v84
  %v535 = vunpack.c.l.b16 %v85
  %v536 = vunpack.c.h.b16 %v85
  %v537 = vunpack.c.l.b16 %v86
  %v538 = vunpack.c.h.b16 %v86
  %v539 = vunpack.c.l.b16 %v87
  %v540 = vunpack.c.h.b16 %v87
  %v541 = vunpack.c.l.b16 %v88
  %v542 = vunpack.c.h.b16 %v88
  %v543 = vunpack.c.l.b16 %v89
  %v544 = vunpack.c.h.b16 %v89
  %v545 = vunpack.c.l.b16 %v90
  %v546 = vunpack.c.h.b16 %v90
  %v547 = vunpack.c.l.b16 %v91
  %v548 = vunpack.c.h.b16 %v91
  %v549 = vunpack.c.l.b16 %v92
  %v550 = vunpack.c.h.b16 %v92
  %v551 = vunpack.c.l.b16 %v93
  %v552 = vunpack.c.h.b16 %v93
  %v553 = vunpack.c.l.b16 %v94
  %v554 = vunpack.c.h.b16 %v94
  %v555 = vunpack.c.l.b16 %v95
  %v556 = vunpack.c.h.b16 %v95
  %v557 = vunpack.c.l.b16 %v96
  %v558 = vunpack.c.h.b16 %v96
  %v559 = vunpack.c.l.b16 %v97
  %v560 = vunpack.c.h.b16 %v97
  %v561 = vunpack.c.l.b16 %v98
  %v562 = vunpack.c.h.b16 %v98
  %v563 = vunpack.c.l.b16 %v99
  %v564 = vunpack.c.h.b16 %v99
  %v565 = vunpack.c.l.b16 %v100
  %v566 = vunpack.c.h.b16 %v100
  %v567 = vunpack.c.l.b16 %v101
  %v568 = vunpack.c.h.b16 %v101
  %v569 = vunpack.c.l.b16 %v102
  %v570 = vunpack.c.h.b16 %v102
  %v571 = vunpack.c.l.b16 %v103
  %v572 = vunpack.c.h.b16 %v103
  %v573 = vunpack.c.l.b16 %v104
  %v574 = vunpack.c.h.b16 %v104
  %v575 = vunpack.c.l.b16 %v105
  %v576 = vunpack.c.h.b16 %v105
  %v577 = vunpack.c.l.b16 %v106
  %v578 = vunpack.c.h.b16 %v106
  %v579 = vunpack.c.l.b16 %v107
  %v580 = vunpack.c.h.b16 %v107
  %v581 = vunpack.c.l.b16 %v108
  %v582 = vunpack.c.h.b16 %v108
  %v583 = vunpack.c.l.b16 %v109
  %v584 = vunpack.c.h.b16 %v109
  %v585 = vunpack.c.l.b16 %v110
  %v586 = vunpack.c.h.b16 %v110
  %v587 = vunpack.c.l.b16 %v111
  %v588 = vunpack.c.h.b16 %v111
  %v589 = vunpack.c.l.b16 %v112
  %v590 = vunpack.c.h.b16 %v112
  %v591 = vunpack.c.l.b16 %v113
  %v592 = vunpack.c.h.b16 %v113
  %v593 = vunpack.c.l.b16 %v114
  %v594 = vunpack.c.h.b16 %v114
  %v595 = vunpack.c.l.b16 %v115
  %v596 = vunpack.c.h.b16 %v115
  %v597 = vunpack.c.l.b16 %v116
  %v598 = vunpack.c.h.b16 %v116
  %v599 = vunpack.c.l.b16 %v117
  %v600 = vunpack.c.h.b16 %v117
  %v601 = vunpack.c.l.b16 %v118
  %v602 = vunpack.c.h.b16 %v118
  %v603 = vunpack.c.l.b16 %v119
  %v604 = vunpack.c.h.b16 %v119
  %v605 = vunpack.c.l.b16 %v120
  %v606 = vunpack.c.h.b16 %v120
  %v607 = vunpack.c.l.b16 %v121
  %v608 = vunpack.c.h.b16 %v121
  %v609 = vunpack.c.l.b16 %v122
  %v610 = vunpack.c.h.b16 %v122
  %v611 = vunpack.c.l.b16 %v123
  %v612 = vunpack.c.h.b16 %v123
  %v613 = vunpack.c.l.b16 %v124
  %v614 = vunpack.c.h.b16 %v124
  %v615 = vunpack.c.l.b16 %v125
  %v616 = vunpack.c.h.b16 %v125
  %v617 = vunpack.c.l.b16 %v126
  %v618 = vunpack.c.h.b16 %v126
  %v619 = vunpack.c.l.b16 %v127
  %v620 = vunpack.c.h.b16 %v127
  %v621 = vunpack.c.l.b16 %v128
  %v622 = vunpack.c.h.b16 %v128
  %v623 = vunpack.c.l.b16 %v129
  %v624 = vunpack.c.h.b16 %v129
  %v625 = vunpack.c.l.b16 %v130
  %v626 = vunpack.c.h.b16 %v130
  %v627 = vunpack.c.l.b16 %v131
  %v628 = vunpack.c.h.b16 %v131
  %v629 = vunpack.c.l.b16 %v132
  %v630 = vunpack.c.h.b16 %v132
  %v631 = vunpack.c.l.b16 %v133
  %v632 = vunpack.c.h.b16 %v133
  %v633 = vunpack.c.l.b16 %v134
  %v634 = vunpack.c.h.b16 %v134
  %v635 = vunpack.c.l.b16 %v135
  %v636 = vunpack.c.h.b16 %v135
  %v637 = vunpack.c.l.b16 %v136
  %v638 = vunpack.c.h.b16 %v136
  %v639 = vunpack.c.l.b16 %v137
  %v640 = vunpack.c.h.b16 %v137
  %v641 = vunpack.c.l.b16 %v138
  %v642 = vunpack.c.h.b16 %v138
  %v643 = vunpack.c.l.b16 %v139
  %v644 = vunpack.c.h.b16 %v139
  %v645 = vunpack.c.l.b16 %v140
  %v646 = vunpack.c.h.b16 %v140
  %v647 = vunpack.c.l.b16 %v141
  %v648 = vunpack.c.h.b16 %v141
  %v649 = vunpack.c.l.b16 %v142
  %v650 = vunpack.c.h.b16 %v142
  %v651 = vunpack.c.l.b16 %v143
  %v652 = vunpack.c.h.b16 %v143
  %v653 = vunpack.c.l.b16 %v144
  %v654 = vunpack.c.h.b16 %v144
  %v655 = vunpack.c.l.b16 %v145
  %v656 = vunpack.c.h.b16 %v145
  %v657 = vunpack.c.l.b16 %v146
  %v658 = vunpack.c.h.b16 %v146
  %v659 = vunpack.c.l.b16 %v147
  %v660 = vunpack.c.h.b16 %v147
  %v661 = vunpack.c.l.b16 %v148
  %v662 = vunpack.c.h.b16 %v148
  %v663 = vunpack.c.l.b16 %v149
  %v664 = vunpack.c.h.b16 %v149
  %v665 = vunpack.c.l.b16 %v150
  %v666 = vunpack.c.h.b16 %v150
  %v667 = vunpack.c.l.b16 %v151
  %v668 = vunpack.c.h.b16 %v151
  %v669 = vunpack.c.l.b16 %v152
  %v670 = vunpack.c.h.b16 %v152
  %v671 = vunpack.c.l.b16 %v153
  %v672 = vunpack.c.h.b16 %v153
  %v673 = vunpack.c.l.b16 %v154
  %v674 = vunpack.c.h.b16 %v154
  %v675 = vunpack.c.l.b16 %v155
  %v676 = vunpack.c.h.b16 %v155
  %v677 = vunpack.c.l.b16 %v156
  %v678 = vunpack.c.h.b16 %v156
  %v679 = vunpack.c.l.b16 %v157
  %v680 = vunpack.c.h.b16 %v157
  %v681 = vunpack.c.l.b16 %v158
  %v682 = vunpack.c.h.b16 %v158
  %v683 = vunpack.c.l.b16 %v159
  %v684 = vunpack.c.h.b16 %v159
  %v685 = vunpack.c.l.b16 %v160
  %v686 = vunpack.c.h.b16 %v160
  %v687 = vunpack.c.l.b16 %v161
  %v688 = vunpack.c.h.b16 %v161
  %v689 = vunpack.c.l.b16 %v162
  %v690 = vunpack.c.h.b16 %v162
  %v691 = vunpack.c.l.b16 %v163
  %v692 = vunpack.c.h.b16 %v163
  %v693 = vunpack.c.l.b16 %v164
  %v694 = vunpack.c.h.b16 %v164
  %v695 = vunpack.c.l.b16 %v165
  %v696 = vunpack.c.h.b16 %v165
  %v697 = vunpack.c.l.b16 %v166
  %v698 = vunpack.c.h.b16 %v166
  %v699 = vunpack.c.l.b16 %v167
  %v700 = vunpack.c.h.b16 %v167
  %v701 = vunpack.c.l.b16 %v168
  %v702 = vunpack.c.h.b16 %v168
  %v703 = vunpack.c.l.b16 %v169
  %v704 = vunpack.c.h.b16 %v169
  %v705 = vunpack.c.l.b16 %v170
  %v706 = vunpack.c.h.b16 %v170
  %v707 = vunpack.c.l.b16 %v171
  %v708 = vunpack.c.h.b16 %v171
  %v709 = vunpack.c.l.b16 %v172
  %v710 = vunpack.c.h.b16 %v172
  %v711 = vunpack.c.l.b16 %v173
  %v712 = vunpack.c.h.b16 %v173
  %v713 = vunpack.c.l.b16 %v174
  %v714 = vunpack.c.h.b16 %v174
  %v715 = vunpack.c.l.b16 %v175
  %v716 = vunpack.c.h.b16 %v175
  %v717 = vunpack.c.l.b16 %v176
  %v718 = vunpack.c.h.b16 %v176
  %v719 = vunpack.c.l.b16 %v177
  %v720 = vunpack.c.h.b16 %v177
  %v721 = vunpack.c.l.b16 %v178
  %v722 = vunpack.c.h.b16 %v178
  %v723 = vunpack.c.l.b16 %v179
  %v724 = vunpack.c.h.b16 %v179
  %v725 = vunpack.c.l.b16 %v180
  %v726 = vunpack.c.h.b16 %v180
  %v727 = vunpack.c.l.b16 %v181
  %v728 = vunpack.c.h.b16 %v181
  %v729 = vunpack.c.l.b16 %v182
  %v730 = vunpack.c.h.b16 %v182
  %v731 = vunpack.c.l.b16 %v183
  %v732 = vunpack.c.h.b16 %v183
  %v733 = vunpack.c.l.b16 %v184
  %v734 = vunpack.c.h.b16 %v184
  %v735 = vunpack.c.l.b16 %v185
  %v736 = vunpack.c.h.b16 %v185
  %v737 = vunpack.c.l.b16 %v186
  %v738 = vunpack.c.h.b16 %v186
  %v739 = vunpack.c.l.b16 %v187
  %v740 = vunpack.c.h.b16 %v187
  %v741 = vunpack.c.l.b16 %v188
  %v742 = vunpack.c.h.b16 %v188
  %v743 = vunpack.c.l.b16 %v189
  %v744 = vunpack.c.h.b16 %v189
  %v745 = vunpack.c.l.b16 %v190
  %v746 = vunpack.c.h.b16 %v190
  %v747 = vunpack.c.l.b16 %v191
  %v748 = vunpack.c.h.b16 %v191
  %v749 = vunpack.c.l.b16 %v192
  %v750 = vunpack.c.h.b16 %v192
  %v751 = vunpack.c.l.b16 %v193
  %v752 = vunpack.c.h.b16 %v193
  %v753 = vunpack.c.l.b16 %v194
  %v754 = vunpack.c.h.b16 %v194
  %v755 = vunpack.c.l.b16 %v195
  %v756 = vunpack.c.h.b16 %v195
  %v757 = vunpack.c.l.b16 %v196
  %v758 = vunpack.c.h.b16 %v196
  %v759 = vunpack.c.l.b16 %v197
  %v760 = vunpack.c.h.b16 %v197
  %v761 = vunpack.c.l.b16 %v198
  %v762 = vunpack.c.h.b16 %v198
  %v763 = vunpack.c.l.b16 %v199
  %v764 = vunpack.c.h.b16 %v199
  %v765 = vunpack.c.l.b16 %v200
  %v766 = vunpack.c.h.b16 %v200
  %v767 = vunpack.c.l.b16 %v201
  %v768 = vunpack.c.h.b16 %v201
  %v769 = vunpack.c.l.b16 %v202
  %v770 = vunpack.c.h.b16 %v202
  %v771 = vunpack.c.l.b16 %v203
  %v772 = vunpack.c.h.b16 %v203
  %v773 = vunpack.c.l.b16 %v204
  %v774 = vunpack.c.h.b16 %v204
  %v775 = vunpack.c.l.b16 %v205
  %v776 = vunpack.c.h.b16 %v205
  %v777 = vunpack.c.l.b16 %v206
  %v778 = vunpack.c.h.b16 %v206
  %v779 = vunpack.c.l.b16 %v207
  %v780 = vunpack.c.h.b16 %v207
  %v781 = vunpack.c.l.b16 %v208
  %v782 = vunpack.c.h.b16 %v208
  %v783 = vunpack.c.l.b16 %v209
  %v784 = vunpack.c.h.b16 %v209
  %v785 = vunpack.c.l.b16 %v210
  %v786 = vunpack.c.h.b16 %v210
  %v787 = vunpack.c.l.b16 %v211
  %v788 = vunpack.c.h.b16 %v211
  %v789 = vunpack.c.l.b16 %v212
  %v790 = vunpack.c.h.b16 %v212
  %v791 = vunpack.c.l.b16 %v213
  %v792 = vunpack.c.h.b16 %v213
  %v793 = vunpack.c.l.b16 %v214
  %v794 = vunpack.c.h.b16 %v214
  %v795 = vunpack.c.l.b16 %v215
  %v796 = vunpack.c.h.b16 %v215
  %v797 = vunpack.c.l.b16 %v216
  %v798 = vunpack.c.h.b16 %v216
  %v799 = vunpack.c.l.b16 %v217
  %v800 = vunpack.c.h.b16 %v217
  %v801 = vunpack.c.l.b16 %v218
  %v802 = vunpack.c.h.b16 %v218
  %v803 = vunpack.c.l.b16 %v219
  %v804 = vunpack.c.h.b16 %v219
  %v805 = vunpack.c.l.b16 %v220
  %v806 = vunpack.c.h.b16 %v220
  %v807 = vunpack.c.l.b16 %v221
  %v808 = vunpack.c.h.b16 %v221
  %v809 = vunpack.c.l.b16 %v222
  %v810 = vunpack.c.h.b16 %v222
  %v811 = vunpack.c.l.b16 %v223
  %v812 = vunpack.c.h.b16 %v223
  %v813 = vunpack.c.l.b16 %v224
  %v814 = vunpack.c.h.b16 %v224
  %v815 = vunpack.c.l.b16 %v225
  %v816 = vunpack.c.h.b16 %v225
  %v817 = vunpack.c.l.b16 %v226
  %v818 = vunpack.c.h.b16 %v226
  %v819 = vunpack.c.l.b16 %v227
  %v820 = vunpack.c.h.b16 %v227
  %v821 = vunpack.c.l.b16 %v228
  %v822 = vunpack.c.h.b16 %v228
  %v823 = vunpack.c.l.b16 %v229
  %v824 = vunpack.c.h.b16 %v229
  %v825 = vunpack.c.l.b16 %v230
  %v826 = vunpack.c.h.b16 %v230
  %v827 = vunpack.c.l.b16 %v231
  %v828 = vunpack.c.h.b16 %v231
  %v829 = vunpack.c.l.b16 %v232
  %v830 = vunpack.c.h.b16 %v232
  %v831 = vunpack.c.l.b16 %v233
  %v832 = vunpack.c.h.b16 %v233
  %v833 = vunpack.c.l.b16 %v234
  %v834 = vunpack.c.h.b16 %v234
  %v835 = vunpack.c.l.b16 %v235
  %v836 = vunpack.c.h.b16 %v235
  %v837 = vunpack.c.l.b16 %v236
  %v838 = vunpack.c.h.b16 %v236
  %v839 = vunpack.c.l.b16 %v237
  %v840 = vunpack.c.h.b16 %v237
  %v841 = vunpack.c.l.b16 %v238
  %v842 = vunpack.c.h.b16 %v238
  %v843 = vunpack.c.l.b16 %v239
  %v844 = vunpack.c.h.b16 %v239
  %v845 = vunpack.c.l.b16 %v240
  %v846 = vunpack.c.h.b16 %v240
  %v847 = vunpack.c.l.b16 %v241
  %v848 = vunpack.c.h.b16 %v241
  %v849 = vunpack.c.l.b16 %v242
  %v850 = vunpack.c.h.b16 %v242
  %v851 = vunpack.c.l.b16 %v243
  %v852 = vunpack.c.h.b16 %v243
  %v853 = vunpack.c.l.b16 %v244
  %v854 = vunpack.c.h.b16 %v244
  %v855 = vpack.c.b16 %v467, %v463
  %v856 = vpack.c.b16 %v468, %v464
  %v857 = vpack.c.b16 %v469, %v465
  %v858 = vpack.c.b16 %v470, %v466
  %v859 = vpack.c.b16 %v475, %v471
  %v860 = vpack.c.b16 %v476, %v472
  %v861 = vpack.c.b16 %v477, %v473
  %v862 = vpack.c.b16 %v478, %v474
  %v863 = vpack.c.b16 %v483, %v479
  %v864 = vpack.c.b16 %v484, %v480
  %v865 = vpack.c.b16 %v485, %v481
  %v866 = vpack.c.b16 %v486, %v482
  %v867 = vpack.c.b16 %v491, %v487
  %v868 = vpack.c.b16 %v492, %v488
  %v869 = vpack.c.b16 %v493, %v489
  %v870 = vpack.c.b16 %v494, %v490
  %v871 = vpack.c.b16 %v499, %v495
  %v872 = vpack.c.b16 %v500, %v496
  %v873 = vpack.c.b16 %v501, %v497
  %v874 = vpack.c.b16 %v502, %v498
  %v875 = vpack.c.b16 %v507, %v503
  %v876 = vpack.c.b16 %v508, %v504
  %v877 = vpack.c.b16 %v509, %v505
  %v878 = vpack.c.b16 %v510, %v506
  %v879 = vpack.c.b16 %v515, %v511
  %v880 = vpack.c.b16 %v516, %v512
  %v881 = vpack.c.b16 %v517, %v513
  %v882 = vpack.c.b16 %v518, %v514
  %v883 = vpack.c.b16 %v523, %v519
  %v884 = vpack.c.b16 %v524, %v520
  %v885 = vpack.c.b16 %v525, %v521
  %v886 = vpack.c.b16 %v526, %v522
  %v887 = vpack.c.b16 %v531, %v527
  %v888 = vpack.c.b16 %v532, %v528
  %v889 = vpack.c.b16 %v533, %v529
  %v890 = vpack.c.b16 %v534, %v530
  %v891 = vpack.c.b16 %v539, %v535
  %v892 = vpack.c.b16 %v540, %v536
  %v893 = vpack.c.b16 %v541, %v537
  %v894 = vpack.c.b16 %v542, %v538
  %v895 = vpack.c.b16 %v547, %v543
  %v896 = vpack.c.b16 %v548, %v544
  %v897 = vpack.c.b16 %v549, %v545
  %v898 = vpack.c.b16 %v550, %v546
  %v899 = vpack.c.b16 %v555, %v551
  %v900 = vpack.c.b16 %v556, %v552
  %v901 = vpack.c.b16 %v557, %v553
  %v902 = vpack.c.b16 %v558, %v554
  %v903 = vpack.c.b16 %v563, %v559
  %v904 = vpack.c.b16 %v564, %v560
  %v905 = vpack.c.b16 %v565, %v561
  %v906 = vpack.c.b16 %v566, %v562
  %v907 = vpack.c.b16 %v571, %v567
  %v908 = vpack.c.b16 %v572, %v568
  %v909 = vpack.c.b16 %v573, %v569
  %v910 = vpack.c.b16 %v574, %v570
  %v911 = vpack.c.b16 %v579, %v575
  %v912 = vpack.c.b16 %v580, %v576
  %v913 = vpack.c.b16 %v581, %v577
  %v914 = vpack.c.b16 %v582, %v578
  %v915 = vpack.c.b16 %v587, %v583
  %v916 = vpack.c.b16 %v588, %v584
  %v917 = vpack.c.b16 %v589, %v585
  %v918 = vpack.c.b16 %v590, %v586
  %v919 = vpack.c.b16 %v595, %v591
  %v920 = vpack.c.b16 %v596, %v592
  %v921 = vpack.c.b16 %v597, %v593
  %v922 = vpack.c.b16 %v598, %v594
  %v923 = vpack.c.b16 %v603, %v599
  %v924 = vpack.c.b16 %v604, %v600
  %v925 = vpack.c.b16 %v605, %v601
  %v926 = vpack.c.b16 %v606, %v602
  %v927 = vpack.c.b16 %v611, %v607
  %v928 = vpack.c.b16 %v612, %v608
  %v929 = vpack.c.b16 %v613, %v609
  %v930 = vpack.c.b16 %v614, %v610
  %v931 = vpack.c.b16 %v619, %v615
  %v932 = vpack.c.b16 %v620, %v616
  %v933 = vpack.c.b16 %v621, %v617
  %v934 = vpack.c.b16 %v622, %v618
  %v935 = vpack.c.b16 %v627, %v623
  %v936 = vpack.c.b16 %v628, %v624
  %v937 = vpack.c.b16 %v629, %v625
  %v938 = vpack.c.b16 %v630, %v626
  %v939 = vpack.c.b16 %v635, %v631
  %v940 = vpack.c.b16 %v636, %v632
  %v941 = vpack.c.b16 %v637, %v633
  %v942 = vpack.c.b16 %v638, %v634
  %v943 = vpack.c.b16 %v643, %v639
  %v944 = vpack.c.b16 %v644, %v640
  %v945 = vpack.c.b16 %v645, %v641
  %v946 = vpack.c.b16 %v646, %v642
  %v947 = vpack.c.b16 %v651, %v647
  %v948 = vpack.c.b16 %v652, %v648
  %v949 = vpack.c.b16 %v653, %v649
  %v950 = vpack.c.b16 %v654, %v650
  %v951 = vpack.c.b16 %v659, %v655
  %v952 = vpack.c.b16 %v660, %v656
  %v953 = vpack.c.b16 %v661, %v657
  %v954 = vpack.c.b16 %v662, %v658
  %v955 = vpack.c.b16 %v667, %v663
  %v956 = vpack.c.b16 %v668, %v664
  %v957 = vpack.c.b16 %v669, %v665
  %v958 = vpack.c.b16 %v670, %v666
  %v959 = vpack.c.b16 %v675, %v671
  %v960 = vpack.c.b16 %v676, %v672
  %v961 = vpack.c.b16 %v677, %v673
  %v962 = vpack.c.b16 %v678, %v674
  %v963 = vpack.c.b16 %v683, %v679
  %v964 = vpack.c.b16 %v684, %v680
  %v965 = vpack.c.b16 %v685, %v681
  %v966 = vpack.c.b16 %v686, %v682
  %v967 = vpack.c.b16 %v691, %v687
  %v968 = vpack.c.b16 %v692, %v688
  %v969 = vpack.c.b16 %v693, %v689
  %v970 = vpack.c.b16 %v694, %v690
  %v971 = vpack.c.b16 %v699, %v695
  %v972 = vpack.c.b16 %v700, %v696
  %v973 = vpack.c.b16 %v701, %v697
  %v974 = vpack.c.b16 %v702, %v698
  %v975 = vpack.c.b16 %v707, %v703
  %v976 = vpack.c.b16 %v708, %v704
  %v977 = vpack.c.b16 %v709, %v705
  %v978 = vpack.c.b16 %v710, %v706
  %v979 = vpack.c.b16 %v715, %v711
  %v980 = vpack.c.b16 %v716, %v712
  %v981 = vpack.c.b16 %v717, %v713
  %v982 = vpack.c.b16 %v718, %v714
  %v983 = vpack.c.b16 %v723, %v719
  %v984 = vpack.c.b16 %v724, %v720
  %v985 = vpack.c.b16 %v725, %v721
  %v986 = vpack.c.b16 %v726, %v722
  %v987 = vpack.c.b16 %v731, %v727
  %v988 = vpack.c.b16 %v732, %v728
  %v989 = vpack.c.b16 %v733, %v729
  %v990 = vpack.c.b16 %v734, %v730
  %v991 = vpack.c.b16 %v739, %v735
  %v992 = vpack.c.b16 %v740, %v736
  %v993 = vpack.c.b16 %v741, %v737
  %v994 = vpack.c.b16 %v742, %v738
  %v995 = vpack.c.b16 %v747, %v743
  %v996 = vpack.c.b16 %v748, %v744
  %v997 = vpack.c.b16 %v749, %v745
  %v998 = vpack.c.b16 %v750, %v746
  %v999 = vpack.c.b16 %v755, %v751
  %v1000 = vpack.c.b16 %v756, %v752
  %v1001 = vpack.c.b16 %v757, %v753
  %v1002 = vpack.c.b16 %v758, %v754
  %v1003 = vpack.c.b16 %v763, %v759
  %v1004 = vpack.c.b16 %v764, %v760
  %v1005 = vpack.c.b16 %v765, %v761
  %v1006 = vpack.c.b16 %v766, %v762
  %v1007 = vpack.c.b16 %v771, %v767
  %v1008 = vpack.c.b16 %v772, %v768
  %v1009 = vpack.c.b16 %v773, %v769
  %v1010 = vpack.c.b16 %v774, %v770
  %v1011 = vpack.c.b16 %v779, %v775
  %v1012 = vpack.c.b16 %v780, %v776
  %v1013 = vpack.c.b16 %v781, %v777
  %v1014 = vpack.c.b16 %v782, %v778
  %v1015 = vpack.c.b16 %v787, %v783
  %v1016 = vpack.c.b16 %v788, %v784
  %v1017 = vpack.c.b16 %v789, %v785
  %v1018 = vpack.c.b16 %v790, %v786
  %v1019 = vpack.c.b16 %v795, %v791
  %v1020 = vpack.c.b16 %v796, %v792
  %v1021 = vpack.c.b16 %v797, %v793
  %v1022 = vpack.c.b16 %v798, %v794
  %v1023 = vpack.c.b16 %v803, %v799
  %v1024 = vpack.c.b16 %v804, %v800
  %v1025 = vpack.c.b16 %v805, %v801
  %v1026 = vpack.c.b16 %v806, %v802
  %v1027 = vpack.c.b16 %v811, %v807
  %v1028 = vpack.c.b16 %v812, %v808
  %v1029 = vpack.c.b16 %v813, %v809
  %v1030 = vpack.c.b16 %v814, %v810
  %v1031 = vpack.c.b16 %v819, %v815
  %v1032 = vpack.c.b16 %v820, %v816
  %v1033 = vpack.c.b16 %v821, %v817
  %v1034 = vpack.c.b16 %v822, %v818
  %v1035 = vpack.c.b16 %v827, %v823
  %v1036 = vpack.c.b16 %v828, %v824
  %v1037 = vpack.c.b16 %v829, %v825
  %v1038 = vpack.c.b16 %v830, %v826
  %v1039 = vpack.c.b16 %v835, %v831
  %v1040 = vpack.c.b16 %v836, %v832
  %v1041 = vpack.c.b16 %v837, %v833
  %v1042 = vpack.c.b16 %v838, %v834
  %v1043 = vpack.c.b16 %v843, %v839
  %v1044 = vpack.c.b16 %v844, %v840
  %v1045 = vpack.c.b16 %v845, %v841
  %v1046 = vpack.c.b16 %v846, %v842
  %v1047 = vpack.c.b16 %v851, %v847
  %v1048 = vpack.c.b16 %v852, %v848
  %v1049 = vpack.c.b16 %v853, %v849
  %v1050 = vpack.c.b16 %v854, %v850
  %vm1247 = vcmask 130048
  %v1249 = vsel %vm1247, %v48, 0
  %1251 = vmatprep.subr.bf16.mxu0 %v856
  %1252 = vmatpush1.bf16.msra.mxu0 %v855
  %1253 = vmatprep.subr.bf16.mxu0 %v860
  %1254 = vmatpush1.bf16.msra.mxu0 %v859
  %1255 = vmatprep.subr.bf16.mxu0 %v864
  %1256 = vmatpush1.bf16.msra.mxu0 %v863
  %1257 = vmatprep.subr.bf16.mxu0 %v868
  %1258 = vmatpush1.bf16.msra.mxu0 %v867
  %1259 = vmatprep.subr.bf16.mxu0 %v872
  %1260 = vmatpush1.bf16.msra.mxu0 %v871
  %1261 = vmatprep.subr.bf16.mxu0 %v876
  %1262 = vmatpush1.bf16.msra.mxu0 %v875
  %1263 = vmatprep.subr.bf16.mxu0 %v880
  %1264 = vmatpush1.bf16.msra.mxu0 %v879
  %1265 = vmatprep.subr.bf16.mxu0 %v884
  %1266 = vmatpush1.bf16.msra.mxu0 %v883
  %1267 = vmatprep.subr.bf16.mxu0 %v888
  %1268 = vmatpush1.bf16.msra.mxu0 %v887
  %1269 = vmatprep.subr.bf16.mxu0 %v892
  %1270 = vmatpush1.bf16.msra.mxu0 %v891
  %1271 = vmatprep.subr.bf16.mxu0 %v896
  %1272 = vmatpush1.bf16.msra.mxu0 %v895
  %1273 = vmatprep.subr.bf16.mxu0 %v900
  %1274 = vmatpush1.bf16.msra.mxu0 %v899
  %1275 = vmatprep.subr.bf16.mxu0 %v904
  %1276 = vmatpush1.bf16.msra.mxu0 %v903
  %1277 = vmatprep.subr.bf16.mxu0 %v908
  %1278 = vmatpush1.bf16.msra.mxu0 %v907
  %1279 = vmatprep.subr.bf16.mxu0 %v912
  %1280 = vmatpush1.bf16.msra.mxu0 %v911
  %1281 = vmatprep.subr.bf16.mxu0 %v916
  %1282 = vmatpush1.bf16.msra.mxu0 %v915
  %1283 = vmatprep.mubr.bf16.mxu0 %v43
  %1284 = vmatmul.mubr.bf16.gmra.mrb[0].mxu0 %v42
  %v1285 = vpop.f32.mrb[0].mxu0
  %v1286 = vadd.f32 %v250, %v1285
  %v1287 = vpop.f32.mrb[0].mxu0
  %v1288 = vadd.f32 %v254, %v1287
  %v1289 = vpop.f32.mrb[0].mxu0
  %v1290 = vpop.f32.mrb[0].mxu0
  %1291 = vdwg.mxu0
  %1292 = vmatprep.subr.bf16.mxu0 %v920
  %1293 = vmatpush1.bf16.msra.mxu0 %v919
  %1294 = vmatprep.subr.bf16.mxu0 %v924
  %1295 = vmatpush1.bf16.msra.mxu0 %v923
  %1296 = vmatprep.subr.bf16.mxu0 %v928
  %1297 = vmatpush1.bf16.msra.mxu0 %v927
  %1298 = vmatprep.subr.bf16.mxu0 %v932
  %1299 = vmatpush1.bf16.msra.mxu0 %v931
  %1300 = vmatprep.subr.bf16.mxu0 %v936
  %1301 = vmatpush1.bf16.msra.mxu0 %v935
  %1302 = vmatprep.subr.bf16.mxu0 %v940
  %1303 = vmatpush1.bf16.msra.mxu0 %v939
  %1304 = vmatprep.subr.bf16.mxu0 %v944
  %1305 = vmatpush1.bf16.msra.mxu0 %v943
  %1306 = vmatprep.subr.bf16.mxu0 %v948
  %1307 = vmatpush1.bf16.msra.mxu0 %v947
  %1308 = vmatprep.subr.bf16.mxu0 %v952
  %1309 = vmatpush1.bf16.msra.mxu0 %v951
  %1310 = vmatprep.subr.bf16.mxu0 %v956
  %1311 = vmatpush1.bf16.msra.mxu0 %v955
  %1312 = vmatprep.subr.bf16.mxu0 %v960
  %1313 = vmatpush1.bf16.msra.mxu0 %v959
  %1314 = vmatprep.subr.bf16.mxu0 %v964
  %1315 = vmatpush1.bf16.msra.mxu0 %v963
  %1316 = vmatprep.subr.bf16.mxu0 %v968
  %1317 = vmatpush1.bf16.msra.mxu0 %v967
  %1318 = vmatprep.subr.bf16.mxu0 %v972
  %1319 = vmatpush1.bf16.msra.mxu0 %v971
  %1320 = vmatprep.subr.bf16.mxu0 %v976
  %1321 = vmatpush1.bf16.msra.mxu0 %v975
  %1322 = vmatprep.subr.bf16.mxu0 %v980
  %1323 = vmatpush1.bf16.msra.mxu0 %v979
  %1324 = vmatprep.mubr.bf16.mxu0 %v45
  %1325 = vmatmul.mubr.bf16.gmra.mrb[0].mxu0 %v44
  %v1326 = vpop.f32.mrb[0].mxu0
  %v1327 = vadd.f32 %v1286, %v1326
  %v1328 = vpop.f32.mrb[0].mxu0
  %v1329 = vadd.f32 %v1288, %v1328
  %v1330 = vpop.f32.mrb[0].mxu0
  %v1331 = vpop.f32.mrb[0].mxu0
  %1332 = vdwg.mxu0
  %1333 = vmatprep.subr.bf16.mxu0 %v984
  %1334 = vmatpush1.bf16.msra.mxu0 %v983
  %1335 = vmatprep.subr.bf16.mxu0 %v988
  %1336 = vmatpush1.bf16.msra.mxu0 %v987
  %1337 = vmatprep.subr.bf16.mxu0 %v992
  %1338 = vmatpush1.bf16.msra.mxu0 %v991
  %1339 = vmatprep.subr.bf16.mxu0 %v996
  %1340 = vmatpush1.bf16.msra.mxu0 %v995
  %1341 = vmatprep.subr.bf16.mxu0 %v1000
  %1342 = vmatpush1.bf16.msra.mxu0 %v999
  %1343 = vmatprep.subr.bf16.mxu0 %v1004
  %1344 = vmatpush1.bf16.msra.mxu0 %v1003
  %1345 = vmatprep.subr.bf16.mxu0 %v1008
  %1346 = vmatpush1.bf16.msra.mxu0 %v1007
  %1347 = vmatprep.subr.bf16.mxu0 %v1012
  %1348 = vmatpush1.bf16.msra.mxu0 %v1011
  %1349 = vmatprep.subr.bf16.mxu0 %v1016
  %1350 = vmatpush1.bf16.msra.mxu0 %v1015
  %1351 = vmatprep.subr.bf16.mxu0 %v1020
  %1352 = vmatpush1.bf16.msra.mxu0 %v1019
  %1353 = vmatprep.subr.bf16.mxu0 %v1024
  %1354 = vmatpush1.bf16.msra.mxu0 %v1023
  %1355 = vmatprep.subr.bf16.mxu0 %v1028
  %1356 = vmatpush1.bf16.msra.mxu0 %v1027
  %1357 = vmatprep.subr.bf16.mxu0 %v1032
  %1358 = vmatpush1.bf16.msra.mxu0 %v1031
  %1359 = vmatprep.subr.bf16.mxu0 %v1036
  %1360 = vmatpush1.bf16.msra.mxu0 %v1035
  %1361 = vmatprep.subr.bf16.mxu0 %v1040
  %1362 = vmatpush1.bf16.msra.mxu0 %v1039
  %1363 = vmatprep.subr.bf16.mxu0 %v1044
  %1364 = vmatpush1.bf16.msra.mxu0 %v1043
  %1365 = vmatprep.mubr.bf16.mxu0 %v47
  %1366 = vmatmul.mubr.bf16.gmra.mrb[0].mxu0 %v46
  %v1367 = vpop.f32.mrb[0].mxu0
  %v1368 = vadd.f32 %v1327, %v1367
  %v1369 = vpop.f32.mrb[0].mxu0
  %v1370 = vadd.f32 %v1329, %v1369
  %v1371 = vpop.f32.mrb[0].mxu0
  %v1372 = vpop.f32.mrb[0].mxu0
  %1373 = vdwg.mxu0
  %1374 = vmatprep.subr.bf16.mxu0 %v1048
  %1375 = vmatpush1.bf16.msra.mxu0 %v1047
  %1376 = vmatprep.subr.bf16.mxu0 0
  %1377 = vmatpush1.bf16.msra.mxu0 0
  %1378 = vmatprep.subr.bf16.mxu0 0
  %1379 = vmatpush1.bf16.msra.mxu0 0
  %1380 = vmatprep.subr.bf16.mxu0 0
  %1381 = vmatpush1.bf16.msra.mxu0 0
  %1382 = vmatprep.subr.bf16.mxu0 0
  %1383 = vmatpush1.bf16.msra.mxu0 0
  %1384 = vmatprep.subr.bf16.mxu0 0
  %1385 = vmatpush1.bf16.msra.mxu0 0
  %1386 = vmatprep.subr.bf16.mxu0 0
  %1387 = vmatpush1.bf16.msra.mxu0 0
  %1388 = vmatprep.subr.bf16.mxu0 0
  %1389 = vmatpush1.bf16.msra.mxu0 0
  %1390 = vmatprep.subr.bf16.mxu0 0
  %1391 = vmatpush1.bf16.msra.mxu0 0
  %1392 = vmatprep.subr.bf16.mxu0 0
  %1393 = vmatpush1.bf16.msra.mxu0 0
  %1394 = vmatprep.subr.bf16.mxu0 0
  %1395 = vmatpush1.bf16.msra.mxu0 0
  %1396 = vmatprep.subr.bf16.mxu0 0
  %1397 = vmatpush1.bf16.msra.mxu0 0
  %1398 = vmatprep.subr.bf16.mxu0 0
  %1399 = vmatpush1.bf16.msra.mxu0 0
  %1400 = vmatprep.subr.bf16.mxu0 0
  %1401 = vmatpush1.bf16.msra.mxu0 0
  %1402 = vmatprep.subr.bf16.mxu0 0
  %1403 = vmatpush1.bf16.msra.mxu0 0
  %1404 = vmatprep.subr.bf16.mxu0 0
  %1405 = vmatpush1.bf16.msra.mxu0 0
  %1406 = vmatprep.mubr.bf16.mxu0 0
  %1407 = vmatmul.mubr.bf16.gmra.mrb[0].mxu0 %v1249
  %v1408 = vpop.f32.mrb[0].mxu0
  %v1409 = vadd.f32 %v1368, %v1408
  %v1410 = vpop.f32.mrb[0].mxu0
  %v1411 = vadd.f32 %v1370, %v1410
  %v1412 = vpop.f32.mrb[0].mxu0
  %v1413 = vpop.f32.mrb[0].mxu0
  %1414 = vdwg.mxu0
  %1415 = vmatprep.subr.bf16.mxu0 %v858
  %1416 = vmatpush1.bf16.msra.mxu0 %v857
  %1417 = vmatprep.subr.bf16.mxu0 %v862
  %1418 = vmatpush1.bf16.msra.mxu0 %v861
  %1419 = vmatprep.subr.bf16.mxu0 %v866
  %1420 = vmatpush1.bf16.msra.mxu0 %v865
  %1421 = vmatprep.subr.bf16.mxu0 %v870
  %1422 = vmatpush1.bf16.msra.mxu0 %v869
  %1423 = vmatprep.subr.bf16.mxu0 %v874
  %1424 = vmatpush1.bf16.msra.mxu0 %v873
  %1425 = vmatprep.subr.bf16.mxu0 %v878
  %1426 = vmatpush1.bf16.msra.mxu0 %v877
  %1427 = vmatprep.subr.bf16.mxu0 %v882
  %1428 = vmatpush1.bf16.msra.mxu0 %v881
  %1429 = vmatprep.subr.bf16.mxu0 %v886
  %1430 = vmatpush1.bf16.msra.mxu0 %v885
  %1431 = vmatprep.subr.bf16.mxu0 %v890
  %1432 = vmatpush1.bf16.msra.mxu0 %v889
  %1433 = vmatprep.subr.bf16.mxu0 %v894
  %1434 = vmatpush1.bf16.msra.mxu0 %v893
  %1435 = vmatprep.subr.bf16.mxu0 %v898
  %1436 = vmatpush1.bf16.msra.mxu0 %v897
  %1437 = vmatprep.subr.bf16.mxu0 %v902
  %1438 = vmatpush1.bf16.msra.mxu0 %v901
  %1439 = vmatprep.subr.bf16.mxu0 %v906
  %1440 = vmatpush1.bf16.msra.mxu0 %v905
  %1441 = vmatprep.subr.bf16.mxu0 %v910
  %1442 = vmatpush1.bf16.msra.mxu0 %v909
  %1443 = vmatprep.subr.bf16.mxu0 %v914
  %1444 = vmatpush1.bf16.msra.mxu0 %v913
  %1445 = vmatprep.subr.bf16.mxu0 %v918
  %1446 = vmatpush1.bf16.msra.mxu0 %v917
  %1447 = vmatprep.mubr.bf16.mxu0 %v43
  %1448 = vmatmul.mubr.bf16.gmra.mrb[0].mxu0 %v42
  %v1449 = vpop.f32.mrb[0].mxu0
  %v1450 = vadd.f32 %v258, %v1449
  %v1451 = vpop.f32.mrb[0].mxu0
  %v1452 = vadd.f32 %v262, %v1451
  %v1453 = vpop.f32.mrb[0].mxu0
  %v1454 = vpop.f32.mrb[0].mxu0
  %1455 = vdwg.mxu0
  %1456 = vmatprep.subr.bf16.mxu0 %v922
  %1457 = vmatpush1.bf16.msra.mxu0 %v921
  %1458 = vmatprep.subr.bf16.mxu0 %v926
  %1459 = vmatpush1.bf16.msra.mxu0 %v925
  %1460 = vmatprep.subr.bf16.mxu0 %v930
  %1461 = vmatpush1.bf16.msra.mxu0 %v929
  %1462 = vmatprep.subr.bf16.mxu0 %v934
  %1463 = vmatpush1.bf16.msra.mxu0 %v933
  %1464 = vmatprep.subr.bf16.mxu0 %v938
  %1465 = vmatpush1.bf16.msra.mxu0 %v937
  %1466 = vmatprep.subr.bf16.mxu0 %v942
  %1467 = vmatpush1.bf16.msra.mxu0 %v941
  %1468 = vmatprep.subr.bf16.mxu0 %v946
  %1469 = vmatpush1.bf16.msra.mxu0 %v945
  %1470 = vmatprep.subr.bf16.mxu0 %v950
  %1471 = vmatpush1.bf16.msra.mxu0 %v949
  %1472 = vmatprep.subr.bf16.mxu0 %v954
  %1473 = vmatpush1.bf16.msra.mxu0 %v953
  %1474 = vmatprep.subr.bf16.mxu0 %v958
  %1475 = vmatpush1.bf16.msra.mxu0 %v957
  %1476 = vmatprep.subr.bf16.mxu0 %v962
  %1477 = vmatpush1.bf16.msra.mxu0 %v961
  %1478 = vmatprep.subr.bf16.mxu0 %v966
  %1479 = vmatpush1.bf16.msra.mxu0 %v965
  %1480 = vmatprep.subr.bf16.mxu0 %v970
  %1481 = vmatpush1.bf16.msra.mxu0 %v969
  %1482 = vmatprep.subr.bf16.mxu0 %v974
  %1483 = vmatpush1.bf16.msra.mxu0 %v973
  %1484 = vmatprep.subr.bf16.mxu0 %v978
  %1485 = vmatpush1.bf16.msra.mxu0 %v977
  %1486 = vmatprep.subr.bf16.mxu0 %v982
  %1487 = vmatpush1.bf16.msra.mxu0 %v981
  %1488 = vmatprep.mubr.bf16.mxu0 %v45
  %1489 = vmatmul.mubr.bf16.gmra.mrb[0].mxu0 %v44
  %v1490 = vpop.f32.mrb[0].mxu0
  %v1491 = vadd.f32 %v1450, %v1490
  %v1492 = vpop.f32.mrb[0].mxu0
  %v1493 = vadd.f32 %v1452, %v1492
  %v1494 = vpop.f32.mrb[0].mxu0
  %v1495 = vpop.f32.mrb[0].mxu0
  %1496 = vdwg.mxu0
  %1497 = vmatprep.subr.bf16.mxu0 %v986
  %1498 = vmatpush1.bf16.msra.mxu0 %v985
  %1499 = vmatprep.subr.bf16.mxu0 %v990
  %1500 = vmatpush1.bf16.msra.mxu0 %v989
  %1501 = vmatprep.subr.bf16.mxu0 %v994
  %1502 = vmatpush1.bf16.msra.mxu0 %v993
  %1503 = vmatprep.subr.bf16.mxu0 %v998
  %1504 = vmatpush1.bf16.msra.mxu0 %v997
  %1505 = vmatprep.subr.bf16.mxu0 %v1002
  %1506 = vmatpush1.bf16.msra.mxu0 %v1001
  %1507 = vmatprep.subr.bf16.mxu0 %v1006
  %1508 = vmatpush1.bf16.msra.mxu0 %v1005
  %1509 = vmatprep.subr.bf16.mxu0 %v1010
  %1510 = vmatpush1.bf16.msra.mxu0 %v1009
  %1511 = vmatprep.subr.bf16.mxu0 %v1014
  %1512 = vmatpush1.bf16.msra.mxu0 %v1013
  %1513 = vmatprep.subr.bf16.mxu0 %v1018
  %1514 = vmatpush1.bf16.msra.mxu0 %v1017
  %1515 = vmatprep.subr.bf16.mxu0 %v1022
  %1516 = vmatpush1.bf16.msra.mxu0 %v1021
  %1517 = vmatprep.subr.bf16.mxu0 %v1026
  %1518 = vmatpush1.bf16.msra.mxu0 %v1025
  %1519 = vmatprep.subr.bf16.mxu0 %v1030
  %1520 = vmatpush1.bf16.msra.mxu0 %v1029
  %1521 = vmatprep.subr.bf16.mxu0 %v1034
  %1522 = vmatpush1.bf16.msra.mxu0 %v1033
  %1523 = vmatprep.subr.bf16.mxu0 %v1038
  %1524 = vmatpush1.bf16.msra.mxu0 %v1037
  %1525 = vmatprep.subr.bf16.mxu0 %v1042
  %1526 = vmatpush1.bf16.msra.mxu0 %v1041
  %1527 = vmatprep.subr.bf16.mxu0 %v1046
  %1528 = vmatpush1.bf16.msra.mxu0 %v1045
  %1529 = vmatprep.mubr.bf16.mxu0 %v47
  %1530 = vmatmul.mubr.bf16.gmra.mrb[0].mxu0 %v46
  %v1531 = vpop.f32.mrb[0].mxu0
  %v1532 = vadd.f32 %v1491, %v1531
  %v1533 = vpop.f32.mrb[0].mxu0
  %v1534 = vadd.f32 %v1493, %v1533
  %v1535 = vpop.f32.mrb[0].mxu0
  %v1536 = vpop.f32.mrb[0].mxu0
  %1537 = vdwg.mxu0
  %1538 = vmatprep.subr.bf16.mxu0 %v1050
  %1539 = vmatpush1.bf16.msra.mxu0 %v1049
  %1540 = vmatprep.subr.bf16.mxu0 0
  %1541 = vmatpush1.bf16.msra.mxu0 0
  %1542 = vmatprep.subr.bf16.mxu0 0
  %1543 = vmatpush1.bf16.msra.mxu0 0
  %1544 = vmatprep.subr.bf16.mxu0 0
  %1545 = vmatpush1.bf16.msra.mxu0 0
  %1546 = vmatprep.subr.bf16.mxu0 0
  %1547 = vmatpush1.bf16.msra.mxu0 0
  %1548 = vmatprep.subr.bf16.mxu0 0
  %1549 = vmatpush1.bf16.msra.mxu0 0
  %1550 = vmatprep.subr.bf16.mxu0 0
  %1551 = vmatpush1.bf16.msra.mxu0 0
  %1552 = vmatprep.subr.bf16.mxu0 0
  %1553 = vmatpush1.bf16.msra.mxu0 0
  %1554 = vmatprep.subr.bf16.mxu0 0
  %1555 = vmatpush1.bf16.msra.mxu0 0
  %1556 = vmatprep.subr.bf16.mxu0 0
  %1557 = vmatpush1.bf16.msra.mxu0 0
  %1558 = vmatprep.subr.bf16.mxu0 0
  %1559 = vmatpush1.bf16.msra.mxu0 0
  %1560 = vmatprep.subr.bf16.mxu0 0
  %1561 = vmatpush1.bf16.msra.mxu0 0
  %1562 = vmatprep.subr.bf16.mxu0 0
  %1563 = vmatpush1.bf16.msra.mxu0 0
  %1564 = vmatprep.subr.bf16.mxu0 0
  %1565 = vmatpush1.bf16.msra.mxu0 0
  %1566 = vmatprep.subr.bf16.mxu0 0
  %1567 = vmatpush1.bf16.msra.mxu0 0
  %1568 = vmatprep.subr.bf16.mxu0 0
  %1569 = vmatpush1.bf16.msra.mxu0 0
  %1570 = vmatprep.mubr.bf16.mxu0 0
  %1571 = vmatmul.mubr.bf16.gmra.mrb[0].mxu0 %v1249
  %v1572 = vpop.f32.mrb[0].mxu0
  %v1573 = vadd.f32 %v1532, %v1572
  %v1574 = vpop.f32.mrb[0].mxu0
  %v1575 = vadd.f32 %v1534, %v1574
  %v1576 = vpop.f32.mrb[0].mxu0
  %v1577 = vpop.f32.mrb[0].mxu0
  %1578 = vdwg.mxu0
  %v1579 = vmax.f32 %v1409, 0.0
  %v1580 = vmax.f32 %v1411, 0.0
  %v1581 = vmax.f32 %v1573, 0.0
  %v1582 = vmax.f32 %v1575, 0.0
  %v1583 = vpack.c.bf16 %v1579, %v1579
  %v1584 = vpack.c.bf16 %v1580, %v1580
  %v1585 = vpack.c.bf16 %v1581, %v1581
  %v1586 = vpack.c.bf16 %v1582, %v1582
  %v1587 = vld [vmem:[%s3] sm:$0xf]
  %v1588 = vld [vmem:[%s3 + $0x4] sm:$0xf]
  %v1589 = vld [vmem:[%s3 + $0x8] sm:$0xf]
  %v1590 = vld [vmem:[%s3 + $0xc] sm:$0xf]
  %v1591 = vld [vmem:[%s3 + $0x10] sm:$0xf]
  %v1592 = vld [vmem:[%s3 + $0x14] sm:$0xf]
  %v1593 = vld [vmem:[%s3 + $0x18] sm:$0xf]
  %v1594 = vld [vmem:[%s3 + $0x1c] sm:$0xf]
  %v1595 = vld [vmem:[%s3 + $0x20] sm:$0xf]
  %v1596 = vld [vmem:[%s3 + $0x24] sm:$0xf]
  %v1597 = vld [vmem:[%s3 + $0x28] sm:$0xf]
  %v1598 = vld [vmem:[%s3 + $0x2c] sm:$0xf]
  %v1599 = vld [vmem:[%s3 + $0x30] sm:$0xf]
  %v1600 = vld [vmem:[%s3 + $0x34] sm:$0xf]
  %v1601 = vld [vmem:[%s3 + $0x38] sm:$0xf]
  %v1602 = vld [vmem:[%s3 + $0x3c] sm:$0xf]
  %v1603 = vld [vmem:[%s3 + $0x40] sm:$0xf]
  %v1604 = vld [vmem:[%s3 + $0x44] sm:$0xf]
  %v1605 = vld [vmem:[%s3 + $0x48] sm:$0xf]
  %v1606 = vld [vmem:[%s3 + $0x4c] sm:$0xf]
  %v1607 = vld [vmem:[%s3 + $0x50] sm:$0xf]
  %v1608 = vld [vmem:[%s3 + $0x54] sm:$0xf]
  %v1609 = vld [vmem:[%s3 + $0x58] sm:$0xf]
  %v1610 = vld [vmem:[%s3 + $0x5c] sm:$0xf]
  %v1611 = vld [vmem:[%s3 + $0x60] sm:$0xf]
  %v1612 = vld [vmem:[%s3 + $0x64] sm:$0xf]
  %v1613 = vld [vmem:[%s3 + $0x68] sm:$0xf]
  %v1614 = vld [vmem:[%s3 + $0x6c] sm:$0xf]
  %v1615 = vld [vmem:[%s3 + $0x70] sm:$0xf]
  %v1616 = vld [vmem:[%s3 + $0x74] sm:$0xf]
  %v1617 = vld [vmem:[%s3 + $0x78] sm:$0xf]
  %v1618 = vld [vmem:[%s3 + $0x7c] sm:$0xf]
  %v1619 = vld [vmem:[%s3 + $0x80] sm:$0xf]
  %v1620 = vld [vmem:[%s3 + $0x84] sm:$0xf]
  %v1621 = vld [vmem:[%s3 + $0x88] sm:$0xf]
  %v1622 = vld [vmem:[%s3 + $0x8c] sm:$0xf]
  %v1623 = vld [vmem:[%s3 + $0x90] sm:$0xf]
  %v1624 = vld [vmem:[%s3 + $0x94] sm:$0xf]
  %v1625 = vld [vmem:[%s3 + $0x98] sm:$0xf]
  %v1626 = vld [vmem:[%s3 + $0x9c] sm:$0xf]
  %v1627 = vld [vmem:[%s3 + $0xa0] sm:$0xf]
  %v1628 = vld [vmem:[%s3 + $0xa4] sm:$0xf]
  %v1629 = vld [vmem:[%s3 + $0xa8] sm:$0xf]
  %v1630 = vld [vmem:[%s3 + $0xac] sm:$0xf]
  %v1631 = vld [vmem:[%s3 + $0xb0] sm:$0xf]
  %v1632 = vld [vmem:[%s3 + $0xb4] sm:$0xf]
  %v1633 = vld [vmem:[%s3 + $0xb8] sm:$0xf]
  %v1634 = vld [vmem:[%s3 + $0xbc] sm:$0xf]
  %v1635 = vld [vmem:[%s3 + $0xc0] sm:$0xf]
  %v1636 = vld [vmem:[%s3 + $0xc4] sm:$0xf]
  %v1637 = vld [vmem:[%s3 + $0xc8] sm:$0xf]
  %v1638 = vld [vmem:[%s3 + $0xcc] sm:$0xf]
  %v1639 = vld [vmem:[%s3 + $0xd0] sm:$0xf]
  %v1640 = vld [vmem:[%s3 + $0xd4] sm:$0xf]
  %v1641 = vld [vmem:[%s3 + $0xd8] sm:$0xf]
  %v1642 = vld [vmem:[%s3 + $0xdc] sm:$0xf]
  %v1643 = vld [vmem:[%s3 + $0xe0] sm:$0xf]
  %v1644 = vld [vmem:[%s3 + $0xe4] sm:$0xf]
  %v1645 = vld [vmem:[%s3 + $0xe8] sm:$0xf]
  %v1646 = vld [vmem:[%s3 + $0xec] sm:$0xf]
  %v1647 = vld [vmem:[%s3 + $0xf0] sm:$0xf]
  %v1648 = vld [vmem:[%s3 + $0xf4] sm:$0xf]
  %v1649 = vld [vmem:[%s3 + $0xf8] sm:$0xf]
  %v1650 = vld [vmem:[%s3 + $0xfc] sm:$0xf]
  %v1651 = vld [vmem:[%s4] sm:$0x1]
  %v1653 = vlaneseq
  %v1654 = vshrl.u32 %v1653, 7
  %v1655 = vsub.s32 0, %v1654
  %v1656 = vrot.slane %v1651, %v1655
  %v1722 = vunpack.c.l.b16 %v1587
  %v1723 = vunpack.c.l.b16 %v1588
  %v1724 = vunpack.c.l.b16 %v1589
  %v1725 = vunpack.c.l.b16 %v1590
  %v1726 = vunpack.c.l.b16 %v1591
  %v1727 = vunpack.c.l.b16 %v1592
  %v1728 = vunpack.c.l.b16 %v1593
  %v1729 = vunpack.c.l.b16 %v1594
  %v1730 = vunpack.c.l.b16 %v1595
  %v1731 = vunpack.c.l.b16 %v1596
  %v1732 = vunpack.c.l.b16 %v1597
  %v1733 = vunpack.c.l.b16 %v1598
  %v1734 = vunpack.c.l.b16 %v1599
  %v1735 = vunpack.c.l.b16 %v1600
  %v1736 = vunpack.c.l.b16 %v1601
  %v1737 = vunpack.c.l.b16 %v1602
  %v1738 = vunpack.c.l.b16 %v1603
  %v1739 = vunpack.c.l.b16 %v1604
  %v1740 = vunpack.c.l.b16 %v1605
  %v1741 = vunpack.c.l.b16 %v1606
  %v1742 = vunpack.c.l.b16 %v1607
  %v1743 = vunpack.c.l.b16 %v1608
  %v1744 = vunpack.c.l.b16 %v1609
  %v1745 = vunpack.c.l.b16 %v1610
  %v1746 = vunpack.c.l.b16 %v1611
  %v1747 = vunpack.c.l.b16 %v1612
  %v1748 = vunpack.c.l.b16 %v1613
  %v1749 = vunpack.c.l.b16 %v1614
  %v1750 = vunpack.c.l.b16 %v1615
  %v1751 = vunpack.c.l.b16 %v1616
  %v1752 = vunpack.c.l.b16 %v1617
  %v1753 = vunpack.c.l.b16 %v1618
  %v1754 = vunpack.c.l.b16 %v1619
  %v1755 = vunpack.c.l.b16 %v1620
  %v1756 = vunpack.c.l.b16 %v1621
  %v1757 = vunpack.c.l.b16 %v1622
  %v1758 = vunpack.c.l.b16 %v1623
  %v1759 = vunpack.c.l.b16 %v1624
  %v1760 = vunpack.c.l.b16 %v1625
  %v1761 = vunpack.c.l.b16 %v1626
  %v1762 = vunpack.c.l.b16 %v1627
  %v1763 = vunpack.c.l.b16 %v1628
  %v1764 = vunpack.c.l.b16 %v1629
  %v1765 = vunpack.c.l.b16 %v1630
  %v1766 = vunpack.c.l.b16 %v1631
  %v1767 = vunpack.c.l.b16 %v1632
  %v1768 = vunpack.c.l.b16 %v1633
  %v1769 = vunpack.c.l.b16 %v1634
  %v1770 = vunpack.c.l.b16 %v1635
  %v1771 = vunpack.c.l.b16 %v1636
  %v1772 = vunpack.c.l.b16 %v1637
  %v1773 = vunpack.c.l.b16 %v1638
  %v1774 = vunpack.c.l.b16 %v1639
  %v1775 = vunpack.c.l.b16 %v1640
  %v1776 = vunpack.c.l.b16 %v1641
  %v1777 = vunpack.c.l.b16 %v1642
  %v1778 = vunpack.c.l.b16 %v1643
  %v1779 = vunpack.c.l.b16 %v1644
  %v1780 = vunpack.c.l.b16 %v1645
  %v1781 = vunpack.c.l.b16 %v1646
  %v1782 = vunpack.c.l.b16 %v1647
  %v1783 = vunpack.c.l.b16 %v1648
  %v1784 = vunpack.c.l.b16 %v1649
  %v1785 = vunpack.c.l.b16 %v1650
  %v1786 = vpack.c.b16 %v1723, %v1722
  %v1787 = vpack.c.b16 %v1725, %v1724
  %v1788 = vpack.c.b16 %v1727, %v1726
  %v1789 = vpack.c.b16 %v1729, %v1728
  %v1790 = vpack.c.b16 %v1731, %v1730
  %v1791 = vpack.c.b16 %v1733, %v1732
  %v1792 = vpack.c.b16 %v1735, %v1734
  %v1793 = vpack.c.b16 %v1737, %v1736
  %v1794 = vpack.c.b16 %v1739, %v1738
  %v1795 = vpack.c.b16 %v1741, %v1740
  %v1796 = vpack.c.b16 %v1743, %v1742
  %v1797 = vpack.c.b16 %v1745, %v1744
  %v1798 = vpack.c.b16 %v1747, %v1746
  %v1799 = vpack.c.b16 %v1749, %v1748
  %v1800 = vpack.c.b16 %v1751, %v1750
  %v1801 = vpack.c.b16 %v1753, %v1752
  %v1802 = vpack.c.b16 %v1755, %v1754
  %v1803 = vpack.c.b16 %v1757, %v1756
  %v1804 = vpack.c.b16 %v1759, %v1758
  %v1805 = vpack.c.b16 %v1761, %v1760
  %v1806 = vpack.c.b16 %v1763, %v1762
  %v1807 = vpack.c.b16 %v1765, %v1764
  %v1808 = vpack.c.b16 %v1767, %v1766
  %v1809 = vpack.c.b16 %v1769, %v1768
  %v1810 = vpack.c.b16 %v1771, %v1770
  %v1811 = vpack.c.b16 %v1773, %v1772
  %v1812 = vpack.c.b16 %v1775, %v1774
  %v1813 = vpack.c.b16 %v1777, %v1776
  %v1814 = vpack.c.b16 %v1779, %v1778
  %v1815 = vpack.c.b16 %v1781, %v1780
  %v1816 = vpack.c.b16 %v1783, %v1782
  %v1817 = vpack.c.b16 %v1785, %v1784
  %1850 = vmatprep.subr.bf16.mxu0 0
  %1851 = vmatpush1.bf16.msra.mxu0 %v1786
  %1852 = vmatprep.subr.bf16.mxu0 0
  %1853 = vmatpush1.bf16.msra.mxu0 %v1787
  %1854 = vmatprep.subr.bf16.mxu0 0
  %1855 = vmatpush1.bf16.msra.mxu0 %v1788
  %1856 = vmatprep.subr.bf16.mxu0 0
  %1857 = vmatpush1.bf16.msra.mxu0 %v1789
  %1858 = vmatprep.subr.bf16.mxu0 0
  %1859 = vmatpush1.bf16.msra.mxu0 %v1790
  %1860 = vmatprep.subr.bf16.mxu0 0
  %1861 = vmatpush1.bf16.msra.mxu0 %v1791
  %1862 = vmatprep.subr.bf16.mxu0 0
  %1863 = vmatpush1.bf16.msra.mxu0 %v1792
  %1864 = vmatprep.subr.bf16.mxu0 0
  %1865 = vmatpush1.bf16.msra.mxu0 %v1793
  %1866 = vmatprep.subr.bf16.mxu0 0
  %1867 = vmatpush1.bf16.msra.mxu0 %v1794
  %1868 = vmatprep.subr.bf16.mxu0 0
  %1869 = vmatpush1.bf16.msra.mxu0 %v1795
  %1870 = vmatprep.subr.bf16.mxu0 0
  %1871 = vmatpush1.bf16.msra.mxu0 %v1796
  %1872 = vmatprep.subr.bf16.mxu0 0
  %1873 = vmatpush1.bf16.msra.mxu0 %v1797
  %1874 = vmatprep.subr.bf16.mxu0 0
  %1875 = vmatpush1.bf16.msra.mxu0 %v1798
  %1876 = vmatprep.subr.bf16.mxu0 0
  %1877 = vmatpush1.bf16.msra.mxu0 %v1799
  %1878 = vmatprep.subr.bf16.mxu0 0
  %1879 = vmatpush1.bf16.msra.mxu0 %v1800
  %1880 = vmatprep.subr.bf16.mxu0 0
  %1881 = vmatpush1.bf16.msra.mxu0 %v1801
  %1882 = vmatprep.mubr.bf16.mxu0 %v1584
  %1883 = vmatmul.mubr.bf16.gmra.mrb[0].mxu0 %v1583
  %v1884 = vpop.f32.mrb[0].mxu0
  %v1885 = vadd.f32 %v1656, %v1884
  %v1886 = vpop.f32.mrb[0].mxu0
  %v1887 = vpop.f32.mrb[0].mxu0
  %v1888 = vpop.f32.mrb[0].mxu0
  %1889 = vdwg.mxu0
  %1890 = vmatprep.subr.bf16.mxu0 0
  %1891 = vmatpush1.bf16.msra.mxu0 %v1802
  %1892 = vmatprep.subr.bf16.mxu0 0
  %1893 = vmatpush1.bf16.msra.mxu0 %v1803
  %1894 = vmatprep.subr.bf16.mxu0 0
  %1895 = vmatpush1.bf16.msra.mxu0 %v1804
  %1896 = vmatprep.subr.bf16.mxu0 0
  %1897 = vmatpush1.bf16.msra.mxu0 %v1805
  %1898 = vmatprep.subr.bf16.mxu0 0
  %1899 = vmatpush1.bf16.msra.mxu0 %v1806
  %1900 = vmatprep.subr.bf16.mxu0 0
  %1901 = vmatpush1.bf16.msra.mxu0 %v1807
  %1902 = vmatprep.subr.bf16.mxu0 0
  %1903 = vmatpush1.bf16.msra.mxu0 %v1808
  %1904 = vmatprep.subr.bf16.mxu0 0
  %1905 = vmatpush1.bf16.msra.mxu0 %v1809
  %1906 = vmatprep.subr.bf16.mxu0 0
  %1907 = vmatpush1.bf16.msra.mxu0 %v1810
  %1908 = vmatprep.subr.bf16.mxu0 0
  %1909 = vmatpush1.bf16.msra.mxu0 %v1811
  %1910 = vmatprep.subr.bf16.mxu0 0
  %1911 = vmatpush1.bf16.msra.mxu0 %v1812
  %1912 = vmatprep.subr.bf16.mxu0 0
  %1913 = vmatpush1.bf16.msra.mxu0 %v1813
  %1914 = vmatprep.subr.bf16.mxu0 0
  %1915 = vmatpush1.bf16.msra.mxu0 %v1814
  %1916 = vmatprep.subr.bf16.mxu0 0
  %1917 = vmatpush1.bf16.msra.mxu0 %v1815
  %1918 = vmatprep.subr.bf16.mxu0 0
  %1919 = vmatpush1.bf16.msra.mxu0 %v1816
  %1920 = vmatprep.subr.bf16.mxu0 0
  %1921 = vmatpush1.bf16.msra.mxu0 %v1817
  %1922 = vmatprep.mubr.bf16.mxu0 %v1586
  %1923 = vmatmul.mubr.bf16.gmra.mrb[0].mxu0 %v1585
  %v1924 = vpop.f32.mrb[0].mxu0
  %v1925 = vadd.f32 %v1885, %v1924
  %v1926 = vpop.f32.mrb[0].mxu0
  %v1927 = vpop.f32.mrb[0].mxu0
  %v1928 = vpop.f32.mrb[0].mxu0
  %1929 = vdwg.mxu0
  %vm1930 = vcmask 162816
  %1931 = vst.msk [vmem:[%s10] sm:$0xff] %vm1930, %v1925
  %v1932 = vpack.c.bf16 %v1925, %v1925
  %v1933 = vld [vmem:[%s5] sm:$0xff]
  %v1934 = vld [vmem:[%s5 + $0x8] sm:$0xff]
  %v1935 = vld [vmem:[%s5 + $0x10] sm:$0xff]
  %v1936 = vld [vmem:[%s5 + $0x18] sm:$0xff]
  %v1937 = vld [vmem:[%s5 + $0x20] sm:$0x33]
  %v1938 = vld [vmem:[%s5 + $0x28] sm:$0x33]
  %v1939 = vld [vmem:[%s6] sm:$0xf]
  %v1941 = vlaneseq
  %v1942 = vshrl.u32 %v1941, 7
  %v1943 = vsub.s32 0, %v1942
  %v1944 = vrot.slane %v1939, %v1943
  %v1945 = vlaneseq
  %v1946 = vshrl.u32 %v1945, 7
  %v1947 = vsub.s32 1, %v1946
  %v1948 = vrot.slane %v1939, %v1947
  %v1949 = vlaneseq
  %v1950 = vshrl.u32 %v1949, 7
  %v1951 = vsub.s32 2, %v1950
  %v1952 = vrot.slane %v1939, %v1951
  %v1953 = vlaneseq
  %v1954 = vshrl.u32 %v1953, 7
  %v1955 = vsub.s32 3, %v1954
  %v1956 = vrot.slane %v1939, %v1955
  %v1967 = vunpack.c.l.b16 %v1933
  %v1968 = vunpack.c.h.b16 %v1933
  %v1969 = vunpack.c.l.b16 %v1934
  %v1970 = vunpack.c.h.b16 %v1934
  %v1971 = vunpack.c.l.b16 %v1935
  %v1972 = vunpack.c.h.b16 %v1935
  %v1973 = vunpack.c.l.b16 %v1936
  %v1974 = vunpack.c.h.b16 %v1936
  %v1975 = vunpack.c.l.b16 %v1937
  %v1976 = vunpack.c.h.b16 %v1937
  %v1977 = vunpack.c.l.b16 %v1938
  %v1978 = vunpack.c.h.b16 %v1938
  %v1979 = vpack.c.b16 %v1971, %v1967
  %v1980 = vpack.c.b16 %v1972, %v1968
  %v1981 = vpack.c.b16 %v1973, %v1969
  %v1982 = vpack.c.b16 %v1974, %v1970
  %v1983 = vpack.c.b16 %v1975, %v1975
  %v1984 = vpack.c.b16 %v1976, %v1976
  %v1985 = vpack.c.b16 %v1977, %v1977
  %v1986 = vpack.c.b16 %v1978, %v1978
  %v1992 = vsel %vm1930, %v1932, 0
  %vm1994 = vcmask 1041408
  %v1996 = vsel %vm1994, %v1983, 0
  %v1999 = vsel %vm1994, %v1984, 0
  %v2002 = vsel %vm1994, %v1985, 0
  %v2005 = vsel %vm1994, %v1986, 0
  %2007 = vmatprep.subr.bf16.mxu0 %v1980
  %2008 = vmatpush1.bf16.msra.mxu0 %v1979
  %2009 = vmatprep.subr.bf16.mxu0 %v1999
  %2010 = vmatpush1.bf16.msra.mxu0 %v1996
  %2011 = vmatprep.subr.bf16.mxu0 0
  %2012 = vmatpush1.bf16.msra.mxu0 0
  %2013 = vmatprep.subr.bf16.mxu0 0
  %2014 = vmatpush1.bf16.msra.mxu0 0
  %2015 = vmatprep.subr.bf16.mxu0 0
  %2016 = vmatpush1.bf16.msra.mxu0 0
  %2017 = vmatprep.subr.bf16.mxu0 0
  %2018 = vmatpush1.bf16.msra.mxu0 0
  %2019 = vmatprep.subr.bf16.mxu0 0
  %2020 = vmatpush1.bf16.msra.mxu0 0
  %2021 = vmatprep.subr.bf16.mxu0 0
  %2022 = vmatpush1.bf16.msra.mxu0 0
  %2023 = vmatprep.subr.bf16.mxu0 0
  %2024 = vmatpush1.bf16.msra.mxu0 0
  %2025 = vmatprep.subr.bf16.mxu0 0
  %2026 = vmatpush1.bf16.msra.mxu0 0
  %2027 = vmatprep.subr.bf16.mxu0 0
  %2028 = vmatpush1.bf16.msra.mxu0 0
  %2029 = vmatprep.subr.bf16.mxu0 0
  %2030 = vmatpush1.bf16.msra.mxu0 0
  %2031 = vmatprep.subr.bf16.mxu0 0
  %2032 = vmatpush1.bf16.msra.mxu0 0
  %2033 = vmatprep.subr.bf16.mxu0 0
  %2034 = vmatpush1.bf16.msra.mxu0 0
  %2035 = vmatprep.subr.bf16.mxu0 0
  %2036 = vmatpush1.bf16.msra.mxu0 0
  %2037 = vmatprep.subr.bf16.mxu0 0
  %2038 = vmatpush1.bf16.msra.mxu0 0
  %2039 = vmatprep.mubr.bf16.mxu0 0
  %2040 = vmatmul.mubr.bf16.gmra.mrb[0].mxu0 %v1992
  %v2041 = vpop.f32.mrb[0].mxu0
  %v2042 = vadd.f32 %v1944, %v2041
  %v2043 = vpop.f32.mrb[0].mxu0
  %v2044 = vadd.f32 %v1948, %v2043
  %v2045 = vpop.f32.mrb[0].mxu0
  %v2046 = vpop.f32.mrb[0].mxu0
  %2047 = vdwg.mxu0
  %2048 = vmatprep.subr.bf16.mxu0 %v1982
  %2049 = vmatpush1.bf16.msra.mxu0 %v1981
  %2050 = vmatprep.subr.bf16.mxu0 %v2005
  %2051 = vmatpush1.bf16.msra.mxu0 %v2002
  %2052 = vmatprep.subr.bf16.mxu0 0
  %2053 = vmatpush1.bf16.msra.mxu0 0
  %2054 = vmatprep.subr.bf16.mxu0 0
  %2055 = vmatpush1.bf16.msra.mxu0 0
  %2056 = vmatprep.subr.bf16.mxu0 0
  %2057 = vmatpush1.bf16.msra.mxu0 0
  %2058 = vmatprep.subr.bf16.mxu0 0
  %2059 = vmatpush1.bf16.msra.mxu0 0
  %2060 = vmatprep.subr.bf16.mxu0 0
  %2061 = vmatpush1.bf16.msra.mxu0 0
  %2062 = vmatprep.subr.bf16.mxu0 0
  %2063 = vmatpush1.bf16.msra.mxu0 0
  %2064 = vmatprep.subr.bf16.mxu0 0
  %2065 = vmatpush1.bf16.msra.mxu0 0
  %2066 = vmatprep.subr.bf16.mxu0 0
  %2067 = vmatpush1.bf16.msra.mxu0 0
  %2068 = vmatprep.subr.bf16.mxu0 0
  %2069 = vmatpush1.bf16.msra.mxu0 0
  %2070 = vmatprep.subr.bf16.mxu0 0
  %2071 = vmatpush1.bf16.msra.mxu0 0
  %2072 = vmatprep.subr.bf16.mxu0 0
  %2073 = vmatpush1.bf16.msra.mxu0 0
  %2074 = vmatprep.subr.bf16.mxu0 0
  %2075 = vmatpush1.bf16.msra.mxu0 0
  %2076 = vmatprep.subr.bf16.mxu0 0
  %2077 = vmatpush1.bf16.msra.mxu0 0
  %2078 = vmatprep.subr.bf16.mxu0 0
  %2079 = vmatpush1.bf16.msra.mxu0 0
  %2080 = vmatprep.mubr.bf16.mxu0 0
  %2081 = vmatmul.mubr.bf16.gmra.mrb[0].mxu0 %v1992
  %v2082 = vpop.f32.mrb[0].mxu0
  %v2083 = vadd.f32 %v1952, %v2082
  %v2084 = vpop.f32.mrb[0].mxu0
  %v2085 = vadd.f32 %v1956, %v2084
  %v2086 = vpop.f32.mrb[0].mxu0
  %v2087 = vpop.f32.mrb[0].mxu0
  %2088 = vdwg.mxu0
  %v2089 = vmax.f32 %v2042, 0.0
  %v2090 = vmax.f32 %v2044, 0.0
  %v2091 = vmax.f32 %v2083, 0.0
  %v2092 = vmax.f32 %v2085, 0.0
  %v2093 = vpack.c.bf16 %v2089, %v2089
  %v2094 = vpack.c.bf16 %v2090, %v2090
  %v2095 = vpack.c.bf16 %v2091, %v2091
  %v2096 = vpack.c.bf16 %v2092, %v2092
  %v2097 = vld [vmem:[%s7] sm:$0xff]
  %v2098 = vld [vmem:[%s7 + $0x8] sm:$0xff]
  %v2099 = vld [vmem:[%s7 + $0x10] sm:$0xff]
  %v2100 = vld [vmem:[%s7 + $0x18] sm:$0xf]
  %v2101 = vld [vmem:[%s7 + $0x1c] sm:$0xff]
  %v2102 = vld [vmem:[%s7 + $0x24] sm:$0xff]
  %v2103 = vld [vmem:[%s7 + $0x2c] sm:$0xff]
  %v2104 = vld [vmem:[%s7 + $0x34] sm:$0xf]
  %v2105 = vld [vmem:[%s7 + $0x38] sm:$0xff]
  %v2106 = vld [vmem:[%s7 + $0x40] sm:$0xff]
  %v2107 = vld [vmem:[%s7 + $0x48] sm:$0xff]
  %v2108 = vld [vmem:[%s7 + $0x50] sm:$0xf]
  %v2109 = vld [vmem:[%s7 + $0x54] sm:$0xff]
  %v2110 = vld [vmem:[%s7 + $0x5c] sm:$0xff]
  %v2111 = vld [vmem:[%s7 + $0x64] sm:$0xff]
  %v2112 = vld [vmem:[%s7 + $0x6c] sm:$0xf]
  %v2113 = vld [vmem:[%s7 + $0x70] sm:$0xff]
  %v2114 = vld [vmem:[%s7 + $0x78] sm:$0xff]
  %v2115 = vld [vmem:[%s7 + $0x80] sm:$0xff]
  %v2116 = vld [vmem:[%s7 + $0x88] sm:$0xf]
  %v2117 = vld [vmem:[%s7 + $0x8c] sm:$0xff]
  %v2118 = vld [vmem:[%s7 + $0x94] sm:$0xff]
  %v2119 = vld [vmem:[%s7 + $0x9c] sm:$0xff]
  %v2120 = vld [vmem:[%s7 + $0xa4] sm:$0xf]
  %v2121 = vld [vmem:[%s7 + $0xa8] sm:$0xff]
  %v2122 = vld [vmem:[%s7 + $0xb0] sm:$0xff]
  %v2123 = vld [vmem:[%s7 + $0xb8] sm:$0xff]
  %v2124 = vld [vmem:[%s7 + $0xc0] sm:$0xf]
  %v2125 = vld [vmem:[%s7 + $0xc4] sm:$0xff]
  %v2126 = vld [vmem:[%s7 + $0xcc] sm:$0xff]
  %v2127 = vld [vmem:[%s7 + $0xd4] sm:$0xff]
  %v2128 = vld [vmem:[%s7 + $0xdc] sm:$0xf]
  %v2129 = vld [vmem:[%s7 + $0xe0] sm:$0xff]
  %v2130 = vld [vmem:[%s7 + $0xe8] sm:$0xff]
  %v2131 = vld [vmem:[%s7 + $0xf0] sm:$0xff]
  %v2132 = vld [vmem:[%s7 + $0xf8] sm:$0xf]
  %v2133 = vld [vmem:[%s7 + $0xfc] sm:$0xff]
  %v2134 = vld [vmem:[%s7 + $0x104] sm:$0xff]
  %v2135 = vld [vmem:[%s7 + $0x10c] sm:$0xff]
  %v2136 = vld [vmem:[%s7 + $0x114] sm:$0xf]
  %v2137 = vld [vmem:[%s7 + $0x118] sm:$0xff]
  %v2138 = vld [vmem:[%s7 + $0x120] sm:$0xff]
  %v2139 = vld [vmem:[%s7 + $0x128] sm:$0xff]
  %v2140 = vld [vmem:[%s7 + $0x130] sm:$0xf]
  %v2141 = vld [vmem:[%s7 + $0x134] sm:$0xff]
  %v2142 = vld [vmem:[%s7 + $0x13c] sm:$0xff]
  %v2143 = vld [vmem:[%s7 + $0x144] sm:$0xff]
  %v2144 = vld [vmem:[%s7 + $0x14c] sm:$0xf]
  %v2145 = vld [vmem:[%s7 + $0x150] sm:$0xff]
  %v2146 = vld [vmem:[%s7 + $0x158] sm:$0xff]
  %v2147 = vld [vmem:[%s7 + $0x160] sm:$0xff]
  %v2148 = vld [vmem:[%s7 + $0x168] sm:$0xf]
  %v2149 = vld [vmem:[%s7 + $0x16c] sm:$0xff]
  %v2150 = vld [vmem:[%s7 + $0x174] sm:$0xff]
  %v2151 = vld [vmem:[%s7 + $0x17c] sm:$0xff]
  %v2152 = vld [vmem:[%s7 + $0x184] sm:$0xf]
  %v2153 = vld [vmem:[%s7 + $0x188] sm:$0xff]
  %v2154 = vld [vmem:[%s7 + $0x190] sm:$0xff]
  %v2155 = vld [vmem:[%s7 + $0x198] sm:$0xff]
  %v2156 = vld [vmem:[%s7 + $0x1a0] sm:$0xf]
  %v2157 = vld [vmem:[%s7 + $0x1a4] sm:$0xff]
  %v2158 = vld [vmem:[%s7 + $0x1ac] sm:$0xff]
  %v2159 = vld [vmem:[%s7 + $0x1b4] sm:$0xff]
  %v2160 = vld [vmem:[%s7 + $0x1bc] sm:$0xf]
  %v2161 = vld [vmem:[%s7 + $0x1c0] sm:$0xff]
  %v2162 = vld [vmem:[%s7 + $0x1c8] sm:$0xff]
  %v2163 = vld [vmem:[%s7 + $0x1d0] sm:$0xff]
  %v2164 = vld [vmem:[%s7 + $0x1d8] sm:$0xf]
  %v2165 = vld [vmem:[%s7 + $0x1dc] sm:$0xff]
  %v2166 = vld [vmem:[%s7 + $0x1e4] sm:$0xff]
  %v2167 = vld [vmem:[%s7 + $0x1ec] sm:$0xff]
  %v2168 = vld [vmem:[%s7 + $0x1f4] sm:$0xf]
  %v2169 = vld [vmem:[%s7 + $0x1f8] sm:$0xff]
  %v2170 = vld [vmem:[%s7 + $0x200] sm:$0xff]
  %v2171 = vld [vmem:[%s7 + $0x208] sm:$0xff]
  %v2172 = vld [vmem:[%s7 + $0x210] sm:$0xf]
  %v2173 = vld [vmem:[%s7 + $0x214] sm:$0xff]
  %v2174 = vld [vmem:[%s7 + $0x21c] sm:$0xff]
  %v2175 = vld [vmem:[%s7 + $0x224] sm:$0xff]
  %v2176 = vld [vmem:[%s7 + $0x22c] sm:$0xf]
  %v2177 = vld [vmem:[%s7 + $0x230] sm:$0xff]
  %v2178 = vld [vmem:[%s7 + $0x238] sm:$0xff]
  %v2179 = vld [vmem:[%s7 + $0x240] sm:$0xff]
  %v2180 = vld [vmem:[%s7 + $0x248] sm:$0xf]
  %v2181 = vld [vmem:[%s7 + $0x24c] sm:$0xff]
  %v2182 = vld [vmem:[%s7 + $0x254] sm:$0xff]
  %v2183 = vld [vmem:[%s7 + $0x25c] sm:$0xff]
  %v2184 = vld [vmem:[%s7 + $0x264] sm:$0xf]
  %v2185 = vld [vmem:[%s7 + $0x268] sm:$0xff]
  %v2186 = vld [vmem:[%s7 + $0x270] sm:$0xff]
  %v2187 = vld [vmem:[%s7 + $0x278] sm:$0xff]
  %v2188 = vld [vmem:[%s7 + $0x280] sm:$0xf]
  %v2189 = vld [vmem:[%s7 + $0x284] sm:$0xff]
  %v2190 = vld [vmem:[%s7 + $0x28c] sm:$0xff]
  %v2191 = vld [vmem:[%s7 + $0x294] sm:$0xff]
  %v2192 = vld [vmem:[%s7 + $0x29c] sm:$0xf]
  %v2193 = vld [vmem:[%s7 + $0x2a0] sm:$0xff]
  %v2194 = vld [vmem:[%s7 + $0x2a8] sm:$0xff]
  %v2195 = vld [vmem:[%s7 + $0x2b0] sm:$0xff]
  %v2196 = vld [vmem:[%s7 + $0x2b8] sm:$0xf]
  %v2197 = vld [vmem:[%s7 + $0x2bc] sm:$0xff]
  %v2198 = vld [vmem:[%s7 + $0x2c4] sm:$0xff]
  %v2199 = vld [vmem:[%s7 + $0x2cc] sm:$0xff]
  %v2200 = vld [vmem:[%s7 + $0x2d4] sm:$0xf]
  %v2201 = vld [vmem:[%s7 + $0x2d8] sm:$0xff]
  %v2202 = vld [vmem:[%s7 + $0x2e0] sm:$0xff]
  %v2203 = vld [vmem:[%s7 + $0x2e8] sm:$0xff]
  %v2204 = vld [vmem:[%s7 + $0x2f0] sm:$0xf]
  %v2205 = vld [vmem:[%s7 + $0x2f4] sm:$0xff]
  %v2206 = vld [vmem:[%s7 + $0x2fc] sm:$0xff]
  %v2207 = vld [vmem:[%s7 + $0x304] sm:$0xff]
  %v2208 = vld [vmem:[%s7 + $0x30c] sm:$0xf]
  %v2209 = vld [vmem:[%s7 + $0x310] sm:$0xff]
  %v2210 = vld [vmem:[%s7 + $0x318] sm:$0xff]
  %v2211 = vld [vmem:[%s7 + $0x320] sm:$0xff]
  %v2212 = vld [vmem:[%s7 + $0x328] sm:$0xf]
  %v2213 = vld [vmem:[%s7 + $0x32c] sm:$0xff]
  %v2214 = vld [vmem:[%s7 + $0x334] sm:$0xff]
  %v2215 = vld [vmem:[%s7 + $0x33c] sm:$0xff]
  %v2216 = vld [vmem:[%s7 + $0x344] sm:$0xf]
  %v2217 = vld [vmem:[%s7 + $0x348] sm:$0xff]
  %v2218 = vld [vmem:[%s7 + $0x350] sm:$0xff]
  %v2219 = vld [vmem:[%s7 + $0x358] sm:$0xff]
  %v2220 = vld [vmem:[%s7 + $0x360] sm:$0xf]
  %v2221 = vld [vmem:[%s7 + $0x364] sm:$0xff]
  %v2222 = vld [vmem:[%s7 + $0x36c] sm:$0xff]
  %v2223 = vld [vmem:[%s7 + $0x374] sm:$0xff]
  %v2224 = vld [vmem:[%s7 + $0x37c] sm:$0xf]
  %v2225 = vld [vmem:[%s7 + $0x380] sm:$0xff]
  %v2226 = vld [vmem:[%s7 + $0x388] sm:$0xff]
  %v2227 = vld [vmem:[%s7 + $0x390] sm:$0xff]
  %v2228 = vld [vmem:[%s7 + $0x398] sm:$0xf]
  %v2229 = vld [vmem:[%s7 + $0x39c] sm:$0xff]
  %v2230 = vld [vmem:[%s7 + $0x3a4] sm:$0xff]
  %v2231 = vld [vmem:[%s7 + $0x3ac] sm:$0xff]
  %v2232 = vld [vmem:[%s7 + $0x3b4] sm:$0xf]
  %v2233 = vld [vmem:[%s7 + $0x3b8] sm:$0xff]
  %v2234 = vld [vmem:[%s7 + $0x3c0] sm:$0xff]
  %v2235 = vld [vmem:[%s7 + $0x3c8] sm:$0xff]
  %v2236 = vld [vmem:[%s7 + $0x3d0] sm:$0xf]
  %v2237 = vld [vmem:[%s7 + $0x3d4] sm:$0xff]
  %v2238 = vld [vmem:[%s7 + $0x3dc] sm:$0xff]
  %v2239 = vld [vmem:[%s7 + $0x3e4] sm:$0xff]
  %v2240 = vld [vmem:[%s7 + $0x3ec] sm:$0xf]
  %v2241 = vld [vmem:[%s7 + $0x3f0] sm:$0xff]
  %v2242 = vld [vmem:[%s7 + $0x3f8] sm:$0xff]
  %v2243 = vld [vmem:[%s7 + $0x400] sm:$0xff]
  %v2244 = vld [vmem:[%s7 + $0x408] sm:$0xf]
  %v2245 = vld [vmem:[%s7 + $0x40c] sm:$0xff]
  %v2246 = vld [vmem:[%s7 + $0x414] sm:$0xff]
  %v2247 = vld [vmem:[%s7 + $0x41c] sm:$0xff]
  %v2248 = vld [vmem:[%s7 + $0x424] sm:$0xf]
  %v2249 = vld [vmem:[%s7 + $0x428] sm:$0xff]
  %v2250 = vld [vmem:[%s7 + $0x430] sm:$0xff]
  %v2251 = vld [vmem:[%s7 + $0x438] sm:$0xff]
  %v2252 = vld [vmem:[%s7 + $0x440] sm:$0xf]
  %v2253 = vld [vmem:[%s7 + $0x444] sm:$0xff]
  %v2254 = vld [vmem:[%s7 + $0x44c] sm:$0xff]
  %v2255 = vld [vmem:[%s7 + $0x454] sm:$0xff]
  %v2256 = vld [vmem:[%s7 + $0x45c] sm:$0xf]
  %v2257 = vld [vmem:[%s7 + $0x460] sm:$0xff]
  %v2258 = vld [vmem:[%s7 + $0x468] sm:$0xff]
  %v2259 = vld [vmem:[%s7 + $0x470] sm:$0xff]
  %v2260 = vld [vmem:[%s7 + $0x478] sm:$0xf]
  %v2261 = vld [vmem:[%s7 + $0x47c] sm:$0xff]
  %v2262 = vld [vmem:[%s7 + $0x484] sm:$0xff]
  %v2263 = vld [vmem:[%s7 + $0x48c] sm:$0xff]
  %v2264 = vld [vmem:[%s7 + $0x494] sm:$0xf]
  %v2265 = vld [vmem:[%s7 + $0x498] sm:$0xff]
  %v2266 = vld [vmem:[%s7 + $0x4a0] sm:$0xff]
  %v2267 = vld [vmem:[%s7 + $0x4a8] sm:$0xff]
  %v2268 = vld [vmem:[%s7 + $0x4b0] sm:$0xf]
  %v2269 = vld [vmem:[%s7 + $0x4b4] sm:$0xff]
  %v2270 = vld [vmem:[%s7 + $0x4bc] sm:$0xff]
  %v2271 = vld [vmem:[%s7 + $0x4c4] sm:$0xff]
  %v2272 = vld [vmem:[%s7 + $0x4cc] sm:$0xf]
  %v2273 = vld [vmem:[%s7 + $0x4d0] sm:$0xff]
  %v2274 = vld [vmem:[%s7 + $0x4d8] sm:$0xff]
  %v2275 = vld [vmem:[%s7 + $0x4e0] sm:$0xff]
  %v2276 = vld [vmem:[%s7 + $0x4e8] sm:$0xf]
  %v2277 = vld [vmem:[%s7 + $0x4ec] sm:$0xff]
  %v2278 = vld [vmem:[%s7 + $0x4f4] sm:$0xff]
  %v2279 = vld [vmem:[%s7 + $0x4fc] sm:$0xff]
  %v2280 = vld [vmem:[%s7 + $0x504] sm:$0xf]
  %v2281 = vld [vmem:[%s7 + $0x508] sm:$0xff]
  %v2282 = vld [vmem:[%s7 + $0x510] sm:$0xff]
  %v2283 = vld [vmem:[%s7 + $0x518] sm:$0xff]
  %v2284 = vld [vmem:[%s7 + $0x520] sm:$0xf]
  %v2285 = vld [vmem:[%s7 + $0x524] sm:$0xff]
  %v2286 = vld [vmem:[%s7 + $0x52c] sm:$0xff]
  %v2287 = vld [vmem:[%s7 + $0x534] sm:$0xff]
  %v2288 = vld [vmem:[%s7 + $0x53c] sm:$0xf]
  %v2289 = vld [vmem:[%s7 + $0x540] sm:$0xff]
  %v2290 = vld [vmem:[%s7 + $0x548] sm:$0xff]
  %v2291 = vld [vmem:[%s7 + $0x550] sm:$0xff]
  %v2292 = vld [vmem:[%s7 + $0x558] sm:$0xf]
  %v2293 = vld [vmem:[%s7 + $0x55c] sm:$0xff]
  %v2294 = vld [vmem:[%s7 + $0x564] sm:$0xff]
  %v2295 = vld [vmem:[%s7 + $0x56c] sm:$0xff]
  %v2296 = vld [vmem:[%s7 + $0x574] sm:$0xf]
  %v2297 = vld [vmem:[%s7 + $0x578] sm:$0xff]
  %v2298 = vld [vmem:[%s7 + $0x580] sm:$0xff]
  %v2299 = vld [vmem:[%s7 + $0x588] sm:$0xff]
  %v2300 = vld [vmem:[%s7 + $0x590] sm:$0xf]
  %v2301 = vld [vmem:[%s7 + $0x594] sm:$0xff]
  %v2302 = vld [vmem:[%s7 + $0x59c] sm:$0xff]
  %v2303 = vld [vmem:[%s7 + $0x5a4] sm:$0xff]
  %v2304 = vld [vmem:[%s7 + $0x5ac] sm:$0xf]
  %v2305 = vld [vmem:[%s7 + $0x5b0] sm:$0xff]
  %v2306 = vld [vmem:[%s7 + $0x5b8] sm:$0xff]
  %v2307 = vld [vmem:[%s7 + $0x5c0] sm:$0xff]
  %v2308 = vld [vmem:[%s7 + $0x5c8] sm:$0xf]
  %v2309 = vld [vmem:[%s7 + $0x5cc] sm:$0xff]
  %v2310 = vld [vmem:[%s7 + $0x5d4] sm:$0xff]
  %v2311 = vld [vmem:[%s7 + $0x5dc] sm:$0xff]
  %v2312 = vld [vmem:[%s7 + $0x5e4] sm:$0xf]
  %v2313 = vld [vmem:[%s7 + $0x5e8] sm:$0xff]
  %v2314 = vld [vmem:[%s7 + $0x5f0] sm:$0xff]
  %v2315 = vld [vmem:[%s7 + $0x5f8] sm:$0xff]
  %v2316 = vld [vmem:[%s7 + $0x600] sm:$0xf]
  %v2317 = vld [vmem:[%s7 + $0x604] sm:$0xff]
  %v2318 = vld [vmem:[%s7 + $0x60c] sm:$0xff]
  %v2319 = vld [vmem:[%s7 + $0x614] sm:$0xff]
  %v2320 = vld [vmem:[%s7 + $0x61c] sm:$0xf]
  %v2321 = vld [vmem:[%s7 + $0x620] sm:$0xff]
  %v2322 = vld [vmem:[%s7 + $0x628] sm:$0xff]
  %v2323 = vld [vmem:[%s7 + $0x630] sm:$0xff]
  %v2324 = vld [vmem:[%s7 + $0x638] sm:$0xf]
  %v2325 = vld [vmem:[%s7 + $0x63c] sm:$0xff]
  %v2326 = vld [vmem:[%s7 + $0x644] sm:$0xff]
  %v2327 = vld [vmem:[%s7 + $0x64c] sm:$0xff]
  %v2328 = vld [vmem:[%s7 + $0x654] sm:$0xf]
  %v2329 = vld [vmem:[%s7 + $0x658] sm:$0xff]
  %v2330 = vld [vmem:[%s7 + $0x660] sm:$0xff]
  %v2331 = vld [vmem:[%s7 + $0x668] sm:$0xff]
  %v2332 = vld [vmem:[%s7 + $0x670] sm:$0xf]
  %v2333 = vld [vmem:[%s7 + $0x674] sm:$0xff]
  %v2334 = vld [vmem:[%s7 + $0x67c] sm:$0xff]
  %v2335 = vld [vmem:[%s7 + $0x684] sm:$0xff]
  %v2336 = vld [vmem:[%s7 + $0x68c] sm:$0xf]
  %v2337 = vld [vmem:[%s7 + $0x690] sm:$0xff]
  %v2338 = vld [vmem:[%s7 + $0x698] sm:$0xff]
  %v2339 = vld [vmem:[%s7 + $0x6a0] sm:$0xff]
  %v2340 = vld [vmem:[%s7 + $0x6a8] sm:$0xf]
  %v2341 = vld [vmem:[%s7 + $0x6ac] sm:$0xff]
  %v2342 = vld [vmem:[%s7 + $0x6b4] sm:$0xff]
  %v2343 = vld [vmem:[%s7 + $0x6bc] sm:$0xff]
  %v2344 = vld [vmem:[%s7 + $0x6c4] sm:$0xf]
  %v2345 = vld [vmem:[%s7 + $0x6c8] sm:$0xff]
  %v2346 = vld [vmem:[%s7 + $0x6d0] sm:$0xff]
  %v2347 = vld [vmem:[%s7 + $0x6d8] sm:$0xff]
  %v2348 = vld [vmem:[%s7 + $0x6e0] sm:$0xf]
  %v2349 = vld [vmem:[%s7 + $0x6e4] sm:$0xff]
  %v2350 = vld [vmem:[%s7 + $0x6ec] sm:$0xff]
  %v2351 = vld [vmem:[%s7 + $0x6f4] sm:$0xff]
  %v2352 = vld [vmem:[%s7 + $0x6fc] sm:$0xf]
  %v2353 = vld [vmem:[%s8] sm:$0x7f]
  %v2355 = vlaneseq
  %v2356 = vshrl.u32 %v2355, 7
  %v2357 = vsub.s32 0, %v2356
  %v2358 = vrot.slane %v2353, %v2357
  %v2359 = vlaneseq
  %v2360 = vshrl.u32 %v2359, 7
  %v2361 = vsub.s32 1, %v2360
  %v2362 = vrot.slane %v2353, %v2361
  %v2363 = vlaneseq
  %v2364 = vshrl.u32 %v2363, 7
  %v2365 = vsub.s32 2, %v2364
  %v2366 = vrot.slane %v2353, %v2365
  %v2367 = vlaneseq
  %v2368 = vshrl.u32 %v2367, 7
  %v2369 = vsub.s32 3, %v2368
  %v2370 = vrot.slane %v2353, %v2369
  %v2371 = vlaneseq
  %v2372 = vshrl.u32 %v2371, 7
  %v2373 = vsub.s32 4, %v2372
  %v2374 = vrot.slane %v2353, %v2373
  %v2375 = vlaneseq
  %v2376 = vshrl.u32 %v2375, 7
  %v2377 = vsub.s32 5, %v2376
  %v2378 = vrot.slane %v2353, %v2377
  %v2379 = vlaneseq
  %v2380 = vshrl.u32 %v2379, 7
  %v2381 = vsub.s32 6, %v2380
  %v2382 = vrot.slane %v2353, %v2381
  %v2646 = vunpack.c.l.b16 %v2097
  %v2647 = vunpack.c.h.b16 %v2097
  %v2648 = vunpack.c.l.b16 %v2098
  %v2649 = vunpack.c.h.b16 %v2098
  %v2650 = vunpack.c.l.b16 %v2099
  %v2651 = vunpack.c.h.b16 %v2099
  %v2652 = vunpack.c.l.b16 %v2100
  %v2653 = vunpack.c.l.b16 %v2101
  %v2654 = vunpack.c.h.b16 %v2101
  %v2655 = vunpack.c.l.b16 %v2102
  %v2656 = vunpack.c.h.b16 %v2102
  %v2657 = vunpack.c.l.b16 %v2103
  %v2658 = vunpack.c.h.b16 %v2103
  %v2659 = vunpack.c.l.b16 %v2104
  %v2660 = vunpack.c.l.b16 %v2105
  %v2661 = vunpack.c.h.b16 %v2105
  %v2662 = vunpack.c.l.b16 %v2106
  %v2663 = vunpack.c.h.b16 %v2106
  %v2664 = vunpack.c.l.b16 %v2107
  %v2665 = vunpack.c.h.b16 %v2107
  %v2666 = vunpack.c.l.b16 %v2108
  %v2667 = vunpack.c.l.b16 %v2109
  %v2668 = vunpack.c.h.b16 %v2109
  %v2669 = vunpack.c.l.b16 %v2110
  %v2670 = vunpack.c.h.b16 %v2110
  %v2671 = vunpack.c.l.b16 %v2111
  %v2672 = vunpack.c.h.b16 %v2111
  %v2673 = vunpack.c.l.b16 %v2112
  %v2674 = vunpack.c.l.b16 %v2113
  %v2675 = vunpack.c.h.b16 %v2113
  %v2676 = vunpack.c.l.b16 %v2114
  %v2677 = vunpack.c.h.b16 %v2114
  %v2678 = vunpack.c.l.b16 %v2115
  %v2679 = vunpack.c.h.b16 %v2115
  %v2680 = vunpack.c.l.b16 %v2116
  %v2681 = vunpack.c.l.b16 %v2117
  %v2682 = vunpack.c.h.b16 %v2117
  %v2683 = vunpack.c.l.b16 %v2118
  %v2684 = vunpack.c.h.b16 %v2118
  %v2685 = vunpack.c.l.b16 %v2119
  %v2686 = vunpack.c.h.b16 %v2119
  %v2687 = vunpack.c.l.b16 %v2120
  %v2688 = vunpack.c.l.b16 %v2121
  %v2689 = vunpack.c.h.b16 %v2121
  %v2690 = vunpack.c.l.b16 %v2122
  %v2691 = vunpack.c.h.b16 %v2122
  %v2692 = vunpack.c.l.b16 %v2123
  %v2693 = vunpack.c.h.b16 %v2123
  %v2694 = vunpack.c.l.b16 %v2124
  %v2695 = vunpack.c.l.b16 %v2125
  %v2696 = vunpack.c.h.b16 %v2125
  %v2697 = vunpack.c.l.b16 %v2126
  %v2698 = vunpack.c.h.b16 %v2126
  %v2699 = vunpack.c.l.b16 %v2127
  %v2700 = vunpack.c.h.b16 %v2127
  %v2701 = vunpack.c.l.b16 %v2128
  %v2702 = vunpack.c.l.b16 %v2129
  %v2703 = vunpack.c.h.b16 %v2129
  %v2704 = vunpack.c.l.b16 %v2130
  %v2705 = vunpack.c.h.b16 %v2130
  %v2706 = vunpack.c.l.b16 %v2131
  %v2707 = vunpack.c.h.b16 %v2131
  %v2708 = vunpack.c.l.b16 %v2132
  %v2709 = vunpack.c.l.b16 %v2133
  %v2710 = vunpack.c.h.b16 %v2133
  %v2711 = vunpack.c.l.b16 %v2134
  %v2712 = vunpack.c.h.b16 %v2134
  %v2713 = vunpack.c.l.b16 %v2135
  %v2714 = vunpack.c.h.b16 %v2135
  %v2715 = vunpack.c.l.b16 %v2136
  %v2716 = vunpack.c.l.b16 %v2137
  %v2717 = vunpack.c.h.b16 %v2137
  %v2718 = vunpack.c.l.b16 %v2138
  %v2719 = vunpack.c.h.b16 %v2138
  %v2720 = vunpack.c.l.b16 %v2139
  %v2721 = vunpack.c.h.b16 %v2139
  %v2722 = vunpack.c.l.b16 %v2140
  %v2723 = vunpack.c.l.b16 %v2141
  %v2724 = vunpack.c.h.b16 %v2141
  %v2725 = vunpack.c.l.b16 %v2142
  %v2726 = vunpack.c.h.b16 %v2142
  %v2727 = vunpack.c.l.b16 %v2143
  %v2728 = vunpack.c.h.b16 %v2143
  %v2729 = vunpack.c.l.b16 %v2144
  %v2730 = vunpack.c.l.b16 %v2145
  %v2731 = vunpack.c.h.b16 %v2145
  %v2732 = vunpack.c.l.b16 %v2146
  %v2733 = vunpack.c.h.b16 %v2146
  %v2734 = vunpack.c.l.b16 %v2147
  %v2735 = vunpack.c.h.b16 %v2147
  %v2736 = vunpack.c.l.b16 %v2148
  %v2737 = vunpack.c.l.b16 %v2149
  %v2738 = vunpack.c.h.b16 %v2149
  %v2739 = vunpack.c.l.b16 %v2150
  %v2740 = vunpack.c.h.b16 %v2150
  %v2741 = vunpack.c.l.b16 %v2151
  %v2742 = vunpack.c.h.b16 %v2151
  %v2743 = vunpack.c.l.b16 %v2152
  %v2744 = vunpack.c.l.b16 %v2153
  %v2745 = vunpack.c.h.b16 %v2153
  %v2746 = vunpack.c.l.b16 %v2154
  %v2747 = vunpack.c.h.b16 %v2154
  %v2748 = vunpack.c.l.b16 %v2155
  %v2749 = vunpack.c.h.b16 %v2155
  %v2750 = vunpack.c.l.b16 %v2156
  %v2751 = vunpack.c.l.b16 %v2157
  %v2752 = vunpack.c.h.b16 %v2157
  %v2753 = vunpack.c.l.b16 %v2158
  %v2754 = vunpack.c.h.b16 %v2158
  %v2755 = vunpack.c.l.b16 %v2159
  %v2756 = vunpack.c.h.b16 %v2159
  %v2757 = vunpack.c.l.b16 %v2160
  %v2758 = vunpack.c.l.b16 %v2161
  %v2759 = vunpack.c.h.b16 %v2161
  %v2760 = vunpack.c.l.b16 %v2162
  %v2761 = vunpack.c.h.b16 %v2162
  %v2762 = vunpack.c.l.b16 %v2163
  %v2763 = vunpack.c.h.b16 %v2163
  %v2764 = vunpack.c.l.b16 %v2164
  %v2765 = vunpack.c.l.b16 %v2165
  %v2766 = vunpack.c.h.b16 %v2165
  %v2767 = vunpack.c.l.b16 %v2166
  %v2768 = vunpack.c.h.b16 %v2166
  %v2769 = vunpack.c.l.b16 %v2167
  %v2770 = vunpack.c.h.b16 %v2167
  %v2771 = vunpack.c.l.b16 %v2168
  %v2772 = vunpack.c.l.b16 %v2169
  %v2773 = vunpack.c.h.b16 %v2169
  %v2774 = vunpack.c.l.b16 %v2170
  %v2775 = vunpack.c.h.b16 %v2170
  %v2776 = vunpack.c.l.b16 %v2171
  %v2777 = vunpack.c.h.b16 %v2171
  %v2778 = vunpack.c.l.b16 %v2172
  %v2779 = vunpack.c.l.b16 %v2173
  %v2780 = vunpack.c.h.b16 %v2173
  %v2781 = vunpack.c.l.b16 %v2174
  %v2782 = vunpack.c.h.b16 %v2174
  %v2783 = vunpack.c.l.b16 %v2175
  %v2784 = vunpack.c.h.b16 %v2175
  %v2785 = vunpack.c.l.b16 %v2176
  %v2786 = vunpack.c.l.b16 %v2177
  %v2787 = vunpack.c.h.b16 %v2177
  %v2788 = vunpack.c.l.b16 %v2178
  %v2789 = vunpack.c.h.b16 %v2178
  %v2790 = vunpack.c.l.b16 %v2179
  %v2791 = vunpack.c.h.b16 %v2179
  %v2792 = vunpack.c.l.b16 %v2180
  %v2793 = vunpack.c.l.b16 %v2181
  %v2794 = vunpack.c.h.b16 %v2181
  %v2795 = vunpack.c.l.b16 %v2182
  %v2796 = vunpack.c.h.b16 %v2182
  %v2797 = vunpack.c.l.b16 %v2183
  %v2798 = vunpack.c.h.b16 %v2183
  %v2799 = vunpack.c.l.b16 %v2184
  %v2800 = vunpack.c.l.b16 %v2185
  %v2801 = vunpack.c.h.b16 %v2185
  %v2802 = vunpack.c.l.b16 %v2186
  %v2803 = vunpack.c.h.b16 %v2186
  %v2804 = vunpack.c.l.b16 %v2187
  %v2805 = vunpack.c.h.b16 %v2187
  %v2806 = vunpack.c.l.b16 %v2188
  %v2807 = vunpack.c.l.b16 %v2189
  %v2808 = vunpack.c.h.b16 %v2189
  %v2809 = vunpack.c.l.b16 %v2190
  %v2810 = vunpack.c.h.b16 %v2190
  %v2811 = vunpack.c.l.b16 %v2191
  %v2812 = vunpack.c.h.b16 %v2191
  %v2813 = vunpack.c.l.b16 %v2192
  %v2814 = vunpack.c.l.b16 %v2193
  %v2815 = vunpack.c.h.b16 %v2193
  %v2816 = vunpack.c.l.b16 %v2194
  %v2817 = vunpack.c.h.b16 %v2194
  %v2818 = vunpack.c.l.b16 %v2195
  %v2819 = vunpack.c.h.b16 %v2195
  %v2820 = vunpack.c.l.b16 %v2196
  %v2821 = vunpack.c.l.b16 %v2197
  %v2822 = vunpack.c.h.b16 %v2197
  %v2823 = vunpack.c.l.b16 %v2198
  %v2824 = vunpack.c.h.b16 %v2198
  %v2825 = vunpack.c.l.b16 %v2199
  %v2826 = vunpack.c.h.b16 %v2199
  %v2827 = vunpack.c.l.b16 %v2200
  %v2828 = vunpack.c.l.b16 %v2201
  %v2829 = vunpack.c.h.b16 %v2201
  %v2830 = vunpack.c.l.b16 %v2202
  %v2831 = vunpack.c.h.b16 %v2202
  %v2832 = vunpack.c.l.b16 %v2203
  %v2833 = vunpack.c.h.b16 %v2203
  %v2834 = vunpack.c.l.b16 %v2204
  %v2835 = vunpack.c.l.b16 %v2205
  %v2836 = vunpack.c.h.b16 %v2205
  %v2837 = vunpack.c.l.b16 %v2206
  %v2838 = vunpack.c.h.b16 %v2206
  %v2839 = vunpack.c.l.b16 %v2207
  %v2840 = vunpack.c.h.b16 %v2207
  %v2841 = vunpack.c.l.b16 %v2208
  %v2842 = vunpack.c.l.b16 %v2209
  %v2843 = vunpack.c.h.b16 %v2209
  %v2844 = vunpack.c.l.b16 %v2210
  %v2845 = vunpack.c.h.b16 %v2210
  %v2846 = vunpack.c.l.b16 %v2211
  %v2847 = vunpack.c.h.b16 %v2211
  %v2848 = vunpack.c.l.b16 %v2212
  %v2849 = vunpack.c.l.b16 %v2213
  %v2850 = vunpack.c.h.b16 %v2213
  %v2851 = vunpack.c.l.b16 %v2214
  %v2852 = vunpack.c.h.b16 %v2214
  %v2853 = vunpack.c.l.b16 %v2215
  %v2854 = vunpack.c.h.b16 %v2215
  %v2855 = vunpack.c.l.b16 %v2216
  %v2856 = vunpack.c.l.b16 %v2217
  %v2857 = vunpack.c.h.b16 %v2217
  %v2858 = vunpack.c.l.b16 %v2218
  %v2859 = vunpack.c.h.b16 %v2218
  %v2860 = vunpack.c.l.b16 %v2219
  %v2861 = vunpack.c.h.b16 %v2219
  %v2862 = vunpack.c.l.b16 %v2220
  %v2863 = vunpack.c.l.b16 %v2221
  %v2864 = vunpack.c.h.b16 %v2221
  %v2865 = vunpack.c.l.b16 %v2222
  %v2866 = vunpack.c.h.b16 %v2222
  %v2867 = vunpack.c.l.b16 %v2223
  %v2868 = vunpack.c.h.b16 %v2223
  %v2869 = vunpack.c.l.b16 %v2224
  %v2870 = vunpack.c.l.b16 %v2225
  %v2871 = vunpack.c.h.b16 %v2225
  %v2872 = vunpack.c.l.b16 %v2226
  %v2873 = vunpack.c.h.b16 %v2226
  %v2874 = vunpack.c.l.b16 %v2227
  %v2875 = vunpack.c.h.b16 %v2227
  %v2876 = vunpack.c.l.b16 %v2228
  %v2877 = vunpack.c.l.b16 %v2229
  %v2878 = vunpack.c.h.b16 %v2229
  %v2879 = vunpack.c.l.b16 %v2230
  %v2880 = vunpack.c.h.b16 %v2230
  %v2881 = vunpack.c.l.b16 %v2231
  %v2882 = vunpack.c.h.b16 %v2231
  %v2883 = vunpack.c.l.b16 %v2232
  %v2884 = vunpack.c.l.b16 %v2233
  %v2885 = vunpack.c.h.b16 %v2233
  %v2886 = vunpack.c.l.b16 %v2234
  %v2887 = vunpack.c.h.b16 %v2234
  %v2888 = vunpack.c.l.b16 %v2235
  %v2889 = vunpack.c.h.b16 %v2235
  %v2890 = vunpack.c.l.b16 %v2236
  %v2891 = vunpack.c.l.b16 %v2237
  %v2892 = vunpack.c.h.b16 %v2237
  %v2893 = vunpack.c.l.b16 %v2238
  %v2894 = vunpack.c.h.b16 %v2238
  %v2895 = vunpack.c.l.b16 %v2239
  %v2896 = vunpack.c.h.b16 %v2239
  %v2897 = vunpack.c.l.b16 %v2240
  %v2898 = vunpack.c.l.b16 %v2241
  %v2899 = vunpack.c.h.b16 %v2241
  %v2900 = vunpack.c.l.b16 %v2242
  %v2901 = vunpack.c.h.b16 %v2242
  %v2902 = vunpack.c.l.b16 %v2243
  %v2903 = vunpack.c.h.b16 %v2243
  %v2904 = vunpack.c.l.b16 %v2244
  %v2905 = vunpack.c.l.b16 %v2245
  %v2906 = vunpack.c.h.b16 %v2245
  %v2907 = vunpack.c.l.b16 %v2246
  %v2908 = vunpack.c.h.b16 %v2246
  %v2909 = vunpack.c.l.b16 %v2247
  %v2910 = vunpack.c.h.b16 %v2247
  %v2911 = vunpack.c.l.b16 %v2248
  %v2912 = vunpack.c.l.b16 %v2249
  %v2913 = vunpack.c.h.b16 %v2249
  %v2914 = vunpack.c.l.b16 %v2250
  %v2915 = vunpack.c.h.b16 %v2250
  %v2916 = vunpack.c.l.b16 %v2251
  %v2917 = vunpack.c.h.b16 %v2251
  %v2918 = vunpack.c.l.b16 %v2252
  %v2919 = vunpack.c.l.b16 %v2253
  %v2920 = vunpack.c.h.b16 %v2253
  %v2921 = vunpack.c.l.b16 %v2254
  %v2922 = vunpack.c.h.b16 %v2254
  %v2923 = vunpack.c.l.b16 %v2255
  %v2924 = vunpack.c.h.b16 %v2255
  %v2925 = vunpack.c.l.b16 %v2256
  %v2926 = vunpack.c.l.b16 %v2257
  %v2927 = vunpack.c.h.b16 %v2257
  %v2928 = vunpack.c.l.b16 %v2258
  %v2929 = vunpack.c.h.b16 %v2258
  %v2930 = vunpack.c.l.b16 %v2259
  %v2931 = vunpack.c.h.b16 %v2259
  %v2932 = vunpack.c.l.b16 %v2260
  %v2933 = vunpack.c.l.b16 %v2261
  %v2934 = vunpack.c.h.b16 %v2261
  %v2935 = vunpack.c.l.b16 %v2262
  %v2936 = vunpack.c.h.b16 %v2262
  %v2937 = vunpack.c.l.b16 %v2263
  %v2938 = vunpack.c.h.b16 %v2263
  %v2939 = vunpack.c.l.b16 %v2264
  %v2940 = vunpack.c.l.b16 %v2265
  %v2941 = vunpack.c.h.b16 %v2265
  %v2942 = vunpack.c.l.b16 %v2266
  %v2943 = vunpack.c.h.b16 %v2266
  %v2944 = vunpack.c.l.b16 %v2267
  %v2945 = vunpack.c.h.b16 %v2267
  %v2946 = vunpack.c.l.b16 %v2268
  %v2947 = vunpack.c.l.b16 %v2269
  %v2948 = vunpack.c.h.b16 %v2269
  %v2949 = vunpack.c.l.b16 %v2270
  %v2950 = vunpack.c.h.b16 %v2270
  %v2951 = vunpack.c.l.b16 %v2271
  %v2952 = vunpack.c.h.b16 %v2271
  %v2953 = vunpack.c.l.b16 %v2272
  %v2954 = vunpack.c.l.b16 %v2273
  %v2955 = vunpack.c.h.b16 %v2273
  %v2956 = vunpack.c.l.b16 %v2274
  %v2957 = vunpack.c.h.b16 %v2274
  %v2958 = vunpack.c.l.b16 %v2275
  %v2959 = vunpack.c.h.b16 %v2275
  %v2960 = vunpack.c.l.b16 %v2276
  %v2961 = vunpack.c.l.b16 %v2277
  %v2962 = vunpack.c.h.b16 %v2277
  %v2963 = vunpack.c.l.b16 %v2278
  %v2964 = vunpack.c.h.b16 %v2278
  %v2965 = vunpack.c.l.b16 %v2279
  %v2966 = vunpack.c.h.b16 %v2279
  %v2967 = vunpack.c.l.b16 %v2280
  %v2968 = vunpack.c.l.b16 %v2281
  %v2969 = vunpack.c.h.b16 %v2281
  %v2970 = vunpack.c.l.b16 %v2282
  %v2971 = vunpack.c.h.b16 %v2282
  %v2972 = vunpack.c.l.b16 %v2283
  %v2973 = vunpack.c.h.b16 %v2283
  %v2974 = vunpack.c.l.b16 %v2284
  %v2975 = vunpack.c.l.b16 %v2285
  %v2976 = vunpack.c.h.b16 %v2285
  %v2977 = vunpack.c.l.b16 %v2286
  %v2978 = vunpack.c.h.b16 %v2286
  %v2979 = vunpack.c.l.b16 %v2287
  %v2980 = vunpack.c.h.b16 %v2287
  %v2981 = vunpack.c.l.b16 %v2288
  %v2982 = vunpack.c.l.b16 %v2289
  %v2983 = vunpack.c.h.b16 %v2289
  %v2984 = vunpack.c.l.b16 %v2290
  %v2985 = vunpack.c.h.b16 %v2290
  %v2986 = vunpack.c.l.b16 %v2291
  %v2987 = vunpack.c.h.b16 %v2291
  %v2988 = vunpack.c.l.b16 %v2292
  %v2989 = vunpack.c.l.b16 %v2293
  %v2990 = vunpack.c.h.b16 %v2293
  %v2991 = vunpack.c.l.b16 %v2294
  %v2992 = vunpack.c.h.b16 %v2294
  %v2993 = vunpack.c.l.b16 %v2295
  %v2994 = vunpack.c.h.b16 %v2295
  %v2995 = vunpack.c.l.b16 %v2296
  %v2996 = vunpack.c.l.b16 %v2297
  %v2997 = vunpack.c.h.b16 %v2297
  %v2998 = vunpack.c.l.b16 %v2298
  %v2999 = vunpack.c.h.b16 %v2298
  %v3000 = vunpack.c.l.b16 %v2299
  %v3001 = vunpack.c.h.b16 %v2299
  %v3002 = vunpack.c.l.b16 %v2300
  %v3003 = vunpack.c.l.b16 %v2301
  %v3004 = vunpack.c.h.b16 %v2301
  %v3005 = vunpack.c.l.b16 %v2302
  %v3006 = vunpack.c.h.b16 %v2302
  %v3007 = vunpack.c.l.b16 %v2303
  %v3008 = vunpack.c.h.b16 %v2303
  %v3009 = vunpack.c.l.b16 %v2304
  %v3010 = vunpack.c.l.b16 %v2305
  %v3011 = vunpack.c.h.b16 %v2305
  %v3012 = vunpack.c.l.b16 %v2306
  %v3013 = vunpack.c.h.b16 %v2306
  %v3014 = vunpack.c.l.b16 %v2307
  %v3015 = vunpack.c.h.b16 %v2307
  %v3016 = vunpack.c.l.b16 %v2308
  %v3017 = vunpack.c.l.b16 %v2309
  %v3018 = vunpack.c.h.b16 %v2309
  %v3019 = vunpack.c.l.b16 %v2310
  %v3020 = vunpack.c.h.b16 %v2310
  %v3021 = vunpack.c.l.b16 %v2311
  %v3022 = vunpack.c.h.b16 %v2311
  %v3023 = vunpack.c.l.b16 %v2312
  %v3024 = vunpack.c.l.b16 %v2313
  %v3025 = vunpack.c.h.b16 %v2313
  %v3026 = vunpack.c.l.b16 %v2314
  %v3027 = vunpack.c.h.b16 %v2314
  %v3028 = vunpack.c.l.b16 %v2315
  %v3029 = vunpack.c.h.b16 %v2315
  %v3030 = vunpack.c.l.b16 %v2316
  %v3031 = vunpack.c.l.b16 %v2317
  %v3032 = vunpack.c.h.b16 %v2317
  %v3033 = vunpack.c.l.b16 %v2318
  %v3034 = vunpack.c.h.b16 %v2318
  %v3035 = vunpack.c.l.b16 %v2319
  %v3036 = vunpack.c.h.b16 %v2319
  %v3037 = vunpack.c.l.b16 %v2320
  %v3038 = vunpack.c.l.b16 %v2321
  %v3039 = vunpack.c.h.b16 %v2321
  %v3040 = vunpack.c.l.b16 %v2322
  %v3041 = vunpack.c.h.b16 %v2322
  %v3042 = vunpack.c.l.b16 %v2323
  %v3043 = vunpack.c.h.b16 %v2323
  %v3044 = vunpack.c.l.b16 %v2324
  %v3045 = vunpack.c.l.b16 %v2325
  %v3046 = vunpack.c.h.b16 %v2325
  %v3047 = vunpack.c.l.b16 %v2326
  %v3048 = vunpack.c.h.b16 %v2326
  %v3049 = vunpack.c.l.b16 %v2327
  %v3050 = vunpack.c.h.b16 %v2327
  %v3051 = vunpack.c.l.b16 %v2328
  %v3052 = vunpack.c.l.b16 %v2329
  %v3053 = vunpack.c.h.b16 %v2329
  %v3054 = vunpack.c.l.b16 %v2330
  %v3055 = vunpack.c.h.b16 %v2330
  %v3056 = vunpack.c.l.b16 %v2331
  %v3057 = vunpack.c.h.b16 %v2331
  %v3058 = vunpack.c.l.b16 %v2332
  %v3059 = vunpack.c.l.b16 %v2333
  %v3060 = vunpack.c.h.b16 %v2333
  %v3061 = vunpack.c.l.b16 %v2334
  %v3062 = vunpack.c.h.b16 %v2334
  %v3063 = vunpack.c.l.b16 %v2335
  %v3064 = vunpack.c.h.b16 %v2335
  %v3065 = vunpack.c.l.b16 %v2336
  %v3066 = vunpack.c.l.b16 %v2337
  %v3067 = vunpack.c.h.b16 %v2337
  %v3068 = vunpack.c.l.b16 %v2338
  %v3069 = vunpack.c.h.b16 %v2338
  %v3070 = vunpack.c.l.b16 %v2339
  %v3071 = vunpack.c.h.b16 %v2339
  %v3072 = vunpack.c.l.b16 %v2340
  %v3073 = vunpack.c.l.b16 %v2341
  %v3074 = vunpack.c.h.b16 %v2341
  %v3075 = vunpack.c.l.b16 %v2342
  %v3076 = vunpack.c.h.b16 %v2342
  %v3077 = vunpack.c.l.b16 %v2343
  %v3078 = vunpack.c.h.b16 %v2343
  %v3079 = vunpack.c.l.b16 %v2344
  %v3080 = vunpack.c.l.b16 %v2345
  %v3081 = vunpack.c.h.b16 %v2345
  %v3082 = vunpack.c.l.b16 %v2346
  %v3083 = vunpack.c.h.b16 %v2346
  %v3084 = vunpack.c.l.b16 %v2347
  %v3085 = vunpack.c.h.b16 %v2347
  %v3086 = vunpack.c.l.b16 %v2348
  %v3087 = vunpack.c.l.b16 %v2349
  %v3088 = vunpack.c.h.b16 %v2349
  %v3089 = vunpack.c.l.b16 %v2350
  %v3090 = vunpack.c.h.b16 %v2350
  %v3091 = vunpack.c.l.b16 %v2351
  %v3092 = vunpack.c.h.b16 %v2351
  %v3093 = vunpack.c.l.b16 %v2352
  %v3094 = vpack.c.b16 %v2653, %v2646
  %v3095 = vpack.c.b16 %v2654, %v2647
  %v3096 = vpack.c.b16 %v2655, %v2648
  %v3097 = vpack.c.b16 %v2656, %v2649
  %v3098 = vpack.c.b16 %v2657, %v2650
  %v3099 = vpack.c.b16 %v2658, %v2651
  %v3100 = vpack.c.b16 %v2659, %v2652
  %v3101 = vpack.c.b16 %v2667, %v2660
  %v3102 = vpack.c.b16 %v2668, %v2661
  %v3103 = vpack.c.b16 %v2669, %v2662
  %v3104 = vpack.c.b16 %v2670, %v2663
  %v3105 = vpack.c.b16 %v2671, %v2664
  %v3106 = vpack.c.b16 %v2672, %v2665
  %v3107 = vpack.c.b16 %v2673, %v2666
  %v3108 = vpack.c.b16 %v2681, %v2674
  %v3109 = vpack.c.b16 %v2682, %v2675
  %v3110 = vpack.c.b16 %v2683, %v2676
  %v3111 = vpack.c.b16 %v2684, %v2677
  %v3112 = vpack.c.b16 %v2685, %v2678
  %v3113 = vpack.c.b16 %v2686, %v2679
  %v3114 = vpack.c.b16 %v2687, %v2680
  %v3115 = vpack.c.b16 %v2695, %v2688
  %v3116 = vpack.c.b16 %v2696, %v2689
  %v3117 = vpack.c.b16 %v2697, %v2690
  %v3118 = vpack.c.b16 %v2698, %v2691
  %v3119 = vpack.c.b16 %v2699, %v2692
  %v3120 = vpack.c.b16 %v2700, %v2693
  %v3121 = vpack.c.b16 %v2701, %v2694
  %v3122 = vpack.c.b16 %v2709, %v2702
  %v3123 = vpack.c.b16 %v2710, %v2703
  %v3124 = vpack.c.b16 %v2711, %v2704
  %v3125 = vpack.c.b16 %v2712, %v2705
  %v3126 = vpack.c.b16 %v2713, %v2706
  %v3127 = vpack.c.b16 %v2714, %v2707
  %v3128 = vpack.c.b16 %v2715, %v2708
  %v3129 = vpack.c.b16 %v2723, %v2716
  %v3130 = vpack.c.b16 %v2724, %v2717
  %v3131 = vpack.c.b16 %v2725, %v2718
  %v3132 = vpack.c.b16 %v2726, %v2719
  %v3133 = vpack.c.b16 %v2727, %v2720
  %v3134 = vpack.c.b16 %v2728, %v2721
  %v3135 = vpack.c.b16 %v2729, %v2722
  %v3136 = vpack.c.b16 %v2737, %v2730
  %v3137 = vpack.c.b16 %v2738, %v2731
  %v3138 = vpack.c.b16 %v2739, %v2732
  %v3139 = vpack.c.b16 %v2740, %v2733
  %v3140 = vpack.c.b16 %v2741, %v2734
  %v3141 = vpack.c.b16 %v2742, %v2735
  %v3142 = vpack.c.b16 %v2743, %v2736
  %v3143 = vpack.c.b16 %v2751, %v2744
  %v3144 = vpack.c.b16 %v2752, %v2745
  %v3145 = vpack.c.b16 %v2753, %v2746
  %v3146 = vpack.c.b16 %v2754, %v2747
  %v3147 = vpack.c.b16 %v2755, %v2748
  %v3148 = vpack.c.b16 %v2756, %v2749
  %v3149 = vpack.c.b16 %v2757, %v2750
  %v3150 = vpack.c.b16 %v2765, %v2758
  %v3151 = vpack.c.b16 %v2766, %v2759
  %v3152 = vpack.c.b16 %v2767, %v2760
  %v3153 = vpack.c.b16 %v2768, %v2761
  %v3154 = vpack.c.b16 %v2769, %v2762
  %v3155 = vpack.c.b16 %v2770, %v2763
  %v3156 = vpack.c.b16 %v2771, %v2764
  %v3157 = vpack.c.b16 %v2779, %v2772
  %v3158 = vpack.c.b16 %v2780, %v2773
  %v3159 = vpack.c.b16 %v2781, %v2774
  %v3160 = vpack.c.b16 %v2782, %v2775
  %v3161 = vpack.c.b16 %v2783, %v2776
  %v3162 = vpack.c.b16 %v2784, %v2777
  %v3163 = vpack.c.b16 %v2785, %v2778
  %v3164 = vpack.c.b16 %v2793, %v2786
  %v3165 = vpack.c.b16 %v2794, %v2787
  %v3166 = vpack.c.b16 %v2795, %v2788
  %v3167 = vpack.c.b16 %v2796, %v2789
  %v3168 = vpack.c.b16 %v2797, %v2790
  %v3169 = vpack.c.b16 %v2798, %v2791
  %v3170 = vpack.c.b16 %v2799, %v2792
  %v3171 = vpack.c.b16 %v2807, %v2800
  %v3172 = vpack.c.b16 %v2808, %v2801
  %v3173 = vpack.c.b16 %v2809, %v2802
  %v3174 = vpack.c.b16 %v2810, %v2803
  %v3175 = vpack.c.b16 %v2811, %v2804
  %v3176 = vpack.c.b16 %v2812, %v2805
  %v3177 = vpack.c.b16 %v2813, %v2806
  %v3178 = vpack.c.b16 %v2821, %v2814
  %v3179 = vpack.c.b16 %v2822, %v2815
  %v3180 = vpack.c.b16 %v2823, %v2816
  %v3181 = vpack.c.b16 %v2824, %v2817
  %v3182 = vpack.c.b16 %v2825, %v2818
  %v3183 = vpack.c.b16 %v2826, %v2819
  %v3184 = vpack.c.b16 %v2827, %v2820
  %v3185 = vpack.c.b16 %v2835, %v2828
  %v3186 = vpack.c.b16 %v2836, %v2829
  %v3187 = vpack.c.b16 %v2837, %v2830
  %v3188 = vpack.c.b16 %v2838, %v2831
  %v3189 = vpack.c.b16 %v2839, %v2832
  %v3190 = vpack.c.b16 %v2840, %v2833
  %v3191 = vpack.c.b16 %v2841, %v2834
  %v3192 = vpack.c.b16 %v2849, %v2842
  %v3193 = vpack.c.b16 %v2850, %v2843
  %v3194 = vpack.c.b16 %v2851, %v2844
  %v3195 = vpack.c.b16 %v2852, %v2845
  %v3196 = vpack.c.b16 %v2853, %v2846
  %v3197 = vpack.c.b16 %v2854, %v2847
  %v3198 = vpack.c.b16 %v2855, %v2848
  %v3199 = vpack.c.b16 %v2863, %v2856
  %v3200 = vpack.c.b16 %v2864, %v2857
  %v3201 = vpack.c.b16 %v2865, %v2858
  %v3202 = vpack.c.b16 %v2866, %v2859
  %v3203 = vpack.c.b16 %v2867, %v2860
  %v3204 = vpack.c.b16 %v2868, %v2861
  %v3205 = vpack.c.b16 %v2869, %v2862
  %v3206 = vpack.c.b16 %v2877, %v2870
  %v3207 = vpack.c.b16 %v2878, %v2871
  %v3208 = vpack.c.b16 %v2879, %v2872
  %v3209 = vpack.c.b16 %v2880, %v2873
  %v3210 = vpack.c.b16 %v2881, %v2874
  %v3211 = vpack.c.b16 %v2882, %v2875
  %v3212 = vpack.c.b16 %v2883, %v2876
  %v3213 = vpack.c.b16 %v2891, %v2884
  %v3214 = vpack.c.b16 %v2892, %v2885
  %v3215 = vpack.c.b16 %v2893, %v2886
  %v3216 = vpack.c.b16 %v2894, %v2887
  %v3217 = vpack.c.b16 %v2895, %v2888
  %v3218 = vpack.c.b16 %v2896, %v2889
  %v3219 = vpack.c.b16 %v2897, %v2890
  %v3220 = vpack.c.b16 %v2905, %v2898
  %v3221 = vpack.c.b16 %v2906, %v2899
  %v3222 = vpack.c.b16 %v2907, %v2900
  %v3223 = vpack.c.b16 %v2908, %v2901
  %v3224 = vpack.c.b16 %v2909, %v2902
  %v3225 = vpack.c.b16 %v2910, %v2903
  %v3226 = vpack.c.b16 %v2911, %v2904
  %v3227 = vpack.c.b16 %v2919, %v2912
  %v3228 = vpack.c.b16 %v2920, %v2913
  %v3229 = vpack.c.b16 %v2921, %v2914
  %v3230 = vpack.c.b16 %v2922, %v2915
  %v3231 = vpack.c.b16 %v2923, %v2916
  %v3232 = vpack.c.b16 %v2924, %v2917
  %v3233 = vpack.c.b16 %v2925, %v2918
  %v3234 = vpack.c.b16 %v2933, %v2926
  %v3235 = vpack.c.b16 %v2934, %v2927
  %v3236 = vpack.c.b16 %v2935, %v2928
  %v3237 = vpack.c.b16 %v2936, %v2929
  %v3238 = vpack.c.b16 %v2937, %v2930
  %v3239 = vpack.c.b16 %v2938, %v2931
  %v3240 = vpack.c.b16 %v2939, %v2932
  %v3241 = vpack.c.b16 %v2947, %v2940
  %v3242 = vpack.c.b16 %v2948, %v2941
  %v3243 = vpack.c.b16 %v2949, %v2942
  %v3244 = vpack.c.b16 %v2950, %v2943
  %v3245 = vpack.c.b16 %v2951, %v2944
  %v3246 = vpack.c.b16 %v2952, %v2945
  %v3247 = vpack.c.b16 %v2953, %v2946
  %v3248 = vpack.c.b16 %v2961, %v2954
  %v3249 = vpack.c.b16 %v2962, %v2955
  %v3250 = vpack.c.b16 %v2963, %v2956
  %v3251 = vpack.c.b16 %v2964, %v2957
  %v3252 = vpack.c.b16 %v2965, %v2958
  %v3253 = vpack.c.b16 %v2966, %v2959
  %v3254 = vpack.c.b16 %v2967, %v2960
  %v3255 = vpack.c.b16 %v2975, %v2968
  %v3256 = vpack.c.b16 %v2976, %v2969
  %v3257 = vpack.c.b16 %v2977, %v2970
  %v3258 = vpack.c.b16 %v2978, %v2971
  %v3259 = vpack.c.b16 %v2979, %v2972
  %v3260 = vpack.c.b16 %v2980, %v2973
  %v3261 = vpack.c.b16 %v2981, %v2974
  %v3262 = vpack.c.b16 %v2989, %v2982
  %v3263 = vpack.c.b16 %v2990, %v2983
  %v3264 = vpack.c.b16 %v2991, %v2984
  %v3265 = vpack.c.b16 %v2992, %v2985
  %v3266 = vpack.c.b16 %v2993, %v2986
  %v3267 = vpack.c.b16 %v2994, %v2987
  %v3268 = vpack.c.b16 %v2995, %v2988
  %v3269 = vpack.c.b16 %v3003, %v2996
  %v3270 = vpack.c.b16 %v3004, %v2997
  %v3271 = vpack.c.b16 %v3005, %v2998
  %v3272 = vpack.c.b16 %v3006, %v2999
  %v3273 = vpack.c.b16 %v3007, %v3000
  %v3274 = vpack.c.b16 %v3008, %v3001
  %v3275 = vpack.c.b16 %v3009, %v3002
  %v3276 = vpack.c.b16 %v3017, %v3010
  %v3277 = vpack.c.b16 %v3018, %v3011
  %v3278 = vpack.c.b16 %v3019, %v3012
  %v3279 = vpack.c.b16 %v3020, %v3013
  %v3280 = vpack.c.b16 %v3021, %v3014
  %v3281 = vpack.c.b16 %v3022, %v3015
  %v3282 = vpack.c.b16 %v3023, %v3016
  %v3283 = vpack.c.b16 %v3031, %v3024
  %v3284 = vpack.c.b16 %v3032, %v3025
  %v3285 = vpack.c.b16 %v3033, %v3026
  %v3286 = vpack.c.b16 %v3034, %v3027
  %v3287 = vpack.c.b16 %v3035, %v3028
  %v3288 = vpack.c.b16 %v3036, %v3029
  %v3289 = vpack.c.b16 %v3037, %v3030
  %v3290 = vpack.c.b16 %v3045, %v3038
  %v3291 = vpack.c.b16 %v3046, %v3039
  %v3292 = vpack.c.b16 %v3047, %v3040
  %v3293 = vpack.c.b16 %v3048, %v3041
  %v3294 = vpack.c.b16 %v3049, %v3042
  %v3295 = vpack.c.b16 %v3050, %v3043
  %v3296 = vpack.c.b16 %v3051, %v3044
  %v3297 = vpack.c.b16 %v3059, %v3052
  %v3298 = vpack.c.b16 %v3060, %v3053
  %v3299 = vpack.c.b16 %v3061, %v3054
  %v3300 = vpack.c.b16 %v3062, %v3055
  %v3301 = vpack.c.b16 %v3063, %v3056
  %v3302 = vpack.c.b16 %v3064, %v3057
  %v3303 = vpack.c.b16 %v3065, %v3058
  %v3304 = vpack.c.b16 %v3073, %v3066
  %v3305 = vpack.c.b16 %v3074, %v3067
  %v3306 = vpack.c.b16 %v3075, %v3068
  %v3307 = vpack.c.b16 %v3076, %v3069
  %v3308 = vpack.c.b16 %v3077, %v3070
  %v3309 = vpack.c.b16 %v3078, %v3071
  %v3310 = vpack.c.b16 %v3079, %v3072
  %v3311 = vpack.c.b16 %v3087, %v3080
  %v3312 = vpack.c.b16 %v3088, %v3081
  %v3313 = vpack.c.b16 %v3089, %v3082
  %v3314 = vpack.c.b16 %v3090, %v3083
  %v3315 = vpack.c.b16 %v3091, %v3084
  %v3316 = vpack.c.b16 %v3092, %v3085
  %v3317 = vpack.c.b16 %v3093, %v3086
  %3542 = vmatprep.subr.bf16.mxu0 %v3095
  %3543 = vmatpush1.bf16.msra.mxu0 %v3094
  %3544 = vmatprep.subr.bf16.mxu0 %v3102
  %3545 = vmatpush1.bf16.msra.mxu0 %v3101
  %3546 = vmatprep.subr.bf16.mxu0 %v3109
  %3547 = vmatpush1.bf16.msra.mxu0 %v3108
  %3548 = vmatprep.subr.bf16.mxu0 %v3116
  %3549 = vmatpush1.bf16.msra.mxu0 %v3115
  %3550 = vmatprep.subr.bf16.mxu0 %v3123
  %3551 = vmatpush1.bf16.msra.mxu0 %v3122
  %3552 = vmatprep.subr.bf16.mxu0 %v3130
  %3553 = vmatpush1.bf16.msra.mxu0 %v3129
  %3554 = vmatprep.subr.bf16.mxu0 %v3137
  %3555 = vmatpush1.bf16.msra.mxu0 %v3136
  %3556 = vmatprep.subr.bf16.mxu0 %v3144
  %3557 = vmatpush1.bf16.msra.mxu0 %v3143
  %3558 = vmatprep.subr.bf16.mxu0 %v3151
  %3559 = vmatpush1.bf16.msra.mxu0 %v3150
  %3560 = vmatprep.subr.bf16.mxu0 %v3158
  %3561 = vmatpush1.bf16.msra.mxu0 %v3157
  %3562 = vmatprep.subr.bf16.mxu0 %v3165
  %3563 = vmatpush1.bf16.msra.mxu0 %v3164
  %3564 = vmatprep.subr.bf16.mxu0 %v3172
  %3565 = vmatpush1.bf16.msra.mxu0 %v3171
  %3566 = vmatprep.subr.bf16.mxu0 %v3179
  %3567 = vmatpush1.bf16.msra.mxu0 %v3178
  %3568 = vmatprep.subr.bf16.mxu0 %v3186
  %3569 = vmatpush1.bf16.msra.mxu0 %v3185
  %3570 = vmatprep.subr.bf16.mxu0 %v3193
  %3571 = vmatpush1.bf16.msra.mxu0 %v3192
  %3572 = vmatprep.subr.bf16.mxu0 %v3200
  %3573 = vmatpush1.bf16.msra.mxu0 %v3199
  %3574 = vmatprep.mubr.bf16.mxu0 %v2094
  %3575 = vmatmul.mubr.bf16.gmra.mrb[0].mxu0 %v2093
  %v3576 = vpop.f32.mrb[0].mxu0
  %v3577 = vadd.f32 %v2358, %v3576
  %v3578 = vpop.f32.mrb[0].mxu0
  %v3579 = vadd.f32 %v2362, %v3578
  %v3580 = vpop.f32.mrb[0].mxu0
  %v3581 = vpop.f32.mrb[0].mxu0
  %3582 = vdwg.mxu0
  %3583 = vmatprep.subr.bf16.mxu0 %v3207
  %3584 = vmatpush1.bf16.msra.mxu0 %v3206
  %3585 = vmatprep.subr.bf16.mxu0 %v3214
  %3586 = vmatpush1.bf16.msra.mxu0 %v3213
  %3587 = vmatprep.subr.bf16.mxu0 %v3221
  %3588 = vmatpush1.bf16.msra.mxu0 %v3220
  %3589 = vmatprep.subr.bf16.mxu0 %v3228
  %3590 = vmatpush1.bf16.msra.mxu0 %v3227
  %3591 = vmatprep.subr.bf16.mxu0 %v3235
  %3592 = vmatpush1.bf16.msra.mxu0 %v3234
  %3593 = vmatprep.subr.bf16.mxu0 %v3242
  %3594 = vmatpush1.bf16.msra.mxu0 %v3241
  %3595 = vmatprep.subr.bf16.mxu0 %v3249
  %3596 = vmatpush1.bf16.msra.mxu0 %v3248
  %3597 = vmatprep.subr.bf16.mxu0 %v3256
  %3598 = vmatpush1.bf16.msra.mxu0 %v3255
  %3599 = vmatprep.subr.bf16.mxu0 %v3263
  %3600 = vmatpush1.bf16.msra.mxu0 %v3262
  %3601 = vmatprep.subr.bf16.mxu0 %v3270
  %3602 = vmatpush1.bf16.msra.mxu0 %v3269
  %3603 = vmatprep.subr.bf16.mxu0 %v3277
  %3604 = vmatpush1.bf16.msra.mxu0 %v3276
  %3605 = vmatprep.subr.bf16.mxu0 %v3284
  %3606 = vmatpush1.bf16.msra.mxu0 %v3283
  %3607 = vmatprep.subr.bf16.mxu0 %v3291
  %3608 = vmatpush1.bf16.msra.mxu0 %v3290
  %3609 = vmatprep.subr.bf16.mxu0 %v3298
  %3610 = vmatpush1.bf16.msra.mxu0 %v3297
  %3611 = vmatprep.subr.bf16.mxu0 %v3305
  %3612 = vmatpush1.bf16.msra.mxu0 %v3304
  %3613 = vmatprep.subr.bf16.mxu0 %v3312
  %3614 = vmatpush1.bf16.msra.mxu0 %v3311
  %3615 = vmatprep.mubr.bf16.mxu0 %v2096
  %3616 = vmatmul.mubr.bf16.gmra.mrb[0].mxu0 %v2095
  %v3617 = vpop.f32.mrb[0].mxu0
  %v3618 = vadd.f32 %v3577, %v3617
  %v3619 = vpop.f32.mrb[0].mxu0
  %v3620 = vadd.f32 %v3579, %v3619
  %v3621 = vpop.f32.mrb[0].mxu0
  %v3622 = vpop.f32.mrb[0].mxu0
  %3623 = vdwg.mxu0
  %3624 = vmatprep.subr.bf16.mxu0 %v3097
  %3625 = vmatpush1.bf16.msra.mxu0 %v3096
  %3626 = vmatprep.subr.bf16.mxu0 %v3104
  %3627 = vmatpush1.bf16.msra.mxu0 %v3103
  %3628 = vmatprep.subr.bf16.mxu0 %v3111
  %3629 = vmatpush1.bf16.msra.mxu0 %v3110
  %3630 = vmatprep.subr.bf16.mxu0 %v3118
  %3631 = vmatpush1.bf16.msra.mxu0 %v3117
  %3632 = vmatprep.subr.bf16.mxu0 %v3125
  %3633 = vmatpush1.bf16.msra.mxu0 %v3124
  %3634 = vmatprep.subr.bf16.mxu0 %v3132
  %3635 = vmatpush1.bf16.msra.mxu0 %v3131
  %3636 = vmatprep.subr.bf16.mxu0 %v3139
  %3637 = vmatpush1.bf16.msra.mxu0 %v3138
  %3638 = vmatprep.subr.bf16.mxu0 %v3146
  %3639 = vmatpush1.bf16.msra.mxu0 %v3145
  %3640 = vmatprep.subr.bf16.mxu0 %v3153
  %3641 = vmatpush1.bf16.msra.mxu0 %v3152
  %3642 = vmatprep.subr.bf16.mxu0 %v3160
  %3643 = vmatpush1.bf16.msra.mxu0 %v3159
  %3644 = vmatprep.subr.bf16.mxu0 %v3167
  %3645 = vmatpush1.bf16.msra.mxu0 %v3166
  %3646 = vmatprep.subr.bf16.mxu0 %v3174
  %3647 = vmatpush1.bf16.msra.mxu0 %v3173
  %3648 = vmatprep.subr.bf16.mxu0 %v3181
  %3649 = vmatpush1.bf16.msra.mxu0 %v3180
  %3650 = vmatprep.subr.bf16.mxu0 %v3188
  %3651 = vmatpush1.bf16.msra.mxu0 %v3187
  %3652 = vmatprep.subr.bf16.mxu0 %v3195
  %3653 = vmatpush1.bf16.msra.mxu0 %v3194
  %3654 = vmatprep.subr.bf16.mxu0 %v3202
  %3655 = vmatpush1.bf16.msra.mxu0 %v3201
  %3656 = vmatprep.mubr.bf16.mxu0 %v2094
  %3657 = vmatmul.mubr.bf16.gmra.mrb[0].mxu0 %v2093
  %v3658 = vpop.f32.mrb[0].mxu0
  %v3659 = vadd.f32 %v2366, %v3658
  %v3660 = vpop.f32.mrb[0].mxu0
  %v3661 = vadd.f32 %v2370, %v3660
  %v3662 = vpop.f32.mrb[0].mxu0
  %v3663 = vpop.f32.mrb[0].mxu0
  %3664 = vdwg.mxu0
  %3665 = vmatprep.subr.bf16.mxu0 %v3209
  %3666 = vmatpush1.bf16.msra.mxu0 %v3208
  %3667 = vmatprep.subr.bf16.mxu0 %v3216
  %3668 = vmatpush1.bf16.msra.mxu0 %v3215
  %3669 = vmatprep.subr.bf16.mxu0 %v3223
  %3670 = vmatpush1.bf16.msra.mxu0 %v3222
  %3671 = vmatprep.subr.bf16.mxu0 %v3230
  %3672 = vmatpush1.bf16.msra.mxu0 %v3229
  %3673 = vmatprep.subr.bf16.mxu0 %v3237
  %3674 = vmatpush1.bf16.msra.mxu0 %v3236
  %3675 = vmatprep.subr.bf16.mxu0 %v3244
  %3676 = vmatpush1.bf16.msra.mxu0 %v3243
  %3677 = vmatprep.subr.bf16.mxu0 %v3251
  %3678 = vmatpush1.bf16.msra.mxu0 %v3250
  %3679 = vmatprep.subr.bf16.mxu0 %v3258
  %3680 = vmatpush1.bf16.msra.mxu0 %v3257
  %3681 = vmatprep.subr.bf16.mxu0 %v3265
  %3682 = vmatpush1.bf16.msra.mxu0 %v3264
  %3683 = vmatprep.subr.bf16.mxu0 %v3272
  %3684 = vmatpush1.bf16.msra.mxu0 %v3271
  %3685 = vmatprep.subr.bf16.mxu0 %v3279
  %3686 = vmatpush1.bf16.msra.mxu0 %v3278
  %3687 = vmatprep.subr.bf16.mxu0 %v3286
  %3688 = vmatpush1.bf16.msra.mxu0 %v3285
  %3689 = vmatprep.subr.bf16.mxu0 %v3293
  %3690 = vmatpush1.bf16.msra.mxu0 %v3292
  %3691 = vmatprep.subr.bf16.mxu0 %v3300
  %3692 = vmatpush1.bf16.msra.mxu0 %v3299
  %3693 = vmatprep.subr.bf16.mxu0 %v3307
  %3694 = vmatpush1.bf16.msra.mxu0 %v3306
  %3695 = vmatprep.subr.bf16.mxu0 %v3314
  %3696 = vmatpush1.bf16.msra.mxu0 %v3313
  %3697 = vmatprep.mubr.bf16.mxu0 %v2096
  %3698 = vmatmul.mubr.bf16.gmra.mrb[0].mxu0 %v2095
  %v3699 = vpop.f32.mrb[0].mxu0
  %v3700 = vadd.f32 %v3659, %v3699
  %v3701 = vpop.f32.mrb[0].mxu0
  %v3702 = vadd.f32 %v3661, %v3701
  %v3703 = vpop.f32.mrb[0].mxu0
  %v3704 = vpop.f32.mrb[0].mxu0
  %3705 = vdwg.mxu0
  %3706 = vmatprep.subr.bf16.mxu0 %v3099
  %3707 = vmatpush1.bf16.msra.mxu0 %v3098
  %3708 = vmatprep.subr.bf16.mxu0 %v3106
  %3709 = vmatpush1.bf16.msra.mxu0 %v3105
  %3710 = vmatprep.subr.bf16.mxu0 %v3113
  %3711 = vmatpush1.bf16.msra.mxu0 %v3112
  %3712 = vmatprep.subr.bf16.mxu0 %v3120
  %3713 = vmatpush1.bf16.msra.mxu0 %v3119
  %3714 = vmatprep.subr.bf16.mxu0 %v3127
  %3715 = vmatpush1.bf16.msra.mxu0 %v3126
  %3716 = vmatprep.subr.bf16.mxu0 %v3134
  %3717 = vmatpush1.bf16.msra.mxu0 %v3133
  %3718 = vmatprep.subr.bf16.mxu0 %v3141
  %3719 = vmatpush1.bf16.msra.mxu0 %v3140
  %3720 = vmatprep.subr.bf16.mxu0 %v3148
  %3721 = vmatpush1.bf16.msra.mxu0 %v3147
  %3722 = vmatprep.subr.bf16.mxu0 %v3155
  %3723 = vmatpush1.bf16.msra.mxu0 %v3154
  %3724 = vmatprep.subr.bf16.mxu0 %v3162
  %3725 = vmatpush1.bf16.msra.mxu0 %v3161
  %3726 = vmatprep.subr.bf16.mxu0 %v3169
  %3727 = vmatpush1.bf16.msra.mxu0 %v3168
  %3728 = vmatprep.subr.bf16.mxu0 %v3176
  %3729 = vmatpush1.bf16.msra.mxu0 %v3175
  %3730 = vmatprep.subr.bf16.mxu0 %v3183
  %3731 = vmatpush1.bf16.msra.mxu0 %v3182
  %3732 = vmatprep.subr.bf16.mxu0 %v3190
  %3733 = vmatpush1.bf16.msra.mxu0 %v3189
  %3734 = vmatprep.subr.bf16.mxu0 %v3197
  %3735 = vmatpush1.bf16.msra.mxu0 %v3196
  %3736 = vmatprep.subr.bf16.mxu0 %v3204
  %3737 = vmatpush1.bf16.msra.mxu0 %v3203
  %3738 = vmatprep.mubr.bf16.mxu0 %v2094
  %3739 = vmatmul.mubr.bf16.gmra.mrb[0].mxu0 %v2093
  %v3740 = vpop.f32.mrb[0].mxu0
  %v3741 = vadd.f32 %v2374, %v3740
  %v3742 = vpop.f32.mrb[0].mxu0
  %v3743 = vadd.f32 %v2378, %v3742
  %v3744 = vpop.f32.mrb[0].mxu0
  %v3745 = vpop.f32.mrb[0].mxu0
  %3746 = vdwg.mxu0
  %3747 = vmatprep.subr.bf16.mxu0 %v3211
  %3748 = vmatpush1.bf16.msra.mxu0 %v3210
  %3749 = vmatprep.subr.bf16.mxu0 %v3218
  %3750 = vmatpush1.bf16.msra.mxu0 %v3217
  %3751 = vmatprep.subr.bf16.mxu0 %v3225
  %3752 = vmatpush1.bf16.msra.mxu0 %v3224
  %3753 = vmatprep.subr.bf16.mxu0 %v3232
  %3754 = vmatpush1.bf16.msra.mxu0 %v3231
  %3755 = vmatprep.subr.bf16.mxu0 %v3239
  %3756 = vmatpush1.bf16.msra.mxu0 %v3238
  %3757 = vmatprep.subr.bf16.mxu0 %v3246
  %3758 = vmatpush1.bf16.msra.mxu0 %v3245
  %3759 = vmatprep.subr.bf16.mxu0 %v3253
  %3760 = vmatpush1.bf16.msra.mxu0 %v3252
  %3761 = vmatprep.subr.bf16.mxu0 %v3260
  %3762 = vmatpush1.bf16.msra.mxu0 %v3259
  %3763 = vmatprep.subr.bf16.mxu0 %v3267
  %3764 = vmatpush1.bf16.msra.mxu0 %v3266
  %3765 = vmatprep.subr.bf16.mxu0 %v3274
  %3766 = vmatpush1.bf16.msra.mxu0 %v3273
  %3767 = vmatprep.subr.bf16.mxu0 %v3281
  %3768 = vmatpush1.bf16.msra.mxu0 %v3280
  %3769 = vmatprep.subr.bf16.mxu0 %v3288
  %3770 = vmatpush1.bf16.msra.mxu0 %v3287
  %3771 = vmatprep.subr.bf16.mxu0 %v3295
  %3772 = vmatpush1.bf16.msra.mxu0 %v3294
  %3773 = vmatprep.subr.bf16.mxu0 %v3302
  %3774 = vmatpush1.bf16.msra.mxu0 %v3301
  %3775 = vmatprep.subr.bf16.mxu0 %v3309
  %3776 = vmatpush1.bf16.msra.mxu0 %v3308
  %3777 = vmatprep.subr.bf16.mxu0 %v3316
  %3778 = vmatpush1.bf16.msra.mxu0 %v3315
  %3779 = vmatprep.mubr.bf16.mxu0 %v2096
  %3780 = vmatmul.mubr.bf16.gmra.mrb[0].mxu0 %v2095
  %v3781 = vpop.f32.mrb[0].mxu0
  %v3782 = vadd.f32 %v3741, %v3781
  %v3783 = vpop.f32.mrb[0].mxu0
  %v3784 = vadd.f32 %v3743, %v3783
  %v3785 = vpop.f32.mrb[0].mxu0
  %v3786 = vpop.f32.mrb[0].mxu0
  %3787 = vdwg.mxu0
  %3788 = vmatprep.subr.bf16.mxu0 0
  %3789 = vmatpush1.bf16.msra.mxu0 %v3100
  %3790 = vmatprep.subr.bf16.mxu0 0
  %3791 = vmatpush1.bf16.msra.mxu0 %v3107
  %3792 = vmatprep.subr.bf16.mxu0 0
  %3793 = vmatpush1.bf16.msra.mxu0 %v3114
  %3794 = vmatprep.subr.bf16.mxu0 0
  %3795 = vmatpush1.bf16.msra.mxu0 %v3121
  %3796 = vmatprep.subr.bf16.mxu0 0
  %3797 = vmatpush1.bf16.msra.mxu0 %v3128
  %3798 = vmatprep.subr.bf16.mxu0 0
  %3799 = vmatpush1.bf16.msra.mxu0 %v3135
  %3800 = vmatprep.subr.bf16.mxu0 0
  %3801 = vmatpush1.bf16.msra.mxu0 %v3142
  %3802 = vmatprep.subr.bf16.mxu0 0
  %3803 = vmatpush1.bf16.msra.mxu0 %v3149
  %3804 = vmatprep.subr.bf16.mxu0 0
  %3805 = vmatpush1.bf16.msra.mxu0 %v3156
  %3806 = vmatprep.subr.bf16.mxu0 0
  %3807 = vmatpush1.bf16.msra.mxu0 %v3163
  %3808 = vmatprep.subr.bf16.mxu0 0
  %3809 = vmatpush1.bf16.msra.mxu0 %v3170
  %3810 = vmatprep.subr.bf16.mxu0 0
  %3811 = vmatpush1.bf16.msra.mxu0 %v3177
  %3812 = vmatprep.subr.bf16.mxu0 0
  %3813 = vmatpush1.bf16.msra.mxu0 %v3184
  %3814 = vmatprep.subr.bf16.mxu0 0
  %3815 = vmatpush1.bf16.msra.mxu0 %v3191
  %3816 = vmatprep.subr.bf16.mxu0 0
  %3817 = vmatpush1.bf16.msra.mxu0 %v3198
  %3818 = vmatprep.subr.bf16.mxu0 0
  %3819 = vmatpush1.bf16.msra.mxu0 %v3205
  %3820 = vmatprep.mubr.bf16.mxu0 %v2094
  %3821 = vmatmul.mubr.bf16.gmra.mrb[0].mxu0 %v2093
  %v3822 = vpop.f32.mrb[0].mxu0
  %v3823 = vadd.f32 %v2382, %v3822
  %v3824 = vpop.f32.mrb[0].mxu0
  %v3825 = vpop.f32.mrb[0].mxu0
  %v3826 = vpop.f32.mrb[0].mxu0
  %3827 = vdwg.mxu0
  %3828 = vmatprep.subr.bf16.mxu0 0
  %3829 = vmatpush1.bf16.msra.mxu0 %v3212
  %3830 = vmatprep.subr.bf16.mxu0 0
  %3831 = vmatpush1.bf16.msra.mxu0 %v3219
  %3832 = vmatprep.subr.bf16.mxu0 0
  %3833 = vmatpush1.bf16.msra.mxu0 %v3226
  %3834 = vmatprep.subr.bf16.mxu0 0
  %3835 = vmatpush1.bf16.msra.mxu0 %v3233
  %3836 = vmatprep.subr.bf16.mxu0 0
  %3837 = vmatpush1.bf16.msra.mxu0 %v3240
  %3838 = vmatprep.subr.bf16.mxu0 0
  %3839 = vmatpush1.bf16.msra.mxu0 %v3247
  %3840 = vmatprep.subr.bf16.mxu0 0
  %3841 = vmatpush1.bf16.msra.mxu0 %v3254
  %3842 = vmatprep.subr.bf16.mxu0 0
  %3843 = vmatpush1.bf16.msra.mxu0 %v3261
  %3844 = vmatprep.subr.bf16.mxu0 0
  %3845 = vmatpush1.bf16.msra.mxu0 %v3268
  %3846 = vmatprep.subr.bf16.mxu0 0
  %3847 = vmatpush1.bf16.msra.mxu0 %v3275
  %3848 = vmatprep.subr.bf16.mxu0 0
  %3849 = vmatpush1.bf16.msra.mxu0 %v3282
  %3850 = vmatprep.subr.bf16.mxu0 0
  %3851 = vmatpush1.bf16.msra.mxu0 %v3289
  %3852 = vmatprep.subr.bf16.mxu0 0
  %3853 = vmatpush1.bf16.msra.mxu0 %v3296
  %3854 = vmatprep.subr.bf16.mxu0 0
  %3855 = vmatpush1.bf16.msra.mxu0 %v3303
  %3856 = vmatprep.subr.bf16.mxu0 0
  %3857 = vmatpush1.bf16.msra.mxu0 %v3310
  %3858 = vmatprep.subr.bf16.mxu0 0
  %3859 = vmatpush1.bf16.msra.mxu0 %v3317
  %3860 = vmatprep.mubr.bf16.mxu0 %v2096
  %3861 = vmatmul.mubr.bf16.gmra.mrb[0].mxu0 %v2095
  %v3862 = vpop.f32.mrb[0].mxu0
  %v3863 = vadd.f32 %v3823, %v3862
  %v3864 = vpop.f32.mrb[0].mxu0
  %v3865 = vpop.f32.mrb[0].mxu0
  %v3866 = vpop.f32.mrb[0].mxu0
  %3867 = vdwg.mxu0
  %v3868 = vxor.u32 %v3618, 2147483648
  %v3869 = vxor.u32 %v3620, 2147483648
  %v3870 = vxor.u32 %v3700, 2147483648
  %v3871 = vxor.u32 %v3702, 2147483648
  %v3872 = vxor.u32 %v3782, 2147483648
  %v3873 = vxor.u32 %v3784, 2147483648
  %v3874 = vxor.u32 %v3863, 2147483648
  %v3875 = vmul.f32 %v3868, 1.442695
  %v3876 = vpow.pop %v3875
  %v3877 = vmul.f32 %v3869, 1.442695
  %v3878 = vpow.pop %v3877
  %v3879 = vmul.f32 %v3870, 1.442695
  %v3880 = vpow.pop %v3879
  %v3881 = vmul.f32 %v3871, 1.442695
  %v3882 = vpow.pop %v3881
  %v3883 = vmul.f32 %v3872, 1.442695
  %v3884 = vpow.pop %v3883
  %v3885 = vmul.f32 %v3873, 1.442695
  %v3886 = vpow.pop %v3885
  %v3887 = vmul.f32 %v3874, 1.442695
  %v3888 = vpow.pop %v3887
  %v3889 = vadd.f32 %v3876, 1.0
  %v3890 = vadd.f32 %v3878, 1.0
  %v3891 = vadd.f32 %v3880, 1.0
  %v3892 = vadd.f32 %v3882, 1.0
  %v3893 = vadd.f32 %v3884, 1.0
  %v3894 = vadd.f32 %v3886, 1.0
  %v3895 = vadd.f32 %v3888, 1.0
  %v3896 = vrcp.pop %v3889
  %v3897 = vmul.f32 1.0, %v3896
  %v3898 = vrcp.pop %v3890
  %v3899 = vmul.f32 1.0, %v3898
  %v3900 = vrcp.pop %v3891
  %v3901 = vmul.f32 1.0, %v3900
  %v3902 = vrcp.pop %v3892
  %v3903 = vmul.f32 1.0, %v3902
  %v3904 = vrcp.pop %v3893
  %v3905 = vmul.f32 1.0, %v3904
  %v3906 = vrcp.pop %v3894
  %v3907 = vmul.f32 1.0, %v3906
  %v3908 = vrcp.pop %v3895
  %v3909 = vmul.f32 1.0, %v3908
  %3910 = vst [vmem:[%s9] sm:$0xff] %v3897
  %3911 = vst [vmem:[%s9 + $0x8] sm:$0xff] %v3899
  %3912 = vst [vmem:[%s9 + $0x10] sm:$0xff] %v3901
  %3913 = vst [vmem:[%s9 + $0x18] sm:$0xff] %v3903
  %3914 = vst [vmem:[%s9 + $0x20] sm:$0xff] %v3905
  %3915 = vst [vmem:[%s9 + $0x28] sm:$0xff] %v3907
  %3916 = vst.msk [vmem:[%s9 + $0x30] sm:$0xff] %vm1247, %v3909
  // Predicated region
  $region38: #{wae_forward.1} parent=0 // pred_check
    _
  $region39: #{wae_forward.1} parent=0 // pred_check_branch
    %3918 = sbr.rel (0) target = $region41
  $region40: #{wae_forward.1} parent=0 // pred_region
    _
  $region41: #{wae_forward.1} parent=0 // pred_fallthru
    _
  // Predicated region
  $region42: #{wae_forward.1} parent=0 // pred_check
    _
  $region43: #{wae_forward.1} parent=0 // pred_check_branch
    %3920 = sbr.rel (0) target = $region45
  $region44: #{wae_forward.1} parent=0 // pred_region
    _
  $region45: #{wae_forward.1} parent=0 // pred_fallthru
    _
  // Predicated region
  $region46: #{wae_forward.1} parent=0 // pred_check
    _
  $region47: #{wae_forward.1} parent=0 // pred_check_branch
    %3922 = sbr.rel (0) target = $region49
  $region48: #{wae_forward.1} parent=0 // pred_region
    _
  $region49: #{wae_forward.1} parent=0 // pred_fallthru
    _
  // Predicated region
  $region50: #{wae_forward.1} parent=0 // pred_check
    _
  $region51: #{wae_forward.1} parent=0 // pred_check_branch
    %3924 = sbr.rel (0) target = $region53
  $region52: #{wae_forward.1} parent=0 // pred_region
    _
  $region53: #{wae_forward.1} parent=0 // pred_fallthru
    _

</llo_original>
